<compile_context>
chip_gen: v7x
topology: tpu7x:2x2x1
jax: 0.10.0
libtpu: 0.0.40
codegen_flags: <defaults>
</compile_context>

<pallas_src>
import numpy as np
import jax
import jax.numpy as jnp
from jax.experimental import pallas as pl
from jax.experimental.pallas import tpu as pltpu


# ----------------------------- Pallas kernels -----------------------------------

def _lrelu(y):
    # LeakyReLU(0.2): for y>=0 max(y, 0.2y)=y, for y<0 max(y, 0.2y)=0.2y
    return jnp.maximum(y, 0.2 * y)


def _conv_bn_lrelu_kernel(segments, m_pad):
    """y = x @ w (+ b)  (bf16 inputs, f32 accumulation on the MXU).

    segments is None : bias add + LeakyReLU(0.2), single full store (c1).
    segments given   : per-segment (= per-scale) training-mode BatchNorm with one-pass
                       batch statistics (biased variance, eps=1e-5, matching
                       torch.nn.BatchNorm2d forward) on STATIC row slices, then
                       LeakyReLU(0.2); per-segment static slice stores; zero tail rows.
    """
    def kernel(*refs):
        if segments is None:
            x_ref, w_ref, b_ref, o_ref = refs
        else:
            x_ref, w_ref, g_ref, beta_ref, o_ref = refs

        y = jnp.dot(x_ref[...], w_ref[...], preferred_element_type=jnp.float32)

        if segments is None:
            o_ref[...] = _lrelu(y + b_ref[...]).astype(o_ref.dtype)
        else:
            gamma = g_ref[...]
            beta = beta_ref[...]
            for lo, hi in segments:                    # static per-scale row ranges
                ys = y[lo:hi, :]
                inv_cnt = 1.0 / float(hi - lo)
                mean = jnp.sum(ys, axis=0, keepdims=True) * inv_cnt
                ex2 = jnp.sum(ys * ys, axis=0, keepdims=True) * inv_cnt
                var = jnp.maximum(ex2 - mean * mean, 0.0)   # clamp: one-pass cancellation
                z = (ys - mean) * jax.lax.rsqrt(var + 1e-5) * gamma + beta
                o_ref[lo:hi, :] = _lrelu(z).astype(o_ref.dtype)
            tail = segments[-1][1]
            if tail < m_pad:                           # zero the padding rows (never read)
                o_ref[tail:, :] = jnp.zeros((m_pad - tail, o_ref.shape[1]), o_ref.dtype)
    return kernel


def _ceil_to(x, m):
    return ((x + m - 1) // m) * m


def conv_layer(cols, w, b=None, gamma=None, beta=None, segments=None):
    """One fused conv layer over the concatenation of all scales' im2col patches."""
    m, k = cols.shape
    cout = w.shape[1]
    m_pad = _ceil_to(m, 16)                            # bf16 sublane packing
    if m_pad != m:
        cols = jnp.pad(cols, ((0, m_pad - m), (0, 0)))

    vmem = pl.BlockSpec(memory_space=pltpu.MemorySpace.VMEM)
    if segments is None:
        args = (cols, w, b)
    else:
        # conv bias omitted: constant-per-channel shifts cancel under training-mode BN.
        args = (cols, w, gamma, beta)

    cost = pl.CostEstimate(
        flops=2 * m_pad * k * cout,
        transcendentals=0,
        bytes_accessed=2 * (m_pad * k + k * cout + m_pad * cout),
    )
    return pl.pallas_call(
        _conv_bn_lrelu_kernel(segments, m_pad),
        out_shape=jax.ShapeDtypeStruct((m_pad, cout), jnp.bfloat16),
        in_specs=[vmem] * len(args),
        out_specs=vmem,
        cost_estimate=cost,
    )(*args)


def _head_kernel(ranges, n_lane_groups):
    """Final Cout=1 conv on the VPU: x*w accumulated into an (M,128) f32 accumulator over
    all lane groups (elementwise VALU adds), ONE cross-lane (XLU) reduce at the end,
    + bias + sigmoid, then per-(scale, sample) spatial means via static row slices.
    Scalar scores are written to an SMEM (n_scales, n_samples) output."""
    def kernel(x_ref, w_ref, b_ref, o_ref):
        m = x_ref.shape[0]
        acc = jnp.zeros((m, 128), jnp.float32)
        for g in range(n_lane_groups):                 # static unroll, lane-aligned slices
            lo = g * 128
            xs = x_ref[:, lo:lo + 128].astype(jnp.float32)
            ws = w_ref[:, lo:lo + 128].astype(jnp.float32)
            acc = acc + xs * ws
        p = jnp.sum(acc, axis=-1, keepdims=True)       # single cross-lane reduction [M,1]
        p = jax.nn.sigmoid(p + b_ref[0, 0])
        for s, per_sample in enumerate(ranges):        # static (scale, sample) row ranges
            for n, (lo, hi) in enumerate(per_sample):
                o_ref[s, n] = jnp.sum(p[lo:hi, :]) / float(hi - lo)
    return kernel


def head_layer(cols, w_row, b, ranges, n_samples):
    m, k = cols.shape
    assert k % 128 == 0
    m_pad = _ceil_to(m, 16)
    if m_pad != m:
        cols = jnp.pad(cols, ((0, m_pad - m), (0, 0)))

    vmem = pl.BlockSpec(memory_space=pltpu.MemorySpace.VMEM)
    smem = pl.BlockSpec(memory_space=pltpu.MemorySpace.SMEM)
    cost = pl.CostEstimate(
        flops=2 * m_pad * k + 8 * m_pad,
        transcendentals=m_pad,
        bytes_accessed=2 * (m_pad * k + k) + 4 * len(ranges) * n_samples,
    )
    return pl.pallas_call(
        _head_kernel(ranges, k // 128),
        out_shape=jax.ShapeDtypeStruct((len(ranges), n_samples), jnp.float32),
        in_specs=[vmem, vmem, smem],
        out_specs=smem,
        cost_estimate=cost,
    )(cols, w_row, b)


# ------------------------------- XLA glue ----------------------------------------

def im2col_3x3_pad1(x, stride):
    """x:[N,H,W,C] -> patch matrix [N*Ho*Wo, 9*C] for pad=1, 3x3 kernel, given stride."""
    N, H, W, C = x.shape
    xp = jnp.pad(x, ((0, 0), (1, 1), (1, 1), (0, 0)))
    Ho = (H + 2 - 3) // stride + 1
    Wo = (W + 2 - 3) // stride + 1
    patches = []
    for dy in range(3):
        for dx in range(3):
            patches.append(
                jax.lax.slice(
                    xp,
                    (0, dy, dx, 0),
                    (N, dy + (Ho - 1) * stride + 1, dx + (Wo - 1) * stride + 1, C),
                    (1, stride, stride, 1),
                )
            )
    cols = jnp.stack(patches, axis=3)            # [N, Ho, Wo, 9, C]
    return cols.reshape(N * Ho * Wo, 9 * C), (N, Ho, Wo)


def maxpool2x2(x):
    """MaxPool2d(kernel=2, stride=2) on NHWC (tiny op on the 6-channel input)."""
    N, H, W, C = x.shape
    x = x.reshape(N, H // 2, 2, W // 2, 2, C)
    return jnp.max(x, axis=(2, 4))


# ------------------------------- parameters --------------------------------------

def make_params(key):
    params = {}
    conv_cfg = [("c1", 6, 64, True), ("c2", 64, 128, False),
                ("c3", 128, 256, False), ("c4", 256, 512, False),
                ("cf", 512, 1, True)]
    for name, cin, cout, use_bias in conv_cfg:
        key, k1, k2 = jax.random.split(key, 3)
        fan_in = cin * 9
        # nn.init.kaiming_normal (fan_in, gain=sqrt(2))
        w = jax.random.normal(k1, (cout, cin, 3, 3), jnp.float32) * jnp.sqrt(2.0 / fan_in)
        # im2col weight layout: row = (dy*3+dx)*Cin + c
        w2d = jnp.transpose(w, (2, 3, 1, 0)).reshape(9 * cin, cout)
        bound = 1.0 / float(np.sqrt(fan_in))
        if name == "cf":
            params["cf_w"] = w2d.T.astype(jnp.bfloat16)   # [1, 9*Cin] row vector (VPU head)
            params["cf_b"] = jax.random.uniform(k2, (1, 1), jnp.float32, -bound, bound)
        else:
            params[name + "_w"] = w2d.astype(jnp.bfloat16)  # bf16 weights, f32 accumulation
            if use_bias:
                params[name + "_b"] = jax.random.uniform(
                    k2, (1, cout), jnp.float32, -bound, bound)
            # c2/c3/c4 conv biases intentionally omitted: a per-channel constant added
            # before training-mode BatchNorm cancels exactly (batch-mean subtraction).
    for name, c in [("bn2", 128), ("bn3", 256), ("bn4", 512)]:
        params[name + "_g"] = jnp.ones((1, c), jnp.float32)
        params[name + "_b"] = jnp.zeros((1, c), jnp.float32)
    return params


# ------------------------------- forward -----------------------------------------

def tipd_forward(params, img_nhwc, t_nhwc):
    # torch.cat(img, t) along channels; cast to bf16 ONCE so all glue is half-width.
    x = jnp.concatenate([img_nhwc, t_nhwc], axis=-1).astype(jnp.bfloat16)   # [N,H,W,6]
    scales = [x]
    for _ in range(2):
        x = maxpool2x2(x)                              # self.sd (MaxPool2d(2,2))
        scales.append(x)
    n_samples = scales[0].shape[0]

    def run_layer(acts, name, stride, bn=None):
        cols_list, shapes = [], []
        for a in acts:
            c, shp = im2col_3x3_pad1(a, stride)
            cols_list.append(c)
            shapes.append(shp)
        cols = jnp.concatenate(cols_list, axis=0)      # rows: scale-major, then (n, ho, wo)
        if bn is None:
            y = conv_layer(cols, params[name + "_w"], b=params[name + "_b"])
        else:
            segs, off = [], 0
            for (nn_, h, w) in shapes:
                segs.append((off, off + nn_ * h * w))
                off += nn_ * h * w
            y = conv_layer(cols, params[name + "_w"],
                           gamma=params[bn + "_g"], beta=params[bn + "_b"],
                           segments=tuple(segs))
        outs, off = [], 0
        cout = params[name + "_w"].shape[1]
        for (nn_, h, w) in shapes:
            m = nn_ * h * w
            outs.append(y[off:off + m].reshape(nn_, h, w, cout))
            off += m
        return outs

    acts = run_layer(scales, "c1", 2)                  # conv1 + lrelu
    acts = run_layer(acts, "c2", 2, "bn2")             # conv2 + bn2 + lrelu
    acts = run_layer(acts, "c3", 2, "bn3")             # conv3 + bn3 + lrelu
    acts = run_layer(acts, "c4", 1, "bn4")             # conv4 + bn4 + lrelu

    # final conv (Cout=1) + sigmoid + per-sample spatial mean, fused VPU head
    cols_list, ranges, off = [], [], 0
    for a in acts:
        c, (nn_, h, w) = im2col_3x3_pad1(a, 1)
        cols_list.append(c)
        per = h * w
        ranges.append(tuple((off + i * per, off + (i + 1) * per) for i in range(nn_)))
        off += nn_ * per
    cols = jnp.concatenate(cols_list, axis=0)
    scores = head_layer(cols, params["cf_w"], params["cf_b"],
                        tuple(ranges), n_samples)      # [3 scales, N]
    # torch.min over the three multiscale per-sample scores
    return jnp.min(scores, axis=0)


# --------------------------------- main -------------------------------------------

if __name__ == "__main__":
    key = jax.random.PRNGKey(0)
    kp, ki, kt = jax.random.split(key, 3)
    params = make_params(kp)

    # PyTorch-convention NCHW inputs, small shapes.
    img_nchw = jax.random.normal(ki, (2, 3, 32, 32), jnp.float32)
    t_nchw = jax.random.normal(kt, (2, 3, 32, 32), jnp.float32)

    # boundary transpose NCHW -> NHWC
    img = jnp.transpose(img_nchw, (0, 2, 3, 1))
    t = jnp.transpose(t_nchw, (0, 2, 3, 1))

    out = jax.jit(tipd_forward)(params, img, t)
    out = jax.block_until_ready(out)
    assert out.shape == (2,) and bool(jnp.all(jnp.isfinite(out)))
    print("KERNEL_OK")
</pallas_src>

<mosaic_0001>
module attributes {stable_mosaic.version = 11 : i64} {
  func.func @kernel(%arg0: memref<672x54xbf16, #tpu.memory_space<vmem>>, %arg1: memref<54x64xbf16, #tpu.memory_space<vmem>>, %arg2: memref<1x64xf32, #tpu.memory_space<vmem>>, %arg3: memref<672x64xbf16, #tpu.memory_space<vmem>>) attributes {dimension_semantics = [], scalar_prefetch = 0 : i64, scratch_operands = 0 : i64, tpu.core_type = #tpu.core_type<tc>} {
    %c0 = arith.constant 0 : index
    %c0_0 = arith.constant 0 : index
    %0 = vector.load %arg0[%c0, %c0_0] : memref<672x54xbf16, #tpu.memory_space<vmem>>, vector<672x54xbf16>
    %c0_1 = arith.constant 0 : index
    %c0_2 = arith.constant 0 : index
    %1 = vector.load %arg1[%c0_1, %c0_2] : memref<54x64xbf16, #tpu.memory_space<vmem>>, vector<54x64xbf16>
    %cst = arith.constant dense<0.000000e+00> : vector<672x64xf32>
    %2 = tpu.matmul %0, %1, %cst {dimension_numbers = #tpu.dot_dimension_numbers<[1], [0], [0], [1], [0, 0, 1, 1], [], []>} : vector<672x54xbf16>, vector<54x64xbf16>, vector<672x64xf32> -> vector<672x64xf32>
    %c0_3 = arith.constant 0 : index
    %c0_4 = arith.constant 0 : index
    %3 = vector.load %arg2[%c0_3, %c0_4] : memref<1x64xf32, #tpu.memory_space<vmem>>, vector<1x64xf32>
    %4 = vector.broadcast %3 : vector<1x64xf32> to vector<672x64xf32>
    %5 = arith.addf %2, %4 : vector<672x64xf32>
    %cst_5 = arith.constant 2.000000e-01 : f32
    %6 = vector.broadcast %cst_5 : f32 to vector<672x64xf32>
    %7 = arith.mulf %6, %5 : vector<672x64xf32>
    %8 = arith.maximumf %5, %7 : vector<672x64xf32>
    %9 = arith.truncf %8 : vector<672x64xf32> to vector<672x64xbf16>
    %c0_6 = arith.constant 0 : index
    %c0_7 = arith.constant 0 : index
    %10 = vector.load %arg3[%c0_6, %c0_7] : memref<672x64xbf16, #tpu.memory_space<vmem>>, vector<672x64xbf16>
    tpu.vector_store %arg3[%c0_6, %c0_7], %9 {strides = array<i32>} : memref<672x64xbf16, #tpu.memory_space<vmem>>, vector<672x64xbf16>,
    return
  }
}

module attributes {stable_mosaic.version = 11 : i64} {
  func.func @kernel(%arg0: memref<176x576xbf16, #tpu.memory_space<vmem>>, %arg1: memref<576x128xbf16, #tpu.memory_space<vmem>>, %arg2: memref<1x128xf32, #tpu.memory_space<vmem>>, %arg3: memref<1x128xf32, #tpu.memory_space<vmem>>, %arg4: memref<176x128xbf16, #tpu.memory_space<vmem>>) attributes {dimension_semantics = [], scalar_prefetch = 0 : i64, scratch_operands = 0 : i64, tpu.core_type = #tpu.core_type<tc>} {
    %c0 = arith.constant 0 : index
    %c0_0 = arith.constant 0 : index
    %0 = vector.load %arg0[%c0, %c0_0] : memref<176x576xbf16, #tpu.memory_space<vmem>>, vector<176x576xbf16>
    %c0_1 = arith.constant 0 : index
    %c0_2 = arith.constant 0 : index
    %1 = vector.load %arg1[%c0_1, %c0_2] : memref<576x128xbf16, #tpu.memory_space<vmem>>, vector<576x128xbf16>
    %cst = arith.constant dense<0.000000e+00> : vector<176x128xf32>
    %2 = tpu.matmul %0, %1, %cst {dimension_numbers = #tpu.dot_dimension_numbers<[1], [0], [0], [1], [0, 0, 1, 1], [], []>} : vector<176x576xbf16>, vector<576x128xbf16>, vector<176x128xf32> -> vector<176x128xf32>
    %c0_3 = arith.constant 0 : index
    %c0_4 = arith.constant 0 : index
    %3 = vector.load %arg2[%c0_3, %c0_4] : memref<1x128xf32, #tpu.memory_space<vmem>>, vector<1x128xf32>
    %c0_5 = arith.constant 0 : index
    %c0_6 = arith.constant 0 : index
    %4 = vector.load %arg3[%c0_5, %c0_6] : memref<1x128xf32, #tpu.memory_space<vmem>>, vector<1x128xf32>
    %5 = vector.extract_strided_slice %2 {offsets = [0, 0], sizes = [128, 128], strides = [1, 1]} : vector<176x128xf32> to vector<128x128xf32>
    %cst_7 = arith.constant dense<0.000000e+00> : vector<128xf32>
    %6 = vector.multi_reduction <add>, %5, %cst_7 [0] : vector<128x128xf32> to vector<128xf32>
    %7 = vector.shape_cast %6 : vector<128xf32> to vector<1x128xf32>
    %cst_8 = arith.constant 7.812500e-03 : f32
    %8 = vector.broadcast %cst_8 : f32 to vector<1x128xf32>
    %9 = arith.mulf %7, %8 : vector<1x128xf32>
    %10 = arith.mulf %5, %5 : vector<128x128xf32>
    %cst_9 = arith.constant dense<0.000000e+00> : vector<128xf32>
    %11 = vector.multi_reduction <add>, %10, %cst_9 [0] : vector<128x128xf32> to vector<128xf32>
    %12 = vector.shape_cast %11 : vector<128xf32> to vector<1x128xf32>
    %cst_10 = arith.constant 7.812500e-03 : f32
    %13 = vector.broadcast %cst_10 : f32 to vector<1x128xf32>
    %14 = arith.mulf %12, %13 : vector<1x128xf32>
    %15 = arith.mulf %9, %9 : vector<1x128xf32>
    %16 = arith.subf %14, %15 : vector<1x128xf32>
    %cst_11 = arith.constant 0.000000e+00 : f32
    %17 = vector.broadcast %cst_11 : f32 to vector<1x128xf32>
    %18 = arith.maximumf %16, %17 : vector<1x128xf32>
    %19 = vector.broadcast %9 : vector<1x128xf32> to vector<128x128xf32>
    %20 = arith.subf %5, %19 : vector<128x128xf32>
    %cst_12 = arith.constant 9.99999974E-6 : f32
    %21 = vector.broadcast %cst_12 : f32 to vector<1x128xf32>
    %22 = arith.addf %18, %21 : vector<1x128xf32>
    %23 = math.rsqrt %22 : vector<1x128xf32>
    %24 = vector.broadcast %23 : vector<1x128xf32> to vector<128x128xf32>
    %25 = arith.mulf %20, %24 : vector<128x128xf32>
    %26 = vector.broadcast %3 : vector<1x128xf32> to vector<128x128xf32>
    %27 = arith.mulf %25, %26 : vector<128x128xf32>
    %28 = vector.broadcast %4 : vector<1x128xf32> to vector<128x128xf32>
    %29 = arith.addf %27, %28 : vector<128x128xf32>
    %cst_13 = arith.constant 2.000000e-01 : f32
    %30 = vector.broadcast %cst_13 : f32 to vector<128x128xf32>
    %31 = arith.mulf %30, %29 : vector<128x128xf32>
    %32 = arith.maximumf %29, %31 : vector<128x128xf32>
    %33 = arith.truncf %32 : vector<128x128xf32> to vector<128x128xbf16>
    %c0_14 = arith.constant 0 : index
    %c0_15 = arith.constant 0 : index
    %34 = vector.load %arg4[%c0_14, %c0_15] : memref<176x128xbf16, #tpu.memory_space<vmem>>, vector<128x128xbf16>
    tpu.vector_store %arg4[%c0_14, %c0_15], %33 {strides = array<i32>} : memref<176x128xbf16, #tpu.memory_space<vmem>>, vector<128x128xbf16>,
    %35 = vector.extract_strided_slice %2 {offsets = [128, 0], sizes = [32, 128], strides = [1, 1]} : vector<176x128xf32> to vector<32x128xf32>
    %cst_16 = arith.constant dense<0.000000e+00> : vector<128xf32>
    %36 = vector.multi_reduction <add>, %35, %cst_16 [0] : vector<32x128xf32> to vector<128xf32>
    %37 = vector.shape_cast %36 : vector<128xf32> to vector<1x128xf32>
    %cst_17 = arith.constant 3.125000e-02 : f32
    %38 = vector.broadcast %cst_17 : f32 to vector<1x128xf32>
    %39 = arith.mulf %37, %38 : vector<1x128xf32>
    %40 = arith.mulf %35, %35 : vector<32x128xf32>
    %cst_18 = arith.constant dense<0.000000e+00> : vector<128xf32>
    %41 = vector.multi_reduction <add>, %40, %cst_18 [0] : vector<32x128xf32> to vector<128xf32>
    %42 = vector.shape_cast %41 : vector<128xf32> to vector<1x128xf32>
    %cst_19 = arith.constant 3.125000e-02 : f32
    %43 = vector.broadcast %cst_19 : f32 to vector<1x128xf32>
    %44 = arith.mulf %42, %43 : vector<1x128xf32>
    %45 = arith.mulf %39, %39 : vector<1x128xf32>
    %46 = arith.subf %44, %45 : vector<1x128xf32>
    %cst_20 = arith.constant 0.000000e+00 : f32
    %47 = vector.broadcast %cst_20 : f32 to vector<1x128xf32>
    %48 = arith.maximumf %46, %47 : vector<1x128xf32>
    %49 = vector.broadcast %39 : vector<1x128xf32> to vector<32x128xf32>
    %50 = arith.subf %35, %49 : vector<32x128xf32>
    %cst_21 = arith.constant 9.99999974E-6 : f32
    %51 = vector.broadcast %cst_21 : f32 to vector<1x128xf32>
    %52 = arith.addf %48, %51 : vector<1x128xf32>
    %53 = math.rsqrt %52 : vector<1x128xf32>
    %54 = vector.broadcast %53 : vector<1x128xf32> to vector<32x128xf32>
    %55 = arith.mulf %50, %54 : vector<32x128xf32>
    %56 = vector.broadcast %3 : vector<1x128xf32> to vector<32x128xf32>
    %57 = arith.mulf %55, %56 : vector<32x128xf32>
    %58 = vector.broadcast %4 : vector<1x128xf32> to vector<32x128xf32>
    %59 = arith.addf %57, %58 : vector<32x128xf32>
    %cst_22 = arith.constant 2.000000e-01 : f32
    %60 = vector.broadcast %cst_22 : f32 to vector<32x128xf32>
    %61 = arith.mulf %60, %59 : vector<32x128xf32>
    %62 = arith.maximumf %59, %61 : vector<32x128xf32>
    %63 = arith.truncf %62 : vector<32x128xf32> to vector<32x128xbf16>
    %c128 = arith.constant 128 : index
    %c0_23 = arith.constant 0 : index
    %64 = vector.load %arg4[%c128, %c0_23] : memref<176x128xbf16, #tpu.memory_space<vmem>>, vector<32x128xbf16>
    tpu.vector_store %arg4[%c128, %c0_23], %63 {strides = array<i32>} : memref<176x128xbf16, #tpu.memory_space<vmem>>, vector<32x128xbf16>,
    %65 = vector.extract_strided_slice %2 {offsets = [160, 0], sizes = [8, 128], strides = [1, 1]} : vector<176x128xf32> to vector<8x128xf32>
    %cst_24 = arith.constant dense<0.000000e+00> : vector<128xf32>
    %66 = vector.multi_reduction <add>, %65, %cst_24 [0] : vector<8x128xf32> to vector<128xf32>
    %67 = vector.shape_cast %66 : vector<128xf32> to vector<1x128xf32>
    %cst_25 = arith.constant 1.250000e-01 : f32
    %68 = vector.broadcast %cst_25 : f32 to vector<1x128xf32>
    %69 = arith.mulf %67, %68 : vector<1x128xf32>
    %70 = arith.mulf %65, %65 : vector<8x128xf32>
    %cst_26 = arith.constant dense<0.000000e+00> : vector<128xf32>
    %71 = vector.multi_reduction <add>, %70, %cst_26 [0] : vector<8x128xf32> to vector<128xf32>
    %72 = vector.shape_cast %71 : vector<128xf32> to vector<1x128xf32>
    %cst_27 = arith.constant 1.250000e-01 : f32
    %73 = vector.broadcast %cst_27 : f32 to vector<1x128xf32>
    %74 = arith.mulf %72, %73 : vector<1x128xf32>
    %75 = arith.mulf %69, %69 : vector<1x128xf32>
    %76 = arith.subf %74, %75 : vector<1x128xf32>
    %cst_28 = arith.constant 0.000000e+00 : f32
    %77 = vector.broadcast %cst_28 : f32 to vector<1x128xf32>
    %78 = arith.maximumf %76, %77 : vector<1x128xf32>
    %79 = vector.broadcast %69 : vector<1x128xf32> to vector<8x128xf32>
    %80 = arith.subf %65, %79 : vector<8x128xf32>
    %cst_29 = arith.constant 9.99999974E-6 : f32
    %81 = vector.broadcast %cst_29 : f32 to vector<1x128xf32>
    %82 = arith.addf %78, %81 : vector<1x128xf32>
    %83 = math.rsqrt %82 : vector<1x128xf32>
    %84 = vector.broadcast %83 : vector<1x128xf32> to vector<8x128xf32>
    %85 = arith.mulf %80, %84 : vector<8x128xf32>
    %86 = vector.broadcast %3 : vector<1x128xf32> to vector<8x128xf32>
    %87 = arith.mulf %85, %86 : vector<8x128xf32>
    %88 = vector.broadcast %4 : vector<1x128xf32> to vector<8x128xf32>
    %89 = arith.addf %87, %88 : vector<8x128xf32>
    %cst_30 = arith.constant 2.000000e-01 : f32
    %90 = vector.broadcast %cst_30 : f32 to vector<8x128xf32>
    %91 = arith.mulf %90, %89 : vector<8x128xf32>
    %92 = arith.maximumf %89, %91 : vector<8x128xf32>
    %93 = arith.truncf %92 : vector<8x128xf32> to vector<8x128xbf16>
    %c160 = arith.constant 160 : index
    %c0_31 = arith.constant 0 : index
    %94 = vector.load %arg4[%c160, %c0_31] : memref<176x128xbf16, #tpu.memory_space<vmem>>, vector<8x128xbf16>
    tpu.vector_store %arg4[%c160, %c0_31], %93 {strides = array<i32>} : memref<176x128xbf16, #tpu.memory_space<vmem>>, vector<8x128xbf16>,
    %cst_32 = arith.constant 0.000000e+00 : bf16
    %95 = vector.broadcast %cst_32 : bf16 to vector<8x128xbf16>
    %c168 = arith.constant 168 : index
    %c0_33 = arith.constant 0 : index
    %96 = vector.load %arg4[%c168, %c0_33] : memref<176x128xbf16, #tpu.memory_space<vmem>>, vector<8x128xbf16>
    tpu.vector_store %arg4[%c168, %c0_33], %95 {strides = array<i32>} : memref<176x128xbf16, #tpu.memory_space<vmem>>, vector<8x128xbf16>,
    return
  }
}

module attributes {stable_mosaic.version = 11 : i64} {
  func.func @kernel(%arg0: memref<48x1152xbf16, #tpu.memory_space<vmem>>, %arg1: memref<1152x256xbf16, #tpu.memory_space<vmem>>, %arg2: memref<1x256xf32, #tpu.memory_space<vmem>>, %arg3: memref<1x256xf32, #tpu.memory_space<vmem>>, %arg4: memref<48x256xbf16, #tpu.memory_space<vmem>>) attributes {dimension_semantics = [], scalar_prefetch = 0 : i64, scratch_operands = 0 : i64, tpu.core_type = #tpu.core_type<tc>} {
    %c0 = arith.constant 0 : index
    %c0_0 = arith.constant 0 : index
    %0 = vector.load %arg0[%c0, %c0_0] : memref<48x1152xbf16, #tpu.memory_space<vmem>>, vector<48x1152xbf16>
    %c0_1 = arith.constant 0 : index
    %c0_2 = arith.constant 0 : index
    %1 = vector.load %arg1[%c0_1, %c0_2] : memref<1152x256xbf16, #tpu.memory_space<vmem>>, vector<1152x256xbf16>
    %cst = arith.constant dense<0.000000e+00> : vector<48x256xf32>
    %2 = tpu.matmul %0, %1, %cst {dimension_numbers = #tpu.dot_dimension_numbers<[1], [0], [0], [1], [0, 0, 1, 1], [], []>} : vector<48x1152xbf16>, vector<1152x256xbf16>, vector<48x256xf32> -> vector<48x256xf32>
    %c0_3 = arith.constant 0 : index
    %c0_4 = arith.constant 0 : index
    %3 = vector.load %arg2[%c0_3, %c0_4] : memref<1x256xf32, #tpu.memory_space<vmem>>, vector<1x256xf32>
    %c0_5 = arith.constant 0 : index
    %c0_6 = arith.constant 0 : index
    %4 = vector.load %arg3[%c0_5, %c0_6] : memref<1x256xf32, #tpu.memory_space<vmem>>, vector<1x256xf32>
    %5 = vector.extract_strided_slice %2 {offsets = [0, 0], sizes = [32, 256], strides = [1, 1]} : vector<48x256xf32> to vector<32x256xf32>
    %cst_7 = arith.constant dense<0.000000e+00> : vector<256xf32>
    %6 = vector.multi_reduction <add>, %5, %cst_7 [0] : vector<32x256xf32> to vector<256xf32>
    %7 = vector.shape_cast %6 : vector<256xf32> to vector<1x256xf32>
    %cst_8 = arith.constant 3.125000e-02 : f32
    %8 = vector.broadcast %cst_8 : f32 to vector<1x256xf32>
    %9 = arith.mulf %7, %8 : vector<1x256xf32>
    %10 = arith.mulf %5, %5 : vector<32x256xf32>
    %cst_9 = arith.constant dense<0.000000e+00> : vector<256xf32>
    %11 = vector.multi_reduction <add>, %10, %cst_9 [0] : vector<32x256xf32> to vector<256xf32>
    %12 = vector.shape_cast %11 : vector<256xf32> to vector<1x256xf32>
    %cst_10 = arith.constant 3.125000e-02 : f32
    %13 = vector.broadcast %cst_10 : f32 to vector<1x256xf32>
    %14 = arith.mulf %12, %13 : vector<1x256xf32>
    %15 = arith.mulf %9, %9 : vector<1x256xf32>
    %16 = arith.subf %14, %15 : vector<1x256xf32>
    %cst_11 = arith.constant 0.000000e+00 : f32
    %17 = vector.broadcast %cst_11 : f32 to vector<1x256xf32>
    %18 = arith.maximumf %16, %17 : vector<1x256xf32>
    %19 = vector.broadcast %9 : vector<1x256xf32> to vector<32x256xf32>
    %20 = arith.subf %5, %19 : vector<32x256xf32>
    %cst_12 = arith.constant 9.99999974E-6 : f32
    %21 = vector.broadcast %cst_12 : f32 to vector<1x256xf32>
    %22 = arith.addf %18, %21 : vector<1x256xf32>
    %23 = math.rsqrt %22 : vector<1x256xf32>
    %24 = vector.broadcast %23 : vector<1x256xf32> to vector<32x256xf32>
    %25 = arith.mulf %20, %24 : vector<32x256xf32>
    %26 = vector.broadcast %3 : vector<1x256xf32> to vector<32x256xf32>
    %27 = arith.mulf %25, %26 : vector<32x256xf32>
    %28 = vector.broadcast %4 : vector<1x256xf32> to vector<32x256xf32>
    %29 = arith.addf %27, %28 : vector<32x256xf32>
    %cst_13 = arith.constant 2.000000e-01 : f32
    %30 = vector.broadcast %cst_13 : f32 to vector<32x256xf32>
    %31 = arith.mulf %30, %29 : vector<32x256xf32>
    %32 = arith.maximumf %29, %31 : vector<32x256xf32>
    %33 = arith.truncf %32 : vector<32x256xf32> to vector<32x256xbf16>
    %c0_14 = arith.constant 0 : index
    %c0_15 = arith.constant 0 : index
    %34 = vector.load %arg4[%c0_14, %c0_15] : memref<48x256xbf16, #tpu.memory_space<vmem>>, vector<32x256xbf16>
    tpu.vector_store %arg4[%c0_14, %c0_15], %33 {strides = array<i32>} : memref<48x256xbf16, #tpu.memory_space<vmem>>, vector<32x256xbf16>,
    %35 = vector.extract_strided_slice %2 {offsets = [32, 0], sizes = [8, 256], strides = [1, 1]} : vector<48x256xf32> to vector<8x256xf32>
    %cst_16 = arith.constant dense<0.000000e+00> : vector<256xf32>
    %36 = vector.multi_reduction <add>, %35, %cst_16 [0] : vector<8x256xf32> to vector<256xf32>
    %37 = vector.shape_cast %36 : vector<256xf32> to vector<1x256xf32>
    %cst_17 = arith.constant 1.250000e-01 : f32
    %38 = vector.broadcast %cst_17 : f32 to vector<1x256xf32>
    %39 = arith.mulf %37, %38 : vector<1x256xf32>
    %40 = arith.mulf %35, %35 : vector<8x256xf32>
    %cst_18 = arith.constant dense<0.000000e+00> : vector<256xf32>
    %41 = vector.multi_reduction <add>, %40, %cst_18 [0] : vector<8x256xf32> to vector<256xf32>
    %42 = vector.shape_cast %41 : vector<256xf32> to vector<1x256xf32>
    %cst_19 = arith.constant 1.250000e-01 : f32
    %43 = vector.broadcast %cst_19 : f32 to vector<1x256xf32>
    %44 = arith.mulf %42, %43 : vector<1x256xf32>
    %45 = arith.mulf %39, %39 : vector<1x256xf32>
    %46 = arith.subf %44, %45 : vector<1x256xf32>
    %cst_20 = arith.constant 0.000000e+00 : f32
    %47 = vector.broadcast %cst_20 : f32 to vector<1x256xf32>
    %48 = arith.maximumf %46, %47 : vector<1x256xf32>
    %49 = vector.broadcast %39 : vector<1x256xf32> to vector<8x256xf32>
    %50 = arith.subf %35, %49 : vector<8x256xf32>
    %cst_21 = arith.constant 9.99999974E-6 : f32
    %51 = vector.broadcast %cst_21 : f32 to vector<1x256xf32>
    %52 = arith.addf %48, %51 : vector<1x256xf32>
    %53 = math.rsqrt %52 : vector<1x256xf32>
    %54 = vector.broadcast %53 : vector<1x256xf32> to vector<8x256xf32>
    %55 = arith.mulf %50, %54 : vector<8x256xf32>
    %56 = vector.broadcast %3 : vector<1x256xf32> to vector<8x256xf32>
    %57 = arith.mulf %55, %56 : vector<8x256xf32>
    %58 = vector.broadcast %4 : vector<1x256xf32> to vector<8x256xf32>
    %59 = arith.addf %57, %58 : vector<8x256xf32>
    %cst_22 = arith.constant 2.000000e-01 : f32
    %60 = vector.broadcast %cst_22 : f32 to vector<8x256xf32>
    %61 = arith.mulf %60, %59 : vector<8x256xf32>
    %62 = arith.maximumf %59, %61 : vector<8x256xf32>
    %63 = arith.truncf %62 : vector<8x256xf32> to vector<8x256xbf16>
    %c32 = arith.constant 32 : index
    %c0_23 = arith.constant 0 : index
    %64 = vector.load %arg4[%c32, %c0_23] : memref<48x256xbf16, #tpu.memory_space<vmem>>, vector<8x256xbf16>
    tpu.vector_store %arg4[%c32, %c0_23], %63 {strides = array<i32>} : memref<48x256xbf16, #tpu.memory_space<vmem>>, vector<8x256xbf16>,
    %65 = vector.extract_strided_slice %2 {offsets = [40, 0], sizes = [2, 256], strides = [1, 1]} : vector<48x256xf32> to vector<2x256xf32>
    %cst_24 = arith.constant dense<0.000000e+00> : vector<256xf32>
    %66 = vector.multi_reduction <add>, %65, %cst_24 [0] : vector<2x256xf32> to vector<256xf32>
    %67 = vector.shape_cast %66 : vector<256xf32> to vector<1x256xf32>
    %cst_25 = arith.constant 5.000000e-01 : f32
    %68 = vector.broadcast %cst_25 : f32 to vector<1x256xf32>
    %69 = arith.mulf %67, %68 : vector<1x256xf32>
    %70 = arith.mulf %65, %65 : vector<2x256xf32>
    %cst_26 = arith.constant dense<0.000000e+00> : vector<256xf32>
    %71 = vector.multi_reduction <add>, %70, %cst_26 [0] : vector<2x256xf32> to vector<256xf32>
    %72 = vector.shape_cast %71 : vector<256xf32> to vector<1x256xf32>
    %cst_27 = arith.constant 5.000000e-01 : f32
    %73 = vector.broadcast %cst_27 : f32 to vector<1x256xf32>
    %74 = arith.mulf %72, %73 : vector<1x256xf32>
    %75 = arith.mulf %69, %69 : vector<1x256xf32>
    %76 = arith.subf %74, %75 : vector<1x256xf32>
    %cst_28 = arith.constant 0.000000e+00 : f32
    %77 = vector.broadcast %cst_28 : f32 to vector<1x256xf32>
    %78 = arith.maximumf %76, %77 : vector<1x256xf32>
    %79 = vector.broadcast %69 : vector<1x256xf32> to vector<2x256xf32>
    %80 = arith.subf %65, %79 : vector<2x256xf32>
    %cst_29 = arith.constant 9.99999974E-6 : f32
    %81 = vector.broadcast %cst_29 : f32 to vector<1x256xf32>
    %82 = arith.addf %78, %81 : vector<1x256xf32>
    %83 = math.rsqrt %82 : vector<1x256xf32>
    %84 = vector.broadcast %83 : vector<1x256xf32> to vector<2x256xf32>
    %85 = arith.mulf %80, %84 : vector<2x256xf32>
    %86 = vector.broadcast %3 : vector<1x256xf32> to vector<2x256xf32>
    %87 = arith.mulf %85, %86 : vector<2x256xf32>
    %88 = vector.broadcast %4 : vector<1x256xf32> to vector<2x256xf32>
    %89 = arith.addf %87, %88 : vector<2x256xf32>
    %cst_30 = arith.constant 2.000000e-01 : f32
    %90 = vector.broadcast %cst_30 : f32 to vector<2x256xf32>
    %91 = arith.mulf %90, %89 : vector<2x256xf32>
    %92 = arith.maximumf %89, %91 : vector<2x256xf32>
    %93 = arith.truncf %92 : vector<2x256xf32> to vector<2x256xbf16>
    %c40 = arith.constant 40 : index
    %c0_31 = arith.constant 0 : index
    %94 = vector.load %arg4[%c40, %c0_31] : memref<48x256xbf16, #tpu.memory_space<vmem>>, vector<2x256xbf16>
    tpu.vector_store %arg4[%c40, %c0_31], %93 {strides = array<i32>} : memref<48x256xbf16, #tpu.memory_space<vmem>>, vector<2x256xbf16>,
    %cst_32 = arith.constant 0.000000e+00 : bf16
    %95 = vector.broadcast %cst_32 : bf16 to vector<6x256xbf16>
    %c42 = arith.constant 42 : index
    %c0_33 = arith.constant 0 : index
    %96 = vector.load %arg4[%c42, %c0_33] : memref<48x256xbf16, #tpu.memory_space<vmem>>, vector<6x256xbf16>
    tpu.vector_store %arg4[%c42, %c0_33], %95 {strides = array<i32>} : memref<48x256xbf16, #tpu.memory_space<vmem>>, vector<6x256xbf16>,
    return
  }
}

module attributes {stable_mosaic.version = 11 : i64} {
  func.func @kernel(%arg0: memref<48x2304xbf16, #tpu.memory_space<vmem>>, %arg1: memref<2304x512xbf16, #tpu.memory_space<vmem>>, %arg2: memref<1x512xf32, #tpu.memory_space<vmem>>, %arg3: memref<1x512xf32, #tpu.memory_space<vmem>>, %arg4: memref<48x512xbf16, #tpu.memory_space<vmem>>) attributes {dimension_semantics = [], scalar_prefetch = 0 : i64, scratch_operands = 0 : i64, tpu.core_type = #tpu.core_type<tc>} {
    %c0 = arith.constant 0 : index
    %c0_0 = arith.constant 0 : index
    %0 = vector.load %arg0[%c0, %c0_0] : memref<48x2304xbf16, #tpu.memory_space<vmem>>, vector<48x2304xbf16>
    %c0_1 = arith.constant 0 : index
    %c0_2 = arith.constant 0 : index
    %1 = vector.load %arg1[%c0_1, %c0_2] : memref<2304x512xbf16, #tpu.memory_space<vmem>>, vector<2304x512xbf16>
    %cst = arith.constant dense<0.000000e+00> : vector<48x512xf32>
    %2 = tpu.matmul %0, %1, %cst {dimension_numbers = #tpu.dot_dimension_numbers<[1], [0], [0], [1], [0, 0, 1, 1], [], []>} : vector<48x2304xbf16>, vector<2304x512xbf16>, vector<48x512xf32> -> vector<48x512xf32>
    %c0_3 = arith.constant 0 : index
    %c0_4 = arith.constant 0 : index
    %3 = vector.load %arg2[%c0_3, %c0_4] : memref<1x512xf32, #tpu.memory_space<vmem>>, vector<1x512xf32>
    %c0_5 = arith.constant 0 : index
    %c0_6 = arith.constant 0 : index
    %4 = vector.load %arg3[%c0_5, %c0_6] : memref<1x512xf32, #tpu.memory_space<vmem>>, vector<1x512xf32>
    %5 = vector.extract_strided_slice %2 {offsets = [0, 0], sizes = [32, 512], strides = [1, 1]} : vector<48x512xf32> to vector<32x512xf32>
    %cst_7 = arith.constant dense<0.000000e+00> : vector<512xf32>
    %6 = vector.multi_reduction <add>, %5, %cst_7 [0] : vector<32x512xf32> to vector<512xf32>
    %7 = vector.shape_cast %6 : vector<512xf32> to vector<1x512xf32>
    %cst_8 = arith.constant 3.125000e-02 : f32
    %8 = vector.broadcast %cst_8 : f32 to vector<1x512xf32>
    %9 = arith.mulf %7, %8 : vector<1x512xf32>
    %10 = arith.mulf %5, %5 : vector<32x512xf32>
    %cst_9 = arith.constant dense<0.000000e+00> : vector<512xf32>
    %11 = vector.multi_reduction <add>, %10, %cst_9 [0] : vector<32x512xf32> to vector<512xf32>
    %12 = vector.shape_cast %11 : vector<512xf32> to vector<1x512xf32>
    %cst_10 = arith.constant 3.125000e-02 : f32
    %13 = vector.broadcast %cst_10 : f32 to vector<1x512xf32>
    %14 = arith.mulf %12, %13 : vector<1x512xf32>
    %15 = arith.mulf %9, %9 : vector<1x512xf32>
    %16 = arith.subf %14, %15 : vector<1x512xf32>
    %cst_11 = arith.constant 0.000000e+00 : f32
    %17 = vector.broadcast %cst_11 : f32 to vector<1x512xf32>
    %18 = arith.maximumf %16, %17 : vector<1x512xf32>
    %19 = vector.broadcast %9 : vector<1x512xf32> to vector<32x512xf32>
    %20 = arith.subf %5, %19 : vector<32x512xf32>
    %cst_12 = arith.constant 9.99999974E-6 : f32
    %21 = vector.broadcast %cst_12 : f32 to vector<1x512xf32>
    %22 = arith.addf %18, %21 : vector<1x512xf32>
    %23 = math.rsqrt %22 : vector<1x512xf32>
    %24 = vector.broadcast %23 : vector<1x512xf32> to vector<32x512xf32>
    %25 = arith.mulf %20, %24 : vector<32x512xf32>
    %26 = vector.broadcast %3 : vector<1x512xf32> to vector<32x512xf32>
    %27 = arith.mulf %25, %26 : vector<32x512xf32>
    %28 = vector.broadcast %4 : vector<1x512xf32> to vector<32x512xf32>
    %29 = arith.addf %27, %28 : vector<32x512xf32>
    %cst_13 = arith.constant 2.000000e-01 : f32
    %30 = vector.broadcast %cst_13 : f32 to vector<32x512xf32>
    %31 = arith.mulf %30, %29 : vector<32x512xf32>
    %32 = arith.maximumf %29, %31 : vector<32x512xf32>
    %33 = arith.truncf %32 : vector<32x512xf32> to vector<32x512xbf16>
    %c0_14 = arith.constant 0 : index
    %c0_15 = arith.constant 0 : index
    %34 = vector.load %arg4[%c0_14, %c0_15] : memref<48x512xbf16, #tpu.memory_space<vmem>>, vector<32x512xbf16>
    tpu.vector_store %arg4[%c0_14, %c0_15], %33 {strides = array<i32>} : memref<48x512xbf16, #tpu.memory_space<vmem>>, vector<32x512xbf16>,
    %35 = vector.extract_strided_slice %2 {offsets = [32, 0], sizes = [8, 512], strides = [1, 1]} : vector<48x512xf32> to vector<8x512xf32>
    %cst_16 = arith.constant dense<0.000000e+00> : vector<512xf32>
    %36 = vector.multi_reduction <add>, %35, %cst_16 [0] : vector<8x512xf32> to vector<512xf32>
    %37 = vector.shape_cast %36 : vector<512xf32> to vector<1x512xf32>
    %cst_17 = arith.constant 1.250000e-01 : f32
    %38 = vector.broadcast %cst_17 : f32 to vector<1x512xf32>
    %39 = arith.mulf %37, %38 : vector<1x512xf32>
    %40 = arith.mulf %35, %35 : vector<8x512xf32>
    %cst_18 = arith.constant dense<0.000000e+00> : vector<512xf32>
    %41 = vector.multi_reduction <add>, %40, %cst_18 [0] : vector<8x512xf32> to vector<512xf32>
    %42 = vector.shape_cast %41 : vector<512xf32> to vector<1x512xf32>
    %cst_19 = arith.constant 1.250000e-01 : f32
    %43 = vector.broadcast %cst_19 : f32 to vector<1x512xf32>
    %44 = arith.mulf %42, %43 : vector<1x512xf32>
    %45 = arith.mulf %39, %39 : vector<1x512xf32>
    %46 = arith.subf %44, %45 : vector<1x512xf32>
    %cst_20 = arith.constant 0.000000e+00 : f32
    %47 = vector.broadcast %cst_20 : f32 to vector<1x512xf32>
    %48 = arith.maximumf %46, %47 : vector<1x512xf32>
    %49 = vector.broadcast %39 : vector<1x512xf32> to vector<8x512xf32>
    %50 = arith.subf %35, %49 : vector<8x512xf32>
    %cst_21 = arith.constant 9.99999974E-6 : f32
    %51 = vector.broadcast %cst_21 : f32 to vector<1x512xf32>
    %52 = arith.addf %48, %51 : vector<1x512xf32>
    %53 = math.rsqrt %52 : vector<1x512xf32>
    %54 = vector.broadcast %53 : vector<1x512xf32> to vector<8x512xf32>
    %55 = arith.mulf %50, %54 : vector<8x512xf32>
    %56 = vector.broadcast %3 : vector<1x512xf32> to vector<8x512xf32>
    %57 = arith.mulf %55, %56 : vector<8x512xf32>
    %58 = vector.broadcast %4 : vector<1x512xf32> to vector<8x512xf32>
    %59 = arith.addf %57, %58 : vector<8x512xf32>
    %cst_22 = arith.constant 2.000000e-01 : f32
    %60 = vector.broadcast %cst_22 : f32 to vector<8x512xf32>
    %61 = arith.mulf %60, %59 : vector<8x512xf32>
    %62 = arith.maximumf %59, %61 : vector<8x512xf32>
    %63 = arith.truncf %62 : vector<8x512xf32> to vector<8x512xbf16>
    %c32 = arith.constant 32 : index
    %c0_23 = arith.constant 0 : index
    %64 = vector.load %arg4[%c32, %c0_23] : memref<48x512xbf16, #tpu.memory_space<vmem>>, vector<8x512xbf16>
    tpu.vector_store %arg4[%c32, %c0_23], %63 {strides = array<i32>} : memref<48x512xbf16, #tpu.memory_space<vmem>>, vector<8x512xbf16>,
    %65 = vector.extract_strided_slice %2 {offsets = [40, 0], sizes = [2, 512], strides = [1, 1]} : vector<48x512xf32> to vector<2x512xf32>
    %cst_24 = arith.constant dense<0.000000e+00> : vector<512xf32>
    %66 = vector.multi_reduction <add>, %65, %cst_24 [0] : vector<2x512xf32> to vector<512xf32>
    %67 = vector.shape_cast %66 : vector<512xf32> to vector<1x512xf32>
    %cst_25 = arith.constant 5.000000e-01 : f32
    %68 = vector.broadcast %cst_25 : f32 to vector<1x512xf32>
    %69 = arith.mulf %67, %68 : vector<1x512xf32>
    %70 = arith.mulf %65, %65 : vector<2x512xf32>
    %cst_26 = arith.constant dense<0.000000e+00> : vector<512xf32>
    %71 = vector.multi_reduction <add>, %70, %cst_26 [0] : vector<2x512xf32> to vector<512xf32>
    %72 = vector.shape_cast %71 : vector<512xf32> to vector<1x512xf32>
    %cst_27 = arith.constant 5.000000e-01 : f32
    %73 = vector.broadcast %cst_27 : f32 to vector<1x512xf32>
    %74 = arith.mulf %72, %73 : vector<1x512xf32>
    %75 = arith.mulf %69, %69 : vector<1x512xf32>
    %76 = arith.subf %74, %75 : vector<1x512xf32>
    %cst_28 = arith.constant 0.000000e+00 : f32
    %77 = vector.broadcast %cst_28 : f32 to vector<1x512xf32>
    %78 = arith.maximumf %76, %77 : vector<1x512xf32>
    %79 = vector.broadcast %69 : vector<1x512xf32> to vector<2x512xf32>
    %80 = arith.subf %65, %79 : vector<2x512xf32>
    %cst_29 = arith.constant 9.99999974E-6 : f32
    %81 = vector.broadcast %cst_29 : f32 to vector<1x512xf32>
    %82 = arith.addf %78, %81 : vector<1x512xf32>
    %83 = math.rsqrt %82 : vector<1x512xf32>
    %84 = vector.broadcast %83 : vector<1x512xf32> to vector<2x512xf32>
    %85 = arith.mulf %80, %84 : vector<2x512xf32>
    %86 = vector.broadcast %3 : vector<1x512xf32> to vector<2x512xf32>
    %87 = arith.mulf %85, %86 : vector<2x512xf32>
    %88 = vector.broadcast %4 : vector<1x512xf32> to vector<2x512xf32>
    %89 = arith.addf %87, %88 : vector<2x512xf32>
    %cst_30 = arith.constant 2.000000e-01 : f32
    %90 = vector.broadcast %cst_30 : f32 to vector<2x512xf32>
    %91 = arith.mulf %90, %89 : vector<2x512xf32>
    %92 = arith.maximumf %89, %91 : vector<2x512xf32>
    %93 = arith.truncf %92 : vector<2x512xf32> to vector<2x512xbf16>
    %c40 = arith.constant 40 : index
    %c0_31 = arith.constant 0 : index
    %94 = vector.load %arg4[%c40, %c0_31] : memref<48x512xbf16, #tpu.memory_space<vmem>>, vector<2x512xbf16>
    tpu.vector_store %arg4[%c40, %c0_31], %93 {strides = array<i32>} : memref<48x512xbf16, #tpu.memory_space<vmem>>, vector<2x512xbf16>,
    %cst_32 = arith.constant 0.000000e+00 : bf16
    %95 = vector.broadcast %cst_32 : bf16 to vector<6x512xbf16>
    %c42 = arith.constant 42 : index
    %c0_33 = arith.constant 0 : index
    %96 = vector.load %arg4[%c42, %c0_33] : memref<48x512xbf16, #tpu.memory_space<vmem>>, vector<6x512xbf16>
    tpu.vector_store %arg4[%c42, %c0_33], %95 {strides = array<i32>} : memref<48x512xbf16, #tpu.memory_space<vmem>>, vector<6x512xbf16>,
    return
  }
}

module attributes {stable_mosaic.version = 11 : i64} {
  func.func @kernel(%arg0: memref<48x4608xbf16, #tpu.memory_space<vmem>>, %arg1: memref<1x4608xbf16, #tpu.memory_space<vmem>>, %arg2: memref<1x1xf32, #tpu.memory_space<smem>>, %arg3: memref<3x2xf32, #tpu.memory_space<smem>>) attributes {dimension_semantics = [], scalar_prefetch = 0 : i64, scratch_operands = 0 : i64, tpu.core_type = #tpu.core_type<tc>} {
    %cst = arith.constant 0.000000e+00 : f32
    %0 = vector.broadcast %cst : f32 to vector<48x128xf32>
    %c0 = arith.constant 0 : index
    %c0_0 = arith.constant 0 : index
    %1 = vector.load %arg0[%c0, %c0_0] : memref<48x4608xbf16, #tpu.memory_space<vmem>>, vector<48x128xbf16>
    %2 = arith.extf %1 : vector<48x128xbf16> to vector<48x128xf32>
    %c0_1 = arith.constant 0 : index
    %c0_2 = arith.constant 0 : index
    %3 = vector.load %arg1[%c0_1, %c0_2] : memref<1x4608xbf16, #tpu.memory_space<vmem>>, vector<1x128xbf16>
    %4 = arith.extf %3 : vector<1x128xbf16> to vector<1x128xf32>
    %5 = vector.broadcast %4 : vector<1x128xf32> to vector<48x128xf32>
    %6 = arith.mulf %2, %5 : vector<48x128xf32>
    %7 = arith.addf %0, %6 : vector<48x128xf32>
    %c0_3 = arith.constant 0 : index
    %c128 = arith.constant 128 : index
    %8 = vector.load %arg0[%c0_3, %c128] : memref<48x4608xbf16, #tpu.memory_space<vmem>>, vector<48x128xbf16>
    %9 = arith.extf %8 : vector<48x128xbf16> to vector<48x128xf32>
    %c0_4 = arith.constant 0 : index
    %c128_5 = arith.constant 128 : index
    %10 = vector.load %arg1[%c0_4, %c128_5] : memref<1x4608xbf16, #tpu.memory_space<vmem>>, vector<1x128xbf16>
    %11 = arith.extf %10 : vector<1x128xbf16> to vector<1x128xf32>
    %12 = vector.broadcast %11 : vector<1x128xf32> to vector<48x128xf32>
    %13 = arith.mulf %9, %12 : vector<48x128xf32>
    %14 = arith.addf %7, %13 : vector<48x128xf32>
    %c0_6 = arith.constant 0 : index
    %c256 = arith.constant 256 : index
    %15 = vector.load %arg0[%c0_6, %c256] : memref<48x4608xbf16, #tpu.memory_space<vmem>>, vector<48x128xbf16>
    %16 = arith.extf %15 : vector<48x128xbf16> to vector<48x128xf32>
    %c0_7 = arith.constant 0 : index
    %c256_8 = arith.constant 256 : index
    %17 = vector.load %arg1[%c0_7, %c256_8] : memref<1x4608xbf16, #tpu.memory_space<vmem>>, vector<1x128xbf16>
    %18 = arith.extf %17 : vector<1x128xbf16> to vector<1x128xf32>
    %19 = vector.broadcast %18 : vector<1x128xf32> to vector<48x128xf32>
    %20 = arith.mulf %16, %19 : vector<48x128xf32>
    %21 = arith.addf %14, %20 : vector<48x128xf32>
    %c0_9 = arith.constant 0 : index
    %c384 = arith.constant 384 : index
    %22 = vector.load %arg0[%c0_9, %c384] : memref<48x4608xbf16, #tpu.memory_space<vmem>>, vector<48x128xbf16>
    %23 = arith.extf %22 : vector<48x128xbf16> to vector<48x128xf32>
    %c0_10 = arith.constant 0 : index
    %c384_11 = arith.constant 384 : index
    %24 = vector.load %arg1[%c0_10, %c384_11] : memref<1x4608xbf16, #tpu.memory_space<vmem>>, vector<1x128xbf16>
    %25 = arith.extf %24 : vector<1x128xbf16> to vector<1x128xf32>
    %26 = vector.broadcast %25 : vector<1x128xf32> to vector<48x128xf32>
    %27 = arith.mulf %23, %26 : vector<48x128xf32>
    %28 = arith.addf %21, %27 : vector<48x128xf32>
    %c0_12 = arith.constant 0 : index
    %c512 = arith.constant 512 : index
    %29 = vector.load %arg0[%c0_12, %c512] : memref<48x4608xbf16, #tpu.memory_space<vmem>>, vector<48x128xbf16>
    %30 = arith.extf %29 : vector<48x128xbf16> to vector<48x128xf32>
    %c0_13 = arith.constant 0 : index
    %c512_14 = arith.constant 512 : index
    %31 = vector.load %arg1[%c0_13, %c512_14] : memref<1x4608xbf16, #tpu.memory_space<vmem>>, vector<1x128xbf16>
    %32 = arith.extf %31 : vector<1x128xbf16> to vector<1x128xf32>
    %33 = vector.broadcast %32 : vector<1x128xf32> to vector<48x128xf32>
    %34 = arith.mulf %30, %33 : vector<48x128xf32>
    %35 = arith.addf %28, %34 : vector<48x128xf32>
    %c0_15 = arith.constant 0 : index
    %c640 = arith.constant 640 : index
    %36 = vector.load %arg0[%c0_15, %c640] : memref<48x4608xbf16, #tpu.memory_space<vmem>>, vector<48x128xbf16>
    %37 = arith.extf %36 : vector<48x128xbf16> to vector<48x128xf32>
    %c0_16 = arith.constant 0 : index
    %c640_17 = arith.constant 640 : index
    %38 = vector.load %arg1[%c0_16, %c640_17] : memref<1x4608xbf16, #tpu.memory_space<vmem>>, vector<1x128xbf16>
    %39 = arith.extf %38 : vector<1x128xbf16> to vector<1x128xf32>
    %40 = vector.broadcast %39 : vector<1x128xf32> to vector<48x128xf32>
    %41 = arith.mulf %37, %40 : vector<48x128xf32>
    %42 = arith.addf %35, %41 : vector<48x128xf32>
    %c0_18 = arith.constant 0 : index
    %c768 = arith.constant 768 : index
    %43 = vector.load %arg0[%c0_18, %c768] : memref<48x4608xbf16, #tpu.memory_space<vmem>>, vector<48x128xbf16>
    %44 = arith.extf %43 : vector<48x128xbf16> to vector<48x128xf32>
    %c0_19 = arith.constant 0 : index
    %c768_20 = arith.constant 768 : index
    %45 = vector.load %arg1[%c0_19, %c768_20] : memref<1x4608xbf16, #tpu.memory_space<vmem>>, vector<1x128xbf16>
    %46 = arith.extf %45 : vector<1x128xbf16> to vector<1x128xf32>
    %47 = vector.broadcast %46 : vector<1x128xf32> to vector<48x128xf32>
    %48 = arith.mulf %44, %47 : vector<48x128xf32>
    %49 = arith.addf %42, %48 : vector<48x128xf32>
    %c0_21 = arith.constant 0 : index
    %c896 = arith.constant 896 : index
    %50 = vector.load %arg0[%c0_21, %c896] : memref<48x4608xbf16, #tpu.memory_space<vmem>>, vector<48x128xbf16>
    %51 = arith.extf %50 : vector<48x128xbf16> to vector<48x128xf32>
    %c0_22 = arith.constant 0 : index
    %c896_23 = arith.constant 896 : index
    %52 = vector.load %arg1[%c0_22, %c896_23] : memref<1x4608xbf16, #tpu.memory_space<vmem>>, vector<1x128xbf16>
    %53 = arith.extf %52 : vector<1x128xbf16> to vector<1x128xf32>
    %54 = vector.broadcast %53 : vector<1x128xf32> to vector<48x128xf32>
    %55 = arith.mulf %51, %54 : vector<48x128xf32>
    %56 = arith.addf %49, %55 : vector<48x128xf32>
    %c0_24 = arith.constant 0 : index
    %c1024 = arith.constant 1024 : index
    %57 = vector.load %arg0[%c0_24, %c1024] : memref<48x4608xbf16, #tpu.memory_space<vmem>>, vector<48x128xbf16>
    %58 = arith.extf %57 : vector<48x128xbf16> to vector<48x128xf32>
    %c0_25 = arith.constant 0 : index
    %c1024_26 = arith.constant 1024 : index
    %59 = vector.load %arg1[%c0_25, %c1024_26] : memref<1x4608xbf16, #tpu.memory_space<vmem>>, vector<1x128xbf16>
    %60 = arith.extf %59 : vector<1x128xbf16> to vector<1x128xf32>
    %61 = vector.broadcast %60 : vector<1x128xf32> to vector<48x128xf32>
    %62 = arith.mulf %58, %61 : vector<48x128xf32>
    %63 = arith.addf %56, %62 : vector<48x128xf32>
    %c0_27 = arith.constant 0 : index
    %c1152 = arith.constant 1152 : index
    %64 = vector.load %arg0[%c0_27, %c1152] : memref<48x4608xbf16, #tpu.memory_space<vmem>>, vector<48x128xbf16>
    %65 = arith.extf %64 : vector<48x128xbf16> to vector<48x128xf32>
    %c0_28 = arith.constant 0 : index
    %c1152_29 = arith.constant 1152 : index
    %66 = vector.load %arg1[%c0_28, %c1152_29] : memref<1x4608xbf16, #tpu.memory_space<vmem>>, vector<1x128xbf16>
    %67 = arith.extf %66 : vector<1x128xbf16> to vector<1x128xf32>
    %68 = vector.broadcast %67 : vector<1x128xf32> to vector<48x128xf32>
    %69 = arith.mulf %65, %68 : vector<48x128xf32>
    %70 = arith.addf %63, %69 : vector<48x128xf32>
    %c0_30 = arith.constant 0 : index
    %c1280 = arith.constant 1280 : index
    %71 = vector.load %arg0[%c0_30, %c1280] : memref<48x4608xbf16, #tpu.memory_space<vmem>>, vector<48x128xbf16>
    %72 = arith.extf %71 : vector<48x128xbf16> to vector<48x128xf32>
    %c0_31 = arith.constant 0 : index
    %c1280_32 = arith.constant 1280 : index
    %73 = vector.load %arg1[%c0_31, %c1280_32] : memref<1x4608xbf16, #tpu.memory_space<vmem>>, vector<1x128xbf16>
    %74 = arith.extf %73 : vector<1x128xbf16> to vector<1x128xf32>
    %75 = vector.broadcast %74 : vector<1x128xf32> to vector<48x128xf32>
    %76 = arith.mulf %72, %75 : vector<48x128xf32>
    %77 = arith.addf %70, %76 : vector<48x128xf32>
    %c0_33 = arith.constant 0 : index
    %c1408 = arith.constant 1408 : index
    %78 = vector.load %arg0[%c0_33, %c1408] : memref<48x4608xbf16, #tpu.memory_space<vmem>>, vector<48x128xbf16>
    %79 = arith.extf %78 : vector<48x128xbf16> to vector<48x128xf32>
    %c0_34 = arith.constant 0 : index
    %c1408_35 = arith.constant 1408 : index
    %80 = vector.load %arg1[%c0_34, %c1408_35] : memref<1x4608xbf16, #tpu.memory_space<vmem>>, vector<1x128xbf16>
    %81 = arith.extf %80 : vector<1x128xbf16> to vector<1x128xf32>
    %82 = vector.broadcast %81 : vector<1x128xf32> to vector<48x128xf32>
    %83 = arith.mulf %79, %82 : vector<48x128xf32>
    %84 = arith.addf %77, %83 : vector<48x128xf32>
    %c0_36 = arith.constant 0 : index
    %c1536 = arith.constant 1536 : index
    %85 = vector.load %arg0[%c0_36, %c1536] : memref<48x4608xbf16, #tpu.memory_space<vmem>>, vector<48x128xbf16>
    %86 = arith.extf %85 : vector<48x128xbf16> to vector<48x128xf32>
    %c0_37 = arith.constant 0 : index
    %c1536_38 = arith.constant 1536 : index
    %87 = vector.load %arg1[%c0_37, %c1536_38] : memref<1x4608xbf16, #tpu.memory_space<vmem>>, vector<1x128xbf16>
    %88 = arith.extf %87 : vector<1x128xbf16> to vector<1x128xf32>
    %89 = vector.broadcast %88 : vector<1x128xf32> to vector<48x128xf32>
    %90 = arith.mulf %86, %89 : vector<48x128xf32>
    %91 = arith.addf %84, %90 : vector<48x128xf32>
    %c0_39 = arith.constant 0 : index
    %c1664 = arith.constant 1664 : index
    %92 = vector.load %arg0[%c0_39, %c1664] : memref<48x4608xbf16, #tpu.memory_space<vmem>>, vector<48x128xbf16>
    %93 = arith.extf %92 : vector<48x128xbf16> to vector<48x128xf32>
    %c0_40 = arith.constant 0 : index
    %c1664_41 = arith.constant 1664 : index
    %94 = vector.load %arg1[%c0_40, %c1664_41] : memref<1x4608xbf16, #tpu.memory_space<vmem>>, vector<1x128xbf16>
    %95 = arith.extf %94 : vector<1x128xbf16> to vector<1x128xf32>
    %96 = vector.broadcast %95 : vector<1x128xf32> to vector<48x128xf32>
    %97 = arith.mulf %93, %96 : vector<48x128xf32>
    %98 = arith.addf %91, %97 : vector<48x128xf32>
    %c0_42 = arith.constant 0 : index
    %c1792 = arith.constant 1792 : index
    %99 = vector.load %arg0[%c0_42, %c1792] : memref<48x4608xbf16, #tpu.memory_space<vmem>>, vector<48x128xbf16>
    %100 = arith.extf %99 : vector<48x128xbf16> to vector<48x128xf32>
    %c0_43 = arith.constant 0 : index
    %c1792_44 = arith.constant 1792 : index
    %101 = vector.load %arg1[%c0_43, %c1792_44] : memref<1x4608xbf16, #tpu.memory_space<vmem>>, vector<1x128xbf16>
    %102 = arith.extf %101 : vector<1x128xbf16> to vector<1x128xf32>
    %103 = vector.broadcast %102 : vector<1x128xf32> to vector<48x128xf32>
    %104 = arith.mulf %100, %103 : vector<48x128xf32>
    %105 = arith.addf %98, %104 : vector<48x128xf32>
    %c0_45 = arith.constant 0 : index
    %c1920 = arith.constant 1920 : index
    %106 = vector.load %arg0[%c0_45, %c1920] : memref<48x4608xbf16, #tpu.memory_space<vmem>>, vector<48x128xbf16>
    %107 = arith.extf %106 : vector<48x128xbf16> to vector<48x128xf32>
    %c0_46 = arith.constant 0 : index
    %c1920_47 = arith.constant 1920 : index
    %108 = vector.load %arg1[%c0_46, %c1920_47] : memref<1x4608xbf16, #tpu.memory_space<vmem>>, vector<1x128xbf16>
    %109 = arith.extf %108 : vector<1x128xbf16> to vector<1x128xf32>
    %110 = vector.broadcast %109 : vector<1x128xf32> to vector<48x128xf32>
    %111 = arith.mulf %107, %110 : vector<48x128xf32>
    %112 = arith.addf %105, %111 : vector<48x128xf32>
    %c0_48 = arith.constant 0 : index
    %c2048 = arith.constant 2048 : index
    %113 = vector.load %arg0[%c0_48, %c2048] : memref<48x4608xbf16, #tpu.memory_space<vmem>>, vector<48x128xbf16>
    %114 = arith.extf %113 : vector<48x128xbf16> to vector<48x128xf32>
    %c0_49 = arith.constant 0 : index
    %c2048_50 = arith.constant 2048 : index
    %115 = vector.load %arg1[%c0_49, %c2048_50] : memref<1x4608xbf16, #tpu.memory_space<vmem>>, vector<1x128xbf16>
    %116 = arith.extf %115 : vector<1x128xbf16> to vector<1x128xf32>
    %117 = vector.broadcast %116 : vector<1x128xf32> to vector<48x128xf32>
    %118 = arith.mulf %114, %117 : vector<48x128xf32>
    %119 = arith.addf %112, %118 : vector<48x128xf32>
    %c0_51 = arith.constant 0 : index
    %c2176 = arith.constant 2176 : index
    %120 = vector.load %arg0[%c0_51, %c2176] : memref<48x4608xbf16, #tpu.memory_space<vmem>>, vector<48x128xbf16>
    %121 = arith.extf %120 : vector<48x128xbf16> to vector<48x128xf32>
    %c0_52 = arith.constant 0 : index
    %c2176_53 = arith.constant 2176 : index
    %122 = vector.load %arg1[%c0_52, %c2176_53] : memref<1x4608xbf16, #tpu.memory_space<vmem>>, vector<1x128xbf16>
    %123 = arith.extf %122 : vector<1x128xbf16> to vector<1x128xf32>
    %124 = vector.broadcast %123 : vector<1x128xf32> to vector<48x128xf32>
    %125 = arith.mulf %121, %124 : vector<48x128xf32>
    %126 = arith.addf %119, %125 : vector<48x128xf32>
    %c0_54 = arith.constant 0 : index
    %c2304 = arith.constant 2304 : index
    %127 = vector.load %arg0[%c0_54, %c2304] : memref<48x4608xbf16, #tpu.memory_space<vmem>>, vector<48x128xbf16>
    %128 = arith.extf %127 : vector<48x128xbf16> to vector<48x128xf32>
    %c0_55 = arith.constant 0 : index
    %c2304_56 = arith.constant 2304 : index
    %129 = vector.load %arg1[%c0_55, %c2304_56] : memref<1x4608xbf16, #tpu.memory_space<vmem>>, vector<1x128xbf16>
    %130 = arith.extf %129 : vector<1x128xbf16> to vector<1x128xf32>
    %131 = vector.broadcast %130 : vector<1x128xf32> to vector<48x128xf32>
    %132 = arith.mulf %128, %131 : vector<48x128xf32>
    %133 = arith.addf %126, %132 : vector<48x128xf32>
    %c0_57 = arith.constant 0 : index
    %c2432 = arith.constant 2432 : index
    %134 = vector.load %arg0[%c0_57, %c2432] : memref<48x4608xbf16, #tpu.memory_space<vmem>>, vector<48x128xbf16>
    %135 = arith.extf %134 : vector<48x128xbf16> to vector<48x128xf32>
    %c0_58 = arith.constant 0 : index
    %c2432_59 = arith.constant 2432 : index
    %136 = vector.load %arg1[%c0_58, %c2432_59] : memref<1x4608xbf16, #tpu.memory_space<vmem>>, vector<1x128xbf16>
    %137 = arith.extf %136 : vector<1x128xbf16> to vector<1x128xf32>
    %138 = vector.broadcast %137 : vector<1x128xf32> to vector<48x128xf32>
    %139 = arith.mulf %135, %138 : vector<48x128xf32>
    %140 = arith.addf %133, %139 : vector<48x128xf32>
    %c0_60 = arith.constant 0 : index
    %c2560 = arith.constant 2560 : index
    %141 = vector.load %arg0[%c0_60, %c2560] : memref<48x4608xbf16, #tpu.memory_space<vmem>>, vector<48x128xbf16>
    %142 = arith.extf %141 : vector<48x128xbf16> to vector<48x128xf32>
    %c0_61 = arith.constant 0 : index
    %c2560_62 = arith.constant 2560 : index
    %143 = vector.load %arg1[%c0_61, %c2560_62] : memref<1x4608xbf16, #tpu.memory_space<vmem>>, vector<1x128xbf16>
    %144 = arith.extf %143 : vector<1x128xbf16> to vector<1x128xf32>
    %145 = vector.broadcast %144 : vector<1x128xf32> to vector<48x128xf32>
    %146 = arith.mulf %142, %145 : vector<48x128xf32>
    %147 = arith.addf %140, %146 : vector<48x128xf32>
    %c0_63 = arith.constant 0 : index
    %c2688 = arith.constant 2688 : index
    %148 = vector.load %arg0[%c0_63, %c2688] : memref<48x4608xbf16, #tpu.memory_space<vmem>>, vector<48x128xbf16>
    %149 = arith.extf %148 : vector<48x128xbf16> to vector<48x128xf32>
    %c0_64 = arith.constant 0 : index
    %c2688_65 = arith.constant 2688 : index
    %150 = vector.load %arg1[%c0_64, %c2688_65] : memref<1x4608xbf16, #tpu.memory_space<vmem>>, vector<1x128xbf16>
    %151 = arith.extf %150 : vector<1x128xbf16> to vector<1x128xf32>
    %152 = vector.broadcast %151 : vector<1x128xf32> to vector<48x128xf32>
    %153 = arith.mulf %149, %152 : vector<48x128xf32>
    %154 = arith.addf %147, %153 : vector<48x128xf32>
    %c0_66 = arith.constant 0 : index
    %c2816 = arith.constant 2816 : index
    %155 = vector.load %arg0[%c0_66, %c2816] : memref<48x4608xbf16, #tpu.memory_space<vmem>>, vector<48x128xbf16>
    %156 = arith.extf %155 : vector<48x128xbf16> to vector<48x128xf32>
    %c0_67 = arith.constant 0 : index
    %c2816_68 = arith.constant 2816 : index
    %157 = vector.load %arg1[%c0_67, %c2816_68] : memref<1x4608xbf16, #tpu.memory_space<vmem>>, vector<1x128xbf16>
    %158 = arith.extf %157 : vector<1x128xbf16> to vector<1x128xf32>
    %159 = vector.broadcast %158 : vector<1x128xf32> to vector<48x128xf32>
    %160 = arith.mulf %156, %159 : vector<48x128xf32>
    %161 = arith.addf %154, %160 : vector<48x128xf32>
    %c0_69 = arith.constant 0 : index
    %c2944 = arith.constant 2944 : index
    %162 = vector.load %arg0[%c0_69, %c2944] : memref<48x4608xbf16, #tpu.memory_space<vmem>>, vector<48x128xbf16>
    %163 = arith.extf %162 : vector<48x128xbf16> to vector<48x128xf32>
    %c0_70 = arith.constant 0 : index
    %c2944_71 = arith.constant 2944 : index
    %164 = vector.load %arg1[%c0_70, %c2944_71] : memref<1x4608xbf16, #tpu.memory_space<vmem>>, vector<1x128xbf16>
    %165 = arith.extf %164 : vector<1x128xbf16> to vector<1x128xf32>
    %166 = vector.broadcast %165 : vector<1x128xf32> to vector<48x128xf32>
    %167 = arith.mulf %163, %166 : vector<48x128xf32>
    %168 = arith.addf %161, %167 : vector<48x128xf32>
    %c0_72 = arith.constant 0 : index
    %c3072 = arith.constant 3072 : index
    %169 = vector.load %arg0[%c0_72, %c3072] : memref<48x4608xbf16, #tpu.memory_space<vmem>>, vector<48x128xbf16>
    %170 = arith.extf %169 : vector<48x128xbf16> to vector<48x128xf32>
    %c0_73 = arith.constant 0 : index
    %c3072_74 = arith.constant 3072 : index
    %171 = vector.load %arg1[%c0_73, %c3072_74] : memref<1x4608xbf16, #tpu.memory_space<vmem>>, vector<1x128xbf16>
    %172 = arith.extf %171 : vector<1x128xbf16> to vector<1x128xf32>
    %173 = vector.broadcast %172 : vector<1x128xf32> to vector<48x128xf32>
    %174 = arith.mulf %170, %173 : vector<48x128xf32>
    %175 = arith.addf %168, %174 : vector<48x128xf32>
    %c0_75 = arith.constant 0 : index
    %c3200 = arith.constant 3200 : index
    %176 = vector.load %arg0[%c0_75, %c3200] : memref<48x4608xbf16, #tpu.memory_space<vmem>>, vector<48x128xbf16>
    %177 = arith.extf %176 : vector<48x128xbf16> to vector<48x128xf32>
    %c0_76 = arith.constant 0 : index
    %c3200_77 = arith.constant 3200 : index
    %178 = vector.load %arg1[%c0_76, %c3200_77] : memref<1x4608xbf16, #tpu.memory_space<vmem>>, vector<1x128xbf16>
    %179 = arith.extf %178 : vector<1x128xbf16> to vector<1x128xf32>
    %180 = vector.broadcast %179 : vector<1x128xf32> to vector<48x128xf32>
    %181 = arith.mulf %177, %180 : vector<48x128xf32>
    %182 = arith.addf %175, %181 : vector<48x128xf32>
    %c0_78 = arith.constant 0 : index
    %c3328 = arith.constant 3328 : index
    %183 = vector.load %arg0[%c0_78, %c3328] : memref<48x4608xbf16, #tpu.memory_space<vmem>>, vector<48x128xbf16>
    %184 = arith.extf %183 : vector<48x128xbf16> to vector<48x128xf32>
    %c0_79 = arith.constant 0 : index
    %c3328_80 = arith.constant 3328 : index
    %185 = vector.load %arg1[%c0_79, %c3328_80] : memref<1x4608xbf16, #tpu.memory_space<vmem>>, vector<1x128xbf16>
    %186 = arith.extf %185 : vector<1x128xbf16> to vector<1x128xf32>
    %187 = vector.broadcast %186 : vector<1x128xf32> to vector<48x128xf32>
    %188 = arith.mulf %184, %187 : vector<48x128xf32>
    %189 = arith.addf %182, %188 : vector<48x128xf32>
    %c0_81 = arith.constant 0 : index
    %c3456 = arith.constant 3456 : index
    %190 = vector.load %arg0[%c0_81, %c3456] : memref<48x4608xbf16, #tpu.memory_space<vmem>>, vector<48x128xbf16>
    %191 = arith.extf %190 : vector<48x128xbf16> to vector<48x128xf32>
    %c0_82 = arith.constant 0 : index
    %c3456_83 = arith.constant 3456 : index
    %192 = vector.load %arg1[%c0_82, %c3456_83] : memref<1x4608xbf16, #tpu.memory_space<vmem>>, vector<1x128xbf16>
    %193 = arith.extf %192 : vector<1x128xbf16> to vector<1x128xf32>
    %194 = vector.broadcast %193 : vector<1x128xf32> to vector<48x128xf32>
    %195 = arith.mulf %191, %194 : vector<48x128xf32>
    %196 = arith.addf %189, %195 : vector<48x128xf32>
    %c0_84 = arith.constant 0 : index
    %c3584 = arith.constant 3584 : index
    %197 = vector.load %arg0[%c0_84, %c3584] : memref<48x4608xbf16, #tpu.memory_space<vmem>>, vector<48x128xbf16>
    %198 = arith.extf %197 : vector<48x128xbf16> to vector<48x128xf32>
    %c0_85 = arith.constant 0 : index
    %c3584_86 = arith.constant 3584 : index
    %199 = vector.load %arg1[%c0_85, %c3584_86] : memref<1x4608xbf16, #tpu.memory_space<vmem>>, vector<1x128xbf16>
    %200 = arith.extf %199 : vector<1x128xbf16> to vector<1x128xf32>
    %201 = vector.broadcast %200 : vector<1x128xf32> to vector<48x128xf32>
    %202 = arith.mulf %198, %201 : vector<48x128xf32>
    %203 = arith.addf %196, %202 : vector<48x128xf32>
    %c0_87 = arith.constant 0 : index
    %c3712 = arith.constant 3712 : index
    %204 = vector.load %arg0[%c0_87, %c3712] : memref<48x4608xbf16, #tpu.memory_space<vmem>>, vector<48x128xbf16>
    %205 = arith.extf %204 : vector<48x128xbf16> to vector<48x128xf32>
    %c0_88 = arith.constant 0 : index
    %c3712_89 = arith.constant 3712 : index
    %206 = vector.load %arg1[%c0_88, %c3712_89] : memref<1x4608xbf16, #tpu.memory_space<vmem>>, vector<1x128xbf16>
    %207 = arith.extf %206 : vector<1x128xbf16> to vector<1x128xf32>
    %208 = vector.broadcast %207 : vector<1x128xf32> to vector<48x128xf32>
    %209 = arith.mulf %205, %208 : vector<48x128xf32>
    %210 = arith.addf %203, %209 : vector<48x128xf32>
    %c0_90 = arith.constant 0 : index
    %c3840 = arith.constant 3840 : index
    %211 = vector.load %arg0[%c0_90, %c3840] : memref<48x4608xbf16, #tpu.memory_space<vmem>>, vector<48x128xbf16>
    %212 = arith.extf %211 : vector<48x128xbf16> to vector<48x128xf32>
    %c0_91 = arith.constant 0 : index
    %c3840_92 = arith.constant 3840 : index
    %213 = vector.load %arg1[%c0_91, %c3840_92] : memref<1x4608xbf16, #tpu.memory_space<vmem>>, vector<1x128xbf16>
    %214 = arith.extf %213 : vector<1x128xbf16> to vector<1x128xf32>
    %215 = vector.broadcast %214 : vector<1x128xf32> to vector<48x128xf32>
    %216 = arith.mulf %212, %215 : vector<48x128xf32>
    %217 = arith.addf %210, %216 : vector<48x128xf32>
    %c0_93 = arith.constant 0 : index
    %c3968 = arith.constant 3968 : index
    %218 = vector.load %arg0[%c0_93, %c3968] : memref<48x4608xbf16, #tpu.memory_space<vmem>>, vector<48x128xbf16>
    %219 = arith.extf %218 : vector<48x128xbf16> to vector<48x128xf32>
    %c0_94 = arith.constant 0 : index
    %c3968_95 = arith.constant 3968 : index
    %220 = vector.load %arg1[%c0_94, %c3968_95] : memref<1x4608xbf16, #tpu.memory_space<vmem>>, vector<1x128xbf16>
    %221 = arith.extf %220 : vector<1x128xbf16> to vector<1x128xf32>
    %222 = vector.broadcast %221 : vector<1x128xf32> to vector<48x128xf32>
    %223 = arith.mulf %219, %222 : vector<48x128xf32>
    %224 = arith.addf %217, %223 : vector<48x128xf32>
    %c0_96 = arith.constant 0 : index
    %c4096 = arith.constant 4096 : index
    %225 = vector.load %arg0[%c0_96, %c4096] : memref<48x4608xbf16, #tpu.memory_space<vmem>>, vector<48x128xbf16>
    %226 = arith.extf %225 : vector<48x128xbf16> to vector<48x128xf32>
    %c0_97 = arith.constant 0 : index
    %c4096_98 = arith.constant 4096 : index
    %227 = vector.load %arg1[%c0_97, %c4096_98] : memref<1x4608xbf16, #tpu.memory_space<vmem>>, vector<1x128xbf16>
    %228 = arith.extf %227 : vector<1x128xbf16> to vector<1x128xf32>
    %229 = vector.broadcast %228 : vector<1x128xf32> to vector<48x128xf32>
    %230 = arith.mulf %226, %229 : vector<48x128xf32>
    %231 = arith.addf %224, %230 : vector<48x128xf32>
    %c0_99 = arith.constant 0 : index
    %c4224 = arith.constant 4224 : index
    %232 = vector.load %arg0[%c0_99, %c4224] : memref<48x4608xbf16, #tpu.memory_space<vmem>>, vector<48x128xbf16>
    %233 = arith.extf %232 : vector<48x128xbf16> to vector<48x128xf32>
    %c0_100 = arith.constant 0 : index
    %c4224_101 = arith.constant 4224 : index
    %234 = vector.load %arg1[%c0_100, %c4224_101] : memref<1x4608xbf16, #tpu.memory_space<vmem>>, vector<1x128xbf16>
    %235 = arith.extf %234 : vector<1x128xbf16> to vector<1x128xf32>
    %236 = vector.broadcast %235 : vector<1x128xf32> to vector<48x128xf32>
    %237 = arith.mulf %233, %236 : vector<48x128xf32>
    %238 = arith.addf %231, %237 : vector<48x128xf32>
    %c0_102 = arith.constant 0 : index
    %c4352 = arith.constant 4352 : index
    %239 = vector.load %arg0[%c0_102, %c4352] : memref<48x4608xbf16, #tpu.memory_space<vmem>>, vector<48x128xbf16>
    %240 = arith.extf %239 : vector<48x128xbf16> to vector<48x128xf32>
    %c0_103 = arith.constant 0 : index
    %c4352_104 = arith.constant 4352 : index
    %241 = vector.load %arg1[%c0_103, %c4352_104] : memref<1x4608xbf16, #tpu.memory_space<vmem>>, vector<1x128xbf16>
    %242 = arith.extf %241 : vector<1x128xbf16> to vector<1x128xf32>
    %243 = vector.broadcast %242 : vector<1x128xf32> to vector<48x128xf32>
    %244 = arith.mulf %240, %243 : vector<48x128xf32>
    %245 = arith.addf %238, %244 : vector<48x128xf32>
    %c0_105 = arith.constant 0 : index
    %c4480 = arith.constant 4480 : index
    %246 = vector.load %arg0[%c0_105, %c4480] : memref<48x4608xbf16, #tpu.memory_space<vmem>>, vector<48x128xbf16>
    %247 = arith.extf %246 : vector<48x128xbf16> to vector<48x128xf32>
    %c0_106 = arith.constant 0 : index
    %c4480_107 = arith.constant 4480 : index
    %248 = vector.load %arg1[%c0_106, %c4480_107] : memref<1x4608xbf16, #tpu.memory_space<vmem>>, vector<1x128xbf16>
    %249 = arith.extf %248 : vector<1x128xbf16> to vector<1x128xf32>
    %250 = vector.broadcast %249 : vector<1x128xf32> to vector<48x128xf32>
    %251 = arith.mulf %247, %250 : vector<48x128xf32>
    %252 = arith.addf %245, %251 : vector<48x128xf32>
    %cst_108 = arith.constant dense<0.000000e+00> : vector<48xf32>
    %253 = vector.multi_reduction <add>, %252, %cst_108 [1] : vector<48x128xf32> to vector<48xf32>
    %254 = vector.shape_cast %253 : vector<48xf32> to vector<48x1xf32>
    %c0_109 = arith.constant 0 : index
    %c0_110 = arith.constant 0 : index
    %255 = memref.load %arg2[%c0_109, %c0_110] : memref<1x1xf32, #tpu.memory_space<smem>>
    %256 = vector.broadcast %255 : f32 to vector<48x1xf32>
    %257 = arith.addf %254, %256 : vector<48x1xf32>
    %258 = arith.negf %257 : vector<48x1xf32>
    %259 = math.exp %258 : vector<48x1xf32>
    %cst_111 = arith.constant 1.000000e+00 : f32
    %260 = vector.broadcast %cst_111 : f32 to vector<48x1xf32>
    %261 = arith.addf %260, %259 : vector<48x1xf32>
    %262 = arith.divf %260, %261 : vector<48x1xf32>
    %263 = vector.extract_strided_slice %262 {offsets = [0, 0], sizes = [16, 1], strides = [1, 1]} : vector<48x1xf32> to vector<16x1xf32>
    %264 = vector.shape_cast %263 : vector<16x1xf32> to vector<1x16x1xf32>
    %cst_112 = arith.constant dense<0.000000e+00> : vector<1xf32>
    %265 = vector.multi_reduction <add>, %264, %cst_112 [1, 2] : vector<1x16x1xf32> to vector<1xf32>
    %266 = vector.shape_cast %265 : vector<1xf32> to vector<1x1x1xf32>
    %267 = vector.extract %266[0, 0, 0] : f32 from vector<1x1x1xf32>
    %cst_113 = arith.constant 1.600000e+01 : f32
    %268 = arith.divf %267, %cst_113 : f32
    %c0_114 = arith.constant 0 : index
    %c0_115 = arith.constant 0 : index
    %269 = memref.load %arg3[%c0_114, %c0_115] : memref<3x2xf32, #tpu.memory_space<smem>>
    memref.store %268, %arg3[%c0_114, %c0_115] : memref<3x2xf32, #tpu.memory_space<smem>>
    %270 = vector.extract_strided_slice %262 {offsets = [16, 0], sizes = [16, 1], strides = [1, 1]} : vector<48x1xf32> to vector<16x1xf32>
    %271 = vector.shape_cast %270 : vector<16x1xf32> to vector<1x16x1xf32>
    %cst_116 = arith.constant dense<0.000000e+00> : vector<1xf32>
    %272 = vector.multi_reduction <add>, %271, %cst_116 [1, 2] : vector<1x16x1xf32> to vector<1xf32>
    %273 = vector.shape_cast %272 : vector<1xf32> to vector<1x1x1xf32>
    %274 = vector.extract %273[0, 0, 0] : f32 from vector<1x1x1xf32>
    %cst_117 = arith.constant 1.600000e+01 : f32
    %275 = arith.divf %274, %cst_117 : f32
    %c0_118 = arith.constant 0 : index
    %c1 = arith.constant 1 : index
    %276 = memref.load %arg3[%c0_118, %c1] : memref<3x2xf32, #tpu.memory_space<smem>>
    memref.store %275, %arg3[%c0_118, %c1] : memref<3x2xf32, #tpu.memory_space<smem>>
    %277 = vector.extract_strided_slice %262 {offsets = [32, 0], sizes = [4, 1], strides = [1, 1]} : vector<48x1xf32> to vector<4x1xf32>
    %278 = vector.shape_cast %277 : vector<4x1xf32> to vector<1x4x1xf32>
    %cst_119 = arith.constant dense<0.000000e+00> : vector<1xf32>
    %279 = vector.multi_reduction <add>, %278, %cst_119 [1, 2] : vector<1x4x1xf32> to vector<1xf32>
    %280 = vector.shape_cast %279 : vector<1xf32> to vector<1x1x1xf32>
    %281 = vector.extract %280[0, 0, 0] : f32 from vector<1x1x1xf32>
    %cst_120 = arith.constant 4.000000e+00 : f32
    %282 = arith.divf %281, %cst_120 : f32
    %c1_121 = arith.constant 1 : index
    %c0_122 = arith.constant 0 : index
    %283 = memref.load %arg3[%c1_121, %c0_122] : memref<3x2xf32, #tpu.memory_space<smem>>
    memref.store %282, %arg3[%c1_121, %c0_122] : memref<3x2xf32, #tpu.memory_space<smem>>
    %284 = vector.extract_strided_slice %262 {offsets = [36, 0], sizes = [4, 1], strides = [1, 1]} : vector<48x1xf32> to vector<4x1xf32>
    %285 = vector.shape_cast %284 : vector<4x1xf32> to vector<1x4x1xf32>
    %cst_123 = arith.constant dense<0.000000e+00> : vector<1xf32>
    %286 = vector.multi_reduction <add>, %285, %cst_123 [1, 2] : vector<1x4x1xf32> to vector<1xf32>
    %287 = vector.shape_cast %286 : vector<1xf32> to vector<1x1x1xf32>
    %288 = vector.extract %287[0, 0, 0] : f32 from vector<1x1x1xf32>
    %cst_124 = arith.constant 4.000000e+00 : f32
    %289 = arith.divf %288, %cst_124 : f32
    %c1_125 = arith.constant 1 : index
    %c1_126 = arith.constant 1 : index
    %290 = memref.load %arg3[%c1_125, %c1_126] : memref<3x2xf32, #tpu.memory_space<smem>>
    memref.store %289, %arg3[%c1_125, %c1_126] : memref<3x2xf32, #tpu.memory_space<smem>>
    %291 = vector.extract_strided_slice %262 {offsets = [40, 0], sizes = [1, 1], strides = [1, 1]} : vector<48x1xf32> to vector<1x1xf32>
    %292 = vector.shape_cast %291 : vector<1x1xf32> to vector<1x1x1xf32>
    %cst_127 = arith.constant dense<0.000000e+00> : vector<1xf32>
    %293 = vector.multi_reduction <add>, %292, %cst_127 [1, 2] : vector<1x1x1xf32> to vector<1xf32>
    %294 = vector.shape_cast %293 : vector<1xf32> to vector<1x1x1xf32>
    %295 = vector.extract %294[0, 0, 0] : f32 from vector<1x1x1xf32>
    %cst_128 = arith.constant 1.000000e+00 : f32
    %296 = arith.divf %295, %cst_128 : f32
    %c2 = arith.constant 2 : index
    %c0_129 = arith.constant 0 : index
    %297 = memref.load %arg3[%c2, %c0_129] : memref<3x2xf32, #tpu.memory_space<smem>>
    memref.store %296, %arg3[%c2, %c0_129] : memref<3x2xf32, #tpu.memory_space<smem>>
    %298 = vector.extract_strided_slice %262 {offsets = [41, 0], sizes = [1, 1], strides = [1, 1]} : vector<48x1xf32> to vector<1x1xf32>
    %299 = vector.shape_cast %298 : vector<1x1xf32> to vector<1x1x1xf32>
    %cst_130 = arith.constant dense<0.000000e+00> : vector<1xf32>
    %300 = vector.multi_reduction <add>, %299, %cst_130 [1, 2] : vector<1x1x1xf32> to vector<1xf32>
    %301 = vector.shape_cast %300 : vector<1xf32> to vector<1x1x1xf32>
    %302 = vector.extract %301[0, 0, 0] : f32 from vector<1x1x1xf32>
    %cst_131 = arith.constant 1.000000e+00 : f32
    %303 = arith.divf %302, %cst_131 : f32
    %c2_132 = arith.constant 2 : index
    %c1_133 = arith.constant 1 : index
    %304 = memref.load %arg3[%c2_132, %c1_133] : memref<3x2xf32, #tpu.memory_space<smem>>
    memref.store %303, %arg3[%c2_132, %c1_133] : memref<3x2xf32, #tpu.memory_space<smem>>
    return
  }
}

</mosaic_0001>

<llo_original>
// kernel: tipd_forward.5
$region0: #{tipd_forward.5}
  #allocation0 [shape = 'u32[]', space=smem, size = 0x4, offset = 0x4, fixed_abs, tag = 'smem constant byte address 0x4 - core index']
  #allocation1 [shape = 'u32[144,128]{1,0:T(1,128)}', space=vmem, size = 0x12000, scoped, tag = 'internal scratch']
  %s0 = inlined_call_operand.vmem [shape: bf16[672,54], index: 0, kind: input, shape index: {}]
  %s1 = inlined_call_operand.vmem [shape: bf16[54,64], index: 1, kind: input, shape index: {}]
  %s2 = inlined_call_operand.vmem [shape: f32[1,64], index: 2, kind: input, shape index: {}]
  %s3 = inlined_call_operand.vmem [shape: bf16[672,64], index: 3, kind: output, shape index: {}]
  %s4 = sld [smem:[#allocation0]]
  $region22: #{tipd_forward.5} parent=0
    _
  %s6 = ssub.s32 1, %s4
  %s7 = scalar_select 0, %s6, %s4
  // Predicated region
  $region2: #{tipd_forward.5} parent=0 // pred_check
    _
  $region3: #{tipd_forward.5} parent=0 // pred_check_branch
    %9 = sbr.rel (0) target = $region5
  $region4: #{tipd_forward.5} parent=0 // pred_region
    _
  $region5: #{tipd_forward.5} parent=0 // pred_fallthru
    _
  // Predicated region
  $region6: #{tipd_forward.5} parent=0 // pred_check
    _
  $region7: #{tipd_forward.5} parent=0 // pred_check_branch
    %11 = sbr.rel (0) target = $region9
  $region8: #{tipd_forward.5} parent=0 // pred_region
    _
  $region9: #{tipd_forward.5} parent=0 // pred_fallthru
    _
  // Predicated region
  $region10: #{tipd_forward.5} parent=0 // pred_check
    _
  $region11: #{tipd_forward.5} parent=0 // pred_check_branch
    %13 = sbr.rel (0) target = $region13
  $region12: #{tipd_forward.5} parent=0 // pred_region
    _
  $region13: #{tipd_forward.5} parent=0 // pred_fallthru
    _
  %v15 = vld [vmem:[%s0] sm:$0xf]
  %v16 = vld [vmem:[%s0 + $0x4] sm:$0xf]
  %v17 = vld [vmem:[%s0 + $0x8] sm:$0xf]
  %v18 = vld [vmem:[%s0 + $0xc] sm:$0xf]
  %v19 = vld [vmem:[%s0 + $0x10] sm:$0xf]
  %v20 = vld [vmem:[%s0 + $0x14] sm:$0xf]
  %v21 = vld [vmem:[%s0 + $0x18] sm:$0xf]
  %v22 = vld [vmem:[%s0 + $0x1c] sm:$0xf]
  %v23 = vld [vmem:[%s0 + $0x20] sm:$0xf]
  %v24 = vld [vmem:[%s0 + $0x24] sm:$0xf]
  %v25 = vld [vmem:[%s0 + $0x28] sm:$0xf]
  %v26 = vld [vmem:[%s0 + $0x2c] sm:$0xf]
  %v27 = vld [vmem:[%s0 + $0x30] sm:$0xf]
  %v28 = vld [vmem:[%s0 + $0x34] sm:$0xf]
  %v29 = vld [vmem:[%s0 + $0x38] sm:$0xf]
  %v30 = vld [vmem:[%s0 + $0x3c] sm:$0xf]
  %v31 = vld [vmem:[%s0 + $0x40] sm:$0xf]
  %v32 = vld [vmem:[%s0 + $0x44] sm:$0xf]
  %v33 = vld [vmem:[%s0 + $0x48] sm:$0xf]
  %v34 = vld [vmem:[%s0 + $0x4c] sm:$0xf]
  %v35 = vld [vmem:[%s0 + $0x50] sm:$0xf]
  %v36 = vld [vmem:[%s0 + $0x54] sm:$0xf]
  %v37 = vld [vmem:[%s0 + $0x58] sm:$0xf]
  %v38 = vld [vmem:[%s0 + $0x5c] sm:$0xf]
  %v39 = vld [vmem:[%s0 + $0x60] sm:$0xf]
  %v40 = vld [vmem:[%s0 + $0x64] sm:$0xf]
  %v41 = vld [vmem:[%s0 + $0x68] sm:$0xf]
  %v42 = vld [vmem:[%s0 + $0x6c] sm:$0xf]
  %v43 = vld [vmem:[%s0 + $0x70] sm:$0xf]
  %v44 = vld [vmem:[%s0 + $0x74] sm:$0xf]
  %v45 = vld [vmem:[%s0 + $0x78] sm:$0xf]
  %v46 = vld [vmem:[%s0 + $0x7c] sm:$0xf]
  %v47 = vld [vmem:[%s0 + $0x80] sm:$0xf]
  %v48 = vld [vmem:[%s0 + $0x84] sm:$0xf]
  %v49 = vld [vmem:[%s0 + $0x88] sm:$0xf]
  %v50 = vld [vmem:[%s0 + $0x8c] sm:$0xf]
  %v51 = vld [vmem:[%s0 + $0x90] sm:$0xf]
  %v52 = vld [vmem:[%s0 + $0x94] sm:$0xf]
  %v53 = vld [vmem:[%s0 + $0x98] sm:$0xf]
  %v54 = vld [vmem:[%s0 + $0x9c] sm:$0xf]
  %v55 = vld [vmem:[%s0 + $0xa0] sm:$0xf]
  %v56 = vld [vmem:[%s0 + $0xa4] sm:$0xf]
  %v57 = vld [vmem:[%s0 + $0xa8] sm:$0xf]
  %v58 = vld [vmem:[%s0 + $0xac] sm:$0xf]
  %v59 = vld [vmem:[%s0 + $0xb0] sm:$0xf]
  %v60 = vld [vmem:[%s0 + $0xb4] sm:$0xf]
  %v61 = vld [vmem:[%s0 + $0xb8] sm:$0xf]
  %v62 = vld [vmem:[%s0 + $0xbc] sm:$0xf]
  %v63 = vld [vmem:[%s0 + $0xc0] sm:$0xf]
  %v64 = vld [vmem:[%s0 + $0xc4] sm:$0xf]
  %v65 = vld [vmem:[%s0 + $0xc8] sm:$0xf]
  %v66 = vld [vmem:[%s0 + $0xcc] sm:$0xf]
  %v67 = vld [vmem:[%s0 + $0xd0] sm:$0xf]
  %v68 = vld [vmem:[%s0 + $0xd4] sm:$0xf]
  %v69 = vld [vmem:[%s0 + $0xd8] sm:$0xf]
  %v70 = vld [vmem:[%s0 + $0xdc] sm:$0xf]
  %v71 = vld [vmem:[%s0 + $0xe0] sm:$0xf]
  %v72 = vld [vmem:[%s0 + $0xe4] sm:$0xf]
  %v73 = vld [vmem:[%s0 + $0xe8] sm:$0xf]
  %v74 = vld [vmem:[%s0 + $0xec] sm:$0xf]
  %v75 = vld [vmem:[%s0 + $0xf0] sm:$0xf]
  %v76 = vld [vmem:[%s0 + $0xf4] sm:$0xf]
  %v77 = vld [vmem:[%s0 + $0xf8] sm:$0xf]
  %v78 = vld [vmem:[%s0 + $0xfc] sm:$0xf]
  %v79 = vld [vmem:[%s0 + $0x100] sm:$0xf]
  %v80 = vld [vmem:[%s0 + $0x104] sm:$0xf]
  %v81 = vld [vmem:[%s0 + $0x108] sm:$0xf]
  %v82 = vld [vmem:[%s0 + $0x10c] sm:$0xf]
  %v83 = vld [vmem:[%s0 + $0x110] sm:$0xf]
  %v84 = vld [vmem:[%s0 + $0x114] sm:$0xf]
  %v85 = vld [vmem:[%s0 + $0x118] sm:$0xf]
  %v86 = vld [vmem:[%s0 + $0x11c] sm:$0xf]
  %v87 = vld [vmem:[%s0 + $0x120] sm:$0xf]
  %v88 = vld [vmem:[%s0 + $0x124] sm:$0xf]
  %v89 = vld [vmem:[%s0 + $0x128] sm:$0xf]
  %v90 = vld [vmem:[%s0 + $0x12c] sm:$0xf]
  %v91 = vld [vmem:[%s0 + $0x130] sm:$0xf]
  %v92 = vld [vmem:[%s0 + $0x134] sm:$0xf]
  %v93 = vld [vmem:[%s0 + $0x138] sm:$0xf]
  %v94 = vld [vmem:[%s0 + $0x13c] sm:$0xf]
  %v95 = vld [vmem:[%s0 + $0x140] sm:$0xf]
  %v96 = vld [vmem:[%s0 + $0x144] sm:$0xf]
  %v97 = vld [vmem:[%s0 + $0x148] sm:$0xf]
  %v98 = vld [vmem:[%s0 + $0x14c] sm:$0xf]
  %v99 = vld [vmem:[%s1] sm:$0xf]
  %v100 = vld [vmem:[%s1 + $0x4] sm:$0xf]
  %v101 = vld [vmem:[%s1 + $0x8] sm:$0xf]
  %v102 = vld [vmem:[%s1 + $0xc] sm:$0xf]
  %v103 = vld [vmem:[%s1 + $0x10] sm:$0xf]
  %v104 = vld [vmem:[%s1 + $0x14] sm:$0xf]
  %v105 = vld [vmem:[%s1 + $0x18] sm:$0x7]
  %v106 = vld [vmem:[%s2] sm:$0x1]
  %v108 = vlaneseq
  %v109 = vshrl.u32 %v108, 7
  %v110 = vsub.s32 0, %v109
  %v111 = vrot.slane %v106, %v110
  %v197 = vunpack.c.l.b16 %v15
  %v198 = vunpack.c.l.b16 %v16
  %v199 = vunpack.c.l.b16 %v17
  %v200 = vunpack.c.l.b16 %v18
  %v201 = vunpack.c.l.b16 %v19
  %v202 = vunpack.c.l.b16 %v20
  %v203 = vunpack.c.l.b16 %v21
  %v204 = vunpack.c.l.b16 %v22
  %v205 = vunpack.c.l.b16 %v23
  %v206 = vunpack.c.l.b16 %v24
  %v207 = vunpack.c.l.b16 %v25
  %v208 = vunpack.c.l.b16 %v26
  %v209 = vunpack.c.l.b16 %v27
  %v210 = vunpack.c.l.b16 %v28
  %v211 = vunpack.c.l.b16 %v29
  %v212 = vunpack.c.l.b16 %v30
  %v213 = vunpack.c.l.b16 %v31
  %v214 = vunpack.c.l.b16 %v32
  %v215 = vunpack.c.l.b16 %v33
  %v216 = vunpack.c.l.b16 %v34
  %v217 = vunpack.c.l.b16 %v35
  %v218 = vunpack.c.l.b16 %v36
  %v219 = vunpack.c.l.b16 %v37
  %v220 = vunpack.c.l.b16 %v38
  %v221 = vunpack.c.l.b16 %v39
  %v222 = vunpack.c.l.b16 %v40
  %v223 = vunpack.c.l.b16 %v41
  %v224 = vunpack.c.l.b16 %v42
  %v225 = vunpack.c.l.b16 %v43
  %v226 = vunpack.c.l.b16 %v44
  %v227 = vunpack.c.l.b16 %v45
  %v228 = vunpack.c.l.b16 %v46
  %v229 = vunpack.c.l.b16 %v47
  %v230 = vunpack.c.l.b16 %v48
  %v231 = vunpack.c.l.b16 %v49
  %v232 = vunpack.c.l.b16 %v50
  %v233 = vunpack.c.l.b16 %v51
  %v234 = vunpack.c.l.b16 %v52
  %v235 = vunpack.c.l.b16 %v53
  %v236 = vunpack.c.l.b16 %v54
  %v237 = vunpack.c.l.b16 %v55
  %v238 = vunpack.c.l.b16 %v56
  %v239 = vunpack.c.l.b16 %v57
  %v240 = vunpack.c.l.b16 %v58
  %v241 = vunpack.c.l.b16 %v59
  %v242 = vunpack.c.l.b16 %v60
  %v243 = vunpack.c.l.b16 %v61
  %v244 = vunpack.c.l.b16 %v62
  %v245 = vunpack.c.l.b16 %v63
  %v246 = vunpack.c.l.b16 %v64
  %v247 = vunpack.c.l.b16 %v65
  %v248 = vunpack.c.l.b16 %v66
  %v249 = vunpack.c.l.b16 %v67
  %v250 = vunpack.c.l.b16 %v68
  %v251 = vunpack.c.l.b16 %v69
  %v252 = vunpack.c.l.b16 %v70
  %v253 = vunpack.c.l.b16 %v71
  %v254 = vunpack.c.l.b16 %v72
  %v255 = vunpack.c.l.b16 %v73
  %v256 = vunpack.c.l.b16 %v74
  %v257 = vunpack.c.l.b16 %v75
  %v258 = vunpack.c.l.b16 %v76
  %v259 = vunpack.c.l.b16 %v77
  %v260 = vunpack.c.l.b16 %v78
  %v261 = vunpack.c.l.b16 %v79
  %v262 = vunpack.c.l.b16 %v80
  %v263 = vunpack.c.l.b16 %v81
  %v264 = vunpack.c.l.b16 %v82
  %v265 = vunpack.c.l.b16 %v83
  %v266 = vunpack.c.l.b16 %v84
  %v267 = vunpack.c.l.b16 %v85
  %v268 = vunpack.c.l.b16 %v86
  %v269 = vunpack.c.l.b16 %v87
  %v270 = vunpack.c.l.b16 %v88
  %v271 = vunpack.c.l.b16 %v89
  %v272 = vunpack.c.l.b16 %v90
  %v273 = vunpack.c.l.b16 %v91
  %v274 = vunpack.c.l.b16 %v92
  %v275 = vunpack.c.l.b16 %v93
  %v276 = vunpack.c.l.b16 %v94
  %v277 = vunpack.c.l.b16 %v95
  %v278 = vunpack.c.l.b16 %v96
  %v279 = vunpack.c.l.b16 %v97
  %v280 = vunpack.c.l.b16 %v98
  %v281 = vpack.c.b16 %v198, %v197
  %v282 = vpack.c.b16 %v200, %v199
  %v283 = vpack.c.b16 %v202, %v201
  %v284 = vpack.c.b16 %v204, %v203
  %v285 = vpack.c.b16 %v206, %v205
  %v286 = vpack.c.b16 %v208, %v207
  %v287 = vpack.c.b16 %v210, %v209
  %v288 = vpack.c.b16 %v212, %v211
  %v289 = vpack.c.b16 %v214, %v213
  %v290 = vpack.c.b16 %v216, %v215
  %v291 = vpack.c.b16 %v218, %v217
  %v292 = vpack.c.b16 %v220, %v219
  %v293 = vpack.c.b16 %v222, %v221
  %v294 = vpack.c.b16 %v224, %v223
  %v295 = vpack.c.b16 %v226, %v225
  %v296 = vpack.c.b16 %v228, %v227
  %v297 = vpack.c.b16 %v230, %v229
  %v298 = vpack.c.b16 %v232, %v231
  %v299 = vpack.c.b16 %v234, %v233
  %v300 = vpack.c.b16 %v236, %v235
  %v301 = vpack.c.b16 %v238, %v237
  %v302 = vpack.c.b16 %v240, %v239
  %v303 = vpack.c.b16 %v242, %v241
  %v304 = vpack.c.b16 %v244, %v243
  %v305 = vpack.c.b16 %v246, %v245
  %v306 = vpack.c.b16 %v248, %v247
  %v307 = vpack.c.b16 %v250, %v249
  %v308 = vpack.c.b16 %v252, %v251
  %v309 = vpack.c.b16 %v254, %v253
  %v310 = vpack.c.b16 %v256, %v255
  %v311 = vpack.c.b16 %v258, %v257
  %v312 = vpack.c.b16 %v260, %v259
  %v313 = vpack.c.b16 %v262, %v261
  %v314 = vpack.c.b16 %v264, %v263
  %v315 = vpack.c.b16 %v266, %v265
  %v316 = vpack.c.b16 %v268, %v267
  %v317 = vpack.c.b16 %v270, %v269
  %v318 = vpack.c.b16 %v272, %v271
  %v319 = vpack.c.b16 %v274, %v273
  %v320 = vpack.c.b16 %v276, %v275
  %v321 = vpack.c.b16 %v278, %v277
  %v322 = vpack.c.b16 %v280, %v279
  %v330 = vunpack.c.l.b16 %v99
  %v331 = vunpack.c.l.b16 %v100
  %v332 = vunpack.c.l.b16 %v101
  %v333 = vunpack.c.l.b16 %v102
  %v334 = vunpack.c.l.b16 %v103
  %v335 = vunpack.c.l.b16 %v104
  %v336 = vunpack.c.l.b16 %v105
  %v337 = vpack.c.b16 %v331, %v330
  %v338 = vpack.c.b16 %v333, %v332
  %v339 = vpack.c.b16 %v335, %v334
  %v340 = vpack.c.b16 %v336, %v336
  %vm344 = vcmask 441344
  %v346 = vsel %vm344, %v281, 0
  %v349 = vsel %vm344, %v282, 0
  %v352 = vsel %vm344, %v283, 0
  %v355 = vsel %vm344, %v284, 0
  %v358 = vsel %vm344, %v285, 0
  %v361 = vsel %vm344, %v286, 0
  %v364 = vsel %vm344, %v287, 0
  %v367 = vsel %vm344, %v288, 0
  %v370 = vsel %vm344, %v289, 0
  %v373 = vsel %vm344, %v290, 0
  %v376 = vsel %vm344, %v291, 0
  %v379 = vsel %vm344, %v292, 0
  %v382 = vsel %vm344, %v293, 0
  %v385 = vsel %vm344, %v294, 0
  %v388 = vsel %vm344, %v295, 0
  %v391 = vsel %vm344, %v296, 0
  %v394 = vsel %vm344, %v297, 0
  %v397 = vsel %vm344, %v298, 0
  %v400 = vsel %vm344, %v299, 0
  %v403 = vsel %vm344, %v300, 0
  %v406 = vsel %vm344, %v301, 0
  %v409 = vsel %vm344, %v302, 0
  %v412 = vsel %vm344, %v303, 0
  %v415 = vsel %vm344, %v304, 0
  %v418 = vsel %vm344, %v305, 0
  %v421 = vsel %vm344, %v306, 0
  %v424 = vsel %vm344, %v307, 0
  %v427 = vsel %vm344, %v308, 0
  %v430 = vsel %vm344, %v309, 0
  %v433 = vsel %vm344, %v310, 0
  %v436 = vsel %vm344, %v311, 0
  %v439 = vsel %vm344, %v312, 0
  %v442 = vsel %vm344, %v313, 0
  %v445 = vsel %vm344, %v314, 0
  %v448 = vsel %vm344, %v315, 0
  %v451 = vsel %vm344, %v316, 0
  %v454 = vsel %vm344, %v317, 0
  %v457 = vsel %vm344, %v318, 0
  %v460 = vsel %vm344, %v319, 0
  %v463 = vsel %vm344, %v320, 0
  %v466 = vsel %vm344, %v321, 0
  %v469 = vsel %vm344, %v322, 0
  %vm471 = vcmask 1042432
  %v473 = vsel %vm471, %v340, 0
  %475 = vmatprep.subr.bf16.mxu0 0
  %476 = vmatpush1.bf16.msra.mxu0 %v337
  %477 = vmatprep.subr.bf16.mxu0 0
  %478 = vmatpush1.bf16.msra.mxu0 %v338
  %479 = vmatprep.subr.bf16.mxu0 0
  %480 = vmatpush1.bf16.msra.mxu0 %v339
  %481 = vmatprep.subr.bf16.mxu0 0
  %482 = vmatpush1.bf16.msra.mxu0 %v473
  %483 = vmatprep.subr.bf16.mxu0 0
  %484 = vmatpush1.bf16.msra.mxu0 0
  %485 = vmatprep.subr.bf16.mxu0 0
  %486 = vmatpush1.bf16.msra.mxu0 0
  %487 = vmatprep.subr.bf16.mxu0 0
  %488 = vmatpush1.bf16.msra.mxu0 0
  %489 = vmatprep.subr.bf16.mxu0 0
  %490 = vmatpush1.bf16.msra.mxu0 0
  %491 = vmatprep.subr.bf16.mxu0 0
  %492 = vmatpush1.bf16.msra.mxu0 0
  %493 = vmatprep.subr.bf16.mxu0 0
  %494 = vmatpush1.bf16.msra.mxu0 0
  %495 = vmatprep.subr.bf16.mxu0 0
  %496 = vmatpush1.bf16.msra.mxu0 0
  %497 = vmatprep.subr.bf16.mxu0 0
  %498 = vmatpush1.bf16.msra.mxu0 0
  %499 = vmatprep.subr.bf16.mxu0 0
  %500 = vmatpush1.bf16.msra.mxu0 0
  %501 = vmatprep.subr.bf16.mxu0 0
  %502 = vmatpush1.bf16.msra.mxu0 0
  %503 = vmatprep.subr.bf16.mxu0 0
  %504 = vmatpush1.bf16.msra.mxu0 0
  %505 = vmatprep.subr.bf16.mxu0 0
  %506 = vmatpush1.bf16.msra.mxu0 0
  %507 = vmatprep.mubr.bf16.mxu0 0
  %508 = vmatmul.mubr.bf16.gmra.mrb[0].mxu0 %v346
  %v509 = vpop.f32.mrb[0].mxu0
  %v510 = vadd.f32 %v111, %v509
  %v511 = vpop.f32.mrb[0].mxu0
  %v512 = vpop.f32.mrb[0].mxu0
  %v513 = vadd.f32 %v111, %v512
  %v514 = vpop.f32.mrb[0].mxu0
  %515 = vmatprep.mubr.bf16.mxu0 0
  %516 = vmatmul.mubr.bf16.gmra.mrb[0].mxu0 %v349
  %v517 = vpop.f32.mrb[0].mxu0
  %v518 = vadd.f32 %v111, %v517
  %v519 = vpop.f32.mrb[0].mxu0
  %v520 = vpop.f32.mrb[0].mxu0
  %v521 = vadd.f32 %v111, %v520
  %v522 = vpop.f32.mrb[0].mxu0
  %523 = vmatprep.mubr.bf16.mxu0 0
  %524 = vmatmul.mubr.bf16.gmra.mrb[0].mxu0 %v352
  %v525 = vpop.f32.mrb[0].mxu0
  %v526 = vadd.f32 %v111, %v525
  %v527 = vpop.f32.mrb[0].mxu0
  %v528 = vpop.f32.mrb[0].mxu0
  %v529 = vadd.f32 %v111, %v528
  %v530 = vpop.f32.mrb[0].mxu0
  %531 = vmatprep.mubr.bf16.mxu0 0
  %532 = vmatmul.mubr.bf16.gmra.mrb[0].mxu0 %v355
  %v533 = vpop.f32.mrb[0].mxu0
  %v534 = vadd.f32 %v111, %v533
  %v535 = vpop.f32.mrb[0].mxu0
  %v536 = vpop.f32.mrb[0].mxu0
  %v537 = vadd.f32 %v111, %v536
  %v538 = vpop.f32.mrb[0].mxu0
  %539 = vmatprep.mubr.bf16.mxu0 0
  %540 = vmatmul.mubr.bf16.gmra.mrb[0].mxu0 %v358
  %v541 = vpop.f32.mrb[0].mxu0
  %v542 = vadd.f32 %v111, %v541
  %v543 = vpop.f32.mrb[0].mxu0
  %v544 = vpop.f32.mrb[0].mxu0
  %v545 = vadd.f32 %v111, %v544
  %v546 = vpop.f32.mrb[0].mxu0
  %547 = vmatprep.mubr.bf16.mxu0 0
  %548 = vmatmul.mubr.bf16.gmra.mrb[0].mxu0 %v361
  %v549 = vpop.f32.mrb[0].mxu0
  %v550 = vadd.f32 %v111, %v549
  %v551 = vpop.f32.mrb[0].mxu0
  %v552 = vpop.f32.mrb[0].mxu0
  %v553 = vadd.f32 %v111, %v552
  %v554 = vpop.f32.mrb[0].mxu0
  %555 = vmatprep.mubr.bf16.mxu0 0
  %556 = vmatmul.mubr.bf16.gmra.mrb[0].mxu0 %v364
  %v557 = vpop.f32.mrb[0].mxu0
  %v558 = vadd.f32 %v111, %v557
  %v559 = vpop.f32.mrb[0].mxu0
  %v560 = vpop.f32.mrb[0].mxu0
  %v561 = vadd.f32 %v111, %v560
  %v562 = vpop.f32.mrb[0].mxu0
  %563 = vmatprep.mubr.bf16.mxu0 0
  %564 = vmatmul.mubr.bf16.gmra.mrb[0].mxu0 %v367
  %v565 = vpop.f32.mrb[0].mxu0
  %v566 = vadd.f32 %v111, %v565
  %v567 = vpop.f32.mrb[0].mxu0
  %v568 = vpop.f32.mrb[0].mxu0
  %v569 = vadd.f32 %v111, %v568
  %v570 = vpop.f32.mrb[0].mxu0
  %571 = vmatprep.mubr.bf16.mxu0 0
  %572 = vmatmul.mubr.bf16.gmra.mrb[0].mxu0 %v370
  %v573 = vpop.f32.mrb[0].mxu0
  %v574 = vadd.f32 %v111, %v573
  %v575 = vpop.f32.mrb[0].mxu0
  %v576 = vpop.f32.mrb[0].mxu0
  %v577 = vadd.f32 %v111, %v576
  %v578 = vpop.f32.mrb[0].mxu0
  %579 = vmatprep.mubr.bf16.mxu0 0
  %580 = vmatmul.mubr.bf16.gmra.mrb[0].mxu0 %v373
  %v581 = vpop.f32.mrb[0].mxu0
  %v582 = vadd.f32 %v111, %v581
  %v583 = vpop.f32.mrb[0].mxu0
  %v584 = vpop.f32.mrb[0].mxu0
  %v585 = vadd.f32 %v111, %v584
  %v586 = vpop.f32.mrb[0].mxu0
  %587 = vmatprep.mubr.bf16.mxu0 0
  %588 = vmatmul.mubr.bf16.gmra.mrb[0].mxu0 %v376
  %v589 = vpop.f32.mrb[0].mxu0
  %v590 = vadd.f32 %v111, %v589
  %v591 = vpop.f32.mrb[0].mxu0
  %v592 = vpop.f32.mrb[0].mxu0
  %v593 = vadd.f32 %v111, %v592
  %v594 = vpop.f32.mrb[0].mxu0
  %595 = vmatprep.mubr.bf16.mxu0 0
  %596 = vmatmul.mubr.bf16.gmra.mrb[0].mxu0 %v379
  %v597 = vpop.f32.mrb[0].mxu0
  %v598 = vadd.f32 %v111, %v597
  %v599 = vpop.f32.mrb[0].mxu0
  %v600 = vpop.f32.mrb[0].mxu0
  %v601 = vadd.f32 %v111, %v600
  %v602 = vpop.f32.mrb[0].mxu0
  %603 = vmatprep.mubr.bf16.mxu0 0
  %604 = vmatmul.mubr.bf16.gmra.mrb[0].mxu0 %v382
  %v605 = vpop.f32.mrb[0].mxu0
  %v606 = vadd.f32 %v111, %v605
  %v607 = vpop.f32.mrb[0].mxu0
  %v608 = vpop.f32.mrb[0].mxu0
  %v609 = vadd.f32 %v111, %v608
  %v610 = vpop.f32.mrb[0].mxu0
  %611 = vmatprep.mubr.bf16.mxu0 0
  %612 = vmatmul.mubr.bf16.gmra.mrb[0].mxu0 %v385
  %v613 = vpop.f32.mrb[0].mxu0
  %v614 = vadd.f32 %v111, %v613
  %v615 = vpop.f32.mrb[0].mxu0
  %v616 = vpop.f32.mrb[0].mxu0
  %v617 = vadd.f32 %v111, %v616
  %v618 = vpop.f32.mrb[0].mxu0
  %619 = vmatprep.mubr.bf16.mxu0 0
  %620 = vmatmul.mubr.bf16.gmra.mrb[0].mxu0 %v388
  %v621 = vpop.f32.mrb[0].mxu0
  %v622 = vadd.f32 %v111, %v621
  %v623 = vpop.f32.mrb[0].mxu0
  %v624 = vpop.f32.mrb[0].mxu0
  %v625 = vadd.f32 %v111, %v624
  %v626 = vpop.f32.mrb[0].mxu0
  %627 = vmatprep.mubr.bf16.mxu0 0
  %628 = vmatmul.mubr.bf16.gmra.mrb[0].mxu0 %v391
  %v629 = vpop.f32.mrb[0].mxu0
  %v630 = vadd.f32 %v111, %v629
  %v631 = vpop.f32.mrb[0].mxu0
  %v632 = vpop.f32.mrb[0].mxu0
  %v633 = vadd.f32 %v111, %v632
  %v634 = vpop.f32.mrb[0].mxu0
  %635 = vmatprep.mubr.bf16.mxu0 0
  %636 = vmatmul.mubr.bf16.gmra.mrb[0].mxu0 %v394
  %v637 = vpop.f32.mrb[0].mxu0
  %v638 = vadd.f32 %v111, %v637
  %v639 = vpop.f32.mrb[0].mxu0
  %v640 = vpop.f32.mrb[0].mxu0
  %v641 = vadd.f32 %v111, %v640
  %v642 = vpop.f32.mrb[0].mxu0
  %643 = vmatprep.mubr.bf16.mxu0 0
  %644 = vmatmul.mubr.bf16.gmra.mrb[0].mxu0 %v397
  %v645 = vpop.f32.mrb[0].mxu0
  %v646 = vadd.f32 %v111, %v645
  %v647 = vpop.f32.mrb[0].mxu0
  %v648 = vpop.f32.mrb[0].mxu0
  %v649 = vadd.f32 %v111, %v648
  %v650 = vpop.f32.mrb[0].mxu0
  %651 = vmatprep.mubr.bf16.mxu0 0
  %652 = vmatmul.mubr.bf16.gmra.mrb[0].mxu0 %v400
  %v653 = vpop.f32.mrb[0].mxu0
  %v654 = vadd.f32 %v111, %v653
  %v655 = vpop.f32.mrb[0].mxu0
  %v656 = vpop.f32.mrb[0].mxu0
  %v657 = vadd.f32 %v111, %v656
  %v658 = vpop.f32.mrb[0].mxu0
  %659 = vmatprep.mubr.bf16.mxu0 0
  %660 = vmatmul.mubr.bf16.gmra.mrb[0].mxu0 %v403
  %v661 = vpop.f32.mrb[0].mxu0
  %v662 = vadd.f32 %v111, %v661
  %v663 = vpop.f32.mrb[0].mxu0
  %v664 = vpop.f32.mrb[0].mxu0
  %v665 = vadd.f32 %v111, %v664
  %v666 = vpop.f32.mrb[0].mxu0
  %667 = vmatprep.mubr.bf16.mxu0 0
  %668 = vmatmul.mubr.bf16.gmra.mrb[0].mxu0 %v406
  %v669 = vpop.f32.mrb[0].mxu0
  %v670 = vadd.f32 %v111, %v669
  %v671 = vpop.f32.mrb[0].mxu0
  %v672 = vpop.f32.mrb[0].mxu0
  %v673 = vadd.f32 %v111, %v672
  %v674 = vpop.f32.mrb[0].mxu0
  %675 = vmatprep.mubr.bf16.mxu0 0
  %676 = vmatmul.mubr.bf16.gmra.mrb[0].mxu0 %v409
  %v677 = vpop.f32.mrb[0].mxu0
  %v678 = vadd.f32 %v111, %v677
  %v679 = vpop.f32.mrb[0].mxu0
  %v680 = vpop.f32.mrb[0].mxu0
  %v681 = vadd.f32 %v111, %v680
  %v682 = vpop.f32.mrb[0].mxu0
  %683 = vmatprep.mubr.bf16.mxu0 0
  %684 = vmatmul.mubr.bf16.gmra.mrb[0].mxu0 %v412
  %v685 = vpop.f32.mrb[0].mxu0
  %v686 = vadd.f32 %v111, %v685
  %v687 = vpop.f32.mrb[0].mxu0
  %v688 = vpop.f32.mrb[0].mxu0
  %v689 = vadd.f32 %v111, %v688
  %v690 = vpop.f32.mrb[0].mxu0
  %691 = vmatprep.mubr.bf16.mxu0 0
  %692 = vmatmul.mubr.bf16.gmra.mrb[0].mxu0 %v415
  %v693 = vpop.f32.mrb[0].mxu0
  %v694 = vadd.f32 %v111, %v693
  %v695 = vpop.f32.mrb[0].mxu0
  %v696 = vpop.f32.mrb[0].mxu0
  %v697 = vadd.f32 %v111, %v696
  %v698 = vpop.f32.mrb[0].mxu0
  %699 = vmatprep.mubr.bf16.mxu0 0
  %700 = vmatmul.mubr.bf16.gmra.mrb[0].mxu0 %v418
  %v701 = vpop.f32.mrb[0].mxu0
  %v702 = vadd.f32 %v111, %v701
  %v703 = vpop.f32.mrb[0].mxu0
  %v704 = vpop.f32.mrb[0].mxu0
  %v705 = vadd.f32 %v111, %v704
  %v706 = vpop.f32.mrb[0].mxu0
  %707 = vmatprep.mubr.bf16.mxu0 0
  %708 = vmatmul.mubr.bf16.gmra.mrb[0].mxu0 %v421
  %v709 = vpop.f32.mrb[0].mxu0
  %v710 = vadd.f32 %v111, %v709
  %v711 = vpop.f32.mrb[0].mxu0
  %v712 = vpop.f32.mrb[0].mxu0
  %v713 = vadd.f32 %v111, %v712
  %v714 = vpop.f32.mrb[0].mxu0
  %715 = vmatprep.mubr.bf16.mxu0 0
  %716 = vmatmul.mubr.bf16.gmra.mrb[0].mxu0 %v424
  %v717 = vpop.f32.mrb[0].mxu0
  %v718 = vadd.f32 %v111, %v717
  %v719 = vpop.f32.mrb[0].mxu0
  %v720 = vpop.f32.mrb[0].mxu0
  %v721 = vadd.f32 %v111, %v720
  %v722 = vpop.f32.mrb[0].mxu0
  %723 = vmatprep.mubr.bf16.mxu0 0
  %724 = vmatmul.mubr.bf16.gmra.mrb[0].mxu0 %v427
  %v725 = vpop.f32.mrb[0].mxu0
  %v726 = vadd.f32 %v111, %v725
  %v727 = vpop.f32.mrb[0].mxu0
  %v728 = vpop.f32.mrb[0].mxu0
  %v729 = vadd.f32 %v111, %v728
  %v730 = vpop.f32.mrb[0].mxu0
  %731 = vmatprep.mubr.bf16.mxu0 0
  %732 = vmatmul.mubr.bf16.gmra.mrb[0].mxu0 %v430
  %v733 = vpop.f32.mrb[0].mxu0
  %v734 = vadd.f32 %v111, %v733
  %v735 = vpop.f32.mrb[0].mxu0
  %v736 = vpop.f32.mrb[0].mxu0
  %v737 = vadd.f32 %v111, %v736
  %v738 = vpop.f32.mrb[0].mxu0
  %739 = vmatprep.mubr.bf16.mxu0 0
  %740 = vmatmul.mubr.bf16.gmra.mrb[0].mxu0 %v433
  %v741 = vpop.f32.mrb[0].mxu0
  %v742 = vadd.f32 %v111, %v741
  %v743 = vpop.f32.mrb[0].mxu0
  %v744 = vpop.f32.mrb[0].mxu0
  %v745 = vadd.f32 %v111, %v744
  %v746 = vpop.f32.mrb[0].mxu0
  %747 = vmatprep.mubr.bf16.mxu0 0
  %748 = vmatmul.mubr.bf16.gmra.mrb[0].mxu0 %v436
  %v749 = vpop.f32.mrb[0].mxu0
  %v750 = vadd.f32 %v111, %v749
  %v751 = vpop.f32.mrb[0].mxu0
  %v752 = vpop.f32.mrb[0].mxu0
  %v753 = vadd.f32 %v111, %v752
  %v754 = vpop.f32.mrb[0].mxu0
  %755 = vmatprep.mubr.bf16.mxu0 0
  %756 = vmatmul.mubr.bf16.gmra.mrb[0].mxu0 %v439
  %v757 = vpop.f32.mrb[0].mxu0
  %v758 = vadd.f32 %v111, %v757
  %v759 = vpop.f32.mrb[0].mxu0
  %v760 = vpop.f32.mrb[0].mxu0
  %v761 = vadd.f32 %v111, %v760
  %v762 = vpop.f32.mrb[0].mxu0
  %763 = vmatprep.mubr.bf16.mxu0 0
  %764 = vmatmul.mubr.bf16.gmra.mrb[0].mxu0 %v442
  %v765 = vpop.f32.mrb[0].mxu0
  %v766 = vadd.f32 %v111, %v765
  %v767 = vpop.f32.mrb[0].mxu0
  %v768 = vpop.f32.mrb[0].mxu0
  %v769 = vadd.f32 %v111, %v768
  %v770 = vpop.f32.mrb[0].mxu0
  %771 = vmatprep.mubr.bf16.mxu0 0
  %772 = vmatmul.mubr.bf16.gmra.mrb[0].mxu0 %v445
  %v773 = vpop.f32.mrb[0].mxu0
  %v774 = vadd.f32 %v111, %v773
  %v775 = vpop.f32.mrb[0].mxu0
  %v776 = vpop.f32.mrb[0].mxu0
  %v777 = vadd.f32 %v111, %v776
  %v778 = vpop.f32.mrb[0].mxu0
  %779 = vmatprep.mubr.bf16.mxu0 0
  %780 = vmatmul.mubr.bf16.gmra.mrb[0].mxu0 %v448
  %v781 = vpop.f32.mrb[0].mxu0
  %v782 = vadd.f32 %v111, %v781
  %v783 = vpop.f32.mrb[0].mxu0
  %v784 = vpop.f32.mrb[0].mxu0
  %v785 = vadd.f32 %v111, %v784
  %v786 = vpop.f32.mrb[0].mxu0
  %787 = vmatprep.mubr.bf16.mxu0 0
  %788 = vmatmul.mubr.bf16.gmra.mrb[0].mxu0 %v451
  %v789 = vpop.f32.mrb[0].mxu0
  %v790 = vadd.f32 %v111, %v789
  %v791 = vpop.f32.mrb[0].mxu0
  %v792 = vpop.f32.mrb[0].mxu0
  %v793 = vadd.f32 %v111, %v792
  %v794 = vpop.f32.mrb[0].mxu0
  %795 = vmatprep.mubr.bf16.mxu0 0
  %796 = vmatmul.mubr.bf16.gmra.mrb[0].mxu0 %v454
  %v797 = vpop.f32.mrb[0].mxu0
  %v798 = vadd.f32 %v111, %v797
  %v799 = vpop.f32.mrb[0].mxu0
  %v800 = vpop.f32.mrb[0].mxu0
  %v801 = vadd.f32 %v111, %v800
  %v802 = vpop.f32.mrb[0].mxu0
  %803 = vmatprep.mubr.bf16.mxu0 0
  %804 = vmatmul.mubr.bf16.gmra.mrb[0].mxu0 %v457
  %v805 = vpop.f32.mrb[0].mxu0
  %v806 = vadd.f32 %v111, %v805
  %v807 = vpop.f32.mrb[0].mxu0
  %v808 = vpop.f32.mrb[0].mxu0
  %v809 = vadd.f32 %v111, %v808
  %v810 = vpop.f32.mrb[0].mxu0
  %811 = vmatprep.mubr.bf16.mxu0 0
  %812 = vmatmul.mubr.bf16.gmra.mrb[0].mxu0 %v460
  %v813 = vpop.f32.mrb[0].mxu0
  %v814 = vadd.f32 %v111, %v813
  %v815 = vpop.f32.mrb[0].mxu0
  %v816 = vpop.f32.mrb[0].mxu0
  %v817 = vadd.f32 %v111, %v816
  %v818 = vpop.f32.mrb[0].mxu0
  %819 = vmatprep.mubr.bf16.mxu0 0
  %820 = vmatmul.mubr.bf16.gmra.mrb[0].mxu0 %v463
  %v821 = vpop.f32.mrb[0].mxu0
  %v822 = vadd.f32 %v111, %v821
  %v823 = vpop.f32.mrb[0].mxu0
  %v824 = vpop.f32.mrb[0].mxu0
  %v825 = vadd.f32 %v111, %v824
  %v826 = vpop.f32.mrb[0].mxu0
  %827 = vmatprep.mubr.bf16.mxu0 0
  %828 = vmatmul.mubr.bf16.gmra.mrb[0].mxu0 %v466
  %v829 = vpop.f32.mrb[0].mxu0
  %v830 = vadd.f32 %v111, %v829
  %v831 = vpop.f32.mrb[0].mxu0
  %v832 = vpop.f32.mrb[0].mxu0
  %v833 = vadd.f32 %v111, %v832
  %v834 = vpop.f32.mrb[0].mxu0
  %835 = vmatprep.mubr.bf16.mxu0 0
  %836 = vmatmul.mubr.bf16.gmra.mrb[0].mxu0 %v469
  %v837 = vpop.f32.mrb[0].mxu0
  %v838 = vadd.f32 %v111, %v837
  %v839 = vpop.f32.mrb[0].mxu0
  %v840 = vpop.f32.mrb[0].mxu0
  %v841 = vadd.f32 %v111, %v840
  %v842 = vpop.f32.mrb[0].mxu0
  %843 = vdwg.mxu0
  %v844 = vmul.f32 %v510, 0.2
  %v845 = vmul.f32 %v513, 0.2
  %v846 = vmul.f32 %v518, 0.2
  %v847 = vmul.f32 %v521, 0.2
  %v848 = vmul.f32 %v526, 0.2
  %v849 = vmul.f32 %v529, 0.2
  %v850 = vmul.f32 %v534, 0.2
  %v851 = vmul.f32 %v537, 0.2
  %v852 = vmul.f32 %v542, 0.2
  %v853 = vmul.f32 %v545, 0.2
  %v854 = vmul.f32 %v550, 0.2
  %v855 = vmul.f32 %v553, 0.2
  %v856 = vmul.f32 %v558, 0.2
  %v857 = vmul.f32 %v561, 0.2
  %v858 = vmul.f32 %v566, 0.2
  %v859 = vmul.f32 %v569, 0.2
  %v860 = vmul.f32 %v574, 0.2
  %v861 = vmul.f32 %v577, 0.2
  %v862 = vmul.f32 %v582, 0.2
  %v863 = vmul.f32 %v585, 0.2
  %v864 = vmul.f32 %v590, 0.2
  %v865 = vmul.f32 %v593, 0.2
  %v866 = vmul.f32 %v598, 0.2
  %v867 = vmul.f32 %v601, 0.2
  %v868 = vmul.f32 %v606, 0.2
  %v869 = vmul.f32 %v609, 0.2
  %v870 = vmul.f32 %v614, 0.2
  %v871 = vmul.f32 %v617, 0.2
  %v872 = vmul.f32 %v622, 0.2
  %v873 = vmul.f32 %v625, 0.2
  %v874 = vmul.f32 %v630, 0.2
  %v875 = vmul.f32 %v633, 0.2
  %v876 = vmul.f32 %v638, 0.2
  %v877 = vmul.f32 %v641, 0.2
  %v878 = vmul.f32 %v646, 0.2
  %v879 = vmul.f32 %v649, 0.2
  %v880 = vmul.f32 %v654, 0.2
  %v881 = vmul.f32 %v657, 0.2
  %v882 = vmul.f32 %v662, 0.2
  %v883 = vmul.f32 %v665, 0.2
  %v884 = vmul.f32 %v670, 0.2
  %v885 = vmul.f32 %v673, 0.2
  %v886 = vmul.f32 %v678, 0.2
  %v887 = vmul.f32 %v681, 0.2
  %v888 = vmul.f32 %v686, 0.2
  %v889 = vmul.f32 %v689, 0.2
  %v890 = vmul.f32 %v694, 0.2
  %v891 = vmul.f32 %v697, 0.2
  %v892 = vmul.f32 %v702, 0.2
  %v893 = vmul.f32 %v705, 0.2
  %v894 = vmul.f32 %v710, 0.2
  %v895 = vmul.f32 %v713, 0.2
  %v896 = vmul.f32 %v718, 0.2
  %v897 = vmul.f32 %v721, 0.2
  %v898 = vmul.f32 %v726, 0.2
  %v899 = vmul.f32 %v729, 0.2
  %v900 = vmul.f32 %v734, 0.2
  %v901 = vmul.f32 %v737, 0.2
  %v902 = vmul.f32 %v742, 0.2
  %v903 = vmul.f32 %v745, 0.2
  %v904 = vmul.f32 %v750, 0.2
  %v905 = vmul.f32 %v753, 0.2
  %v906 = vmul.f32 %v758, 0.2
  %v907 = vmul.f32 %v761, 0.2
  %v908 = vmul.f32 %v766, 0.2
  %v909 = vmul.f32 %v769, 0.2
  %v910 = vmul.f32 %v774, 0.2
  %v911 = vmul.f32 %v777, 0.2
  %v912 = vmul.f32 %v782, 0.2
  %v913 = vmul.f32 %v785, 0.2
  %v914 = vmul.f32 %v790, 0.2
  %v915 = vmul.f32 %v793, 0.2
  %v916 = vmul.f32 %v798, 0.2
  %v917 = vmul.f32 %v801, 0.2
  %v918 = vmul.f32 %v806, 0.2
  %v919 = vmul.f32 %v809, 0.2
  %v920 = vmul.f32 %v814, 0.2
  %v921 = vmul.f32 %v817, 0.2
  %v922 = vmul.f32 %v822, 0.2
  %v923 = vmul.f32 %v825, 0.2
  %v924 = vmul.f32 %v830, 0.2
  %v925 = vmul.f32 %v833, 0.2
  %v926 = vmul.f32 %v838, 0.2
  %v927 = vmul.f32 %v841, 0.2
  %v928 = vmax.f32 %v510, %v844
  %v929 = vmax.f32 %v513, %v845
  %v930 = vmax.f32 %v518, %v846
  %v931 = vmax.f32 %v521, %v847
  %v932 = vmax.f32 %v526, %v848
  %v933 = vmax.f32 %v529, %v849
  %v934 = vmax.f32 %v534, %v850
  %v935 = vmax.f32 %v537, %v851
  %v936 = vmax.f32 %v542, %v852
  %v937 = vmax.f32 %v545, %v853
  %v938 = vmax.f32 %v550, %v854
  %v939 = vmax.f32 %v553, %v855
  %v940 = vmax.f32 %v558, %v856
  %v941 = vmax.f32 %v561, %v857
  %v942 = vmax.f32 %v566, %v858
  %v943 = vmax.f32 %v569, %v859
  %v944 = vmax.f32 %v574, %v860
  %v945 = vmax.f32 %v577, %v861
  %v946 = vmax.f32 %v582, %v862
  %v947 = vmax.f32 %v585, %v863
  %v948 = vmax.f32 %v590, %v864
  %v949 = vmax.f32 %v593, %v865
  %v950 = vmax.f32 %v598, %v866
  %v951 = vmax.f32 %v601, %v867
  %v952 = vmax.f32 %v606, %v868
  %v953 = vmax.f32 %v609, %v869
  %v954 = vmax.f32 %v614, %v870
  %v955 = vmax.f32 %v617, %v871
  %v956 = vmax.f32 %v622, %v872
  %v957 = vmax.f32 %v625, %v873
  %v958 = vmax.f32 %v630, %v874
  %v959 = vmax.f32 %v633, %v875
  %v960 = vmax.f32 %v638, %v876
  %v961 = vmax.f32 %v641, %v877
  %v962 = vmax.f32 %v646, %v878
  %v963 = vmax.f32 %v649, %v879
  %v964 = vmax.f32 %v654, %v880
  %v965 = vmax.f32 %v657, %v881
  %v966 = vmax.f32 %v662, %v882
  %v967 = vmax.f32 %v665, %v883
  %v968 = vmax.f32 %v670, %v884
  %v969 = vmax.f32 %v673, %v885
  %v970 = vmax.f32 %v678, %v886
  %v971 = vmax.f32 %v681, %v887
  %v972 = vmax.f32 %v686, %v888
  %v973 = vmax.f32 %v689, %v889
  %v974 = vmax.f32 %v694, %v890
  %v975 = vmax.f32 %v697, %v891
  %v976 = vmax.f32 %v702, %v892
  %v977 = vmax.f32 %v705, %v893
  %v978 = vmax.f32 %v710, %v894
  %v979 = vmax.f32 %v713, %v895
  %v980 = vmax.f32 %v718, %v896
  %v981 = vmax.f32 %v721, %v897
  %v982 = vmax.f32 %v726, %v898
  %v983 = vmax.f32 %v729, %v899
  %v984 = vmax.f32 %v734, %v900
  %v985 = vmax.f32 %v737, %v901
  %v986 = vmax.f32 %v742, %v902
  %v987 = vmax.f32 %v745, %v903
  %v988 = vmax.f32 %v750, %v904
  %v989 = vmax.f32 %v753, %v905
  %v990 = vmax.f32 %v758, %v906
  %v991 = vmax.f32 %v761, %v907
  %v992 = vmax.f32 %v766, %v908
  %v993 = vmax.f32 %v769, %v909
  %v994 = vmax.f32 %v774, %v910
  %v995 = vmax.f32 %v777, %v911
  %v996 = vmax.f32 %v782, %v912
  %v997 = vmax.f32 %v785, %v913
  %v998 = vmax.f32 %v790, %v914
  %v999 = vmax.f32 %v793, %v915
  %v1000 = vmax.f32 %v798, %v916
  %v1001 = vmax.f32 %v801, %v917
  %v1002 = vmax.f32 %v806, %v918
  %v1003 = vmax.f32 %v809, %v919
  %v1004 = vmax.f32 %v814, %v920
  %v1005 = vmax.f32 %v817, %v921
  %v1006 = vmax.f32 %v822, %v922
  %v1007 = vmax.f32 %v825, %v923
  %v1008 = vmax.f32 %v830, %v924
  %v1009 = vmax.f32 %v833, %v925
  %v1010 = vmax.f32 %v838, %v926
  %v1011 = vmax.f32 %v841, %v927
  %v1012 = vpack.c.bf16 %v929, %v928
  %v1013 = vpack.c.bf16 %v931, %v930
  %v1014 = vpack.c.bf16 %v933, %v932
  %v1015 = vpack.c.bf16 %v935, %v934
  %v1016 = vpack.c.bf16 %v937, %v936
  %v1017 = vpack.c.bf16 %v939, %v938
  %v1018 = vpack.c.bf16 %v941, %v940
  %v1019 = vpack.c.bf16 %v943, %v942
  %v1020 = vpack.c.bf16 %v945, %v944
  %v1021 = vpack.c.bf16 %v947, %v946
  %v1022 = vpack.c.bf16 %v949, %v948
  %v1023 = vpack.c.bf16 %v951, %v950
  %v1024 = vpack.c.bf16 %v953, %v952
  %v1025 = vpack.c.bf16 %v955, %v954
  %v1026 = vpack.c.bf16 %v957, %v956
  %v1027 = vpack.c.bf16 %v959, %v958
  %v1028 = vpack.c.bf16 %v961, %v960
  %v1029 = vpack.c.bf16 %v963, %v962
  %v1030 = vpack.c.bf16 %v965, %v964
  %v1031 = vpack.c.bf16 %v967, %v966
  %v1032 = vpack.c.bf16 %v969, %v968
  %v1033 = vpack.c.bf16 %v971, %v970
  %v1034 = vpack.c.bf16 %v973, %v972
  %v1035 = vpack.c.bf16 %v975, %v974
  %v1036 = vpack.c.bf16 %v977, %v976
  %v1037 = vpack.c.bf16 %v979, %v978
  %v1038 = vpack.c.bf16 %v981, %v980
  %v1039 = vpack.c.bf16 %v983, %v982
  %v1040 = vpack.c.bf16 %v985, %v984
  %v1041 = vpack.c.bf16 %v987, %v986
  %v1042 = vpack.c.bf16 %v989, %v988
  %v1043 = vpack.c.bf16 %v991, %v990
  %v1044 = vpack.c.bf16 %v993, %v992
  %v1045 = vpack.c.bf16 %v995, %v994
  %v1046 = vpack.c.bf16 %v997, %v996
  %v1047 = vpack.c.bf16 %v999, %v998
  %v1048 = vpack.c.bf16 %v1001, %v1000
  %v1049 = vpack.c.bf16 %v1003, %v1002
  %v1050 = vpack.c.bf16 %v1005, %v1004
  %v1051 = vpack.c.bf16 %v1007, %v1006
  %v1052 = vpack.c.bf16 %v1009, %v1008
  %v1053 = vpack.c.bf16 %v1011, %v1010
  %v1096 = vunpack.c.l.b16 %v1012
  %v1097 = vunpack.c.h.b16 %v1012
  %v1098 = vunpack.c.l.b16 %v1013
  %v1099 = vunpack.c.h.b16 %v1013
  %v1100 = vunpack.c.l.b16 %v1014
  %v1101 = vunpack.c.h.b16 %v1014
  %v1102 = vunpack.c.l.b16 %v1015
  %v1103 = vunpack.c.h.b16 %v1015
  %v1104 = vunpack.c.l.b16 %v1016
  %v1105 = vunpack.c.h.b16 %v1016
  %v1106 = vunpack.c.l.b16 %v1017
  %v1107 = vunpack.c.h.b16 %v1017
  %v1108 = vunpack.c.l.b16 %v1018
  %v1109 = vunpack.c.h.b16 %v1018
  %v1110 = vunpack.c.l.b16 %v1019
  %v1111 = vunpack.c.h.b16 %v1019
  %v1112 = vunpack.c.l.b16 %v1020
  %v1113 = vunpack.c.h.b16 %v1020
  %v1114 = vunpack.c.l.b16 %v1021
  %v1115 = vunpack.c.h.b16 %v1021
  %v1116 = vunpack.c.l.b16 %v1022
  %v1117 = vunpack.c.h.b16 %v1022
  %v1118 = vunpack.c.l.b16 %v1023
  %v1119 = vunpack.c.h.b16 %v1023
  %v1120 = vunpack.c.l.b16 %v1024
  %v1121 = vunpack.c.h.b16 %v1024
  %v1122 = vunpack.c.l.b16 %v1025
  %v1123 = vunpack.c.h.b16 %v1025
  %v1124 = vunpack.c.l.b16 %v1026
  %v1125 = vunpack.c.h.b16 %v1026
  %v1126 = vunpack.c.l.b16 %v1027
  %v1127 = vunpack.c.h.b16 %v1027
  %v1128 = vunpack.c.l.b16 %v1028
  %v1129 = vunpack.c.h.b16 %v1028
  %v1130 = vunpack.c.l.b16 %v1029
  %v1131 = vunpack.c.h.b16 %v1029
  %v1132 = vunpack.c.l.b16 %v1030
  %v1133 = vunpack.c.h.b16 %v1030
  %v1134 = vunpack.c.l.b16 %v1031
  %v1135 = vunpack.c.h.b16 %v1031
  %v1136 = vunpack.c.l.b16 %v1032
  %v1137 = vunpack.c.h.b16 %v1032
  %v1138 = vunpack.c.l.b16 %v1033
  %v1139 = vunpack.c.h.b16 %v1033
  %v1140 = vunpack.c.l.b16 %v1034
  %v1141 = vunpack.c.h.b16 %v1034
  %v1142 = vunpack.c.l.b16 %v1035
  %v1143 = vunpack.c.h.b16 %v1035
  %v1144 = vunpack.c.l.b16 %v1036
  %v1145 = vunpack.c.h.b16 %v1036
  %v1146 = vunpack.c.l.b16 %v1037
  %v1147 = vunpack.c.h.b16 %v1037
  %v1148 = vunpack.c.l.b16 %v1038
  %v1149 = vunpack.c.h.b16 %v1038
  %v1150 = vunpack.c.l.b16 %v1039
  %v1151 = vunpack.c.h.b16 %v1039
  %v1152 = vunpack.c.l.b16 %v1040
  %v1153 = vunpack.c.h.b16 %v1040
  %v1154 = vunpack.c.l.b16 %v1041
  %v1155 = vunpack.c.h.b16 %v1041
  %v1156 = vunpack.c.l.b16 %v1042
  %v1157 = vunpack.c.h.b16 %v1042
  %v1158 = vunpack.c.l.b16 %v1043
  %v1159 = vunpack.c.h.b16 %v1043
  %v1160 = vunpack.c.l.b16 %v1044
  %v1161 = vunpack.c.h.b16 %v1044
  %v1162 = vunpack.c.l.b16 %v1045
  %v1163 = vunpack.c.h.b16 %v1045
  %v1164 = vunpack.c.l.b16 %v1046
  %v1165 = vunpack.c.h.b16 %v1046
  %v1166 = vunpack.c.l.b16 %v1047
  %v1167 = vunpack.c.h.b16 %v1047
  %v1168 = vunpack.c.l.b16 %v1048
  %v1169 = vunpack.c.h.b16 %v1048
  %v1170 = vunpack.c.l.b16 %v1049
  %v1171 = vunpack.c.h.b16 %v1049
  %v1172 = vunpack.c.l.b16 %v1050
  %v1173 = vunpack.c.h.b16 %v1050
  %v1174 = vunpack.c.l.b16 %v1051
  %v1175 = vunpack.c.h.b16 %v1051
  %v1176 = vunpack.c.l.b16 %v1052
  %v1177 = vunpack.c.h.b16 %v1052
  %v1178 = vunpack.c.l.b16 %v1053
  %v1179 = vunpack.c.h.b16 %v1053
  %v1180 = vpack.c.b16 %v1096, %v1096
  %v1181 = vpack.c.b16 %v1097, %v1097
  %v1182 = vpack.c.b16 %v1098, %v1098
  %v1183 = vpack.c.b16 %v1099, %v1099
  %v1184 = vpack.c.b16 %v1100, %v1100
  %v1185 = vpack.c.b16 %v1101, %v1101
  %v1186 = vpack.c.b16 %v1102, %v1102
  %v1187 = vpack.c.b16 %v1103, %v1103
  %v1188 = vpack.c.b16 %v1104, %v1104
  %v1189 = vpack.c.b16 %v1105, %v1105
  %v1190 = vpack.c.b16 %v1106, %v1106
  %v1191 = vpack.c.b16 %v1107, %v1107
  %v1192 = vpack.c.b16 %v1108, %v1108
  %v1193 = vpack.c.b16 %v1109, %v1109
  %v1194 = vpack.c.b16 %v1110, %v1110
  %v1195 = vpack.c.b16 %v1111, %v1111
  %v1196 = vpack.c.b16 %v1112, %v1112
  %v1197 = vpack.c.b16 %v1113, %v1113
  %v1198 = vpack.c.b16 %v1114, %v1114
  %v1199 = vpack.c.b16 %v1115, %v1115
  %v1200 = vpack.c.b16 %v1116, %v1116
  %v1201 = vpack.c.b16 %v1117, %v1117
  %v1202 = vpack.c.b16 %v1118, %v1118
  %v1203 = vpack.c.b16 %v1119, %v1119
  %v1204 = vpack.c.b16 %v1120, %v1120
  %v1205 = vpack.c.b16 %v1121, %v1121
  %v1206 = vpack.c.b16 %v1122, %v1122
  %v1207 = vpack.c.b16 %v1123, %v1123
  %v1208 = vpack.c.b16 %v1124, %v1124
  %v1209 = vpack.c.b16 %v1125, %v1125
  %v1210 = vpack.c.b16 %v1126, %v1126
  %v1211 = vpack.c.b16 %v1127, %v1127
  %v1212 = vpack.c.b16 %v1128, %v1128
  %v1213 = vpack.c.b16 %v1129, %v1129
  %v1214 = vpack.c.b16 %v1130, %v1130
  %v1215 = vpack.c.b16 %v1131, %v1131
  %v1216 = vpack.c.b16 %v1132, %v1132
  %v1217 = vpack.c.b16 %v1133, %v1133
  %v1218 = vpack.c.b16 %v1134, %v1134
  %v1219 = vpack.c.b16 %v1135, %v1135
  %v1220 = vpack.c.b16 %v1136, %v1136
  %v1221 = vpack.c.b16 %v1137, %v1137
  %v1222 = vpack.c.b16 %v1138, %v1138
  %v1223 = vpack.c.b16 %v1139, %v1139
  %v1224 = vpack.c.b16 %v1140, %v1140
  %v1225 = vpack.c.b16 %v1141, %v1141
  %v1226 = vpack.c.b16 %v1142, %v1142
  %v1227 = vpack.c.b16 %v1143, %v1143
  %v1228 = vpack.c.b16 %v1144, %v1144
  %v1229 = vpack.c.b16 %v1145, %v1145
  %v1230 = vpack.c.b16 %v1146, %v1146
  %v1231 = vpack.c.b16 %v1147, %v1147
  %v1232 = vpack.c.b16 %v1148, %v1148
  %v1233 = vpack.c.b16 %v1149, %v1149
  %v1234 = vpack.c.b16 %v1150, %v1150
  %v1235 = vpack.c.b16 %v1151, %v1151
  %v1236 = vpack.c.b16 %v1152, %v1152
  %v1237 = vpack.c.b16 %v1153, %v1153
  %v1238 = vpack.c.b16 %v1154, %v1154
  %v1239 = vpack.c.b16 %v1155, %v1155
  %v1240 = vpack.c.b16 %v1156, %v1156
  %v1241 = vpack.c.b16 %v1157, %v1157
  %v1242 = vpack.c.b16 %v1158, %v1158
  %v1243 = vpack.c.b16 %v1159, %v1159
  %v1244 = vpack.c.b16 %v1160, %v1160
  %v1245 = vpack.c.b16 %v1161, %v1161
  %v1246 = vpack.c.b16 %v1162, %v1162
  %v1247 = vpack.c.b16 %v1163, %v1163
  %v1248 = vpack.c.b16 %v1164, %v1164
  %v1249 = vpack.c.b16 %v1165, %v1165
  %v1250 = vpack.c.b16 %v1166, %v1166
  %v1251 = vpack.c.b16 %v1167, %v1167
  %v1252 = vpack.c.b16 %v1168, %v1168
  %v1253 = vpack.c.b16 %v1169, %v1169
  %v1254 = vpack.c.b16 %v1170, %v1170
  %v1255 = vpack.c.b16 %v1171, %v1171
  %v1256 = vpack.c.b16 %v1172, %v1172
  %v1257 = vpack.c.b16 %v1173, %v1173
  %v1258 = vpack.c.b16 %v1174, %v1174
  %v1259 = vpack.c.b16 %v1175, %v1175
  %v1260 = vpack.c.b16 %v1176, %v1176
  %v1261 = vpack.c.b16 %v1177, %v1177
  %v1262 = vpack.c.b16 %v1178, %v1178
  %v1263 = vpack.c.b16 %v1179, %v1179
  %vm1348 = vcmask 519168
  %1349 = vst.msk [vmem:[%s3] sm:$0xf] %vm1348, %v1180
  %1350 = vst.msk [vmem:[%s3 + $0x4] sm:$0xf] %vm1348, %v1181
  %1351 = vst.msk [vmem:[%s3 + $0x8] sm:$0xf] %vm1348, %v1182
  %1352 = vst.msk [vmem:[%s3 + $0xc] sm:$0xf] %vm1348, %v1183
  %1353 = vst.msk [vmem:[%s3 + $0x10] sm:$0xf] %vm1348, %v1184
  %1354 = vst.msk [vmem:[%s3 + $0x14] sm:$0xf] %vm1348, %v1185
  %1355 = vst.msk [vmem:[%s3 + $0x18] sm:$0xf] %vm1348, %v1186
  %1356 = vst.msk [vmem:[%s3 + $0x1c] sm:$0xf] %vm1348, %v1187
  %1357 = vst.msk [vmem:[%s3 + $0x20] sm:$0xf] %vm1348, %v1188
  %1358 = vst.msk [vmem:[%s3 + $0x24] sm:$0xf] %vm1348, %v1189
  %1359 = vst.msk [vmem:[%s3 + $0x28] sm:$0xf] %vm1348, %v1190
  %1360 = vst.msk [vmem:[%s3 + $0x2c] sm:$0xf] %vm1348, %v1191
  %1361 = vst.msk [vmem:[%s3 + $0x30] sm:$0xf] %vm1348, %v1192
  %1362 = vst.msk [vmem:[%s3 + $0x34] sm:$0xf] %vm1348, %v1193
  %1363 = vst.msk [vmem:[%s3 + $0x38] sm:$0xf] %vm1348, %v1194
  %1364 = vst.msk [vmem:[%s3 + $0x3c] sm:$0xf] %vm1348, %v1195
  %1365 = vst.msk [vmem:[%s3 + $0x40] sm:$0xf] %vm1348, %v1196
  %1366 = vst.msk [vmem:[%s3 + $0x44] sm:$0xf] %vm1348, %v1197
  %1367 = vst.msk [vmem:[%s3 + $0x48] sm:$0xf] %vm1348, %v1198
  %1368 = vst.msk [vmem:[%s3 + $0x4c] sm:$0xf] %vm1348, %v1199
  %1369 = vst.msk [vmem:[%s3 + $0x50] sm:$0xf] %vm1348, %v1200
  %1370 = vst.msk [vmem:[%s3 + $0x54] sm:$0xf] %vm1348, %v1201
  %1371 = vst.msk [vmem:[%s3 + $0x58] sm:$0xf] %vm1348, %v1202
  %1372 = vst.msk [vmem:[%s3 + $0x5c] sm:$0xf] %vm1348, %v1203
  %1373 = vst.msk [vmem:[%s3 + $0x60] sm:$0xf] %vm1348, %v1204
  %1374 = vst.msk [vmem:[%s3 + $0x64] sm:$0xf] %vm1348, %v1205
  %1375 = vst.msk [vmem:[%s3 + $0x68] sm:$0xf] %vm1348, %v1206
  %1376 = vst.msk [vmem:[%s3 + $0x6c] sm:$0xf] %vm1348, %v1207
  %1377 = vst.msk [vmem:[%s3 + $0x70] sm:$0xf] %vm1348, %v1208
  %1378 = vst.msk [vmem:[%s3 + $0x74] sm:$0xf] %vm1348, %v1209
  %1379 = vst.msk [vmem:[%s3 + $0x78] sm:$0xf] %vm1348, %v1210
  %1380 = vst.msk [vmem:[%s3 + $0x7c] sm:$0xf] %vm1348, %v1211
  %1381 = vst.msk [vmem:[%s3 + $0x80] sm:$0xf] %vm1348, %v1212
  %1382 = vst.msk [vmem:[%s3 + $0x84] sm:$0xf] %vm1348, %v1213
  %1383 = vst.msk [vmem:[%s3 + $0x88] sm:$0xf] %vm1348, %v1214
  %1384 = vst.msk [vmem:[%s3 + $0x8c] sm:$0xf] %vm1348, %v1215
  %1385 = vst.msk [vmem:[%s3 + $0x90] sm:$0xf] %vm1348, %v1216
  %1386 = vst.msk [vmem:[%s3 + $0x94] sm:$0xf] %vm1348, %v1217
  %1387 = vst.msk [vmem:[%s3 + $0x98] sm:$0xf] %vm1348, %v1218
  %1388 = vst.msk [vmem:[%s3 + $0x9c] sm:$0xf] %vm1348, %v1219
  %1389 = vst.msk [vmem:[%s3 + $0xa0] sm:$0xf] %vm1348, %v1220
  %1390 = vst.msk [vmem:[%s3 + $0xa4] sm:$0xf] %vm1348, %v1221
  %1391 = vst.msk [vmem:[%s3 + $0xa8] sm:$0xf] %vm1348, %v1222
  %1392 = vst.msk [vmem:[%s3 + $0xac] sm:$0xf] %vm1348, %v1223
  %1393 = vst.msk [vmem:[%s3 + $0xb0] sm:$0xf] %vm1348, %v1224
  %1394 = vst.msk [vmem:[%s3 + $0xb4] sm:$0xf] %vm1348, %v1225
  %1395 = vst.msk [vmem:[%s3 + $0xb8] sm:$0xf] %vm1348, %v1226
  %1396 = vst.msk [vmem:[%s3 + $0xbc] sm:$0xf] %vm1348, %v1227
  %1397 = vst.msk [vmem:[%s3 + $0xc0] sm:$0xf] %vm1348, %v1228
  %1398 = vst.msk [vmem:[%s3 + $0xc4] sm:$0xf] %vm1348, %v1229
  %1399 = vst.msk [vmem:[%s3 + $0xc8] sm:$0xf] %vm1348, %v1230
  %1400 = vst.msk [vmem:[%s3 + $0xcc] sm:$0xf] %vm1348, %v1231
  %1401 = vst.msk [vmem:[%s3 + $0xd0] sm:$0xf] %vm1348, %v1232
  %1402 = vst.msk [vmem:[%s3 + $0xd4] sm:$0xf] %vm1348, %v1233
  %1403 = vst.msk [vmem:[%s3 + $0xd8] sm:$0xf] %vm1348, %v1234
  %1404 = vst.msk [vmem:[%s3 + $0xdc] sm:$0xf] %vm1348, %v1235
  %1405 = vst.msk [vmem:[%s3 + $0xe0] sm:$0xf] %vm1348, %v1236
  %1406 = vst.msk [vmem:[%s3 + $0xe4] sm:$0xf] %vm1348, %v1237
  %1407 = vst.msk [vmem:[%s3 + $0xe8] sm:$0xf] %vm1348, %v1238
  %1408 = vst.msk [vmem:[%s3 + $0xec] sm:$0xf] %vm1348, %v1239
  %1409 = vst.msk [vmem:[%s3 + $0xf0] sm:$0xf] %vm1348, %v1240
  %1410 = vst.msk [vmem:[%s3 + $0xf4] sm:$0xf] %vm1348, %v1241
  %1411 = vst.msk [vmem:[%s3 + $0xf8] sm:$0xf] %vm1348, %v1242
  %1412 = vst.msk [vmem:[%s3 + $0xfc] sm:$0xf] %vm1348, %v1243
  %1413 = vst.msk [vmem:[%s3 + $0x100] sm:$0xf] %vm1348, %v1244
  %1414 = vst.msk [vmem:[%s3 + $0x104] sm:$0xf] %vm1348, %v1245
  %1415 = vst.msk [vmem:[%s3 + $0x108] sm:$0xf] %vm1348, %v1246
  %1416 = vst.msk [vmem:[%s3 + $0x10c] sm:$0xf] %vm1348, %v1247
  %1417 = vst.msk [vmem:[%s3 + $0x110] sm:$0xf] %vm1348, %v1248
  %1418 = vst.msk [vmem:[%s3 + $0x114] sm:$0xf] %vm1348, %v1249
  %1419 = vst.msk [vmem:[%s3 + $0x118] sm:$0xf] %vm1348, %v1250
  %1420 = vst.msk [vmem:[%s3 + $0x11c] sm:$0xf] %vm1348, %v1251
  %1421 = vst.msk [vmem:[%s3 + $0x120] sm:$0xf] %vm1348, %v1252
  %1422 = vst.msk [vmem:[%s3 + $0x124] sm:$0xf] %vm1348, %v1253
  %1423 = vst.msk [vmem:[%s3 + $0x128] sm:$0xf] %vm1348, %v1254
  %1424 = vst.msk [vmem:[%s3 + $0x12c] sm:$0xf] %vm1348, %v1255
  %1425 = vst.msk [vmem:[%s3 + $0x130] sm:$0xf] %vm1348, %v1256
  %1426 = vst.msk [vmem:[%s3 + $0x134] sm:$0xf] %vm1348, %v1257
  %1427 = vst.msk [vmem:[%s3 + $0x138] sm:$0xf] %vm1348, %v1258
  %1428 = vst.msk [vmem:[%s3 + $0x13c] sm:$0xf] %vm1348, %v1259
  %1429 = vst.msk [vmem:[%s3 + $0x140] sm:$0xf] %vm1348, %v1260
  %1430 = vst.msk [vmem:[%s3 + $0x144] sm:$0xf] %vm1348, %v1261
  %1431 = vst.msk [vmem:[%s3 + $0x148] sm:$0xf] %vm1348, %v1262
  %1432 = vst.msk [vmem:[%s3 + $0x14c] sm:$0xf] %vm1348, %v1263
  // Predicated region
  $region14: #{tipd_forward.5} parent=0 // pred_check
    _
  $region15: #{tipd_forward.5} parent=0 // pred_check_branch
    %1434 = sbr.rel (0) target = $region17
  $region16: #{tipd_forward.5} parent=0 // pred_region
    _
  $region17: #{tipd_forward.5} parent=0 // pred_fallthru
    _
  // Predicated region
  $region18: #{tipd_forward.5} parent=0 // pred_check
    _
  $region19: #{tipd_forward.5} parent=0 // pred_check_branch
    %1436 = sbr.rel (0) target = $region21
  $region20: #{tipd_forward.5} parent=0 // pred_region
    _
  $region21: #{tipd_forward.5} parent=0 // pred_fallthru
    _

// kernel: tipd_forward.6
$region0: #{tipd_forward.6}
  #allocation0 [shape = 'u32[]', space=smem, size = 0x4, offset = 0x4, fixed_abs, tag = 'smem constant byte address 0x4 - core index']
  #allocation1 [shape = 'u32[144,128]{1,0:T(1,128)}', space=vmem, size = 0x12000, scoped, tag = 'internal scratch']
  %s0 = inlined_call_operand.vmem [shape: bf16[176,576], index: 0, kind: input, shape index: {}]
  %s1 = inlined_call_operand.vmem [shape: bf16[576,128], index: 1, kind: input, shape index: {}]
  %s2 = inlined_call_operand.vmem [shape: f32[1,128], index: 2, kind: input, shape index: {}]
  %s3 = inlined_call_operand.vmem [shape: f32[1,128], index: 3, kind: input, shape index: {}]
  %s4 = inlined_call_operand.vmem [shape: bf16[176,128], index: 4, kind: output, shape index: {}]
  %s5 = sld [smem:[#allocation0]]
  $region26: #{tipd_forward.6} parent=0
    _
  %s7 = ssub.s32 1, %s5
  %s8 = scalar_select 0, %s7, %s5
  // Predicated region
  $region2: #{tipd_forward.6} parent=0 // pred_check
    _
  $region3: #{tipd_forward.6} parent=0 // pred_check_branch
    %10 = sbr.rel (0) target = $region5
  $region4: #{tipd_forward.6} parent=0 // pred_region
    _
  $region5: #{tipd_forward.6} parent=0 // pred_fallthru
    _
  // Predicated region
  $region6: #{tipd_forward.6} parent=0 // pred_check
    _
  $region7: #{tipd_forward.6} parent=0 // pred_check_branch
    %12 = sbr.rel (0) target = $region9
  $region8: #{tipd_forward.6} parent=0 // pred_region
    _
  $region9: #{tipd_forward.6} parent=0 // pred_fallthru
    _
  // Predicated region
  $region10: #{tipd_forward.6} parent=0 // pred_check
    _
  $region11: #{tipd_forward.6} parent=0 // pred_check_branch
    %14 = sbr.rel (0) target = $region13
  $region12: #{tipd_forward.6} parent=0 // pred_region
    _
  $region13: #{tipd_forward.6} parent=0 // pred_fallthru
    _
  // Predicated region
  $region14: #{tipd_forward.6} parent=0 // pred_check
    _
  $region15: #{tipd_forward.6} parent=0 // pred_check_branch
    %16 = sbr.rel (0) target = $region17
  $region16: #{tipd_forward.6} parent=0 // pred_region
    _
  $region17: #{tipd_forward.6} parent=0 // pred_fallthru
    _
  %v18 = vld [vmem:[%s0] sm:$0xff]
  %v19 = vld [vmem:[%s0 + $0x8] sm:$0xff]
  %v20 = vld [vmem:[%s0 + $0x10] sm:$0xf]
  %v21 = vld [vmem:[%s0 + $0x14] sm:$0xff]
  %v22 = vld [vmem:[%s0 + $0x1c] sm:$0xff]
  %v23 = vld [vmem:[%s0 + $0x24] sm:$0xf]
  %v24 = vld [vmem:[%s0 + $0x28] sm:$0xff]
  %v25 = vld [vmem:[%s0 + $0x30] sm:$0xff]
  %v26 = vld [vmem:[%s0 + $0x38] sm:$0xf]
  %v27 = vld [vmem:[%s0 + $0x3c] sm:$0xff]
  %v28 = vld [vmem:[%s0 + $0x44] sm:$0xff]
  %v29 = vld [vmem:[%s0 + $0x4c] sm:$0xf]
  %v30 = vld [vmem:[%s0 + $0x50] sm:$0xff]
  %v31 = vld [vmem:[%s0 + $0x58] sm:$0xff]
  %v32 = vld [vmem:[%s0 + $0x60] sm:$0xf]
  %v33 = vld [vmem:[%s0 + $0x64] sm:$0xff]
  %v34 = vld [vmem:[%s0 + $0x6c] sm:$0xff]
  %v35 = vld [vmem:[%s0 + $0x74] sm:$0xf]
  %v36 = vld [vmem:[%s0 + $0x78] sm:$0xff]
  %v37 = vld [vmem:[%s0 + $0x80] sm:$0xff]
  %v38 = vld [vmem:[%s0 + $0x88] sm:$0xf]
  %v39 = vld [vmem:[%s0 + $0x8c] sm:$0xff]
  %v40 = vld [vmem:[%s0 + $0x94] sm:$0xff]
  %v41 = vld [vmem:[%s0 + $0x9c] sm:$0xf]
  %v42 = vld [vmem:[%s0 + $0xa0] sm:$0xff]
  %v43 = vld [vmem:[%s0 + $0xa8] sm:$0xff]
  %v44 = vld [vmem:[%s0 + $0xb0] sm:$0xf]
  %v45 = vld [vmem:[%s0 + $0xb4] sm:$0xff]
  %v46 = vld [vmem:[%s0 + $0xbc] sm:$0xff]
  %v47 = vld [vmem:[%s0 + $0xc4] sm:$0xf]
  %v48 = vld [vmem:[%s0 + $0xc8] sm:$0xff]
  %v49 = vld [vmem:[%s0 + $0xd0] sm:$0xff]
  %v50 = vld [vmem:[%s0 + $0xd8] sm:$0xf]
  %v51 = vld [vmem:[%s0 + $0xdc] sm:$0xff]
  %v52 = vld [vmem:[%s0 + $0xe4] sm:$0xff]
  %v53 = vld [vmem:[%s0 + $0xec] sm:$0xf]
  %v54 = vld [vmem:[%s0 + $0xf0] sm:$0xff]
  %v55 = vld [vmem:[%s0 + $0xf8] sm:$0xff]
  %v56 = vld [vmem:[%s0 + $0x100] sm:$0xf]
  %v57 = vld [vmem:[%s0 + $0x104] sm:$0xff]
  %v58 = vld [vmem:[%s0 + $0x10c] sm:$0xff]
  %v59 = vld [vmem:[%s0 + $0x114] sm:$0xf]
  %v60 = vld [vmem:[%s0 + $0x118] sm:$0xff]
  %v61 = vld [vmem:[%s0 + $0x120] sm:$0xff]
  %v62 = vld [vmem:[%s0 + $0x128] sm:$0xf]
  %v63 = vld [vmem:[%s0 + $0x12c] sm:$0xff]
  %v64 = vld [vmem:[%s0 + $0x134] sm:$0xff]
  %v65 = vld [vmem:[%s0 + $0x13c] sm:$0xf]
  %v66 = vld [vmem:[%s0 + $0x140] sm:$0xff]
  %v67 = vld [vmem:[%s0 + $0x148] sm:$0xff]
  %v68 = vld [vmem:[%s0 + $0x150] sm:$0xf]
  %v69 = vld [vmem:[%s0 + $0x154] sm:$0xff]
  %v70 = vld [vmem:[%s0 + $0x15c] sm:$0xff]
  %v71 = vld [vmem:[%s0 + $0x164] sm:$0xf]
  %v72 = vld [vmem:[%s0 + $0x168] sm:$0xff]
  %v73 = vld [vmem:[%s0 + $0x170] sm:$0xff]
  %v74 = vld [vmem:[%s0 + $0x178] sm:$0xf]
  %v75 = vld [vmem:[%s0 + $0x17c] sm:$0xff]
  %v76 = vld [vmem:[%s0 + $0x184] sm:$0xff]
  %v77 = vld [vmem:[%s0 + $0x18c] sm:$0xf]
  %v78 = vld [vmem:[%s0 + $0x190] sm:$0xff]
  %v79 = vld [vmem:[%s0 + $0x198] sm:$0xff]
  %v80 = vld [vmem:[%s0 + $0x1a0] sm:$0xf]
  %v81 = vld [vmem:[%s0 + $0x1a4] sm:$0xff]
  %v82 = vld [vmem:[%s0 + $0x1ac] sm:$0xff]
  %v83 = vld [vmem:[%s0 + $0x1b4] sm:$0xf]
  %v84 = vld [vmem:[%s1] sm:$0xf]
  %v85 = vld [vmem:[%s1 + $0x4] sm:$0xf]
  %v86 = vld [vmem:[%s1 + $0x8] sm:$0xf]
  %v87 = vld [vmem:[%s1 + $0xc] sm:$0xf]
  %v88 = vld [vmem:[%s1 + $0x10] sm:$0xf]
  %v89 = vld [vmem:[%s1 + $0x14] sm:$0xf]
  %v90 = vld [vmem:[%s1 + $0x18] sm:$0xf]
  %v91 = vld [vmem:[%s1 + $0x1c] sm:$0xf]
  %v92 = vld [vmem:[%s1 + $0x20] sm:$0xf]
  %v93 = vld [vmem:[%s1 + $0x24] sm:$0xf]
  %v94 = vld [vmem:[%s1 + $0x28] sm:$0xf]
  %v95 = vld [vmem:[%s1 + $0x2c] sm:$0xf]
  %v96 = vld [vmem:[%s1 + $0x30] sm:$0xf]
  %v97 = vld [vmem:[%s1 + $0x34] sm:$0xf]
  %v98 = vld [vmem:[%s1 + $0x38] sm:$0xf]
  %v99 = vld [vmem:[%s1 + $0x3c] sm:$0xf]
  %v100 = vld [vmem:[%s1 + $0x40] sm:$0xf]
  %v101 = vld [vmem:[%s1 + $0x44] sm:$0xf]
  %v102 = vld [vmem:[%s1 + $0x48] sm:$0xf]
  %v103 = vld [vmem:[%s1 + $0x4c] sm:$0xf]
  %v104 = vld [vmem:[%s1 + $0x50] sm:$0xf]
  %v105 = vld [vmem:[%s1 + $0x54] sm:$0xf]
  %v106 = vld [vmem:[%s1 + $0x58] sm:$0xf]
  %v107 = vld [vmem:[%s1 + $0x5c] sm:$0xf]
  %v108 = vld [vmem:[%s1 + $0x60] sm:$0xf]
  %v109 = vld [vmem:[%s1 + $0x64] sm:$0xf]
  %v110 = vld [vmem:[%s1 + $0x68] sm:$0xf]
  %v111 = vld [vmem:[%s1 + $0x6c] sm:$0xf]
  %v112 = vld [vmem:[%s1 + $0x70] sm:$0xf]
  %v113 = vld [vmem:[%s1 + $0x74] sm:$0xf]
  %v114 = vld [vmem:[%s1 + $0x78] sm:$0xf]
  %v115 = vld [vmem:[%s1 + $0x7c] sm:$0xf]
  %v116 = vld [vmem:[%s1 + $0x80] sm:$0xf]
  %v117 = vld [vmem:[%s1 + $0x84] sm:$0xf]
  %v118 = vld [vmem:[%s1 + $0x88] sm:$0xf]
  %v119 = vld [vmem:[%s1 + $0x8c] sm:$0xf]
  %v120 = vld [vmem:[%s1 + $0x90] sm:$0xf]
  %v121 = vld [vmem:[%s1 + $0x94] sm:$0xf]
  %v122 = vld [vmem:[%s1 + $0x98] sm:$0xf]
  %v123 = vld [vmem:[%s1 + $0x9c] sm:$0xf]
  %v124 = vld [vmem:[%s1 + $0xa0] sm:$0xf]
  %v125 = vld [vmem:[%s1 + $0xa4] sm:$0xf]
  %v126 = vld [vmem:[%s1 + $0xa8] sm:$0xf]
  %v127 = vld [vmem:[%s1 + $0xac] sm:$0xf]
  %v128 = vld [vmem:[%s1 + $0xb0] sm:$0xf]
  %v129 = vld [vmem:[%s1 + $0xb4] sm:$0xf]
  %v130 = vld [vmem:[%s1 + $0xb8] sm:$0xf]
  %v131 = vld [vmem:[%s1 + $0xbc] sm:$0xf]
  %v132 = vld [vmem:[%s1 + $0xc0] sm:$0xf]
  %v133 = vld [vmem:[%s1 + $0xc4] sm:$0xf]
  %v134 = vld [vmem:[%s1 + $0xc8] sm:$0xf]
  %v135 = vld [vmem:[%s1 + $0xcc] sm:$0xf]
  %v136 = vld [vmem:[%s1 + $0xd0] sm:$0xf]
  %v137 = vld [vmem:[%s1 + $0xd4] sm:$0xf]
  %v138 = vld [vmem:[%s1 + $0xd8] sm:$0xf]
  %v139 = vld [vmem:[%s1 + $0xdc] sm:$0xf]
  %v140 = vld [vmem:[%s1 + $0xe0] sm:$0xf]
  %v141 = vld [vmem:[%s1 + $0xe4] sm:$0xf]
  %v142 = vld [vmem:[%s1 + $0xe8] sm:$0xf]
  %v143 = vld [vmem:[%s1 + $0xec] sm:$0xf]
  %v144 = vld [vmem:[%s1 + $0xf0] sm:$0xf]
  %v145 = vld [vmem:[%s1 + $0xf4] sm:$0xf]
  %v146 = vld [vmem:[%s1 + $0xf8] sm:$0xf]
  %v147 = vld [vmem:[%s1 + $0xfc] sm:$0xf]
  %v148 = vld [vmem:[%s1 + $0x100] sm:$0xf]
  %v149 = vld [vmem:[%s1 + $0x104] sm:$0xf]
  %v150 = vld [vmem:[%s1 + $0x108] sm:$0xf]
  %v151 = vld [vmem:[%s1 + $0x10c] sm:$0xf]
  %v152 = vld [vmem:[%s1 + $0x110] sm:$0xf]
  %v153 = vld [vmem:[%s1 + $0x114] sm:$0xf]
  %v154 = vld [vmem:[%s1 + $0x118] sm:$0xf]
  %v155 = vld [vmem:[%s1 + $0x11c] sm:$0xf]
  %v222 = vunpack.c.l.b16 %v18
  %v223 = vunpack.c.h.b16 %v18
  %v224 = vunpack.c.l.b16 %v19
  %v225 = vunpack.c.h.b16 %v19
  %v226 = vunpack.c.l.b16 %v20
  %v227 = vunpack.c.l.b16 %v21
  %v228 = vunpack.c.h.b16 %v21
  %v229 = vunpack.c.l.b16 %v22
  %v230 = vunpack.c.h.b16 %v22
  %v231 = vunpack.c.l.b16 %v23
  %v232 = vunpack.c.l.b16 %v24
  %v233 = vunpack.c.h.b16 %v24
  %v234 = vunpack.c.l.b16 %v25
  %v235 = vunpack.c.h.b16 %v25
  %v236 = vunpack.c.l.b16 %v26
  %v237 = vunpack.c.l.b16 %v27
  %v238 = vunpack.c.h.b16 %v27
  %v239 = vunpack.c.l.b16 %v28
  %v240 = vunpack.c.h.b16 %v28
  %v241 = vunpack.c.l.b16 %v29
  %v242 = vunpack.c.l.b16 %v30
  %v243 = vunpack.c.h.b16 %v30
  %v244 = vunpack.c.l.b16 %v31
  %v245 = vunpack.c.h.b16 %v31
  %v246 = vunpack.c.l.b16 %v32
  %v247 = vunpack.c.l.b16 %v33
  %v248 = vunpack.c.h.b16 %v33
  %v249 = vunpack.c.l.b16 %v34
  %v250 = vunpack.c.h.b16 %v34
  %v251 = vunpack.c.l.b16 %v35
  %v252 = vunpack.c.l.b16 %v36
  %v253 = vunpack.c.h.b16 %v36
  %v254 = vunpack.c.l.b16 %v37
  %v255 = vunpack.c.h.b16 %v37
  %v256 = vunpack.c.l.b16 %v38
  %v257 = vunpack.c.l.b16 %v39
  %v258 = vunpack.c.h.b16 %v39
  %v259 = vunpack.c.l.b16 %v40
  %v260 = vunpack.c.h.b16 %v40
  %v261 = vunpack.c.l.b16 %v41
  %v262 = vunpack.c.l.b16 %v42
  %v263 = vunpack.c.h.b16 %v42
  %v264 = vunpack.c.l.b16 %v43
  %v265 = vunpack.c.h.b16 %v43
  %v266 = vunpack.c.l.b16 %v44
  %v267 = vunpack.c.l.b16 %v45
  %v268 = vunpack.c.h.b16 %v45
  %v269 = vunpack.c.l.b16 %v46
  %v270 = vunpack.c.h.b16 %v46
  %v271 = vunpack.c.l.b16 %v47
  %v272 = vunpack.c.l.b16 %v48
  %v273 = vunpack.c.h.b16 %v48
  %v274 = vunpack.c.l.b16 %v49
  %v275 = vunpack.c.h.b16 %v49
  %v276 = vunpack.c.l.b16 %v50
  %v277 = vunpack.c.l.b16 %v51
  %v278 = vunpack.c.h.b16 %v51
  %v279 = vunpack.c.l.b16 %v52
  %v280 = vunpack.c.h.b16 %v52
  %v281 = vunpack.c.l.b16 %v53
  %v282 = vunpack.c.l.b16 %v54
  %v283 = vunpack.c.h.b16 %v54
  %v284 = vunpack.c.l.b16 %v55
  %v285 = vunpack.c.h.b16 %v55
  %v286 = vunpack.c.l.b16 %v56
  %v287 = vunpack.c.l.b16 %v57
  %v288 = vunpack.c.h.b16 %v57
  %v289 = vunpack.c.l.b16 %v58
  %v290 = vunpack.c.h.b16 %v58
  %v291 = vunpack.c.l.b16 %v59
  %v292 = vunpack.c.l.b16 %v60
  %v293 = vunpack.c.h.b16 %v60
  %v294 = vunpack.c.l.b16 %v61
  %v295 = vunpack.c.h.b16 %v61
  %v296 = vunpack.c.l.b16 %v62
  %v297 = vunpack.c.l.b16 %v63
  %v298 = vunpack.c.h.b16 %v63
  %v299 = vunpack.c.l.b16 %v64
  %v300 = vunpack.c.h.b16 %v64
  %v301 = vunpack.c.l.b16 %v65
  %v302 = vunpack.c.l.b16 %v66
  %v303 = vunpack.c.h.b16 %v66
  %v304 = vunpack.c.l.b16 %v67
  %v305 = vunpack.c.h.b16 %v67
  %v306 = vunpack.c.l.b16 %v68
  %v307 = vunpack.c.l.b16 %v69
  %v308 = vunpack.c.h.b16 %v69
  %v309 = vunpack.c.l.b16 %v70
  %v310 = vunpack.c.h.b16 %v70
  %v311 = vunpack.c.l.b16 %v71
  %v312 = vunpack.c.l.b16 %v72
  %v313 = vunpack.c.h.b16 %v72
  %v314 = vunpack.c.l.b16 %v73
  %v315 = vunpack.c.h.b16 %v73
  %v316 = vunpack.c.l.b16 %v74
  %v317 = vunpack.c.l.b16 %v75
  %v318 = vunpack.c.h.b16 %v75
  %v319 = vunpack.c.l.b16 %v76
  %v320 = vunpack.c.h.b16 %v76
  %v321 = vunpack.c.l.b16 %v77
  %v322 = vunpack.c.l.b16 %v78
  %v323 = vunpack.c.h.b16 %v78
  %v324 = vunpack.c.l.b16 %v79
  %v325 = vunpack.c.h.b16 %v79
  %v326 = vunpack.c.l.b16 %v80
  %v327 = vunpack.c.l.b16 %v81
  %v328 = vunpack.c.h.b16 %v81
  %v329 = vunpack.c.l.b16 %v82
  %v330 = vunpack.c.h.b16 %v82
  %v331 = vunpack.c.l.b16 %v83
  %v332 = vpack.c.b16 %v227, %v222
  %v333 = vpack.c.b16 %v228, %v223
  %v334 = vpack.c.b16 %v229, %v224
  %v335 = vpack.c.b16 %v230, %v225
  %v336 = vpack.c.b16 %v231, %v226
  %v337 = vpack.c.b16 %v237, %v232
  %v338 = vpack.c.b16 %v238, %v233
  %v339 = vpack.c.b16 %v239, %v234
  %v340 = vpack.c.b16 %v240, %v235
  %v341 = vpack.c.b16 %v241, %v236
  %v342 = vpack.c.b16 %v247, %v242
  %v343 = vpack.c.b16 %v248, %v243
  %v344 = vpack.c.b16 %v249, %v244
  %v345 = vpack.c.b16 %v250, %v245
  %v346 = vpack.c.b16 %v251, %v246
  %v347 = vpack.c.b16 %v257, %v252
  %v348 = vpack.c.b16 %v258, %v253
  %v349 = vpack.c.b16 %v259, %v254
  %v350 = vpack.c.b16 %v260, %v255
  %v351 = vpack.c.b16 %v261, %v256
  %v352 = vpack.c.b16 %v267, %v262
  %v353 = vpack.c.b16 %v268, %v263
  %v354 = vpack.c.b16 %v269, %v264
  %v355 = vpack.c.b16 %v270, %v265
  %v356 = vpack.c.b16 %v271, %v266
  %v357 = vpack.c.b16 %v277, %v272
  %v358 = vpack.c.b16 %v278, %v273
  %v359 = vpack.c.b16 %v279, %v274
  %v360 = vpack.c.b16 %v280, %v275
  %v361 = vpack.c.b16 %v281, %v276
  %v362 = vpack.c.b16 %v287, %v282
  %v363 = vpack.c.b16 %v288, %v283
  %v364 = vpack.c.b16 %v289, %v284
  %v365 = vpack.c.b16 %v290, %v285
  %v366 = vpack.c.b16 %v291, %v286
  %v367 = vpack.c.b16 %v297, %v292
  %v368 = vpack.c.b16 %v298, %v293
  %v369 = vpack.c.b16 %v299, %v294
  %v370 = vpack.c.b16 %v300, %v295
  %v371 = vpack.c.b16 %v301, %v296
  %v372 = vpack.c.b16 %v307, %v302
  %v373 = vpack.c.b16 %v308, %v303
  %v374 = vpack.c.b16 %v309, %v304
  %v375 = vpack.c.b16 %v310, %v305
  %v376 = vpack.c.b16 %v311, %v306
  %v377 = vpack.c.b16 %v317, %v312
  %v378 = vpack.c.b16 %v318, %v313
  %v379 = vpack.c.b16 %v319, %v314
  %v380 = vpack.c.b16 %v320, %v315
  %v381 = vpack.c.b16 %v321, %v316
  %v382 = vpack.c.b16 %v327, %v322
  %v383 = vpack.c.b16 %v328, %v323
  %v384 = vpack.c.b16 %v329, %v324
  %v385 = vpack.c.b16 %v330, %v325
  %v386 = vpack.c.b16 %v331, %v326
  %v503 = vunpack.c.l.b16 %v84
  %v504 = vunpack.c.l.b16 %v85
  %v505 = vunpack.c.l.b16 %v86
  %v506 = vunpack.c.l.b16 %v87
  %v507 = vunpack.c.l.b16 %v88
  %v508 = vunpack.c.l.b16 %v89
  %v509 = vunpack.c.l.b16 %v90
  %v510 = vunpack.c.l.b16 %v91
  %v511 = vunpack.c.l.b16 %v92
  %v512 = vunpack.c.l.b16 %v93
  %v513 = vunpack.c.l.b16 %v94
  %v514 = vunpack.c.l.b16 %v95
  %v515 = vunpack.c.l.b16 %v96
  %v516 = vunpack.c.l.b16 %v97
  %v517 = vunpack.c.l.b16 %v98
  %v518 = vunpack.c.l.b16 %v99
  %v519 = vunpack.c.l.b16 %v100
  %v520 = vunpack.c.l.b16 %v101
  %v521 = vunpack.c.l.b16 %v102
  %v522 = vunpack.c.l.b16 %v103
  %v523 = vunpack.c.l.b16 %v104
  %v524 = vunpack.c.l.b16 %v105
  %v525 = vunpack.c.l.b16 %v106
  %v526 = vunpack.c.l.b16 %v107
  %v527 = vunpack.c.l.b16 %v108
  %v528 = vunpack.c.l.b16 %v109
  %v529 = vunpack.c.l.b16 %v110
  %v530 = vunpack.c.l.b16 %v111
  %v531 = vunpack.c.l.b16 %v112
  %v532 = vunpack.c.l.b16 %v113
  %v533 = vunpack.c.l.b16 %v114
  %v534 = vunpack.c.l.b16 %v115
  %v535 = vunpack.c.l.b16 %v116
  %v536 = vunpack.c.l.b16 %v117
  %v537 = vunpack.c.l.b16 %v118
  %v538 = vunpack.c.l.b16 %v119
  %v539 = vunpack.c.l.b16 %v120
  %v540 = vunpack.c.l.b16 %v121
  %v541 = vunpack.c.l.b16 %v122
  %v542 = vunpack.c.l.b16 %v123
  %v543 = vunpack.c.l.b16 %v124
  %v544 = vunpack.c.l.b16 %v125
  %v545 = vunpack.c.l.b16 %v126
  %v546 = vunpack.c.l.b16 %v127
  %v547 = vunpack.c.l.b16 %v128
  %v548 = vunpack.c.l.b16 %v129
  %v549 = vunpack.c.l.b16 %v130
  %v550 = vunpack.c.l.b16 %v131
  %v551 = vunpack.c.l.b16 %v132
  %v552 = vunpack.c.l.b16 %v133
  %v553 = vunpack.c.l.b16 %v134
  %v554 = vunpack.c.l.b16 %v135
  %v555 = vunpack.c.l.b16 %v136
  %v556 = vunpack.c.l.b16 %v137
  %v557 = vunpack.c.l.b16 %v138
  %v558 = vunpack.c.l.b16 %v139
  %v559 = vunpack.c.l.b16 %v140
  %v560 = vunpack.c.l.b16 %v141
  %v561 = vunpack.c.l.b16 %v142
  %v562 = vunpack.c.l.b16 %v143
  %v563 = vunpack.c.l.b16 %v144
  %v564 = vunpack.c.l.b16 %v145
  %v565 = vunpack.c.l.b16 %v146
  %v566 = vunpack.c.l.b16 %v147
  %v567 = vunpack.c.l.b16 %v148
  %v568 = vunpack.c.l.b16 %v149
  %v569 = vunpack.c.l.b16 %v150
  %v570 = vunpack.c.l.b16 %v151
  %v571 = vunpack.c.l.b16 %v152
  %v572 = vunpack.c.l.b16 %v153
  %v573 = vunpack.c.l.b16 %v154
  %v574 = vunpack.c.l.b16 %v155
  %v575 = vpack.c.b16 %v504, %v503
  %v576 = vpack.c.b16 %v506, %v505
  %v577 = vpack.c.b16 %v508, %v507
  %v578 = vpack.c.b16 %v510, %v509
  %v579 = vpack.c.b16 %v512, %v511
  %v580 = vpack.c.b16 %v514, %v513
  %v581 = vpack.c.b16 %v516, %v515
  %v582 = vpack.c.b16 %v518, %v517
  %v583 = vpack.c.b16 %v520, %v519
  %v584 = vpack.c.b16 %v522, %v521
  %v585 = vpack.c.b16 %v524, %v523
  %v586 = vpack.c.b16 %v526, %v525
  %v587 = vpack.c.b16 %v528, %v527
  %v588 = vpack.c.b16 %v530, %v529
  %v589 = vpack.c.b16 %v532, %v531
  %v590 = vpack.c.b16 %v534, %v533
  %v591 = vpack.c.b16 %v536, %v535
  %v592 = vpack.c.b16 %v538, %v537
  %v593 = vpack.c.b16 %v540, %v539
  %v594 = vpack.c.b16 %v542, %v541
  %v595 = vpack.c.b16 %v544, %v543
  %v596 = vpack.c.b16 %v546, %v545
  %v597 = vpack.c.b16 %v548, %v547
  %v598 = vpack.c.b16 %v550, %v549
  %v599 = vpack.c.b16 %v552, %v551
  %v600 = vpack.c.b16 %v554, %v553
  %v601 = vpack.c.b16 %v556, %v555
  %v602 = vpack.c.b16 %v558, %v557
  %v603 = vpack.c.b16 %v560, %v559
  %v604 = vpack.c.b16 %v562, %v561
  %v605 = vpack.c.b16 %v564, %v563
  %v606 = vpack.c.b16 %v566, %v565
  %v607 = vpack.c.b16 %v568, %v567
  %v608 = vpack.c.b16 %v570, %v569
  %v609 = vpack.c.b16 %v572, %v571
  %v610 = vpack.c.b16 %v574, %v573
  %vm647 = vcmask 523264
  %v649 = vsel %vm647, %v336, 0
  %v652 = vsel %vm647, %v341, 0
  %v655 = vsel %vm647, %v346, 0
  %v658 = vsel %vm647, %v351, 0
  %v661 = vsel %vm647, %v356, 0
  %v664 = vsel %vm647, %v361, 0
  %v667 = vsel %vm647, %v366, 0
  %v670 = vsel %vm647, %v371, 0
  %v673 = vsel %vm647, %v376, 0
  %v676 = vsel %vm647, %v381, 0
  %v679 = vsel %vm647, %v386, 0
  %681 = vmatprep.subr.bf16.mxu0 0
  %682 = vmatpush1.bf16.msra.mxu0 %v575
  %683 = vmatprep.subr.bf16.mxu0 0
  %684 = vmatpush1.bf16.msra.mxu0 %v576
  %685 = vmatprep.subr.bf16.mxu0 0
  %686 = vmatpush1.bf16.msra.mxu0 %v577
  %687 = vmatprep.subr.bf16.mxu0 0
  %688 = vmatpush1.bf16.msra.mxu0 %v578
  %689 = vmatprep.subr.bf16.mxu0 0
  %690 = vmatpush1.bf16.msra.mxu0 %v579
  %691 = vmatprep.subr.bf16.mxu0 0
  %692 = vmatpush1.bf16.msra.mxu0 %v580
  %693 = vmatprep.subr.bf16.mxu0 0
  %694 = vmatpush1.bf16.msra.mxu0 %v581
  %695 = vmatprep.subr.bf16.mxu0 0
  %696 = vmatpush1.bf16.msra.mxu0 %v582
  %697 = vmatprep.subr.bf16.mxu0 0
  %698 = vmatpush1.bf16.msra.mxu0 %v583
  %699 = vmatprep.subr.bf16.mxu0 0
  %700 = vmatpush1.bf16.msra.mxu0 %v584
  %701 = vmatprep.subr.bf16.mxu0 0
  %702 = vmatpush1.bf16.msra.mxu0 %v585
  %703 = vmatprep.subr.bf16.mxu0 0
  %704 = vmatpush1.bf16.msra.mxu0 %v586
  %705 = vmatprep.subr.bf16.mxu0 0
  %706 = vmatpush1.bf16.msra.mxu0 %v587
  %707 = vmatprep.subr.bf16.mxu0 0
  %708 = vmatpush1.bf16.msra.mxu0 %v588
  %709 = vmatprep.subr.bf16.mxu0 0
  %710 = vmatpush1.bf16.msra.mxu0 %v589
  %711 = vmatprep.subr.bf16.mxu0 0
  %712 = vmatpush1.bf16.msra.mxu0 %v590
  %713 = vmatprep.mubr.bf16.mxu0 %v333
  %714 = vmatmul.mubr.bf16.gmra.mrb[0].mxu0 %v332
  %v715 = vpop.f32.mrb[0].mxu0
  %v716 = vadd.f32 0.0, %v715
  %v717 = vpop.f32.mrb[0].mxu0
  %v718 = vpop.f32.mrb[0].mxu0
  %v719 = vadd.f32 0.0, %v718
  %v720 = vpop.f32.mrb[0].mxu0
  %721 = vmatprep.mubr.bf16.mxu0 %v338
  %722 = vmatmul.mubr.bf16.gmra.mrb[0].mxu0 %v337
  %v723 = vpop.f32.mrb[0].mxu0
  %v724 = vadd.f32 0.0, %v723
  %v725 = vpop.f32.mrb[0].mxu0
  %v726 = vpop.f32.mrb[0].mxu0
  %v727 = vadd.f32 0.0, %v726
  %v728 = vpop.f32.mrb[0].mxu0
  %729 = vmatprep.mubr.bf16.mxu0 %v343
  %730 = vmatmul.mubr.bf16.gmra.mrb[0].mxu0 %v342
  %v731 = vpop.f32.mrb[0].mxu0
  %v732 = vadd.f32 0.0, %v731
  %v733 = vpop.f32.mrb[0].mxu0
  %v734 = vpop.f32.mrb[0].mxu0
  %v735 = vadd.f32 0.0, %v734
  %v736 = vpop.f32.mrb[0].mxu0
  %737 = vmatprep.mubr.bf16.mxu0 %v348
  %738 = vmatmul.mubr.bf16.gmra.mrb[0].mxu0 %v347
  %v739 = vpop.f32.mrb[0].mxu0
  %v740 = vadd.f32 0.0, %v739
  %v741 = vpop.f32.mrb[0].mxu0
  %v742 = vpop.f32.mrb[0].mxu0
  %v743 = vadd.f32 0.0, %v742
  %v744 = vpop.f32.mrb[0].mxu0
  %745 = vmatprep.mubr.bf16.mxu0 %v353
  %746 = vmatmul.mubr.bf16.gmra.mrb[0].mxu0 %v352
  %v747 = vpop.f32.mrb[0].mxu0
  %v748 = vadd.f32 0.0, %v747
  %v749 = vpop.f32.mrb[0].mxu0
  %v750 = vpop.f32.mrb[0].mxu0
  %v751 = vadd.f32 0.0, %v750
  %v752 = vpop.f32.mrb[0].mxu0
  %753 = vmatprep.mubr.bf16.mxu0 %v358
  %754 = vmatmul.mubr.bf16.gmra.mrb[0].mxu0 %v357
  %v755 = vpop.f32.mrb[0].mxu0
  %v756 = vadd.f32 0.0, %v755
  %v757 = vpop.f32.mrb[0].mxu0
  %v758 = vpop.f32.mrb[0].mxu0
  %v759 = vadd.f32 0.0, %v758
  %v760 = vpop.f32.mrb[0].mxu0
  %761 = vmatprep.mubr.bf16.mxu0 %v363
  %762 = vmatmul.mubr.bf16.gmra.mrb[0].mxu0 %v362
  %v763 = vpop.f32.mrb[0].mxu0
  %v764 = vadd.f32 0.0, %v763
  %v765 = vpop.f32.mrb[0].mxu0
  %v766 = vpop.f32.mrb[0].mxu0
  %v767 = vadd.f32 0.0, %v766
  %v768 = vpop.f32.mrb[0].mxu0
  %769 = vmatprep.mubr.bf16.mxu0 %v368
  %770 = vmatmul.mubr.bf16.gmra.mrb[0].mxu0 %v367
  %v771 = vpop.f32.mrb[0].mxu0
  %v772 = vadd.f32 0.0, %v771
  %v773 = vpop.f32.mrb[0].mxu0
  %v774 = vpop.f32.mrb[0].mxu0
  %v775 = vadd.f32 0.0, %v774
  %v776 = vpop.f32.mrb[0].mxu0
  %777 = vmatprep.mubr.bf16.mxu0 %v373
  %778 = vmatmul.mubr.bf16.gmra.mrb[0].mxu0 %v372
  %v779 = vpop.f32.mrb[0].mxu0
  %v780 = vadd.f32 0.0, %v779
  %v781 = vpop.f32.mrb[0].mxu0
  %v782 = vpop.f32.mrb[0].mxu0
  %v783 = vadd.f32 0.0, %v782
  %v784 = vpop.f32.mrb[0].mxu0
  %785 = vmatprep.mubr.bf16.mxu0 %v378
  %786 = vmatmul.mubr.bf16.gmra.mrb[0].mxu0 %v377
  %v787 = vpop.f32.mrb[0].mxu0
  %v788 = vadd.f32 0.0, %v787
  %v789 = vpop.f32.mrb[0].mxu0
  %v790 = vpop.f32.mrb[0].mxu0
  %v791 = vadd.f32 0.0, %v790
  %v792 = vpop.f32.mrb[0].mxu0
  %793 = vmatprep.mubr.bf16.mxu0 %v383
  %794 = vmatmul.mubr.bf16.gmra.mrb[0].mxu0 %v382
  %v795 = vpop.f32.mrb[0].mxu0
  %v796 = vadd.f32 0.0, %v795
  %v797 = vpop.f32.mrb[0].mxu0
  %v798 = vpop.f32.mrb[0].mxu0
  %v799 = vpop.f32.mrb[0].mxu0
  %800 = vdwg.mxu0
  %801 = vmatprep.subr.bf16.mxu0 0
  %802 = vmatpush1.bf16.msra.mxu0 %v591
  %803 = vmatprep.subr.bf16.mxu0 0
  %804 = vmatpush1.bf16.msra.mxu0 %v592
  %805 = vmatprep.subr.bf16.mxu0 0
  %806 = vmatpush1.bf16.msra.mxu0 %v593
  %807 = vmatprep.subr.bf16.mxu0 0
  %808 = vmatpush1.bf16.msra.mxu0 %v594
  %809 = vmatprep.subr.bf16.mxu0 0
  %810 = vmatpush1.bf16.msra.mxu0 %v595
  %811 = vmatprep.subr.bf16.mxu0 0
  %812 = vmatpush1.bf16.msra.mxu0 %v596
  %813 = vmatprep.subr.bf16.mxu0 0
  %814 = vmatpush1.bf16.msra.mxu0 %v597
  %815 = vmatprep.subr.bf16.mxu0 0
  %816 = vmatpush1.bf16.msra.mxu0 %v598
  %817 = vmatprep.subr.bf16.mxu0 0
  %818 = vmatpush1.bf16.msra.mxu0 %v599
  %819 = vmatprep.subr.bf16.mxu0 0
  %820 = vmatpush1.bf16.msra.mxu0 %v600
  %821 = vmatprep.subr.bf16.mxu0 0
  %822 = vmatpush1.bf16.msra.mxu0 %v601
  %823 = vmatprep.subr.bf16.mxu0 0
  %824 = vmatpush1.bf16.msra.mxu0 %v602
  %825 = vmatprep.subr.bf16.mxu0 0
  %826 = vmatpush1.bf16.msra.mxu0 %v603
  %827 = vmatprep.subr.bf16.mxu0 0
  %828 = vmatpush1.bf16.msra.mxu0 %v604
  %829 = vmatprep.subr.bf16.mxu0 0
  %830 = vmatpush1.bf16.msra.mxu0 %v605
  %831 = vmatprep.subr.bf16.mxu0 0
  %832 = vmatpush1.bf16.msra.mxu0 %v606
  %833 = vmatprep.mubr.bf16.mxu0 %v335
  %834 = vmatmul.mubr.bf16.gmra.mrb[0].mxu0 %v334
  %v835 = vpop.f32.mrb[0].mxu0
  %v836 = vadd.f32 %v716, %v835
  %v837 = vpop.f32.mrb[0].mxu0
  %v838 = vpop.f32.mrb[0].mxu0
  %v839 = vadd.f32 %v719, %v838
  %v840 = vpop.f32.mrb[0].mxu0
  %841 = vmatprep.mubr.bf16.mxu0 %v340
  %842 = vmatmul.mubr.bf16.gmra.mrb[0].mxu0 %v339
  %v843 = vpop.f32.mrb[0].mxu0
  %v844 = vadd.f32 %v724, %v843
  %v845 = vpop.f32.mrb[0].mxu0
  %v846 = vpop.f32.mrb[0].mxu0
  %v847 = vadd.f32 %v727, %v846
  %v848 = vpop.f32.mrb[0].mxu0
  %849 = vmatprep.mubr.bf16.mxu0 %v345
  %850 = vmatmul.mubr.bf16.gmra.mrb[0].mxu0 %v344
  %v851 = vpop.f32.mrb[0].mxu0
  %v852 = vadd.f32 %v732, %v851
  %v853 = vpop.f32.mrb[0].mxu0
  %v854 = vpop.f32.mrb[0].mxu0
  %v855 = vadd.f32 %v735, %v854
  %v856 = vpop.f32.mrb[0].mxu0
  %857 = vmatprep.mubr.bf16.mxu0 %v350
  %858 = vmatmul.mubr.bf16.gmra.mrb[0].mxu0 %v349
  %v859 = vpop.f32.mrb[0].mxu0
  %v860 = vadd.f32 %v740, %v859
  %v861 = vpop.f32.mrb[0].mxu0
  %v862 = vpop.f32.mrb[0].mxu0
  %v863 = vadd.f32 %v743, %v862
  %v864 = vpop.f32.mrb[0].mxu0
  %865 = vmatprep.mubr.bf16.mxu0 %v355
  %866 = vmatmul.mubr.bf16.gmra.mrb[0].mxu0 %v354
  %v867 = vpop.f32.mrb[0].mxu0
  %v868 = vadd.f32 %v748, %v867
  %v869 = vpop.f32.mrb[0].mxu0
  %v870 = vpop.f32.mrb[0].mxu0
  %v871 = vadd.f32 %v751, %v870
  %v872 = vpop.f32.mrb[0].mxu0
  %873 = vmatprep.mubr.bf16.mxu0 %v360
  %874 = vmatmul.mubr.bf16.gmra.mrb[0].mxu0 %v359
  %v875 = vpop.f32.mrb[0].mxu0
  %v876 = vadd.f32 %v756, %v875
  %v877 = vpop.f32.mrb[0].mxu0
  %v878 = vpop.f32.mrb[0].mxu0
  %v879 = vadd.f32 %v759, %v878
  %v880 = vpop.f32.mrb[0].mxu0
  %881 = vmatprep.mubr.bf16.mxu0 %v365
  %882 = vmatmul.mubr.bf16.gmra.mrb[0].mxu0 %v364
  %v883 = vpop.f32.mrb[0].mxu0
  %v884 = vadd.f32 %v764, %v883
  %v885 = vpop.f32.mrb[0].mxu0
  %v886 = vpop.f32.mrb[0].mxu0
  %v887 = vadd.f32 %v767, %v886
  %v888 = vpop.f32.mrb[0].mxu0
  %889 = vmatprep.mubr.bf16.mxu0 %v370
  %890 = vmatmul.mubr.bf16.gmra.mrb[0].mxu0 %v369
  %v891 = vpop.f32.mrb[0].mxu0
  %v892 = vadd.f32 %v772, %v891
  %v893 = vpop.f32.mrb[0].mxu0
  %v894 = vpop.f32.mrb[0].mxu0
  %v895 = vadd.f32 %v775, %v894
  %v896 = vpop.f32.mrb[0].mxu0
  %897 = vmatprep.mubr.bf16.mxu0 %v375
  %898 = vmatmul.mubr.bf16.gmra.mrb[0].mxu0 %v374
  %v899 = vpop.f32.mrb[0].mxu0
  %v900 = vadd.f32 %v780, %v899
  %v901 = vpop.f32.mrb[0].mxu0
  %v902 = vpop.f32.mrb[0].mxu0
  %v903 = vadd.f32 %v783, %v902
  %v904 = vpop.f32.mrb[0].mxu0
  %905 = vmatprep.mubr.bf16.mxu0 %v380
  %906 = vmatmul.mubr.bf16.gmra.mrb[0].mxu0 %v379
  %v907 = vpop.f32.mrb[0].mxu0
  %v908 = vadd.f32 %v788, %v907
  %v909 = vpop.f32.mrb[0].mxu0
  %v910 = vpop.f32.mrb[0].mxu0
  %v911 = vadd.f32 %v791, %v910
  %v912 = vpop.f32.mrb[0].mxu0
  %913 = vmatprep.mubr.bf16.mxu0 %v385
  %914 = vmatmul.mubr.bf16.gmra.mrb[0].mxu0 %v384
  %v915 = vpop.f32.mrb[0].mxu0
  %v916 = vadd.f32 %v796, %v915
  %v917 = vpop.f32.mrb[0].mxu0
  %v918 = vpop.f32.mrb[0].mxu0
  %v919 = vpop.f32.mrb[0].mxu0
  %920 = vdwg.mxu0
  %921 = vmatprep.subr.bf16.mxu0 0
  %922 = vmatpush1.bf16.msra.mxu0 %v607
  %923 = vmatprep.subr.bf16.mxu0 0
  %924 = vmatpush1.bf16.msra.mxu0 %v608
  %925 = vmatprep.subr.bf16.mxu0 0
  %926 = vmatpush1.bf16.msra.mxu0 %v609
  %927 = vmatprep.subr.bf16.mxu0 0
  %928 = vmatpush1.bf16.msra.mxu0 %v610
  %929 = vmatprep.subr.bf16.mxu0 0
  %930 = vmatpush1.bf16.msra.mxu0 0
  %931 = vmatprep.subr.bf16.mxu0 0
  %932 = vmatpush1.bf16.msra.mxu0 0
  %933 = vmatprep.subr.bf16.mxu0 0
  %934 = vmatpush1.bf16.msra.mxu0 0
  %935 = vmatprep.subr.bf16.mxu0 0
  %936 = vmatpush1.bf16.msra.mxu0 0
  %937 = vmatprep.subr.bf16.mxu0 0
  %938 = vmatpush1.bf16.msra.mxu0 0
  %939 = vmatprep.subr.bf16.mxu0 0
  %940 = vmatpush1.bf16.msra.mxu0 0
  %941 = vmatprep.subr.bf16.mxu0 0
  %942 = vmatpush1.bf16.msra.mxu0 0
  %943 = vmatprep.subr.bf16.mxu0 0
  %944 = vmatpush1.bf16.msra.mxu0 0
  %945 = vmatprep.subr.bf16.mxu0 0
  %946 = vmatpush1.bf16.msra.mxu0 0
  %947 = vmatprep.subr.bf16.mxu0 0
  %948 = vmatpush1.bf16.msra.mxu0 0
  %949 = vmatprep.subr.bf16.mxu0 0
  %950 = vmatpush1.bf16.msra.mxu0 0
  %951 = vmatprep.subr.bf16.mxu0 0
  %952 = vmatpush1.bf16.msra.mxu0 0
  %953 = vmatprep.mubr.bf16.mxu0 0
  %954 = vmatmul.mubr.bf16.gmra.mrb[0].mxu0 %v649
  %v955 = vpop.f32.mrb[0].mxu0
  %v956 = vadd.f32 %v836, %v955
  %v957 = vpop.f32.mrb[0].mxu0
  %v958 = vpop.f32.mrb[0].mxu0
  %v959 = vadd.f32 %v839, %v958
  %v960 = vpop.f32.mrb[0].mxu0
  %961 = vmatprep.mubr.bf16.mxu0 0
  %962 = vmatmul.mubr.bf16.gmra.mrb[0].mxu0 %v652
  %v963 = vpop.f32.mrb[0].mxu0
  %v964 = vadd.f32 %v844, %v963
  %v965 = vpop.f32.mrb[0].mxu0
  %v966 = vpop.f32.mrb[0].mxu0
  %v967 = vadd.f32 %v847, %v966
  %v968 = vpop.f32.mrb[0].mxu0
  %969 = vmatprep.mubr.bf16.mxu0 0
  %970 = vmatmul.mubr.bf16.gmra.mrb[0].mxu0 %v655
  %v971 = vpop.f32.mrb[0].mxu0
  %v972 = vadd.f32 %v852, %v971
  %v973 = vpop.f32.mrb[0].mxu0
  %v974 = vpop.f32.mrb[0].mxu0
  %v975 = vadd.f32 %v855, %v974
  %v976 = vpop.f32.mrb[0].mxu0
  %977 = vmatprep.mubr.bf16.mxu0 0
  %978 = vmatmul.mubr.bf16.gmra.mrb[0].mxu0 %v658
  %v979 = vpop.f32.mrb[0].mxu0
  %v980 = vadd.f32 %v860, %v979
  %v981 = vpop.f32.mrb[0].mxu0
  %v982 = vpop.f32.mrb[0].mxu0
  %v983 = vadd.f32 %v863, %v982
  %v984 = vpop.f32.mrb[0].mxu0
  %985 = vmatprep.mubr.bf16.mxu0 0
  %986 = vmatmul.mubr.bf16.gmra.mrb[0].mxu0 %v661
  %v987 = vpop.f32.mrb[0].mxu0
  %v988 = vadd.f32 %v868, %v987
  %v989 = vpop.f32.mrb[0].mxu0
  %v990 = vpop.f32.mrb[0].mxu0
  %v991 = vadd.f32 %v871, %v990
  %v992 = vpop.f32.mrb[0].mxu0
  %993 = vmatprep.mubr.bf16.mxu0 0
  %994 = vmatmul.mubr.bf16.gmra.mrb[0].mxu0 %v664
  %v995 = vpop.f32.mrb[0].mxu0
  %v996 = vadd.f32 %v876, %v995
  %v997 = vpop.f32.mrb[0].mxu0
  %v998 = vpop.f32.mrb[0].mxu0
  %v999 = vadd.f32 %v879, %v998
  %v1000 = vpop.f32.mrb[0].mxu0
  %1001 = vmatprep.mubr.bf16.mxu0 0
  %1002 = vmatmul.mubr.bf16.gmra.mrb[0].mxu0 %v667
  %v1003 = vpop.f32.mrb[0].mxu0
  %v1004 = vadd.f32 %v884, %v1003
  %v1005 = vpop.f32.mrb[0].mxu0
  %v1006 = vpop.f32.mrb[0].mxu0
  %v1007 = vadd.f32 %v887, %v1006
  %v1008 = vpop.f32.mrb[0].mxu0
  %1009 = vmatprep.mubr.bf16.mxu0 0
  %1010 = vmatmul.mubr.bf16.gmra.mrb[0].mxu0 %v670
  %v1011 = vpop.f32.mrb[0].mxu0
  %v1012 = vadd.f32 %v892, %v1011
  %v1013 = vpop.f32.mrb[0].mxu0
  %v1014 = vpop.f32.mrb[0].mxu0
  %v1015 = vadd.f32 %v895, %v1014
  %v1016 = vpop.f32.mrb[0].mxu0
  %1017 = vmatprep.mubr.bf16.mxu0 0
  %1018 = vmatmul.mubr.bf16.gmra.mrb[0].mxu0 %v673
  %v1019 = vpop.f32.mrb[0].mxu0
  %v1020 = vadd.f32 %v900, %v1019
  %v1021 = vpop.f32.mrb[0].mxu0
  %v1022 = vpop.f32.mrb[0].mxu0
  %v1023 = vadd.f32 %v903, %v1022
  %v1024 = vpop.f32.mrb[0].mxu0
  %1025 = vmatprep.mubr.bf16.mxu0 0
  %1026 = vmatmul.mubr.bf16.gmra.mrb[0].mxu0 %v676
  %v1027 = vpop.f32.mrb[0].mxu0
  %v1028 = vadd.f32 %v908, %v1027
  %v1029 = vpop.f32.mrb[0].mxu0
  %v1030 = vpop.f32.mrb[0].mxu0
  %v1031 = vadd.f32 %v911, %v1030
  %v1032 = vpop.f32.mrb[0].mxu0
  %1033 = vmatprep.mubr.bf16.mxu0 0
  %1034 = vmatmul.mubr.bf16.gmra.mrb[0].mxu0 %v679
  %v1035 = vpop.f32.mrb[0].mxu0
  %v1036 = vadd.f32 %v916, %v1035
  %v1037 = vpop.f32.mrb[0].mxu0
  %v1038 = vpop.f32.mrb[0].mxu0
  %v1039 = vpop.f32.mrb[0].mxu0
  %1040 = vdwg.mxu0
  %v1041 = vld [vmem:[%s2] sm:$0x1]
  %v1042 = vld [vmem:[%s3] sm:$0x1]
  %v1043 = vadd.f32 %v956, %v959
  %v1044 = vadd.f32 %v1043, %v964
  %v1045 = vadd.f32 %v1044, %v967
  %v1046 = vadd.f32 %v1045, %v972
  %v1047 = vadd.f32 %v1046, %v975
  %v1048 = vadd.f32 %v1047, %v980
  %v1049 = vadd.f32 %v1048, %v983
  %v1050 = vadd.f32 %v1049, %v988
  %v1051 = vadd.f32 %v1050, %v991
  %v1052 = vadd.f32 %v1051, %v996
  %v1053 = vadd.f32 %v1052, %v999
  %v1054 = vadd.f32 %v1053, %v1004
  %v1055 = vadd.f32 %v1054, %v1007
  %v1056 = vadd.f32 %v1055, %v1012
  %v1057 = vadd.f32 %v1056, %v1015
  %v1058 = vrot.slane %v1057, 4
  %v1059 = vadd.f32 %v1057, %v1058
  %v1060 = vrot.slane %v1059, 2
  %v1061 = vadd.f32 %v1059, %v1060
  %v1062 = vrot.slane %v1061, 1
  %v1063 = vadd.f32 %v1061, %v1062
  %v1064 = vmul.f32 %v1063, 0.0078125
  %v1065 = vmul.f32 %v956, %v956
  %v1066 = vmul.f32 %v959, %v959
  %v1067 = vmul.f32 %v964, %v964
  %v1068 = vmul.f32 %v967, %v967
  %v1069 = vmul.f32 %v972, %v972
  %v1070 = vmul.f32 %v975, %v975
  %v1071 = vmul.f32 %v980, %v980
  %v1072 = vmul.f32 %v983, %v983
  %v1073 = vmul.f32 %v988, %v988
  %v1074 = vmul.f32 %v991, %v991
  %v1075 = vmul.f32 %v996, %v996
  %v1076 = vmul.f32 %v999, %v999
  %v1077 = vmul.f32 %v1004, %v1004
  %v1078 = vmul.f32 %v1007, %v1007
  %v1079 = vmul.f32 %v1012, %v1012
  %v1080 = vmul.f32 %v1015, %v1015
  %v1081 = vadd.f32 %v1065, %v1066
  %v1082 = vadd.f32 %v1081, %v1067
  %v1083 = vadd.f32 %v1082, %v1068
  %v1084 = vadd.f32 %v1083, %v1069
  %v1085 = vadd.f32 %v1084, %v1070
  %v1086 = vadd.f32 %v1085, %v1071
  %v1087 = vadd.f32 %v1086, %v1072
  %v1088 = vadd.f32 %v1087, %v1073
  %v1089 = vadd.f32 %v1088, %v1074
  %v1090 = vadd.f32 %v1089, %v1075
  %v1091 = vadd.f32 %v1090, %v1076
  %v1092 = vadd.f32 %v1091, %v1077
  %v1093 = vadd.f32 %v1092, %v1078
  %v1094 = vadd.f32 %v1093, %v1079
  %v1095 = vadd.f32 %v1094, %v1080
  %v1096 = vrot.slane %v1095, 4
  %v1097 = vadd.f32 %v1095, %v1096
  %v1098 = vrot.slane %v1097, 2
  %v1099 = vadd.f32 %v1097, %v1098
  %v1100 = vrot.slane %v1099, 1
  %v1101 = vadd.f32 %v1099, %v1100
  %v1102 = vmul.f32 %v1101, 0.0078125
  %v1103 = vmul.f32 %v1064, %v1064
  %v1104 = vsub.f32 %v1102, %v1103
  %v1105 = vmax.f32 %v1104, 0.0
  %v1106 = vsub.f32 %v956, %v1064
  %v1107 = vsub.f32 %v959, %v1064
  %v1108 = vsub.f32 %v964, %v1064
  %v1109 = vsub.f32 %v967, %v1064
  %v1110 = vsub.f32 %v972, %v1064
  %v1111 = vsub.f32 %v975, %v1064
  %v1112 = vsub.f32 %v980, %v1064
  %v1113 = vsub.f32 %v983, %v1064
  %v1114 = vsub.f32 %v988, %v1064
  %v1115 = vsub.f32 %v991, %v1064
  %v1116 = vsub.f32 %v996, %v1064
  %v1117 = vsub.f32 %v999, %v1064
  %v1118 = vsub.f32 %v1004, %v1064
  %v1119 = vsub.f32 %v1007, %v1064
  %v1120 = vsub.f32 %v1012, %v1064
  %v1121 = vsub.f32 %v1015, %v1064
  %v1122 = vadd.f32 %v1105, 1e-05
  %v1123 = vrsqrt.pop %v1122
  %v1124 = vmul.f32 %v1106, %v1123
  %v1125 = vmul.f32 %v1107, %v1123
  %v1126 = vmul.f32 %v1108, %v1123
  %v1127 = vmul.f32 %v1109, %v1123
  %v1128 = vmul.f32 %v1110, %v1123
  %v1129 = vmul.f32 %v1111, %v1123
  %v1130 = vmul.f32 %v1112, %v1123
  %v1131 = vmul.f32 %v1113, %v1123
  %v1132 = vmul.f32 %v1114, %v1123
  %v1133 = vmul.f32 %v1115, %v1123
  %v1134 = vmul.f32 %v1116, %v1123
  %v1135 = vmul.f32 %v1117, %v1123
  %v1136 = vmul.f32 %v1118, %v1123
  %v1137 = vmul.f32 %v1119, %v1123
  %v1138 = vmul.f32 %v1120, %v1123
  %v1139 = vmul.f32 %v1121, %v1123
  %v1141 = vlaneseq
  %v1142 = vshrl.u32 %v1141, 7
  %v1143 = vsub.s32 0, %v1142
  %v1144 = vrot.slane %v1041, %v1143
  %v1146 = vmul.f32 %v1124, %v1144
  %v1147 = vmul.f32 %v1125, %v1144
  %v1148 = vmul.f32 %v1126, %v1144
  %v1149 = vmul.f32 %v1127, %v1144
  %v1150 = vmul.f32 %v1128, %v1144
  %v1151 = vmul.f32 %v1129, %v1144
  %v1152 = vmul.f32 %v1130, %v1144
  %v1153 = vmul.f32 %v1131, %v1144
  %v1154 = vmul.f32 %v1132, %v1144
  %v1155 = vmul.f32 %v1133, %v1144
  %v1156 = vmul.f32 %v1134, %v1144
  %v1157 = vmul.f32 %v1135, %v1144
  %v1158 = vmul.f32 %v1136, %v1144
  %v1159 = vmul.f32 %v1137, %v1144
  %v1160 = vmul.f32 %v1138, %v1144
  %v1161 = vmul.f32 %v1139, %v1144
  %v1163 = vlaneseq
  %v1164 = vshrl.u32 %v1163, 7
  %v1165 = vsub.s32 0, %v1164
  %v1166 = vrot.slane %v1042, %v1165
  %v1168 = vadd.f32 %v1146, %v1166
  %v1169 = vadd.f32 %v1147, %v1166
  %v1170 = vadd.f32 %v1148, %v1166
  %v1171 = vadd.f32 %v1149, %v1166
  %v1172 = vadd.f32 %v1150, %v1166
  %v1173 = vadd.f32 %v1151, %v1166
  %v1174 = vadd.f32 %v1152, %v1166
  %v1175 = vadd.f32 %v1153, %v1166
  %v1176 = vadd.f32 %v1154, %v1166
  %v1177 = vadd.f32 %v1155, %v1166
  %v1178 = vadd.f32 %v1156, %v1166
  %v1179 = vadd.f32 %v1157, %v1166
  %v1180 = vadd.f32 %v1158, %v1166
  %v1181 = vadd.f32 %v1159, %v1166
  %v1182 = vadd.f32 %v1160, %v1166
  %v1183 = vadd.f32 %v1161, %v1166
  %v1184 = vmul.f32 %v1168, 0.2
  %v1185 = vmul.f32 %v1169, 0.2
  %v1186 = vmul.f32 %v1170, 0.2
  %v1187 = vmul.f32 %v1171, 0.2
  %v1188 = vmul.f32 %v1172, 0.2
  %v1189 = vmul.f32 %v1173, 0.2
  %v1190 = vmul.f32 %v1174, 0.2
  %v1191 = vmul.f32 %v1175, 0.2
  %v1192 = vmul.f32 %v1176, 0.2
  %v1193 = vmul.f32 %v1177, 0.2
  %v1194 = vmul.f32 %v1178, 0.2
  %v1195 = vmul.f32 %v1179, 0.2
  %v1196 = vmul.f32 %v1180, 0.2
  %v1197 = vmul.f32 %v1181, 0.2
  %v1198 = vmul.f32 %v1182, 0.2
  %v1199 = vmul.f32 %v1183, 0.2
  %v1200 = vmax.f32 %v1168, %v1184
  %v1201 = vmax.f32 %v1169, %v1185
  %v1202 = vmax.f32 %v1170, %v1186
  %v1203 = vmax.f32 %v1171, %v1187
  %v1204 = vmax.f32 %v1172, %v1188
  %v1205 = vmax.f32 %v1173, %v1189
  %v1206 = vmax.f32 %v1174, %v1190
  %v1207 = vmax.f32 %v1175, %v1191
  %v1208 = vmax.f32 %v1176, %v1192
  %v1209 = vmax.f32 %v1177, %v1193
  %v1210 = vmax.f32 %v1178, %v1194
  %v1211 = vmax.f32 %v1179, %v1195
  %v1212 = vmax.f32 %v1180, %v1196
  %v1213 = vmax.f32 %v1181, %v1197
  %v1214 = vmax.f32 %v1182, %v1198
  %v1215 = vmax.f32 %v1183, %v1199
  %v1216 = vpack.c.bf16 %v1201, %v1200
  %v1217 = vpack.c.bf16 %v1203, %v1202
  %v1218 = vpack.c.bf16 %v1205, %v1204
  %v1219 = vpack.c.bf16 %v1207, %v1206
  %v1220 = vpack.c.bf16 %v1209, %v1208
  %v1221 = vpack.c.bf16 %v1211, %v1210
  %v1222 = vpack.c.bf16 %v1213, %v1212
  %v1223 = vpack.c.bf16 %v1215, %v1214
  %v1232 = vunpack.c.l.b16 %v1216
  %v1233 = vunpack.c.h.b16 %v1216
  %v1234 = vunpack.c.l.b16 %v1217
  %v1235 = vunpack.c.h.b16 %v1217
  %v1236 = vunpack.c.l.b16 %v1218
  %v1237 = vunpack.c.h.b16 %v1218
  %v1238 = vunpack.c.l.b16 %v1219
  %v1239 = vunpack.c.h.b16 %v1219
  %v1240 = vunpack.c.l.b16 %v1220
  %v1241 = vunpack.c.h.b16 %v1220
  %v1242 = vunpack.c.l.b16 %v1221
  %v1243 = vunpack.c.h.b16 %v1221
  %v1244 = vunpack.c.l.b16 %v1222
  %v1245 = vunpack.c.h.b16 %v1222
  %v1246 = vunpack.c.l.b16 %v1223
  %v1247 = vunpack.c.h.b16 %v1223
  %v1248 = vpack.c.b16 %v1232, %v1232
  %v1249 = vpack.c.b16 %v1233, %v1233
  %v1250 = vpack.c.b16 %v1234, %v1234
  %v1251 = vpack.c.b16 %v1235, %v1235
  %v1252 = vpack.c.b16 %v1236, %v1236
  %v1253 = vpack.c.b16 %v1237, %v1237
  %v1254 = vpack.c.b16 %v1238, %v1238
  %v1255 = vpack.c.b16 %v1239, %v1239
  %v1256 = vpack.c.b16 %v1240, %v1240
  %v1257 = vpack.c.b16 %v1241, %v1241
  %v1258 = vpack.c.b16 %v1242, %v1242
  %v1259 = vpack.c.b16 %v1243, %v1243
  %v1260 = vpack.c.b16 %v1244, %v1244
  %v1261 = vpack.c.b16 %v1245, %v1245
  %v1262 = vpack.c.b16 %v1246, %v1246
  %v1263 = vpack.c.b16 %v1247, %v1247
  %1280 = vst [vmem:[%s4] sm:$0xf] %v1248
  %1281 = vst [vmem:[%s4 + $0x4] sm:$0xf] %v1249
  %1282 = vst [vmem:[%s4 + $0x8] sm:$0xf] %v1250
  %1283 = vst [vmem:[%s4 + $0xc] sm:$0xf] %v1251
  %1284 = vst [vmem:[%s4 + $0x10] sm:$0xf] %v1252
  %1285 = vst [vmem:[%s4 + $0x14] sm:$0xf] %v1253
  %1286 = vst [vmem:[%s4 + $0x18] sm:$0xf] %v1254
  %1287 = vst [vmem:[%s4 + $0x1c] sm:$0xf] %v1255
  %1288 = vst [vmem:[%s4 + $0x20] sm:$0xf] %v1256
  %1289 = vst [vmem:[%s4 + $0x24] sm:$0xf] %v1257
  %1290 = vst [vmem:[%s4 + $0x28] sm:$0xf] %v1258
  %1291 = vst [vmem:[%s4 + $0x2c] sm:$0xf] %v1259
  %1292 = vst [vmem:[%s4 + $0x30] sm:$0xf] %v1260
  %1293 = vst [vmem:[%s4 + $0x34] sm:$0xf] %v1261
  %1294 = vst [vmem:[%s4 + $0x38] sm:$0xf] %v1262
  %1295 = vst [vmem:[%s4 + $0x3c] sm:$0xf] %v1263
  %v1296 = vadd.f32 %v1020, %v1023
  %v1297 = vadd.f32 %v1296, %v1028
  %v1298 = vadd.f32 %v1297, %v1031
  %v1299 = vrot.slane %v1298, 4
  %v1300 = vadd.f32 %v1298, %v1299
  %v1301 = vrot.slane %v1300, 2
  %v1302 = vadd.f32 %v1300, %v1301
  %v1303 = vrot.slane %v1302, 1
  %v1304 = vadd.f32 %v1302, %v1303
  %v1305 = vmul.f32 %v1304, 0.03125
  %v1306 = vmul.f32 %v1020, %v1020
  %v1307 = vmul.f32 %v1023, %v1023
  %v1308 = vmul.f32 %v1028, %v1028
  %v1309 = vmul.f32 %v1031, %v1031
  %v1310 = vadd.f32 %v1306, %v1307
  %v1311 = vadd.f32 %v1310, %v1308
  %v1312 = vadd.f32 %v1311, %v1309
  %v1313 = vrot.slane %v1312, 4
  %v1314 = vadd.f32 %v1312, %v1313
  %v1315 = vrot.slane %v1314, 2
  %v1316 = vadd.f32 %v1314, %v1315
  %v1317 = vrot.slane %v1316, 1
  %v1318 = vadd.f32 %v1316, %v1317
  %v1319 = vmul.f32 %v1318, 0.03125
  %v1320 = vmul.f32 %v1305, %v1305
  %v1321 = vsub.f32 %v1319, %v1320
  %v1322 = vmax.f32 %v1321, 0.0
  %v1323 = vsub.f32 %v1020, %v1305
  %v1324 = vsub.f32 %v1023, %v1305
  %v1325 = vsub.f32 %v1028, %v1305
  %v1326 = vsub.f32 %v1031, %v1305
  %v1327 = vadd.f32 %v1322, 1e-05
  %v1328 = vrsqrt.pop %v1327
  %v1329 = vmul.f32 %v1323, %v1328
  %v1330 = vmul.f32 %v1324, %v1328
  %v1331 = vmul.f32 %v1325, %v1328
  %v1332 = vmul.f32 %v1326, %v1328
  %v1333 = vmul.f32 %v1329, %v1144
  %v1334 = vmul.f32 %v1330, %v1144
  %v1335 = vmul.f32 %v1331, %v1144
  %v1336 = vmul.f32 %v1332, %v1144
  %v1337 = vadd.f32 %v1333, %v1166
  %v1338 = vadd.f32 %v1334, %v1166
  %v1339 = vadd.f32 %v1335, %v1166
  %v1340 = vadd.f32 %v1336, %v1166
  %v1341 = vmul.f32 %v1337, 0.2
  %v1342 = vmul.f32 %v1338, 0.2
  %v1343 = vmul.f32 %v1339, 0.2
  %v1344 = vmul.f32 %v1340, 0.2
  %v1345 = vmax.f32 %v1337, %v1341
  %v1346 = vmax.f32 %v1338, %v1342
  %v1347 = vmax.f32 %v1339, %v1343
  %v1348 = vmax.f32 %v1340, %v1344
  %v1349 = vpack.c.bf16 %v1346, %v1345
  %v1350 = vpack.c.bf16 %v1348, %v1347
  %v1353 = vunpack.c.l.b16 %v1349
  %v1354 = vunpack.c.h.b16 %v1349
  %v1355 = vunpack.c.l.b16 %v1350
  %v1356 = vunpack.c.h.b16 %v1350
  %v1357 = vpack.c.b16 %v1353, %v1353
  %v1358 = vpack.c.b16 %v1354, %v1354
  %v1359 = vpack.c.b16 %v1355, %v1355
  %v1360 = vpack.c.b16 %v1356, %v1356
  %1365 = vst [vmem:[%s4 + $0x40] sm:$0xf] %v1357
  %1366 = vst [vmem:[%s4 + $0x44] sm:$0xf] %v1358
  %1367 = vst [vmem:[%s4 + $0x48] sm:$0xf] %v1359
  %1368 = vst [vmem:[%s4 + $0x4c] sm:$0xf] %v1360
  %v1369 = vrot.slane %v1036, 4
  %v1370 = vadd.f32 %v1036, %v1369
  %v1371 = vrot.slane %v1370, 2
  %v1372 = vadd.f32 %v1370, %v1371
  %v1373 = vrot.slane %v1372, 1
  %v1374 = vadd.f32 %v1372, %v1373
  %v1375 = vmul.f32 %v1374, 0.125
  %v1376 = vmul.f32 %v1036, %v1036
  %v1377 = vrot.slane %v1376, 4
  %v1378 = vadd.f32 %v1376, %v1377
  %v1379 = vrot.slane %v1378, 2
  %v1380 = vadd.f32 %v1378, %v1379
  %v1381 = vrot.slane %v1380, 1
  %v1382 = vadd.f32 %v1380, %v1381
  %v1383 = vmul.f32 %v1382, 0.125
  %v1384 = vmul.f32 %v1375, %v1375
  %v1385 = vsub.f32 %v1383, %v1384
  %v1386 = vmax.f32 %v1385, 0.0
  %v1387 = vsub.f32 %v1036, %v1375
  %v1388 = vadd.f32 %v1386, 1e-05
  %v1389 = vrsqrt.pop %v1388
  %v1390 = vmul.f32 %v1387, %v1389
  %v1391 = vmul.f32 %v1390, %v1144
  %v1392 = vadd.f32 %v1391, %v1166
  %v1393 = vmul.f32 %v1392, 0.2
  %v1394 = vmax.f32 %v1392, %v1393
  %v1395 = vpack.c.bf16 %v1394, %v1394
  %1396 = vst [vmem:[%s4 + $0x50] sm:$0xf] %v1395
  %1397 = vst [vmem:[%s4 + $0x54] sm:$0xf] 0
  // Predicated region
  $region18: #{tipd_forward.6} parent=0 // pred_check
    _
  $region19: #{tipd_forward.6} parent=0 // pred_check_branch
    %1399 = sbr.rel (0) target = $region21
  $region20: #{tipd_forward.6} parent=0 // pred_region
    _
  $region21: #{tipd_forward.6} parent=0 // pred_fallthru
    _
  // Predicated region
  $region22: #{tipd_forward.6} parent=0 // pred_check
    _
  $region23: #{tipd_forward.6} parent=0 // pred_check_branch
    %1401 = sbr.rel (0) target = $region25
  $region24: #{tipd_forward.6} parent=0 // pred_region
    _
  $region25: #{tipd_forward.6} parent=0 // pred_fallthru
    _

// kernel: tipd_forward.7
$region0: #{tipd_forward.7}
  #allocation0 [shape = 'u32[]', space=smem, size = 0x4, offset = 0x4, fixed_abs, tag = 'smem constant byte address 0x4 - core index']
  #allocation1 [shape = 'u32[144,128]{1,0:T(1,128)}', space=vmem, size = 0x12000, scoped, tag = 'internal scratch']
  %s0 = inlined_call_operand.vmem [shape: bf16[48,1152], index: 0, kind: input, shape index: {}]
  %s1 = inlined_call_operand.vmem [shape: bf16[1152,256], index: 1, kind: input, shape index: {}]
  %s2 = inlined_call_operand.vmem [shape: f32[1,256], index: 2, kind: input, shape index: {}]
  %s3 = inlined_call_operand.vmem [shape: f32[1,256], index: 3, kind: input, shape index: {}]
  %s4 = inlined_call_operand.vmem [shape: bf16[48,256], index: 4, kind: output, shape index: {}]
  %s5 = sld [smem:[#allocation0]]
  $region26: #{tipd_forward.7} parent=0
    _
  %s7 = ssub.s32 1, %s5
  %s8 = scalar_select 0, %s7, %s5
  // Predicated region
  $region2: #{tipd_forward.7} parent=0 // pred_check
    _
  $region3: #{tipd_forward.7} parent=0 // pred_check_branch
    %10 = sbr.rel (0) target = $region5
  $region4: #{tipd_forward.7} parent=0 // pred_region
    _
  $region5: #{tipd_forward.7} parent=0 // pred_fallthru
    _
  // Predicated region
  $region6: #{tipd_forward.7} parent=0 // pred_check
    _
  $region7: #{tipd_forward.7} parent=0 // pred_check_branch
    %12 = sbr.rel (0) target = $region9
  $region8: #{tipd_forward.7} parent=0 // pred_region
    _
  $region9: #{tipd_forward.7} parent=0 // pred_fallthru
    _
  // Predicated region
  $region10: #{tipd_forward.7} parent=0 // pred_check
    _
  $region11: #{tipd_forward.7} parent=0 // pred_check_branch
    %14 = sbr.rel (0) target = $region13
  $region12: #{tipd_forward.7} parent=0 // pred_region
    _
  $region13: #{tipd_forward.7} parent=0 // pred_fallthru
    _
  // Predicated region
  $region14: #{tipd_forward.7} parent=0 // pred_check
    _
  $region15: #{tipd_forward.7} parent=0 // pred_check_branch
    %16 = sbr.rel (0) target = $region17
  $region16: #{tipd_forward.7} parent=0 // pred_region
    _
  $region17: #{tipd_forward.7} parent=0 // pred_fallthru
    _
  %v18 = vld [vmem:[%s0] sm:$0xff]
  %v19 = vld [vmem:[%s0 + $0x8] sm:$0xff]
  %v20 = vld [vmem:[%s0 + $0x10] sm:$0xff]
  %v21 = vld [vmem:[%s0 + $0x18] sm:$0xff]
  %v22 = vld [vmem:[%s0 + $0x20] sm:$0xf]
  %v23 = vld [vmem:[%s0 + $0x24] sm:$0xff]
  %v24 = vld [vmem:[%s0 + $0x2c] sm:$0xff]
  %v25 = vld [vmem:[%s0 + $0x34] sm:$0xff]
  %v26 = vld [vmem:[%s0 + $0x3c] sm:$0xff]
  %v27 = vld [vmem:[%s0 + $0x44] sm:$0xf]
  %v28 = vld [vmem:[%s0 + $0x48] sm:$0xff]
  %v29 = vld [vmem:[%s0 + $0x50] sm:$0xff]
  %v30 = vld [vmem:[%s0 + $0x58] sm:$0xff]
  %v31 = vld [vmem:[%s0 + $0x60] sm:$0xff]
  %v32 = vld [vmem:[%s0 + $0x68] sm:$0xf]
  %v33 = vld [vmem:[%s0 + $0x6c] sm:$0xff]
  %v34 = vld [vmem:[%s0 + $0x74] sm:$0xff]
  %v35 = vld [vmem:[%s0 + $0x7c] sm:$0xff]
  %v36 = vld [vmem:[%s0 + $0x84] sm:$0xff]
  %v37 = vld [vmem:[%s0 + $0x8c] sm:$0xf]
  %v38 = vld [vmem:[%s0 + $0x90] sm:$0xff]
  %v39 = vld [vmem:[%s0 + $0x98] sm:$0xff]
  %v40 = vld [vmem:[%s0 + $0xa0] sm:$0xff]
  %v41 = vld [vmem:[%s0 + $0xa8] sm:$0xff]
  %v42 = vld [vmem:[%s0 + $0xb0] sm:$0xf]
  %v43 = vld [vmem:[%s0 + $0xb4] sm:$0xff]
  %v44 = vld [vmem:[%s0 + $0xbc] sm:$0xff]
  %v45 = vld [vmem:[%s0 + $0xc4] sm:$0xff]
  %v46 = vld [vmem:[%s0 + $0xcc] sm:$0xff]
  %v47 = vld [vmem:[%s0 + $0xd4] sm:$0xf]
  %v48 = vld [vmem:[%s1] sm:$0xff]
  %v49 = vld [vmem:[%s1 + $0x8] sm:$0xff]
  %v50 = vld [vmem:[%s1 + $0x10] sm:$0xff]
  %v51 = vld [vmem:[%s1 + $0x18] sm:$0xff]
  %v52 = vld [vmem:[%s1 + $0x20] sm:$0xff]
  %v53 = vld [vmem:[%s1 + $0x28] sm:$0xff]
  %v54 = vld [vmem:[%s1 + $0x30] sm:$0xff]
  %v55 = vld [vmem:[%s1 + $0x38] sm:$0xff]
  %v56 = vld [vmem:[%s1 + $0x40] sm:$0xff]
  %v57 = vld [vmem:[%s1 + $0x48] sm:$0xff]
  %v58 = vld [vmem:[%s1 + $0x50] sm:$0xff]
  %v59 = vld [vmem:[%s1 + $0x58] sm:$0xff]
  %v60 = vld [vmem:[%s1 + $0x60] sm:$0xff]
  %v61 = vld [vmem:[%s1 + $0x68] sm:$0xff]
  %v62 = vld [vmem:[%s1 + $0x70] sm:$0xff]
  %v63 = vld [vmem:[%s1 + $0x78] sm:$0xff]
  %v64 = vld [vmem:[%s1 + $0x80] sm:$0xff]
  %v65 = vld [vmem:[%s1 + $0x88] sm:$0xff]
  %v66 = vld [vmem:[%s1 + $0x90] sm:$0xff]
  %v67 = vld [vmem:[%s1 + $0x98] sm:$0xff]
  %v68 = vld [vmem:[%s1 + $0xa0] sm:$0xff]
  %v69 = vld [vmem:[%s1 + $0xa8] sm:$0xff]
  %v70 = vld [vmem:[%s1 + $0xb0] sm:$0xff]
  %v71 = vld [vmem:[%s1 + $0xb8] sm:$0xff]
  %v72 = vld [vmem:[%s1 + $0xc0] sm:$0xff]
  %v73 = vld [vmem:[%s1 + $0xc8] sm:$0xff]
  %v74 = vld [vmem:[%s1 + $0xd0] sm:$0xff]
  %v75 = vld [vmem:[%s1 + $0xd8] sm:$0xff]
  %v76 = vld [vmem:[%s1 + $0xe0] sm:$0xff]
  %v77 = vld [vmem:[%s1 + $0xe8] sm:$0xff]
  %v78 = vld [vmem:[%s1 + $0xf0] sm:$0xff]
  %v79 = vld [vmem:[%s1 + $0xf8] sm:$0xff]
  %v80 = vld [vmem:[%s1 + $0x100] sm:$0xff]
  %v81 = vld [vmem:[%s1 + $0x108] sm:$0xff]
  %v82 = vld [vmem:[%s1 + $0x110] sm:$0xff]
  %v83 = vld [vmem:[%s1 + $0x118] sm:$0xff]
  %v84 = vld [vmem:[%s1 + $0x120] sm:$0xff]
  %v85 = vld [vmem:[%s1 + $0x128] sm:$0xff]
  %v86 = vld [vmem:[%s1 + $0x130] sm:$0xff]
  %v87 = vld [vmem:[%s1 + $0x138] sm:$0xff]
  %v88 = vld [vmem:[%s1 + $0x140] sm:$0xff]
  %v89 = vld [vmem:[%s1 + $0x148] sm:$0xff]
  %v90 = vld [vmem:[%s1 + $0x150] sm:$0xff]
  %v91 = vld [vmem:[%s1 + $0x158] sm:$0xff]
  %v92 = vld [vmem:[%s1 + $0x160] sm:$0xff]
  %v93 = vld [vmem:[%s1 + $0x168] sm:$0xff]
  %v94 = vld [vmem:[%s1 + $0x170] sm:$0xff]
  %v95 = vld [vmem:[%s1 + $0x178] sm:$0xff]
  %v96 = vld [vmem:[%s1 + $0x180] sm:$0xff]
  %v97 = vld [vmem:[%s1 + $0x188] sm:$0xff]
  %v98 = vld [vmem:[%s1 + $0x190] sm:$0xff]
  %v99 = vld [vmem:[%s1 + $0x198] sm:$0xff]
  %v100 = vld [vmem:[%s1 + $0x1a0] sm:$0xff]
  %v101 = vld [vmem:[%s1 + $0x1a8] sm:$0xff]
  %v102 = vld [vmem:[%s1 + $0x1b0] sm:$0xff]
  %v103 = vld [vmem:[%s1 + $0x1b8] sm:$0xff]
  %v104 = vld [vmem:[%s1 + $0x1c0] sm:$0xff]
  %v105 = vld [vmem:[%s1 + $0x1c8] sm:$0xff]
  %v106 = vld [vmem:[%s1 + $0x1d0] sm:$0xff]
  %v107 = vld [vmem:[%s1 + $0x1d8] sm:$0xff]
  %v108 = vld [vmem:[%s1 + $0x1e0] sm:$0xff]
  %v109 = vld [vmem:[%s1 + $0x1e8] sm:$0xff]
  %v110 = vld [vmem:[%s1 + $0x1f0] sm:$0xff]
  %v111 = vld [vmem:[%s1 + $0x1f8] sm:$0xff]
  %v112 = vld [vmem:[%s1 + $0x200] sm:$0xff]
  %v113 = vld [vmem:[%s1 + $0x208] sm:$0xff]
  %v114 = vld [vmem:[%s1 + $0x210] sm:$0xff]
  %v115 = vld [vmem:[%s1 + $0x218] sm:$0xff]
  %v116 = vld [vmem:[%s1 + $0x220] sm:$0xff]
  %v117 = vld [vmem:[%s1 + $0x228] sm:$0xff]
  %v118 = vld [vmem:[%s1 + $0x230] sm:$0xff]
  %v119 = vld [vmem:[%s1 + $0x238] sm:$0xff]
  %v120 = vld [vmem:[%s1 + $0x240] sm:$0xff]
  %v121 = vld [vmem:[%s1 + $0x248] sm:$0xff]
  %v122 = vld [vmem:[%s1 + $0x250] sm:$0xff]
  %v123 = vld [vmem:[%s1 + $0x258] sm:$0xff]
  %v124 = vld [vmem:[%s1 + $0x260] sm:$0xff]
  %v125 = vld [vmem:[%s1 + $0x268] sm:$0xff]
  %v126 = vld [vmem:[%s1 + $0x270] sm:$0xff]
  %v127 = vld [vmem:[%s1 + $0x278] sm:$0xff]
  %v128 = vld [vmem:[%s1 + $0x280] sm:$0xff]
  %v129 = vld [vmem:[%s1 + $0x288] sm:$0xff]
  %v130 = vld [vmem:[%s1 + $0x290] sm:$0xff]
  %v131 = vld [vmem:[%s1 + $0x298] sm:$0xff]
  %v132 = vld [vmem:[%s1 + $0x2a0] sm:$0xff]
  %v133 = vld [vmem:[%s1 + $0x2a8] sm:$0xff]
  %v134 = vld [vmem:[%s1 + $0x2b0] sm:$0xff]
  %v135 = vld [vmem:[%s1 + $0x2b8] sm:$0xff]
  %v136 = vld [vmem:[%s1 + $0x2c0] sm:$0xff]
  %v137 = vld [vmem:[%s1 + $0x2c8] sm:$0xff]
  %v138 = vld [vmem:[%s1 + $0x2d0] sm:$0xff]
  %v139 = vld [vmem:[%s1 + $0x2d8] sm:$0xff]
  %v140 = vld [vmem:[%s1 + $0x2e0] sm:$0xff]
  %v141 = vld [vmem:[%s1 + $0x2e8] sm:$0xff]
  %v142 = vld [vmem:[%s1 + $0x2f0] sm:$0xff]
  %v143 = vld [vmem:[%s1 + $0x2f8] sm:$0xff]
  %v144 = vld [vmem:[%s1 + $0x300] sm:$0xff]
  %v145 = vld [vmem:[%s1 + $0x308] sm:$0xff]
  %v146 = vld [vmem:[%s1 + $0x310] sm:$0xff]
  %v147 = vld [vmem:[%s1 + $0x318] sm:$0xff]
  %v148 = vld [vmem:[%s1 + $0x320] sm:$0xff]
  %v149 = vld [vmem:[%s1 + $0x328] sm:$0xff]
  %v150 = vld [vmem:[%s1 + $0x330] sm:$0xff]
  %v151 = vld [vmem:[%s1 + $0x338] sm:$0xff]
  %v152 = vld [vmem:[%s1 + $0x340] sm:$0xff]
  %v153 = vld [vmem:[%s1 + $0x348] sm:$0xff]
  %v154 = vld [vmem:[%s1 + $0x350] sm:$0xff]
  %v155 = vld [vmem:[%s1 + $0x358] sm:$0xff]
  %v156 = vld [vmem:[%s1 + $0x360] sm:$0xff]
  %v157 = vld [vmem:[%s1 + $0x368] sm:$0xff]
  %v158 = vld [vmem:[%s1 + $0x370] sm:$0xff]
  %v159 = vld [vmem:[%s1 + $0x378] sm:$0xff]
  %v160 = vld [vmem:[%s1 + $0x380] sm:$0xff]
  %v161 = vld [vmem:[%s1 + $0x388] sm:$0xff]
  %v162 = vld [vmem:[%s1 + $0x390] sm:$0xff]
  %v163 = vld [vmem:[%s1 + $0x398] sm:$0xff]
  %v164 = vld [vmem:[%s1 + $0x3a0] sm:$0xff]
  %v165 = vld [vmem:[%s1 + $0x3a8] sm:$0xff]
  %v166 = vld [vmem:[%s1 + $0x3b0] sm:$0xff]
  %v167 = vld [vmem:[%s1 + $0x3b8] sm:$0xff]
  %v168 = vld [vmem:[%s1 + $0x3c0] sm:$0xff]
  %v169 = vld [vmem:[%s1 + $0x3c8] sm:$0xff]
  %v170 = vld [vmem:[%s1 + $0x3d0] sm:$0xff]
  %v171 = vld [vmem:[%s1 + $0x3d8] sm:$0xff]
  %v172 = vld [vmem:[%s1 + $0x3e0] sm:$0xff]
  %v173 = vld [vmem:[%s1 + $0x3e8] sm:$0xff]
  %v174 = vld [vmem:[%s1 + $0x3f0] sm:$0xff]
  %v175 = vld [vmem:[%s1 + $0x3f8] sm:$0xff]
  %v176 = vld [vmem:[%s1 + $0x400] sm:$0xff]
  %v177 = vld [vmem:[%s1 + $0x408] sm:$0xff]
  %v178 = vld [vmem:[%s1 + $0x410] sm:$0xff]
  %v179 = vld [vmem:[%s1 + $0x418] sm:$0xff]
  %v180 = vld [vmem:[%s1 + $0x420] sm:$0xff]
  %v181 = vld [vmem:[%s1 + $0x428] sm:$0xff]
  %v182 = vld [vmem:[%s1 + $0x430] sm:$0xff]
  %v183 = vld [vmem:[%s1 + $0x438] sm:$0xff]
  %v184 = vld [vmem:[%s1 + $0x440] sm:$0xff]
  %v185 = vld [vmem:[%s1 + $0x448] sm:$0xff]
  %v186 = vld [vmem:[%s1 + $0x450] sm:$0xff]
  %v187 = vld [vmem:[%s1 + $0x458] sm:$0xff]
  %v188 = vld [vmem:[%s1 + $0x460] sm:$0xff]
  %v189 = vld [vmem:[%s1 + $0x468] sm:$0xff]
  %v190 = vld [vmem:[%s1 + $0x470] sm:$0xff]
  %v191 = vld [vmem:[%s1 + $0x478] sm:$0xff]
  %v222 = vunpack.c.l.b16 %v18
  %v223 = vunpack.c.h.b16 %v18
  %v224 = vunpack.c.l.b16 %v19
  %v225 = vunpack.c.h.b16 %v19
  %v226 = vunpack.c.l.b16 %v20
  %v227 = vunpack.c.h.b16 %v20
  %v228 = vunpack.c.l.b16 %v21
  %v229 = vunpack.c.h.b16 %v21
  %v230 = vunpack.c.l.b16 %v22
  %v231 = vunpack.c.l.b16 %v23
  %v232 = vunpack.c.h.b16 %v23
  %v233 = vunpack.c.l.b16 %v24
  %v234 = vunpack.c.h.b16 %v24
  %v235 = vunpack.c.l.b16 %v25
  %v236 = vunpack.c.h.b16 %v25
  %v237 = vunpack.c.l.b16 %v26
  %v238 = vunpack.c.h.b16 %v26
  %v239 = vunpack.c.l.b16 %v27
  %v240 = vunpack.c.l.b16 %v28
  %v241 = vunpack.c.h.b16 %v28
  %v242 = vunpack.c.l.b16 %v29
  %v243 = vunpack.c.h.b16 %v29
  %v244 = vunpack.c.l.b16 %v30
  %v245 = vunpack.c.h.b16 %v30
  %v246 = vunpack.c.l.b16 %v31
  %v247 = vunpack.c.h.b16 %v31
  %v248 = vunpack.c.l.b16 %v32
  %v249 = vunpack.c.l.b16 %v33
  %v250 = vunpack.c.h.b16 %v33
  %v251 = vunpack.c.l.b16 %v34
  %v252 = vunpack.c.h.b16 %v34
  %v253 = vunpack.c.l.b16 %v35
  %v254 = vunpack.c.h.b16 %v35
  %v255 = vunpack.c.l.b16 %v36
  %v256 = vunpack.c.h.b16 %v36
  %v257 = vunpack.c.l.b16 %v37
  %v258 = vunpack.c.l.b16 %v38
  %v259 = vunpack.c.h.b16 %v38
  %v260 = vunpack.c.l.b16 %v39
  %v261 = vunpack.c.h.b16 %v39
  %v262 = vunpack.c.l.b16 %v40
  %v263 = vunpack.c.h.b16 %v40
  %v264 = vunpack.c.l.b16 %v41
  %v265 = vunpack.c.h.b16 %v41
  %v266 = vunpack.c.l.b16 %v42
  %v267 = vunpack.c.l.b16 %v43
  %v268 = vunpack.c.h.b16 %v43
  %v269 = vunpack.c.l.b16 %v44
  %v270 = vunpack.c.h.b16 %v44
  %v271 = vunpack.c.l.b16 %v45
  %v272 = vunpack.c.h.b16 %v45
  %v273 = vunpack.c.l.b16 %v46
  %v274 = vunpack.c.h.b16 %v46
  %v275 = vunpack.c.l.b16 %v47
  %v276 = vpack.c.b16 %v231, %v222
  %v277 = vpack.c.b16 %v232, %v223
  %v278 = vpack.c.b16 %v233, %v224
  %v279 = vpack.c.b16 %v234, %v225
  %v280 = vpack.c.b16 %v235, %v226
  %v281 = vpack.c.b16 %v236, %v227
  %v282 = vpack.c.b16 %v237, %v228
  %v283 = vpack.c.b16 %v238, %v229
  %v284 = vpack.c.b16 %v239, %v230
  %v285 = vpack.c.b16 %v249, %v240
  %v286 = vpack.c.b16 %v250, %v241
  %v287 = vpack.c.b16 %v251, %v242
  %v288 = vpack.c.b16 %v252, %v243
  %v289 = vpack.c.b16 %v253, %v244
  %v290 = vpack.c.b16 %v254, %v245
  %v291 = vpack.c.b16 %v255, %v246
  %v292 = vpack.c.b16 %v256, %v247
  %v293 = vpack.c.b16 %v257, %v248
  %v294 = vpack.c.b16 %v267, %v258
  %v295 = vpack.c.b16 %v268, %v259
  %v296 = vpack.c.b16 %v269, %v260
  %v297 = vpack.c.b16 %v270, %v261
  %v298 = vpack.c.b16 %v271, %v262
  %v299 = vpack.c.b16 %v272, %v263
  %v300 = vpack.c.b16 %v273, %v264
  %v301 = vpack.c.b16 %v274, %v265
  %v302 = vpack.c.b16 %v275, %v266
  %v474 = vunpack.c.l.b16 %v48
  %v475 = vunpack.c.h.b16 %v48
  %v476 = vunpack.c.l.b16 %v49
  %v477 = vunpack.c.h.b16 %v49
  %v478 = vunpack.c.l.b16 %v50
  %v479 = vunpack.c.h.b16 %v50
  %v480 = vunpack.c.l.b16 %v51
  %v481 = vunpack.c.h.b16 %v51
  %v482 = vunpack.c.l.b16 %v52
  %v483 = vunpack.c.h.b16 %v52
  %v484 = vunpack.c.l.b16 %v53
  %v485 = vunpack.c.h.b16 %v53
  %v486 = vunpack.c.l.b16 %v54
  %v487 = vunpack.c.h.b16 %v54
  %v488 = vunpack.c.l.b16 %v55
  %v489 = vunpack.c.h.b16 %v55
  %v490 = vunpack.c.l.b16 %v56
  %v491 = vunpack.c.h.b16 %v56
  %v492 = vunpack.c.l.b16 %v57
  %v493 = vunpack.c.h.b16 %v57
  %v494 = vunpack.c.l.b16 %v58
  %v495 = vunpack.c.h.b16 %v58
  %v496 = vunpack.c.l.b16 %v59
  %v497 = vunpack.c.h.b16 %v59
  %v498 = vunpack.c.l.b16 %v60
  %v499 = vunpack.c.h.b16 %v60
  %v500 = vunpack.c.l.b16 %v61
  %v501 = vunpack.c.h.b16 %v61
  %v502 = vunpack.c.l.b16 %v62
  %v503 = vunpack.c.h.b16 %v62
  %v504 = vunpack.c.l.b16 %v63
  %v505 = vunpack.c.h.b16 %v63
  %v506 = vunpack.c.l.b16 %v64
  %v507 = vunpack.c.h.b16 %v64
  %v508 = vunpack.c.l.b16 %v65
  %v509 = vunpack.c.h.b16 %v65
  %v510 = vunpack.c.l.b16 %v66
  %v511 = vunpack.c.h.b16 %v66
  %v512 = vunpack.c.l.b16 %v67
  %v513 = vunpack.c.h.b16 %v67
  %v514 = vunpack.c.l.b16 %v68
  %v515 = vunpack.c.h.b16 %v68
  %v516 = vunpack.c.l.b16 %v69
  %v517 = vunpack.c.h.b16 %v69
  %v518 = vunpack.c.l.b16 %v70
  %v519 = vunpack.c.h.b16 %v70
  %v520 = vunpack.c.l.b16 %v71
  %v521 = vunpack.c.h.b16 %v71
  %v522 = vunpack.c.l.b16 %v72
  %v523 = vunpack.c.h.b16 %v72
  %v524 = vunpack.c.l.b16 %v73
  %v525 = vunpack.c.h.b16 %v73
  %v526 = vunpack.c.l.b16 %v74
  %v527 = vunpack.c.h.b16 %v74
  %v528 = vunpack.c.l.b16 %v75
  %v529 = vunpack.c.h.b16 %v75
  %v530 = vunpack.c.l.b16 %v76
  %v531 = vunpack.c.h.b16 %v76
  %v532 = vunpack.c.l.b16 %v77
  %v533 = vunpack.c.h.b16 %v77
  %v534 = vunpack.c.l.b16 %v78
  %v535 = vunpack.c.h.b16 %v78
  %v536 = vunpack.c.l.b16 %v79
  %v537 = vunpack.c.h.b16 %v79
  %v538 = vunpack.c.l.b16 %v80
  %v539 = vunpack.c.h.b16 %v80
  %v540 = vunpack.c.l.b16 %v81
  %v541 = vunpack.c.h.b16 %v81
  %v542 = vunpack.c.l.b16 %v82
  %v543 = vunpack.c.h.b16 %v82
  %v544 = vunpack.c.l.b16 %v83
  %v545 = vunpack.c.h.b16 %v83
  %v546 = vunpack.c.l.b16 %v84
  %v547 = vunpack.c.h.b16 %v84
  %v548 = vunpack.c.l.b16 %v85
  %v549 = vunpack.c.h.b16 %v85
  %v550 = vunpack.c.l.b16 %v86
  %v551 = vunpack.c.h.b16 %v86
  %v552 = vunpack.c.l.b16 %v87
  %v553 = vunpack.c.h.b16 %v87
  %v554 = vunpack.c.l.b16 %v88
  %v555 = vunpack.c.h.b16 %v88
  %v556 = vunpack.c.l.b16 %v89
  %v557 = vunpack.c.h.b16 %v89
  %v558 = vunpack.c.l.b16 %v90
  %v559 = vunpack.c.h.b16 %v90
  %v560 = vunpack.c.l.b16 %v91
  %v561 = vunpack.c.h.b16 %v91
  %v562 = vunpack.c.l.b16 %v92
  %v563 = vunpack.c.h.b16 %v92
  %v564 = vunpack.c.l.b16 %v93
  %v565 = vunpack.c.h.b16 %v93
  %v566 = vunpack.c.l.b16 %v94
  %v567 = vunpack.c.h.b16 %v94
  %v568 = vunpack.c.l.b16 %v95
  %v569 = vunpack.c.h.b16 %v95
  %v570 = vunpack.c.l.b16 %v96
  %v571 = vunpack.c.h.b16 %v96
  %v572 = vunpack.c.l.b16 %v97
  %v573 = vunpack.c.h.b16 %v97
  %v574 = vunpack.c.l.b16 %v98
  %v575 = vunpack.c.h.b16 %v98
  %v576 = vunpack.c.l.b16 %v99
  %v577 = vunpack.c.h.b16 %v99
  %v578 = vunpack.c.l.b16 %v100
  %v579 = vunpack.c.h.b16 %v100
  %v580 = vunpack.c.l.b16 %v101
  %v581 = vunpack.c.h.b16 %v101
  %v582 = vunpack.c.l.b16 %v102
  %v583 = vunpack.c.h.b16 %v102
  %v584 = vunpack.c.l.b16 %v103
  %v585 = vunpack.c.h.b16 %v103
  %v586 = vunpack.c.l.b16 %v104
  %v587 = vunpack.c.h.b16 %v104
  %v588 = vunpack.c.l.b16 %v105
  %v589 = vunpack.c.h.b16 %v105
  %v590 = vunpack.c.l.b16 %v106
  %v591 = vunpack.c.h.b16 %v106
  %v592 = vunpack.c.l.b16 %v107
  %v593 = vunpack.c.h.b16 %v107
  %v594 = vunpack.c.l.b16 %v108
  %v595 = vunpack.c.h.b16 %v108
  %v596 = vunpack.c.l.b16 %v109
  %v597 = vunpack.c.h.b16 %v109
  %v598 = vunpack.c.l.b16 %v110
  %v599 = vunpack.c.h.b16 %v110
  %v600 = vunpack.c.l.b16 %v111
  %v601 = vunpack.c.h.b16 %v111
  %v602 = vunpack.c.l.b16 %v112
  %v603 = vunpack.c.h.b16 %v112
  %v604 = vunpack.c.l.b16 %v113
  %v605 = vunpack.c.h.b16 %v113
  %v606 = vunpack.c.l.b16 %v114
  %v607 = vunpack.c.h.b16 %v114
  %v608 = vunpack.c.l.b16 %v115
  %v609 = vunpack.c.h.b16 %v115
  %v610 = vunpack.c.l.b16 %v116
  %v611 = vunpack.c.h.b16 %v116
  %v612 = vunpack.c.l.b16 %v117
  %v613 = vunpack.c.h.b16 %v117
  %v614 = vunpack.c.l.b16 %v118
  %v615 = vunpack.c.h.b16 %v118
  %v616 = vunpack.c.l.b16 %v119
  %v617 = vunpack.c.h.b16 %v119
  %v618 = vunpack.c.l.b16 %v120
  %v619 = vunpack.c.h.b16 %v120
  %v620 = vunpack.c.l.b16 %v121
  %v621 = vunpack.c.h.b16 %v121
  %v622 = vunpack.c.l.b16 %v122
  %v623 = vunpack.c.h.b16 %v122
  %v624 = vunpack.c.l.b16 %v123
  %v625 = vunpack.c.h.b16 %v123
  %v626 = vunpack.c.l.b16 %v124
  %v627 = vunpack.c.h.b16 %v124
  %v628 = vunpack.c.l.b16 %v125
  %v629 = vunpack.c.h.b16 %v125
  %v630 = vunpack.c.l.b16 %v126
  %v631 = vunpack.c.h.b16 %v126
  %v632 = vunpack.c.l.b16 %v127
  %v633 = vunpack.c.h.b16 %v127
  %v634 = vunpack.c.l.b16 %v128
  %v635 = vunpack.c.h.b16 %v128
  %v636 = vunpack.c.l.b16 %v129
  %v637 = vunpack.c.h.b16 %v129
  %v638 = vunpack.c.l.b16 %v130
  %v639 = vunpack.c.h.b16 %v130
  %v640 = vunpack.c.l.b16 %v131
  %v641 = vunpack.c.h.b16 %v131
  %v642 = vunpack.c.l.b16 %v132
  %v643 = vunpack.c.h.b16 %v132
  %v644 = vunpack.c.l.b16 %v133
  %v645 = vunpack.c.h.b16 %v133
  %v646 = vunpack.c.l.b16 %v134
  %v647 = vunpack.c.h.b16 %v134
  %v648 = vunpack.c.l.b16 %v135
  %v649 = vunpack.c.h.b16 %v135
  %v650 = vunpack.c.l.b16 %v136
  %v651 = vunpack.c.h.b16 %v136
  %v652 = vunpack.c.l.b16 %v137
  %v653 = vunpack.c.h.b16 %v137
  %v654 = vunpack.c.l.b16 %v138
  %v655 = vunpack.c.h.b16 %v138
  %v656 = vunpack.c.l.b16 %v139
  %v657 = vunpack.c.h.b16 %v139
  %v658 = vunpack.c.l.b16 %v140
  %v659 = vunpack.c.h.b16 %v140
  %v660 = vunpack.c.l.b16 %v141
  %v661 = vunpack.c.h.b16 %v141
  %v662 = vunpack.c.l.b16 %v142
  %v663 = vunpack.c.h.b16 %v142
  %v664 = vunpack.c.l.b16 %v143
  %v665 = vunpack.c.h.b16 %v143
  %v666 = vunpack.c.l.b16 %v144
  %v667 = vunpack.c.h.b16 %v144
  %v668 = vunpack.c.l.b16 %v145
  %v669 = vunpack.c.h.b16 %v145
  %v670 = vunpack.c.l.b16 %v146
  %v671 = vunpack.c.h.b16 %v146
  %v672 = vunpack.c.l.b16 %v147
  %v673 = vunpack.c.h.b16 %v147
  %v674 = vunpack.c.l.b16 %v148
  %v675 = vunpack.c.h.b16 %v148
  %v676 = vunpack.c.l.b16 %v149
  %v677 = vunpack.c.h.b16 %v149
  %v678 = vunpack.c.l.b16 %v150
  %v679 = vunpack.c.h.b16 %v150
  %v680 = vunpack.c.l.b16 %v151
  %v681 = vunpack.c.h.b16 %v151
  %v682 = vunpack.c.l.b16 %v152
  %v683 = vunpack.c.h.b16 %v152
  %v684 = vunpack.c.l.b16 %v153
  %v685 = vunpack.c.h.b16 %v153
  %v686 = vunpack.c.l.b16 %v154
  %v687 = vunpack.c.h.b16 %v154
  %v688 = vunpack.c.l.b16 %v155
  %v689 = vunpack.c.h.b16 %v155
  %v690 = vunpack.c.l.b16 %v156
  %v691 = vunpack.c.h.b16 %v156
  %v692 = vunpack.c.l.b16 %v157
  %v693 = vunpack.c.h.b16 %v157
  %v694 = vunpack.c.l.b16 %v158
  %v695 = vunpack.c.h.b16 %v158
  %v696 = vunpack.c.l.b16 %v159
  %v697 = vunpack.c.h.b16 %v159
  %v698 = vunpack.c.l.b16 %v160
  %v699 = vunpack.c.h.b16 %v160
  %v700 = vunpack.c.l.b16 %v161
  %v701 = vunpack.c.h.b16 %v161
  %v702 = vunpack.c.l.b16 %v162
  %v703 = vunpack.c.h.b16 %v162
  %v704 = vunpack.c.l.b16 %v163
  %v705 = vunpack.c.h.b16 %v163
  %v706 = vunpack.c.l.b16 %v164
  %v707 = vunpack.c.h.b16 %v164
  %v708 = vunpack.c.l.b16 %v165
  %v709 = vunpack.c.h.b16 %v165
  %v710 = vunpack.c.l.b16 %v166
  %v711 = vunpack.c.h.b16 %v166
  %v712 = vunpack.c.l.b16 %v167
  %v713 = vunpack.c.h.b16 %v167
  %v714 = vunpack.c.l.b16 %v168
  %v715 = vunpack.c.h.b16 %v168
  %v716 = vunpack.c.l.b16 %v169
  %v717 = vunpack.c.h.b16 %v169
  %v718 = vunpack.c.l.b16 %v170
  %v719 = vunpack.c.h.b16 %v170
  %v720 = vunpack.c.l.b16 %v171
  %v721 = vunpack.c.h.b16 %v171
  %v722 = vunpack.c.l.b16 %v172
  %v723 = vunpack.c.h.b16 %v172
  %v724 = vunpack.c.l.b16 %v173
  %v725 = vunpack.c.h.b16 %v173
  %v726 = vunpack.c.l.b16 %v174
  %v727 = vunpack.c.h.b16 %v174
  %v728 = vunpack.c.l.b16 %v175
  %v729 = vunpack.c.h.b16 %v175
  %v730 = vunpack.c.l.b16 %v176
  %v731 = vunpack.c.h.b16 %v176
  %v732 = vunpack.c.l.b16 %v177
  %v733 = vunpack.c.h.b16 %v177
  %v734 = vunpack.c.l.b16 %v178
  %v735 = vunpack.c.h.b16 %v178
  %v736 = vunpack.c.l.b16 %v179
  %v737 = vunpack.c.h.b16 %v179
  %v738 = vunpack.c.l.b16 %v180
  %v739 = vunpack.c.h.b16 %v180
  %v740 = vunpack.c.l.b16 %v181
  %v741 = vunpack.c.h.b16 %v181
  %v742 = vunpack.c.l.b16 %v182
  %v743 = vunpack.c.h.b16 %v182
  %v744 = vunpack.c.l.b16 %v183
  %v745 = vunpack.c.h.b16 %v183
  %v746 = vunpack.c.l.b16 %v184
  %v747 = vunpack.c.h.b16 %v184
  %v748 = vunpack.c.l.b16 %v185
  %v749 = vunpack.c.h.b16 %v185
  %v750 = vunpack.c.l.b16 %v186
  %v751 = vunpack.c.h.b16 %v186
  %v752 = vunpack.c.l.b16 %v187
  %v753 = vunpack.c.h.b16 %v187
  %v754 = vunpack.c.l.b16 %v188
  %v755 = vunpack.c.h.b16 %v188
  %v756 = vunpack.c.l.b16 %v189
  %v757 = vunpack.c.h.b16 %v189
  %v758 = vunpack.c.l.b16 %v190
  %v759 = vunpack.c.h.b16 %v190
  %v760 = vunpack.c.l.b16 %v191
  %v761 = vunpack.c.h.b16 %v191
  %v762 = vpack.c.b16 %v476, %v474
  %v763 = vpack.c.b16 %v477, %v475
  %v764 = vpack.c.b16 %v480, %v478
  %v765 = vpack.c.b16 %v481, %v479
  %v766 = vpack.c.b16 %v484, %v482
  %v767 = vpack.c.b16 %v485, %v483
  %v768 = vpack.c.b16 %v488, %v486
  %v769 = vpack.c.b16 %v489, %v487
  %v770 = vpack.c.b16 %v492, %v490
  %v771 = vpack.c.b16 %v493, %v491
  %v772 = vpack.c.b16 %v496, %v494
  %v773 = vpack.c.b16 %v497, %v495
  %v774 = vpack.c.b16 %v500, %v498
  %v775 = vpack.c.b16 %v501, %v499
  %v776 = vpack.c.b16 %v504, %v502
  %v777 = vpack.c.b16 %v505, %v503
  %v778 = vpack.c.b16 %v508, %v506
  %v779 = vpack.c.b16 %v509, %v507
  %v780 = vpack.c.b16 %v512, %v510
  %v781 = vpack.c.b16 %v513, %v511
  %v782 = vpack.c.b16 %v516, %v514
  %v783 = vpack.c.b16 %v517, %v515
  %v784 = vpack.c.b16 %v520, %v518
  %v785 = vpack.c.b16 %v521, %v519
  %v786 = vpack.c.b16 %v524, %v522
  %v787 = vpack.c.b16 %v525, %v523
  %v788 = vpack.c.b16 %v528, %v526
  %v789 = vpack.c.b16 %v529, %v527
  %v790 = vpack.c.b16 %v532, %v530
  %v791 = vpack.c.b16 %v533, %v531
  %v792 = vpack.c.b16 %v536, %v534
  %v793 = vpack.c.b16 %v537, %v535
  %v794 = vpack.c.b16 %v540, %v538
  %v795 = vpack.c.b16 %v541, %v539
  %v796 = vpack.c.b16 %v544, %v542
  %v797 = vpack.c.b16 %v545, %v543
  %v798 = vpack.c.b16 %v548, %v546
  %v799 = vpack.c.b16 %v549, %v547
  %v800 = vpack.c.b16 %v552, %v550
  %v801 = vpack.c.b16 %v553, %v551
  %v802 = vpack.c.b16 %v556, %v554
  %v803 = vpack.c.b16 %v557, %v555
  %v804 = vpack.c.b16 %v560, %v558
  %v805 = vpack.c.b16 %v561, %v559
  %v806 = vpack.c.b16 %v564, %v562
  %v807 = vpack.c.b16 %v565, %v563
  %v808 = vpack.c.b16 %v568, %v566
  %v809 = vpack.c.b16 %v569, %v567
  %v810 = vpack.c.b16 %v572, %v570
  %v811 = vpack.c.b16 %v573, %v571
  %v812 = vpack.c.b16 %v576, %v574
  %v813 = vpack.c.b16 %v577, %v575
  %v814 = vpack.c.b16 %v580, %v578
  %v815 = vpack.c.b16 %v581, %v579
  %v816 = vpack.c.b16 %v584, %v582
  %v817 = vpack.c.b16 %v585, %v583
  %v818 = vpack.c.b16 %v588, %v586
  %v819 = vpack.c.b16 %v589, %v587
  %v820 = vpack.c.b16 %v592, %v590
  %v821 = vpack.c.b16 %v593, %v591
  %v822 = vpack.c.b16 %v596, %v594
  %v823 = vpack.c.b16 %v597, %v595
  %v824 = vpack.c.b16 %v600, %v598
  %v825 = vpack.c.b16 %v601, %v599
  %v826 = vpack.c.b16 %v604, %v602
  %v827 = vpack.c.b16 %v605, %v603
  %v828 = vpack.c.b16 %v608, %v606
  %v829 = vpack.c.b16 %v609, %v607
  %v830 = vpack.c.b16 %v612, %v610
  %v831 = vpack.c.b16 %v613, %v611
  %v832 = vpack.c.b16 %v616, %v614
  %v833 = vpack.c.b16 %v617, %v615
  %v834 = vpack.c.b16 %v620, %v618
  %v835 = vpack.c.b16 %v621, %v619
  %v836 = vpack.c.b16 %v624, %v622
  %v837 = vpack.c.b16 %v625, %v623
  %v838 = vpack.c.b16 %v628, %v626
  %v839 = vpack.c.b16 %v629, %v627
  %v840 = vpack.c.b16 %v632, %v630
  %v841 = vpack.c.b16 %v633, %v631
  %v842 = vpack.c.b16 %v636, %v634
  %v843 = vpack.c.b16 %v637, %v635
  %v844 = vpack.c.b16 %v640, %v638
  %v845 = vpack.c.b16 %v641, %v639
  %v846 = vpack.c.b16 %v644, %v642
  %v847 = vpack.c.b16 %v645, %v643
  %v848 = vpack.c.b16 %v648, %v646
  %v849 = vpack.c.b16 %v649, %v647
  %v850 = vpack.c.b16 %v652, %v650
  %v851 = vpack.c.b16 %v653, %v651
  %v852 = vpack.c.b16 %v656, %v654
  %v853 = vpack.c.b16 %v657, %v655
  %v854 = vpack.c.b16 %v660, %v658
  %v855 = vpack.c.b16 %v661, %v659
  %v856 = vpack.c.b16 %v664, %v662
  %v857 = vpack.c.b16 %v665, %v663
  %v858 = vpack.c.b16 %v668, %v666
  %v859 = vpack.c.b16 %v669, %v667
  %v860 = vpack.c.b16 %v672, %v670
  %v861 = vpack.c.b16 %v673, %v671
  %v862 = vpack.c.b16 %v676, %v674
  %v863 = vpack.c.b16 %v677, %v675
  %v864 = vpack.c.b16 %v680, %v678
  %v865 = vpack.c.b16 %v681, %v679
  %v866 = vpack.c.b16 %v684, %v682
  %v867 = vpack.c.b16 %v685, %v683
  %v868 = vpack.c.b16 %v688, %v686
  %v869 = vpack.c.b16 %v689, %v687
  %v870 = vpack.c.b16 %v692, %v690
  %v871 = vpack.c.b16 %v693, %v691
  %v872 = vpack.c.b16 %v696, %v694
  %v873 = vpack.c.b16 %v697, %v695
  %v874 = vpack.c.b16 %v700, %v698
  %v875 = vpack.c.b16 %v701, %v699
  %v876 = vpack.c.b16 %v704, %v702
  %v877 = vpack.c.b16 %v705, %v703
  %v878 = vpack.c.b16 %v708, %v706
  %v879 = vpack.c.b16 %v709, %v707
  %v880 = vpack.c.b16 %v712, %v710
  %v881 = vpack.c.b16 %v713, %v711
  %v882 = vpack.c.b16 %v716, %v714
  %v883 = vpack.c.b16 %v717, %v715
  %v884 = vpack.c.b16 %v720, %v718
  %v885 = vpack.c.b16 %v721, %v719
  %v886 = vpack.c.b16 %v724, %v722
  %v887 = vpack.c.b16 %v725, %v723
  %v888 = vpack.c.b16 %v728, %v726
  %v889 = vpack.c.b16 %v729, %v727
  %v890 = vpack.c.b16 %v732, %v730
  %v891 = vpack.c.b16 %v733, %v731
  %v892 = vpack.c.b16 %v736, %v734
  %v893 = vpack.c.b16 %v737, %v735
  %v894 = vpack.c.b16 %v740, %v738
  %v895 = vpack.c.b16 %v741, %v739
  %v896 = vpack.c.b16 %v744, %v742
  %v897 = vpack.c.b16 %v745, %v743
  %v898 = vpack.c.b16 %v748, %v746
  %v899 = vpack.c.b16 %v749, %v747
  %v900 = vpack.c.b16 %v752, %v750
  %v901 = vpack.c.b16 %v753, %v751
  %v902 = vpack.c.b16 %v756, %v754
  %v903 = vpack.c.b16 %v757, %v755
  %v904 = vpack.c.b16 %v760, %v758
  %v905 = vpack.c.b16 %v761, %v759
  %1050 = vmatprep.subr.bf16.mxu0 %v763
  %1051 = vmatpush1.bf16.msra.mxu0 %v762
  %1052 = vmatprep.subr.bf16.mxu0 %v765
  %1053 = vmatpush1.bf16.msra.mxu0 %v764
  %1054 = vmatprep.subr.bf16.mxu0 %v767
  %1055 = vmatpush1.bf16.msra.mxu0 %v766
  %1056 = vmatprep.subr.bf16.mxu0 %v769
  %1057 = vmatpush1.bf16.msra.mxu0 %v768
  %1058 = vmatprep.subr.bf16.mxu0 %v771
  %1059 = vmatpush1.bf16.msra.mxu0 %v770
  %1060 = vmatprep.subr.bf16.mxu0 %v773
  %1061 = vmatpush1.bf16.msra.mxu0 %v772
  %1062 = vmatprep.subr.bf16.mxu0 %v775
  %1063 = vmatpush1.bf16.msra.mxu0 %v774
  %1064 = vmatprep.subr.bf16.mxu0 %v777
  %1065 = vmatpush1.bf16.msra.mxu0 %v776
  %1066 = vmatprep.subr.bf16.mxu0 %v779
  %1067 = vmatpush1.bf16.msra.mxu0 %v778
  %1068 = vmatprep.subr.bf16.mxu0 %v781
  %1069 = vmatpush1.bf16.msra.mxu0 %v780
  %1070 = vmatprep.subr.bf16.mxu0 %v783
  %1071 = vmatpush1.bf16.msra.mxu0 %v782
  %1072 = vmatprep.subr.bf16.mxu0 %v785
  %1073 = vmatpush1.bf16.msra.mxu0 %v784
  %1074 = vmatprep.subr.bf16.mxu0 %v787
  %1075 = vmatpush1.bf16.msra.mxu0 %v786
  %1076 = vmatprep.subr.bf16.mxu0 %v789
  %1077 = vmatpush1.bf16.msra.mxu0 %v788
  %1078 = vmatprep.subr.bf16.mxu0 %v791
  %1079 = vmatpush1.bf16.msra.mxu0 %v790
  %1080 = vmatprep.subr.bf16.mxu0 %v793
  %1081 = vmatpush1.bf16.msra.mxu0 %v792
  %1082 = vmatprep.mubr.bf16.mxu0 %v277
  %1083 = vmatmul.mubr.bf16.gmra.mrb[0].mxu0 %v276
  %v1084 = vpop.f32.mrb[0].mxu0
  %v1085 = vadd.f32 0.0, %v1084
  %v1086 = vpop.f32.mrb[0].mxu0
  %v1087 = vadd.f32 0.0, %v1086
  %v1088 = vpop.f32.mrb[0].mxu0
  %v1089 = vadd.f32 0.0, %v1088
  %v1090 = vpop.f32.mrb[0].mxu0
  %v1091 = vadd.f32 0.0, %v1090
  %1092 = vmatprep.mubr.bf16.mxu0 %v286
  %1093 = vmatmul.mubr.bf16.gmra.mrb[0].mxu0 %v285
  %v1094 = vpop.f32.mrb[0].mxu0
  %v1095 = vadd.f32 0.0, %v1094
  %v1096 = vpop.f32.mrb[0].mxu0
  %v1097 = vadd.f32 0.0, %v1096
  %v1098 = vpop.f32.mrb[0].mxu0
  %v1099 = vadd.f32 0.0, %v1098
  %v1100 = vpop.f32.mrb[0].mxu0
  %v1101 = vadd.f32 0.0, %v1100
  %1102 = vmatprep.mubr.bf16.mxu0 %v295
  %1103 = vmatmul.mubr.bf16.gmra.mrb[0].mxu0 %v294
  %v1104 = vpop.f32.mrb[0].mxu0
  %v1105 = vadd.f32 0.0, %v1104
  %v1106 = vpop.f32.mrb[0].mxu0
  %v1107 = vadd.f32 0.0, %v1106
  %v1108 = vpop.f32.mrb[0].mxu0
  %v1109 = vadd.f32 0.0, %v1108
  %v1110 = vpop.f32.mrb[0].mxu0
  %v1111 = vadd.f32 0.0, %v1110
  %1112 = vdwg.mxu0
  %1113 = vmatprep.subr.bf16.mxu0 %v795
  %1114 = vmatpush1.bf16.msra.mxu0 %v794
  %1115 = vmatprep.subr.bf16.mxu0 %v797
  %1116 = vmatpush1.bf16.msra.mxu0 %v796
  %1117 = vmatprep.subr.bf16.mxu0 %v799
  %1118 = vmatpush1.bf16.msra.mxu0 %v798
  %1119 = vmatprep.subr.bf16.mxu0 %v801
  %1120 = vmatpush1.bf16.msra.mxu0 %v800
  %1121 = vmatprep.subr.bf16.mxu0 %v803
  %1122 = vmatpush1.bf16.msra.mxu0 %v802
  %1123 = vmatprep.subr.bf16.mxu0 %v805
  %1124 = vmatpush1.bf16.msra.mxu0 %v804
  %1125 = vmatprep.subr.bf16.mxu0 %v807
  %1126 = vmatpush1.bf16.msra.mxu0 %v806
  %1127 = vmatprep.subr.bf16.mxu0 %v809
  %1128 = vmatpush1.bf16.msra.mxu0 %v808
  %1129 = vmatprep.subr.bf16.mxu0 %v811
  %1130 = vmatpush1.bf16.msra.mxu0 %v810
  %1131 = vmatprep.subr.bf16.mxu0 %v813
  %1132 = vmatpush1.bf16.msra.mxu0 %v812
  %1133 = vmatprep.subr.bf16.mxu0 %v815
  %1134 = vmatpush1.bf16.msra.mxu0 %v814
  %1135 = vmatprep.subr.bf16.mxu0 %v817
  %1136 = vmatpush1.bf16.msra.mxu0 %v816
  %1137 = vmatprep.subr.bf16.mxu0 %v819
  %1138 = vmatpush1.bf16.msra.mxu0 %v818
  %1139 = vmatprep.subr.bf16.mxu0 %v821
  %1140 = vmatpush1.bf16.msra.mxu0 %v820
  %1141 = vmatprep.subr.bf16.mxu0 %v823
  %1142 = vmatpush1.bf16.msra.mxu0 %v822
  %1143 = vmatprep.subr.bf16.mxu0 %v825
  %1144 = vmatpush1.bf16.msra.mxu0 %v824
  %1145 = vmatprep.mubr.bf16.mxu0 %v279
  %1146 = vmatmul.mubr.bf16.gmra.mrb[0].mxu0 %v278
  %v1147 = vpop.f32.mrb[0].mxu0
  %v1148 = vadd.f32 %v1085, %v1147
  %v1149 = vpop.f32.mrb[0].mxu0
  %v1150 = vadd.f32 %v1087, %v1149
  %v1151 = vpop.f32.mrb[0].mxu0
  %v1152 = vadd.f32 %v1089, %v1151
  %v1153 = vpop.f32.mrb[0].mxu0
  %v1154 = vadd.f32 %v1091, %v1153
  %1155 = vmatprep.mubr.bf16.mxu0 %v288
  %1156 = vmatmul.mubr.bf16.gmra.mrb[0].mxu0 %v287
  %v1157 = vpop.f32.mrb[0].mxu0
  %v1158 = vadd.f32 %v1095, %v1157
  %v1159 = vpop.f32.mrb[0].mxu0
  %v1160 = vadd.f32 %v1097, %v1159
  %v1161 = vpop.f32.mrb[0].mxu0
  %v1162 = vadd.f32 %v1099, %v1161
  %v1163 = vpop.f32.mrb[0].mxu0
  %v1164 = vadd.f32 %v1101, %v1163
  %1165 = vmatprep.mubr.bf16.mxu0 %v297
  %1166 = vmatmul.mubr.bf16.gmra.mrb[0].mxu0 %v296
  %v1167 = vpop.f32.mrb[0].mxu0
  %v1168 = vadd.f32 %v1105, %v1167
  %v1169 = vpop.f32.mrb[0].mxu0
  %v1170 = vadd.f32 %v1107, %v1169
  %v1171 = vpop.f32.mrb[0].mxu0
  %v1172 = vadd.f32 %v1109, %v1171
  %v1173 = vpop.f32.mrb[0].mxu0
  %v1174 = vadd.f32 %v1111, %v1173
  %1175 = vdwg.mxu0
  %1176 = vmatprep.subr.bf16.mxu0 %v827
  %1177 = vmatpush1.bf16.msra.mxu0 %v826
  %1178 = vmatprep.subr.bf16.mxu0 %v829
  %1179 = vmatpush1.bf16.msra.mxu0 %v828
  %1180 = vmatprep.subr.bf16.mxu0 %v831
  %1181 = vmatpush1.bf16.msra.mxu0 %v830
  %1182 = vmatprep.subr.bf16.mxu0 %v833
  %1183 = vmatpush1.bf16.msra.mxu0 %v832
  %1184 = vmatprep.subr.bf16.mxu0 %v835
  %1185 = vmatpush1.bf16.msra.mxu0 %v834
  %1186 = vmatprep.subr.bf16.mxu0 %v837
  %1187 = vmatpush1.bf16.msra.mxu0 %v836
  %1188 = vmatprep.subr.bf16.mxu0 %v839
  %1189 = vmatpush1.bf16.msra.mxu0 %v838
  %1190 = vmatprep.subr.bf16.mxu0 %v841
  %1191 = vmatpush1.bf16.msra.mxu0 %v840
  %1192 = vmatprep.subr.bf16.mxu0 %v843
  %1193 = vmatpush1.bf16.msra.mxu0 %v842
  %1194 = vmatprep.subr.bf16.mxu0 %v845
  %1195 = vmatpush1.bf16.msra.mxu0 %v844
  %1196 = vmatprep.subr.bf16.mxu0 %v847
  %1197 = vmatpush1.bf16.msra.mxu0 %v846
  %1198 = vmatprep.subr.bf16.mxu0 %v849
  %1199 = vmatpush1.bf16.msra.mxu0 %v848
  %1200 = vmatprep.subr.bf16.mxu0 %v851
  %1201 = vmatpush1.bf16.msra.mxu0 %v850
  %1202 = vmatprep.subr.bf16.mxu0 %v853
  %1203 = vmatpush1.bf16.msra.mxu0 %v852
  %1204 = vmatprep.subr.bf16.mxu0 %v855
  %1205 = vmatpush1.bf16.msra.mxu0 %v854
  %1206 = vmatprep.subr.bf16.mxu0 %v857
  %1207 = vmatpush1.bf16.msra.mxu0 %v856
  %1208 = vmatprep.mubr.bf16.mxu0 %v281
  %1209 = vmatmul.mubr.bf16.gmra.mrb[0].mxu0 %v280
  %v1210 = vpop.f32.mrb[0].mxu0
  %v1211 = vadd.f32 %v1148, %v1210
  %v1212 = vpop.f32.mrb[0].mxu0
  %v1213 = vadd.f32 %v1150, %v1212
  %v1214 = vpop.f32.mrb[0].mxu0
  %v1215 = vadd.f32 %v1152, %v1214
  %v1216 = vpop.f32.mrb[0].mxu0
  %v1217 = vadd.f32 %v1154, %v1216
  %1218 = vmatprep.mubr.bf16.mxu0 %v290
  %1219 = vmatmul.mubr.bf16.gmra.mrb[0].mxu0 %v289
  %v1220 = vpop.f32.mrb[0].mxu0
  %v1221 = vadd.f32 %v1158, %v1220
  %v1222 = vpop.f32.mrb[0].mxu0
  %v1223 = vadd.f32 %v1160, %v1222
  %v1224 = vpop.f32.mrb[0].mxu0
  %v1225 = vadd.f32 %v1162, %v1224
  %v1226 = vpop.f32.mrb[0].mxu0
  %v1227 = vadd.f32 %v1164, %v1226
  %1228 = vmatprep.mubr.bf16.mxu0 %v299
  %1229 = vmatmul.mubr.bf16.gmra.mrb[0].mxu0 %v298
  %v1230 = vpop.f32.mrb[0].mxu0
  %v1231 = vadd.f32 %v1168, %v1230
  %v1232 = vpop.f32.mrb[0].mxu0
  %v1233 = vadd.f32 %v1170, %v1232
  %v1234 = vpop.f32.mrb[0].mxu0
  %v1235 = vadd.f32 %v1172, %v1234
  %v1236 = vpop.f32.mrb[0].mxu0
  %v1237 = vadd.f32 %v1174, %v1236
  %1238 = vdwg.mxu0
  %1239 = vmatprep.subr.bf16.mxu0 %v859
  %1240 = vmatpush1.bf16.msra.mxu0 %v858
  %1241 = vmatprep.subr.bf16.mxu0 %v861
  %1242 = vmatpush1.bf16.msra.mxu0 %v860
  %1243 = vmatprep.subr.bf16.mxu0 %v863
  %1244 = vmatpush1.bf16.msra.mxu0 %v862
  %1245 = vmatprep.subr.bf16.mxu0 %v865
  %1246 = vmatpush1.bf16.msra.mxu0 %v864
  %1247 = vmatprep.subr.bf16.mxu0 %v867
  %1248 = vmatpush1.bf16.msra.mxu0 %v866
  %1249 = vmatprep.subr.bf16.mxu0 %v869
  %1250 = vmatpush1.bf16.msra.mxu0 %v868
  %1251 = vmatprep.subr.bf16.mxu0 %v871
  %1252 = vmatpush1.bf16.msra.mxu0 %v870
  %1253 = vmatprep.subr.bf16.mxu0 %v873
  %1254 = vmatpush1.bf16.msra.mxu0 %v872
  %1255 = vmatprep.subr.bf16.mxu0 %v875
  %1256 = vmatpush1.bf16.msra.mxu0 %v874
  %1257 = vmatprep.subr.bf16.mxu0 %v877
  %1258 = vmatpush1.bf16.msra.mxu0 %v876
  %1259 = vmatprep.subr.bf16.mxu0 %v879
  %1260 = vmatpush1.bf16.msra.mxu0 %v878
  %1261 = vmatprep.subr.bf16.mxu0 %v881
  %1262 = vmatpush1.bf16.msra.mxu0 %v880
  %1263 = vmatprep.subr.bf16.mxu0 %v883
  %1264 = vmatpush1.bf16.msra.mxu0 %v882
  %1265 = vmatprep.subr.bf16.mxu0 %v885
  %1266 = vmatpush1.bf16.msra.mxu0 %v884
  %1267 = vmatprep.subr.bf16.mxu0 %v887
  %1268 = vmatpush1.bf16.msra.mxu0 %v886
  %1269 = vmatprep.subr.bf16.mxu0 %v889
  %1270 = vmatpush1.bf16.msra.mxu0 %v888
  %1271 = vmatprep.mubr.bf16.mxu0 %v283
  %1272 = vmatmul.mubr.bf16.gmra.mrb[0].mxu0 %v282
  %v1273 = vpop.f32.mrb[0].mxu0
  %v1274 = vadd.f32 %v1211, %v1273
  %v1275 = vpop.f32.mrb[0].mxu0
  %v1276 = vadd.f32 %v1213, %v1275
  %v1277 = vpop.f32.mrb[0].mxu0
  %v1278 = vadd.f32 %v1215, %v1277
  %v1279 = vpop.f32.mrb[0].mxu0
  %v1280 = vadd.f32 %v1217, %v1279
  %1281 = vmatprep.mubr.bf16.mxu0 %v292
  %1282 = vmatmul.mubr.bf16.gmra.mrb[0].mxu0 %v291
  %v1283 = vpop.f32.mrb[0].mxu0
  %v1284 = vadd.f32 %v1221, %v1283
  %v1285 = vpop.f32.mrb[0].mxu0
  %v1286 = vadd.f32 %v1223, %v1285
  %v1287 = vpop.f32.mrb[0].mxu0
  %v1288 = vadd.f32 %v1225, %v1287
  %v1289 = vpop.f32.mrb[0].mxu0
  %v1290 = vadd.f32 %v1227, %v1289
  %1291 = vmatprep.mubr.bf16.mxu0 %v301
  %1292 = vmatmul.mubr.bf16.gmra.mrb[0].mxu0 %v300
  %v1293 = vpop.f32.mrb[0].mxu0
  %v1294 = vadd.f32 %v1231, %v1293
  %v1295 = vpop.f32.mrb[0].mxu0
  %v1296 = vadd.f32 %v1233, %v1295
  %v1297 = vpop.f32.mrb[0].mxu0
  %v1298 = vadd.f32 %v1235, %v1297
  %v1299 = vpop.f32.mrb[0].mxu0
  %v1300 = vadd.f32 %v1237, %v1299
  %1301 = vdwg.mxu0
  %1302 = vmatprep.subr.bf16.mxu0 %v891
  %1303 = vmatpush1.bf16.msra.mxu0 %v890
  %1304 = vmatprep.subr.bf16.mxu0 %v893
  %1305 = vmatpush1.bf16.msra.mxu0 %v892
  %1306 = vmatprep.subr.bf16.mxu0 %v895
  %1307 = vmatpush1.bf16.msra.mxu0 %v894
  %1308 = vmatprep.subr.bf16.mxu0 %v897
  %1309 = vmatpush1.bf16.msra.mxu0 %v896
  %1310 = vmatprep.subr.bf16.mxu0 %v899
  %1311 = vmatpush1.bf16.msra.mxu0 %v898
  %1312 = vmatprep.subr.bf16.mxu0 %v901
  %1313 = vmatpush1.bf16.msra.mxu0 %v900
  %1314 = vmatprep.subr.bf16.mxu0 %v903
  %1315 = vmatpush1.bf16.msra.mxu0 %v902
  %1316 = vmatprep.subr.bf16.mxu0 %v905
  %1317 = vmatpush1.bf16.msra.mxu0 %v904
  %1318 = vmatprep.subr.bf16.mxu0 0
  %1319 = vmatpush1.bf16.msra.mxu0 0
  %1320 = vmatprep.subr.bf16.mxu0 0
  %1321 = vmatpush1.bf16.msra.mxu0 0
  %1322 = vmatprep.subr.bf16.mxu0 0
  %1323 = vmatpush1.bf16.msra.mxu0 0
  %1324 = vmatprep.subr.bf16.mxu0 0
  %1325 = vmatpush1.bf16.msra.mxu0 0
  %1326 = vmatprep.subr.bf16.mxu0 0
  %1327 = vmatpush1.bf16.msra.mxu0 0
  %1328 = vmatprep.subr.bf16.mxu0 0
  %1329 = vmatpush1.bf16.msra.mxu0 0
  %1330 = vmatprep.subr.bf16.mxu0 0
  %1331 = vmatpush1.bf16.msra.mxu0 0
  %1332 = vmatprep.subr.bf16.mxu0 0
  %1333 = vmatpush1.bf16.msra.mxu0 0
  %1334 = vmatprep.mubr.bf16.mxu0 0
  %1335 = vmatmul.mubr.bf16.gmra.mrb[0].mxu0 %v284
  %v1336 = vpop.f32.mrb[0].mxu0
  %v1337 = vadd.f32 %v1274, %v1336
  %v1338 = vpop.f32.mrb[0].mxu0
  %v1339 = vadd.f32 %v1276, %v1338
  %v1340 = vpop.f32.mrb[0].mxu0
  %v1341 = vadd.f32 %v1278, %v1340
  %v1342 = vpop.f32.mrb[0].mxu0
  %v1343 = vadd.f32 %v1280, %v1342
  %1344 = vmatprep.mubr.bf16.mxu0 0
  %1345 = vmatmul.mubr.bf16.gmra.mrb[0].mxu0 %v293
  %v1346 = vpop.f32.mrb[0].mxu0
  %v1347 = vadd.f32 %v1284, %v1346
  %v1348 = vpop.f32.mrb[0].mxu0
  %v1349 = vadd.f32 %v1286, %v1348
  %v1350 = vpop.f32.mrb[0].mxu0
  %v1351 = vadd.f32 %v1288, %v1350
  %v1352 = vpop.f32.mrb[0].mxu0
  %v1353 = vadd.f32 %v1290, %v1352
  %1354 = vmatprep.mubr.bf16.mxu0 0
  %1355 = vmatmul.mubr.bf16.gmra.mrb[0].mxu0 %v302
  %v1356 = vpop.f32.mrb[0].mxu0
  %v1357 = vadd.f32 %v1294, %v1356
  %v1358 = vpop.f32.mrb[0].mxu0
  %v1359 = vadd.f32 %v1296, %v1358
  %v1360 = vpop.f32.mrb[0].mxu0
  %v1361 = vadd.f32 %v1298, %v1360
  %v1362 = vpop.f32.mrb[0].mxu0
  %v1363 = vadd.f32 %v1300, %v1362
  %1364 = vdwg.mxu0
  %v1365 = vld [vmem:[%s2] sm:$0x3]
  %v1366 = vld [vmem:[%s3] sm:$0x3]
  %v1367 = vadd.f32 %v1337, %v1341
  %v1368 = vadd.f32 %v1367, %v1347
  %v1369 = vadd.f32 %v1368, %v1351
  %v1370 = vrot.slane %v1369, 4
  %v1371 = vadd.f32 %v1369, %v1370
  %v1372 = vrot.slane %v1371, 2
  %v1373 = vadd.f32 %v1371, %v1372
  %v1374 = vrot.slane %v1373, 1
  %v1375 = vadd.f32 %v1373, %v1374
  %v1376 = vadd.f32 %v1339, %v1343
  %v1377 = vadd.f32 %v1376, %v1349
  %v1378 = vadd.f32 %v1377, %v1353
  %v1379 = vrot.slane %v1378, 4
  %v1380 = vadd.f32 %v1378, %v1379
  %v1381 = vrot.slane %v1380, 2
  %v1382 = vadd.f32 %v1380, %v1381
  %v1383 = vrot.slane %v1382, 1
  %v1384 = vadd.f32 %v1382, %v1383
  %v1385 = vmul.f32 %v1375, 0.03125
  %v1386 = vmul.f32 %v1384, 0.03125
  %v1387 = vmul.f32 %v1337, %v1337
  %v1388 = vmul.f32 %v1339, %v1339
  %v1389 = vmul.f32 %v1341, %v1341
  %v1390 = vmul.f32 %v1343, %v1343
  %v1391 = vmul.f32 %v1347, %v1347
  %v1392 = vmul.f32 %v1349, %v1349
  %v1393 = vmul.f32 %v1351, %v1351
  %v1394 = vmul.f32 %v1353, %v1353
  %v1395 = vadd.f32 %v1387, %v1389
  %v1396 = vadd.f32 %v1395, %v1391
  %v1397 = vadd.f32 %v1396, %v1393
  %v1398 = vrot.slane %v1397, 4
  %v1399 = vadd.f32 %v1397, %v1398
  %v1400 = vrot.slane %v1399, 2
  %v1401 = vadd.f32 %v1399, %v1400
  %v1402 = vrot.slane %v1401, 1
  %v1403 = vadd.f32 %v1401, %v1402
  %v1404 = vadd.f32 %v1388, %v1390
  %v1405 = vadd.f32 %v1404, %v1392
  %v1406 = vadd.f32 %v1405, %v1394
  %v1407 = vrot.slane %v1406, 4
  %v1408 = vadd.f32 %v1406, %v1407
  %v1409 = vrot.slane %v1408, 2
  %v1410 = vadd.f32 %v1408, %v1409
  %v1411 = vrot.slane %v1410, 1
  %v1412 = vadd.f32 %v1410, %v1411
  %v1413 = vmul.f32 %v1403, 0.03125
  %v1414 = vmul.f32 %v1412, 0.03125
  %v1415 = vmul.f32 %v1385, %v1385
  %v1416 = vmul.f32 %v1386, %v1386
  %v1417 = vsub.f32 %v1413, %v1415
  %v1418 = vsub.f32 %v1414, %v1416
  %v1419 = vmax.f32 %v1417, 0.0
  %v1420 = vmax.f32 %v1418, 0.0
  %v1421 = vsub.f32 %v1337, %v1385
  %v1422 = vsub.f32 %v1339, %v1386
  %v1423 = vsub.f32 %v1341, %v1385
  %v1424 = vsub.f32 %v1343, %v1386
  %v1425 = vsub.f32 %v1347, %v1385
  %v1426 = vsub.f32 %v1349, %v1386
  %v1427 = vsub.f32 %v1351, %v1385
  %v1428 = vsub.f32 %v1353, %v1386
  %v1429 = vadd.f32 %v1419, 1e-05
  %v1430 = vadd.f32 %v1420, 1e-05
  %v1431 = vrsqrt.pop %v1429
  %v1432 = vrsqrt.pop %v1430
  %v1433 = vmul.f32 %v1421, %v1431
  %v1434 = vmul.f32 %v1422, %v1432
  %v1435 = vmul.f32 %v1423, %v1431
  %v1436 = vmul.f32 %v1424, %v1432
  %v1437 = vmul.f32 %v1425, %v1431
  %v1438 = vmul.f32 %v1426, %v1432
  %v1439 = vmul.f32 %v1427, %v1431
  %v1440 = vmul.f32 %v1428, %v1432
  %v1442 = vlaneseq
  %v1443 = vshrl.u32 %v1442, 7
  %v1444 = vsub.s32 0, %v1443
  %v1445 = vrot.slane %v1365, %v1444
  %v1446 = vlaneseq
  %v1447 = vshrl.u32 %v1446, 7
  %v1448 = vsub.s32 1, %v1447
  %v1449 = vrot.slane %v1365, %v1448
  %v1452 = vmul.f32 %v1433, %v1445
  %v1453 = vmul.f32 %v1434, %v1449
  %v1454 = vmul.f32 %v1435, %v1445
  %v1455 = vmul.f32 %v1436, %v1449
  %v1456 = vmul.f32 %v1437, %v1445
  %v1457 = vmul.f32 %v1438, %v1449
  %v1458 = vmul.f32 %v1439, %v1445
  %v1459 = vmul.f32 %v1440, %v1449
  %v1461 = vlaneseq
  %v1462 = vshrl.u32 %v1461, 7
  %v1463 = vsub.s32 0, %v1462
  %v1464 = vrot.slane %v1366, %v1463
  %v1465 = vlaneseq
  %v1466 = vshrl.u32 %v1465, 7
  %v1467 = vsub.s32 1, %v1466
  %v1468 = vrot.slane %v1366, %v1467
  %v1471 = vadd.f32 %v1452, %v1464
  %v1472 = vadd.f32 %v1453, %v1468
  %v1473 = vadd.f32 %v1454, %v1464
  %v1474 = vadd.f32 %v1455, %v1468
  %v1475 = vadd.f32 %v1456, %v1464
  %v1476 = vadd.f32 %v1457, %v1468
  %v1477 = vadd.f32 %v1458, %v1464
  %v1478 = vadd.f32 %v1459, %v1468
  %v1479 = vmul.f32 %v1471, 0.2
  %v1480 = vmul.f32 %v1472, 0.2
  %v1481 = vmul.f32 %v1473, 0.2
  %v1482 = vmul.f32 %v1474, 0.2
  %v1483 = vmul.f32 %v1475, 0.2
  %v1484 = vmul.f32 %v1476, 0.2
  %v1485 = vmul.f32 %v1477, 0.2
  %v1486 = vmul.f32 %v1478, 0.2
  %v1487 = vmax.f32 %v1471, %v1479
  %v1488 = vmax.f32 %v1472, %v1480
  %v1489 = vmax.f32 %v1473, %v1481
  %v1490 = vmax.f32 %v1474, %v1482
  %v1491 = vmax.f32 %v1475, %v1483
  %v1492 = vmax.f32 %v1476, %v1484
  %v1493 = vmax.f32 %v1477, %v1485
  %v1494 = vmax.f32 %v1478, %v1486
  %v1495 = vpack.c.bf16 %v1489, %v1487
  %v1496 = vpack.c.bf16 %v1490, %v1488
  %v1497 = vpack.c.bf16 %v1493, %v1491
  %v1498 = vpack.c.bf16 %v1494, %v1492
  %v1503 = vunpack.c.l.b16 %v1495
  %v1504 = vunpack.c.l.b16 %v1496
  %v1505 = vunpack.c.h.b16 %v1495
  %v1506 = vunpack.c.h.b16 %v1496
  %v1507 = vunpack.c.l.b16 %v1497
  %v1508 = vunpack.c.l.b16 %v1498
  %v1509 = vunpack.c.h.b16 %v1497
  %v1510 = vunpack.c.h.b16 %v1498
  %v1511 = vpack.c.b16 %v1504, %v1503
  %v1512 = vpack.c.b16 %v1506, %v1505
  %v1513 = vpack.c.b16 %v1508, %v1507
  %v1514 = vpack.c.b16 %v1510, %v1509
  %1519 = vst [vmem:[%s4] sm:$0xff] %v1511
  %1520 = vst [vmem:[%s4 + $0x8] sm:$0xff] %v1512
  %1521 = vst [vmem:[%s4 + $0x10] sm:$0xff] %v1513
  %1522 = vst [vmem:[%s4 + $0x18] sm:$0xff] %v1514
  %v1523 = vrot.slane %v1357, 4
  %v1524 = vadd.f32 %v1357, %v1523
  %v1525 = vrot.slane %v1524, 2
  %v1526 = vadd.f32 %v1524, %v1525
  %v1527 = vrot.slane %v1526, 1
  %v1528 = vadd.f32 %v1526, %v1527
  %v1529 = vrot.slane %v1359, 4
  %v1530 = vadd.f32 %v1359, %v1529
  %v1531 = vrot.slane %v1530, 2
  %v1532 = vadd.f32 %v1530, %v1531
  %v1533 = vrot.slane %v1532, 1
  %v1534 = vadd.f32 %v1532, %v1533
  %v1535 = vmul.f32 %v1528, 0.125
  %v1536 = vmul.f32 %v1534, 0.125
  %v1537 = vmul.f32 %v1357, %v1357
  %v1538 = vmul.f32 %v1359, %v1359
  %v1539 = vrot.slane %v1537, 4
  %v1540 = vadd.f32 %v1537, %v1539
  %v1541 = vrot.slane %v1540, 2
  %v1542 = vadd.f32 %v1540, %v1541
  %v1543 = vrot.slane %v1542, 1
  %v1544 = vadd.f32 %v1542, %v1543
  %v1545 = vrot.slane %v1538, 4
  %v1546 = vadd.f32 %v1538, %v1545
  %v1547 = vrot.slane %v1546, 2
  %v1548 = vadd.f32 %v1546, %v1547
  %v1549 = vrot.slane %v1548, 1
  %v1550 = vadd.f32 %v1548, %v1549
  %v1551 = vmul.f32 %v1544, 0.125
  %v1552 = vmul.f32 %v1550, 0.125
  %v1553 = vmul.f32 %v1535, %v1535
  %v1554 = vmul.f32 %v1536, %v1536
  %v1555 = vsub.f32 %v1551, %v1553
  %v1556 = vsub.f32 %v1552, %v1554
  %v1557 = vmax.f32 %v1555, 0.0
  %v1558 = vmax.f32 %v1556, 0.0
  %v1559 = vsub.f32 %v1357, %v1535
  %v1560 = vsub.f32 %v1359, %v1536
  %v1561 = vadd.f32 %v1557, 1e-05
  %v1562 = vadd.f32 %v1558, 1e-05
  %v1563 = vrsqrt.pop %v1561
  %v1564 = vrsqrt.pop %v1562
  %v1565 = vmul.f32 %v1559, %v1563
  %v1566 = vmul.f32 %v1560, %v1564
  %v1567 = vmul.f32 %v1565, %v1445
  %v1568 = vmul.f32 %v1566, %v1449
  %v1569 = vadd.f32 %v1567, %v1464
  %v1570 = vadd.f32 %v1568, %v1468
  %v1571 = vmul.f32 %v1569, 0.2
  %v1572 = vmul.f32 %v1570, 0.2
  %v1573 = vmax.f32 %v1569, %v1571
  %v1574 = vmax.f32 %v1570, %v1572
  %v1575 = vpack.c.bf16 %v1573, %v1573
  %v1576 = vpack.c.bf16 %v1574, %v1574
  %v1579 = vunpack.c.l.b16 %v1575
  %v1580 = vunpack.c.l.b16 %v1576
  %v1581 = vpack.c.b16 %v1580, %v1579
  %1583 = vst [vmem:[%s4 + $0x20] sm:$0xff] %v1581
  %vm1584 = vcmask 1041408
  %v1585 = vsel %vm1584, %v1361, 0.0
  %v1586 = vrot.slane %v1585, 4
  %v1587 = vadd.f32 %v1585, %v1586
  %v1588 = vrot.slane %v1587, 2
  %v1589 = vadd.f32 %v1587, %v1588
  %v1590 = vrot.slane %v1589, 1
  %v1591 = vadd.f32 %v1589, %v1590
  %v1592 = vsel %vm1584, %v1363, 0.0
  %v1593 = vrot.slane %v1592, 4
  %v1594 = vadd.f32 %v1592, %v1593
  %v1595 = vrot.slane %v1594, 2
  %v1596 = vadd.f32 %v1594, %v1595
  %v1597 = vrot.slane %v1596, 1
  %v1598 = vadd.f32 %v1596, %v1597
  %v1599 = vmul.f32 %v1591, 0.5
  %v1600 = vmul.f32 %v1598, 0.5
  %v1601 = vmul.f32 %v1361, %v1361
  %v1602 = vmul.f32 %v1363, %v1363
  %v1603 = vsel %vm1584, %v1601, 0.0
  %v1604 = vrot.slane %v1603, 4
  %v1605 = vadd.f32 %v1603, %v1604
  %v1606 = vrot.slane %v1605, 2
  %v1607 = vadd.f32 %v1605, %v1606
  %v1608 = vrot.slane %v1607, 1
  %v1609 = vadd.f32 %v1607, %v1608
  %v1610 = vsel %vm1584, %v1602, 0.0
  %v1611 = vrot.slane %v1610, 4
  %v1612 = vadd.f32 %v1610, %v1611
  %v1613 = vrot.slane %v1612, 2
  %v1614 = vadd.f32 %v1612, %v1613
  %v1615 = vrot.slane %v1614, 1
  %v1616 = vadd.f32 %v1614, %v1615
  %v1617 = vmul.f32 %v1609, 0.5
  %v1618 = vmul.f32 %v1616, 0.5
  %v1619 = vmul.f32 %v1599, %v1599
  %v1620 = vmul.f32 %v1600, %v1600
  %v1621 = vsub.f32 %v1617, %v1619
  %v1622 = vsub.f32 %v1618, %v1620
  %v1623 = vmax.f32 %v1621, 0.0
  %v1624 = vmax.f32 %v1622, 0.0
  %v1625 = vsub.f32 %v1361, %v1599
  %v1626 = vsub.f32 %v1363, %v1600
  %v1627 = vadd.f32 %v1623, 1e-05
  %v1628 = vadd.f32 %v1624, 1e-05
  %v1629 = vrsqrt.pop %v1627
  %v1630 = vrsqrt.pop %v1628
  %v1631 = vmul.f32 %v1625, %v1629
  %v1632 = vmul.f32 %v1626, %v1630
  %v1633 = vmul.f32 %v1631, %v1445
  %v1634 = vmul.f32 %v1632, %v1449
  %v1635 = vadd.f32 %v1633, %v1464
  %v1636 = vadd.f32 %v1634, %v1468
  %v1637 = vmul.f32 %v1635, 0.2
  %v1638 = vmul.f32 %v1636, 0.2
  %v1639 = vmax.f32 %v1635, %v1637
  %v1640 = vmax.f32 %v1636, %v1638
  %v1641 = vpack.c.bf16 %v1639, %v1639
  %v1642 = vpack.c.bf16 %v1640, %v1640
  %v1645 = vunpack.c.l.b16 %v1641
  %v1646 = vunpack.c.l.b16 %v1642
  %v1647 = vpack.c.b16 %v1646, %v1645
  %1649 = vst [vmem:[%s4 + $0x28] sm:$0x11] %v1647
  %1650 = vst [vmem:[%s4 + $0x28] sm:$0xee] 0
  // Predicated region
  $region18: #{tipd_forward.7} parent=0 // pred_check
    _
  $region19: #{tipd_forward.7} parent=0 // pred_check_branch
    %1652 = sbr.rel (0) target = $region21
  $region20: #{tipd_forward.7} parent=0 // pred_region
    _
  $region21: #{tipd_forward.7} parent=0 // pred_fallthru
    _
  // Predicated region
  $region22: #{tipd_forward.7} parent=0 // pred_check
    _
  $region23: #{tipd_forward.7} parent=0 // pred_check_branch
    %1654 = sbr.rel (0) target = $region25
  $region24: #{tipd_forward.7} parent=0 // pred_region
    _
  $region25: #{tipd_forward.7} parent=0 // pred_fallthru
    _

// kernel: tipd_forward.8
$region0: #{tipd_forward.8}
  #allocation0 [shape = 'u32[]', space=smem, size = 0x4, offset = 0x4, fixed_abs, tag = 'smem constant byte address 0x4 - core index']
  #allocation1 [shape = 'u32[144,128]{1,0:T(1,128)}', space=vmem, size = 0x12000, scoped, tag = 'internal scratch']
  %s0 = inlined_call_operand.vmem [shape: bf16[48,2304], index: 0, kind: input, shape index: {}]
  %s1 = inlined_call_operand.vmem [shape: bf16[2304,512], index: 1, kind: input, shape index: {}]
  %s2 = inlined_call_operand.vmem [shape: f32[1,512], index: 2, kind: input, shape index: {}]
  %s3 = inlined_call_operand.vmem [shape: f32[1,512], index: 3, kind: input, shape index: {}]
  %s4 = inlined_call_operand.vmem [shape: bf16[48,512], index: 4, kind: output, shape index: {}]
  %s5 = sld [smem:[#allocation0]]
  $region26: #{tipd_forward.8} parent=0
    _
  %s7 = ssub.s32 1, %s5
  %s8 = scalar_select 0, %s7, %s5
  // Predicated region
  $region2: #{tipd_forward.8} parent=0 // pred_check
    _
  $region3: #{tipd_forward.8} parent=0 // pred_check_branch
    %10 = sbr.rel (0) target = $region5
  $region4: #{tipd_forward.8} parent=0 // pred_region
    _
  $region5: #{tipd_forward.8} parent=0 // pred_fallthru
    _
  // Predicated region
  $region6: #{tipd_forward.8} parent=0 // pred_check
    _
  $region7: #{tipd_forward.8} parent=0 // pred_check_branch
    %12 = sbr.rel (0) target = $region9
  $region8: #{tipd_forward.8} parent=0 // pred_region
    _
  $region9: #{tipd_forward.8} parent=0 // pred_fallthru
    _
  // Predicated region
  $region10: #{tipd_forward.8} parent=0 // pred_check
    _
  $region11: #{tipd_forward.8} parent=0 // pred_check_branch
    %14 = sbr.rel (0) target = $region13
  $region12: #{tipd_forward.8} parent=0 // pred_region
    _
  $region13: #{tipd_forward.8} parent=0 // pred_fallthru
    _
  // Predicated region
  $region14: #{tipd_forward.8} parent=0 // pred_check
    _
  $region15: #{tipd_forward.8} parent=0 // pred_check_branch
    %16 = sbr.rel (0) target = $region17
  $region16: #{tipd_forward.8} parent=0 // pred_region
    _
  $region17: #{tipd_forward.8} parent=0 // pred_fallthru
    _
  %v18 = vld [vmem:[%s0] sm:$0xff]
  %v19 = vld [vmem:[%s0 + $0x8] sm:$0xff]
  %v20 = vld [vmem:[%s0 + $0x10] sm:$0xff]
  %v21 = vld [vmem:[%s0 + $0x18] sm:$0xff]
  %v22 = vld [vmem:[%s0 + $0x20] sm:$0xff]
  %v23 = vld [vmem:[%s0 + $0x28] sm:$0xff]
  %v24 = vld [vmem:[%s0 + $0x30] sm:$0xff]
  %v25 = vld [vmem:[%s0 + $0x38] sm:$0xff]
  %v26 = vld [vmem:[%s0 + $0x40] sm:$0xff]
  %v27 = vld [vmem:[%s0 + $0x48] sm:$0xff]
  %v28 = vld [vmem:[%s0 + $0x50] sm:$0xff]
  %v29 = vld [vmem:[%s0 + $0x58] sm:$0xff]
  %v30 = vld [vmem:[%s0 + $0x60] sm:$0xff]
  %v31 = vld [vmem:[%s0 + $0x68] sm:$0xff]
  %v32 = vld [vmem:[%s0 + $0x70] sm:$0xff]
  %v33 = vld [vmem:[%s0 + $0x78] sm:$0xff]
  %v34 = vld [vmem:[%s0 + $0x80] sm:$0xff]
  %v35 = vld [vmem:[%s0 + $0x88] sm:$0xff]
  %v36 = vld [vmem:[%s0 + $0x90] sm:$0xff]
  %v37 = vld [vmem:[%s0 + $0x98] sm:$0xff]
  %v38 = vld [vmem:[%s0 + $0xa0] sm:$0xff]
  %v39 = vld [vmem:[%s0 + $0xa8] sm:$0xff]
  %v40 = vld [vmem:[%s0 + $0xb0] sm:$0xff]
  %v41 = vld [vmem:[%s0 + $0xb8] sm:$0xff]
  %v42 = vld [vmem:[%s0 + $0xc0] sm:$0xff]
  %v43 = vld [vmem:[%s0 + $0xc8] sm:$0xff]
  %v44 = vld [vmem:[%s0 + $0xd0] sm:$0xff]
  %v45 = vld [vmem:[%s0 + $0xd8] sm:$0xff]
  %v46 = vld [vmem:[%s0 + $0xe0] sm:$0xff]
  %v47 = vld [vmem:[%s0 + $0xe8] sm:$0xff]
  %v48 = vld [vmem:[%s0 + $0xf0] sm:$0xff]
  %v49 = vld [vmem:[%s0 + $0xf8] sm:$0xff]
  %v50 = vld [vmem:[%s0 + $0x100] sm:$0xff]
  %v51 = vld [vmem:[%s0 + $0x108] sm:$0xff]
  %v52 = vld [vmem:[%s0 + $0x110] sm:$0xff]
  %v53 = vld [vmem:[%s0 + $0x118] sm:$0xff]
  %v54 = vld [vmem:[%s0 + $0x120] sm:$0xff]
  %v55 = vld [vmem:[%s0 + $0x128] sm:$0xff]
  %v56 = vld [vmem:[%s0 + $0x130] sm:$0xff]
  %v57 = vld [vmem:[%s0 + $0x138] sm:$0xff]
  %v58 = vld [vmem:[%s0 + $0x140] sm:$0xff]
  %v59 = vld [vmem:[%s0 + $0x148] sm:$0xff]
  %v60 = vld [vmem:[%s0 + $0x150] sm:$0xff]
  %v61 = vld [vmem:[%s0 + $0x158] sm:$0xff]
  %v62 = vld [vmem:[%s0 + $0x160] sm:$0xff]
  %v63 = vld [vmem:[%s0 + $0x168] sm:$0xff]
  %v64 = vld [vmem:[%s0 + $0x170] sm:$0xff]
  %v65 = vld [vmem:[%s0 + $0x178] sm:$0xff]
  %v66 = vld [vmem:[%s0 + $0x180] sm:$0xff]
  %v67 = vld [vmem:[%s0 + $0x188] sm:$0xff]
  %v68 = vld [vmem:[%s0 + $0x190] sm:$0xff]
  %v69 = vld [vmem:[%s0 + $0x198] sm:$0xff]
  %v70 = vld [vmem:[%s0 + $0x1a0] sm:$0xff]
  %v71 = vld [vmem:[%s0 + $0x1a8] sm:$0xff]
  %v72 = vld [vmem:[%s1] sm:$0xff]
  %v73 = vld [vmem:[%s1 + $0x8] sm:$0xff]
  %v74 = vld [vmem:[%s1 + $0x10] sm:$0xff]
  %v75 = vld [vmem:[%s1 + $0x18] sm:$0xff]
  %v76 = vld [vmem:[%s1 + $0x20] sm:$0xff]
  %v77 = vld [vmem:[%s1 + $0x28] sm:$0xff]
  %v78 = vld [vmem:[%s1 + $0x30] sm:$0xff]
  %v79 = vld [vmem:[%s1 + $0x38] sm:$0xff]
  %v80 = vld [vmem:[%s1 + $0x40] sm:$0xff]
  %v81 = vld [vmem:[%s1 + $0x48] sm:$0xff]
  %v82 = vld [vmem:[%s1 + $0x50] sm:$0xff]
  %v83 = vld [vmem:[%s1 + $0x58] sm:$0xff]
  %v84 = vld [vmem:[%s1 + $0x60] sm:$0xff]
  %v85 = vld [vmem:[%s1 + $0x68] sm:$0xff]
  %v86 = vld [vmem:[%s1 + $0x70] sm:$0xff]
  %v87 = vld [vmem:[%s1 + $0x78] sm:$0xff]
  %v88 = vld [vmem:[%s1 + $0x80] sm:$0xff]
  %v89 = vld [vmem:[%s1 + $0x88] sm:$0xff]
  %v90 = vld [vmem:[%s1 + $0x90] sm:$0xff]
  %v91 = vld [vmem:[%s1 + $0x98] sm:$0xff]
  %v92 = vld [vmem:[%s1 + $0xa0] sm:$0xff]
  %v93 = vld [vmem:[%s1 + $0xa8] sm:$0xff]
  %v94 = vld [vmem:[%s1 + $0xb0] sm:$0xff]
  %v95 = vld [vmem:[%s1 + $0xb8] sm:$0xff]
  %v96 = vld [vmem:[%s1 + $0xc0] sm:$0xff]
  %v97 = vld [vmem:[%s1 + $0xc8] sm:$0xff]
  %v98 = vld [vmem:[%s1 + $0xd0] sm:$0xff]
  %v99 = vld [vmem:[%s1 + $0xd8] sm:$0xff]
  %v100 = vld [vmem:[%s1 + $0xe0] sm:$0xff]
  %v101 = vld [vmem:[%s1 + $0xe8] sm:$0xff]
  %v102 = vld [vmem:[%s1 + $0xf0] sm:$0xff]
  %v103 = vld [vmem:[%s1 + $0xf8] sm:$0xff]
  %v104 = vld [vmem:[%s1 + $0x100] sm:$0xff]
  %v105 = vld [vmem:[%s1 + $0x108] sm:$0xff]
  %v106 = vld [vmem:[%s1 + $0x110] sm:$0xff]
  %v107 = vld [vmem:[%s1 + $0x118] sm:$0xff]
  %v108 = vld [vmem:[%s1 + $0x120] sm:$0xff]
  %v109 = vld [vmem:[%s1 + $0x128] sm:$0xff]
  %v110 = vld [vmem:[%s1 + $0x130] sm:$0xff]
  %v111 = vld [vmem:[%s1 + $0x138] sm:$0xff]
  %v112 = vld [vmem:[%s1 + $0x140] sm:$0xff]
  %v113 = vld [vmem:[%s1 + $0x148] sm:$0xff]
  %v114 = vld [vmem:[%s1 + $0x150] sm:$0xff]
  %v115 = vld [vmem:[%s1 + $0x158] sm:$0xff]
  %v116 = vld [vmem:[%s1 + $0x160] sm:$0xff]
  %v117 = vld [vmem:[%s1 + $0x168] sm:$0xff]
  %v118 = vld [vmem:[%s1 + $0x170] sm:$0xff]
  %v119 = vld [vmem:[%s1 + $0x178] sm:$0xff]
  %v120 = vld [vmem:[%s1 + $0x180] sm:$0xff]
  %v121 = vld [vmem:[%s1 + $0x188] sm:$0xff]
  %v122 = vld [vmem:[%s1 + $0x190] sm:$0xff]
  %v123 = vld [vmem:[%s1 + $0x198] sm:$0xff]
  %v124 = vld [vmem:[%s1 + $0x1a0] sm:$0xff]
  %v125 = vld [vmem:[%s1 + $0x1a8] sm:$0xff]
  %v126 = vld [vmem:[%s1 + $0x1b0] sm:$0xff]
  %v127 = vld [vmem:[%s1 + $0x1b8] sm:$0xff]
  %v128 = vld [vmem:[%s1 + $0x1c0] sm:$0xff]
  %v129 = vld [vmem:[%s1 + $0x1c8] sm:$0xff]
  %v130 = vld [vmem:[%s1 + $0x1d0] sm:$0xff]
  %v131 = vld [vmem:[%s1 + $0x1d8] sm:$0xff]
  %v132 = vld [vmem:[%s1 + $0x1e0] sm:$0xff]
  %v133 = vld [vmem:[%s1 + $0x1e8] sm:$0xff]
  %v134 = vld [vmem:[%s1 + $0x1f0] sm:$0xff]
  %v135 = vld [vmem:[%s1 + $0x1f8] sm:$0xff]
  %v136 = vld [vmem:[%s1 + $0x200] sm:$0xff]
  %v137 = vld [vmem:[%s1 + $0x208] sm:$0xff]
  %v138 = vld [vmem:[%s1 + $0x210] sm:$0xff]
  %v139 = vld [vmem:[%s1 + $0x218] sm:$0xff]
  %v140 = vld [vmem:[%s1 + $0x220] sm:$0xff]
  %v141 = vld [vmem:[%s1 + $0x228] sm:$0xff]
  %v142 = vld [vmem:[%s1 + $0x230] sm:$0xff]
  %v143 = vld [vmem:[%s1 + $0x238] sm:$0xff]
  %v144 = vld [vmem:[%s1 + $0x240] sm:$0xff]
  %v145 = vld [vmem:[%s1 + $0x248] sm:$0xff]
  %v146 = vld [vmem:[%s1 + $0x250] sm:$0xff]
  %v147 = vld [vmem:[%s1 + $0x258] sm:$0xff]
  %v148 = vld [vmem:[%s1 + $0x260] sm:$0xff]
  %v149 = vld [vmem:[%s1 + $0x268] sm:$0xff]
  %v150 = vld [vmem:[%s1 + $0x270] sm:$0xff]
  %v151 = vld [vmem:[%s1 + $0x278] sm:$0xff]
  %v152 = vld [vmem:[%s1 + $0x280] sm:$0xff]
  %v153 = vld [vmem:[%s1 + $0x288] sm:$0xff]
  %v154 = vld [vmem:[%s1 + $0x290] sm:$0xff]
  %v155 = vld [vmem:[%s1 + $0x298] sm:$0xff]
  %v156 = vld [vmem:[%s1 + $0x2a0] sm:$0xff]
  %v157 = vld [vmem:[%s1 + $0x2a8] sm:$0xff]
  %v158 = vld [vmem:[%s1 + $0x2b0] sm:$0xff]
  %v159 = vld [vmem:[%s1 + $0x2b8] sm:$0xff]
  %v160 = vld [vmem:[%s1 + $0x2c0] sm:$0xff]
  %v161 = vld [vmem:[%s1 + $0x2c8] sm:$0xff]
  %v162 = vld [vmem:[%s1 + $0x2d0] sm:$0xff]
  %v163 = vld [vmem:[%s1 + $0x2d8] sm:$0xff]
  %v164 = vld [vmem:[%s1 + $0x2e0] sm:$0xff]
  %v165 = vld [vmem:[%s1 + $0x2e8] sm:$0xff]
  %v166 = vld [vmem:[%s1 + $0x2f0] sm:$0xff]
  %v167 = vld [vmem:[%s1 + $0x2f8] sm:$0xff]
  %v168 = vld [vmem:[%s1 + $0x300] sm:$0xff]
  %v169 = vld [vmem:[%s1 + $0x308] sm:$0xff]
  %v170 = vld [vmem:[%s1 + $0x310] sm:$0xff]
  %v171 = vld [vmem:[%s1 + $0x318] sm:$0xff]
  %v172 = vld [vmem:[%s1 + $0x320] sm:$0xff]
  %v173 = vld [vmem:[%s1 + $0x328] sm:$0xff]
  %v174 = vld [vmem:[%s1 + $0x330] sm:$0xff]
  %v175 = vld [vmem:[%s1 + $0x338] sm:$0xff]
  %v176 = vld [vmem:[%s1 + $0x340] sm:$0xff]
  %v177 = vld [vmem:[%s1 + $0x348] sm:$0xff]
  %v178 = vld [vmem:[%s1 + $0x350] sm:$0xff]
  %v179 = vld [vmem:[%s1 + $0x358] sm:$0xff]
  %v180 = vld [vmem:[%s1 + $0x360] sm:$0xff]
  %v181 = vld [vmem:[%s1 + $0x368] sm:$0xff]
  %v182 = vld [vmem:[%s1 + $0x370] sm:$0xff]
  %v183 = vld [vmem:[%s1 + $0x378] sm:$0xff]
  %v184 = vld [vmem:[%s1 + $0x380] sm:$0xff]
  %v185 = vld [vmem:[%s1 + $0x388] sm:$0xff]
  %v186 = vld [vmem:[%s1 + $0x390] sm:$0xff]
  %v187 = vld [vmem:[%s1 + $0x398] sm:$0xff]
  %v188 = vld [vmem:[%s1 + $0x3a0] sm:$0xff]
  %v189 = vld [vmem:[%s1 + $0x3a8] sm:$0xff]
  %v190 = vld [vmem:[%s1 + $0x3b0] sm:$0xff]
  %v191 = vld [vmem:[%s1 + $0x3b8] sm:$0xff]
  %v192 = vld [vmem:[%s1 + $0x3c0] sm:$0xff]
  %v193 = vld [vmem:[%s1 + $0x3c8] sm:$0xff]
  %v194 = vld [vmem:[%s1 + $0x3d0] sm:$0xff]
  %v195 = vld [vmem:[%s1 + $0x3d8] sm:$0xff]
  %v196 = vld [vmem:[%s1 + $0x3e0] sm:$0xff]
  %v197 = vld [vmem:[%s1 + $0x3e8] sm:$0xff]
  %v198 = vld [vmem:[%s1 + $0x3f0] sm:$0xff]
  %v199 = vld [vmem:[%s1 + $0x3f8] sm:$0xff]
  %v200 = vld [vmem:[%s1 + $0x400] sm:$0xff]
  %v201 = vld [vmem:[%s1 + $0x408] sm:$0xff]
  %v202 = vld [vmem:[%s1 + $0x410] sm:$0xff]
  %v203 = vld [vmem:[%s1 + $0x418] sm:$0xff]
  %v204 = vld [vmem:[%s1 + $0x420] sm:$0xff]
  %v205 = vld [vmem:[%s1 + $0x428] sm:$0xff]
  %v206 = vld [vmem:[%s1 + $0x430] sm:$0xff]
  %v207 = vld [vmem:[%s1 + $0x438] sm:$0xff]
  %v208 = vld [vmem:[%s1 + $0x440] sm:$0xff]
  %v209 = vld [vmem:[%s1 + $0x448] sm:$0xff]
  %v210 = vld [vmem:[%s1 + $0x450] sm:$0xff]
  %v211 = vld [vmem:[%s1 + $0x458] sm:$0xff]
  %v212 = vld [vmem:[%s1 + $0x460] sm:$0xff]
  %v213 = vld [vmem:[%s1 + $0x468] sm:$0xff]
  %v214 = vld [vmem:[%s1 + $0x470] sm:$0xff]
  %v215 = vld [vmem:[%s1 + $0x478] sm:$0xff]
  %v216 = vld [vmem:[%s1 + $0x480] sm:$0xff]
  %v217 = vld [vmem:[%s1 + $0x488] sm:$0xff]
  %v218 = vld [vmem:[%s1 + $0x490] sm:$0xff]
  %v219 = vld [vmem:[%s1 + $0x498] sm:$0xff]
  %v220 = vld [vmem:[%s1 + $0x4a0] sm:$0xff]
  %v221 = vld [vmem:[%s1 + $0x4a8] sm:$0xff]
  %v222 = vld [vmem:[%s1 + $0x4b0] sm:$0xff]
  %v223 = vld [vmem:[%s1 + $0x4b8] sm:$0xff]
  %v224 = vld [vmem:[%s1 + $0x4c0] sm:$0xff]
  %v225 = vld [vmem:[%s1 + $0x4c8] sm:$0xff]
  %v226 = vld [vmem:[%s1 + $0x4d0] sm:$0xff]
  %v227 = vld [vmem:[%s1 + $0x4d8] sm:$0xff]
  %v228 = vld [vmem:[%s1 + $0x4e0] sm:$0xff]
  %v229 = vld [vmem:[%s1 + $0x4e8] sm:$0xff]
  %v230 = vld [vmem:[%s1 + $0x4f0] sm:$0xff]
  %v231 = vld [vmem:[%s1 + $0x4f8] sm:$0xff]
  %v232 = vld [vmem:[%s1 + $0x500] sm:$0xff]
  %v233 = vld [vmem:[%s1 + $0x508] sm:$0xff]
  %v234 = vld [vmem:[%s1 + $0x510] sm:$0xff]
  %v235 = vld [vmem:[%s1 + $0x518] sm:$0xff]
  %v236 = vld [vmem:[%s1 + $0x520] sm:$0xff]
  %v237 = vld [vmem:[%s1 + $0x528] sm:$0xff]
  %v238 = vld [vmem:[%s1 + $0x530] sm:$0xff]
  %v239 = vld [vmem:[%s1 + $0x538] sm:$0xff]
  %v240 = vld [vmem:[%s1 + $0x540] sm:$0xff]
  %v241 = vld [vmem:[%s1 + $0x548] sm:$0xff]
  %v242 = vld [vmem:[%s1 + $0x550] sm:$0xff]
  %v243 = vld [vmem:[%s1 + $0x558] sm:$0xff]
  %v244 = vld [vmem:[%s1 + $0x560] sm:$0xff]
  %v245 = vld [vmem:[%s1 + $0x568] sm:$0xff]
  %v246 = vld [vmem:[%s1 + $0x570] sm:$0xff]
  %v247 = vld [vmem:[%s1 + $0x578] sm:$0xff]
  %v248 = vld [vmem:[%s1 + $0x580] sm:$0xff]
  %v249 = vld [vmem:[%s1 + $0x588] sm:$0xff]
  %v250 = vld [vmem:[%s1 + $0x590] sm:$0xff]
  %v251 = vld [vmem:[%s1 + $0x598] sm:$0xff]
  %v252 = vld [vmem:[%s1 + $0x5a0] sm:$0xff]
  %v253 = vld [vmem:[%s1 + $0x5a8] sm:$0xff]
  %v254 = vld [vmem:[%s1 + $0x5b0] sm:$0xff]
  %v255 = vld [vmem:[%s1 + $0x5b8] sm:$0xff]
  %v256 = vld [vmem:[%s1 + $0x5c0] sm:$0xff]
  %v257 = vld [vmem:[%s1 + $0x5c8] sm:$0xff]
  %v258 = vld [vmem:[%s1 + $0x5d0] sm:$0xff]
  %v259 = vld [vmem:[%s1 + $0x5d8] sm:$0xff]
  %v260 = vld [vmem:[%s1 + $0x5e0] sm:$0xff]
  %v261 = vld [vmem:[%s1 + $0x5e8] sm:$0xff]
  %v262 = vld [vmem:[%s1 + $0x5f0] sm:$0xff]
  %v263 = vld [vmem:[%s1 + $0x5f8] sm:$0xff]
  %v264 = vld [vmem:[%s1 + $0x600] sm:$0xff]
  %v265 = vld [vmem:[%s1 + $0x608] sm:$0xff]
  %v266 = vld [vmem:[%s1 + $0x610] sm:$0xff]
  %v267 = vld [vmem:[%s1 + $0x618] sm:$0xff]
  %v268 = vld [vmem:[%s1 + $0x620] sm:$0xff]
  %v269 = vld [vmem:[%s1 + $0x628] sm:$0xff]
  %v270 = vld [vmem:[%s1 + $0x630] sm:$0xff]
  %v271 = vld [vmem:[%s1 + $0x638] sm:$0xff]
  %v272 = vld [vmem:[%s1 + $0x640] sm:$0xff]
  %v273 = vld [vmem:[%s1 + $0x648] sm:$0xff]
  %v274 = vld [vmem:[%s1 + $0x650] sm:$0xff]
  %v275 = vld [vmem:[%s1 + $0x658] sm:$0xff]
  %v276 = vld [vmem:[%s1 + $0x660] sm:$0xff]
  %v277 = vld [vmem:[%s1 + $0x668] sm:$0xff]
  %v278 = vld [vmem:[%s1 + $0x670] sm:$0xff]
  %v279 = vld [vmem:[%s1 + $0x678] sm:$0xff]
  %v280 = vld [vmem:[%s1 + $0x680] sm:$0xff]
  %v281 = vld [vmem:[%s1 + $0x688] sm:$0xff]
  %v282 = vld [vmem:[%s1 + $0x690] sm:$0xff]
  %v283 = vld [vmem:[%s1 + $0x698] sm:$0xff]
  %v284 = vld [vmem:[%s1 + $0x6a0] sm:$0xff]
  %v285 = vld [vmem:[%s1 + $0x6a8] sm:$0xff]
  %v286 = vld [vmem:[%s1 + $0x6b0] sm:$0xff]
  %v287 = vld [vmem:[%s1 + $0x6b8] sm:$0xff]
  %v288 = vld [vmem:[%s1 + $0x6c0] sm:$0xff]
  %v289 = vld [vmem:[%s1 + $0x6c8] sm:$0xff]
  %v290 = vld [vmem:[%s1 + $0x6d0] sm:$0xff]
  %v291 = vld [vmem:[%s1 + $0x6d8] sm:$0xff]
  %v292 = vld [vmem:[%s1 + $0x6e0] sm:$0xff]
  %v293 = vld [vmem:[%s1 + $0x6e8] sm:$0xff]
  %v294 = vld [vmem:[%s1 + $0x6f0] sm:$0xff]
  %v295 = vld [vmem:[%s1 + $0x6f8] sm:$0xff]
  %v296 = vld [vmem:[%s1 + $0x700] sm:$0xff]
  %v297 = vld [vmem:[%s1 + $0x708] sm:$0xff]
  %v298 = vld [vmem:[%s1 + $0x710] sm:$0xff]
  %v299 = vld [vmem:[%s1 + $0x718] sm:$0xff]
  %v300 = vld [vmem:[%s1 + $0x720] sm:$0xff]
  %v301 = vld [vmem:[%s1 + $0x728] sm:$0xff]
  %v302 = vld [vmem:[%s1 + $0x730] sm:$0xff]
  %v303 = vld [vmem:[%s1 + $0x738] sm:$0xff]
  %v304 = vld [vmem:[%s1 + $0x740] sm:$0xff]
  %v305 = vld [vmem:[%s1 + $0x748] sm:$0xff]
  %v306 = vld [vmem:[%s1 + $0x750] sm:$0xff]
  %v307 = vld [vmem:[%s1 + $0x758] sm:$0xff]
  %v308 = vld [vmem:[%s1 + $0x760] sm:$0xff]
  %v309 = vld [vmem:[%s1 + $0x768] sm:$0xff]
  %v310 = vld [vmem:[%s1 + $0x770] sm:$0xff]
  %v311 = vld [vmem:[%s1 + $0x778] sm:$0xff]
  %v312 = vld [vmem:[%s1 + $0x780] sm:$0xff]
  %v313 = vld [vmem:[%s1 + $0x788] sm:$0xff]
  %v314 = vld [vmem:[%s1 + $0x790] sm:$0xff]
  %v315 = vld [vmem:[%s1 + $0x798] sm:$0xff]
  %v316 = vld [vmem:[%s1 + $0x7a0] sm:$0xff]
  %v317 = vld [vmem:[%s1 + $0x7a8] sm:$0xff]
  %v318 = vld [vmem:[%s1 + $0x7b0] sm:$0xff]
  %v319 = vld [vmem:[%s1 + $0x7b8] sm:$0xff]
  %v320 = vld [vmem:[%s1 + $0x7c0] sm:$0xff]
  %v321 = vld [vmem:[%s1 + $0x7c8] sm:$0xff]
  %v322 = vld [vmem:[%s1 + $0x7d0] sm:$0xff]
  %v323 = vld [vmem:[%s1 + $0x7d8] sm:$0xff]
  %v324 = vld [vmem:[%s1 + $0x7e0] sm:$0xff]
  %v325 = vld [vmem:[%s1 + $0x7e8] sm:$0xff]
  %v326 = vld [vmem:[%s1 + $0x7f0] sm:$0xff]
  %v327 = vld [vmem:[%s1 + $0x7f8] sm:$0xff]
  %v328 = vld [vmem:[%s1 + $0x800] sm:$0xff]
  %v329 = vld [vmem:[%s1 + $0x808] sm:$0xff]
  %v330 = vld [vmem:[%s1 + $0x810] sm:$0xff]
  %v331 = vld [vmem:[%s1 + $0x818] sm:$0xff]
  %v332 = vld [vmem:[%s1 + $0x820] sm:$0xff]
  %v333 = vld [vmem:[%s1 + $0x828] sm:$0xff]
  %v334 = vld [vmem:[%s1 + $0x830] sm:$0xff]
  %v335 = vld [vmem:[%s1 + $0x838] sm:$0xff]
  %v336 = vld [vmem:[%s1 + $0x840] sm:$0xff]
  %v337 = vld [vmem:[%s1 + $0x848] sm:$0xff]
  %v338 = vld [vmem:[%s1 + $0x850] sm:$0xff]
  %v339 = vld [vmem:[%s1 + $0x858] sm:$0xff]
  %v340 = vld [vmem:[%s1 + $0x860] sm:$0xff]
  %v341 = vld [vmem:[%s1 + $0x868] sm:$0xff]
  %v342 = vld [vmem:[%s1 + $0x870] sm:$0xff]
  %v343 = vld [vmem:[%s1 + $0x878] sm:$0xff]
  %v344 = vld [vmem:[%s1 + $0x880] sm:$0xff]
  %v345 = vld [vmem:[%s1 + $0x888] sm:$0xff]
  %v346 = vld [vmem:[%s1 + $0x890] sm:$0xff]
  %v347 = vld [vmem:[%s1 + $0x898] sm:$0xff]
  %v348 = vld [vmem:[%s1 + $0x8a0] sm:$0xff]
  %v349 = vld [vmem:[%s1 + $0x8a8] sm:$0xff]
  %v350 = vld [vmem:[%s1 + $0x8b0] sm:$0xff]
  %v351 = vld [vmem:[%s1 + $0x8b8] sm:$0xff]
  %v352 = vld [vmem:[%s1 + $0x8c0] sm:$0xff]
  %v353 = vld [vmem:[%s1 + $0x8c8] sm:$0xff]
  %v354 = vld [vmem:[%s1 + $0x8d0] sm:$0xff]
  %v355 = vld [vmem:[%s1 + $0x8d8] sm:$0xff]
  %v356 = vld [vmem:[%s1 + $0x8e0] sm:$0xff]
  %v357 = vld [vmem:[%s1 + $0x8e8] sm:$0xff]
  %v358 = vld [vmem:[%s1 + $0x8f0] sm:$0xff]
  %v359 = vld [vmem:[%s1 + $0x8f8] sm:$0xff]
  %v360 = vld [vmem:[%s1 + $0x900] sm:$0xff]
  %v361 = vld [vmem:[%s1 + $0x908] sm:$0xff]
  %v362 = vld [vmem:[%s1 + $0x910] sm:$0xff]
  %v363 = vld [vmem:[%s1 + $0x918] sm:$0xff]
  %v364 = vld [vmem:[%s1 + $0x920] sm:$0xff]
  %v365 = vld [vmem:[%s1 + $0x928] sm:$0xff]
  %v366 = vld [vmem:[%s1 + $0x930] sm:$0xff]
  %v367 = vld [vmem:[%s1 + $0x938] sm:$0xff]
  %v368 = vld [vmem:[%s1 + $0x940] sm:$0xff]
  %v369 = vld [vmem:[%s1 + $0x948] sm:$0xff]
  %v370 = vld [vmem:[%s1 + $0x950] sm:$0xff]
  %v371 = vld [vmem:[%s1 + $0x958] sm:$0xff]
  %v372 = vld [vmem:[%s1 + $0x960] sm:$0xff]
  %v373 = vld [vmem:[%s1 + $0x968] sm:$0xff]
  %v374 = vld [vmem:[%s1 + $0x970] sm:$0xff]
  %v375 = vld [vmem:[%s1 + $0x978] sm:$0xff]
  %v376 = vld [vmem:[%s1 + $0x980] sm:$0xff]
  %v377 = vld [vmem:[%s1 + $0x988] sm:$0xff]
  %v378 = vld [vmem:[%s1 + $0x990] sm:$0xff]
  %v379 = vld [vmem:[%s1 + $0x998] sm:$0xff]
  %v380 = vld [vmem:[%s1 + $0x9a0] sm:$0xff]
  %v381 = vld [vmem:[%s1 + $0x9a8] sm:$0xff]
  %v382 = vld [vmem:[%s1 + $0x9b0] sm:$0xff]
  %v383 = vld [vmem:[%s1 + $0x9b8] sm:$0xff]
  %v384 = vld [vmem:[%s1 + $0x9c0] sm:$0xff]
  %v385 = vld [vmem:[%s1 + $0x9c8] sm:$0xff]
  %v386 = vld [vmem:[%s1 + $0x9d0] sm:$0xff]
  %v387 = vld [vmem:[%s1 + $0x9d8] sm:$0xff]
  %v388 = vld [vmem:[%s1 + $0x9e0] sm:$0xff]
  %v389 = vld [vmem:[%s1 + $0x9e8] sm:$0xff]
  %v390 = vld [vmem:[%s1 + $0x9f0] sm:$0xff]
  %v391 = vld [vmem:[%s1 + $0x9f8] sm:$0xff]
  %v392 = vld [vmem:[%s1 + $0xa00] sm:$0xff]
  %v393 = vld [vmem:[%s1 + $0xa08] sm:$0xff]
  %v394 = vld [vmem:[%s1 + $0xa10] sm:$0xff]
  %v395 = vld [vmem:[%s1 + $0xa18] sm:$0xff]
  %v396 = vld [vmem:[%s1 + $0xa20] sm:$0xff]
  %v397 = vld [vmem:[%s1 + $0xa28] sm:$0xff]
  %v398 = vld [vmem:[%s1 + $0xa30] sm:$0xff]
  %v399 = vld [vmem:[%s1 + $0xa38] sm:$0xff]
  %v400 = vld [vmem:[%s1 + $0xa40] sm:$0xff]
  %v401 = vld [vmem:[%s1 + $0xa48] sm:$0xff]
  %v402 = vld [vmem:[%s1 + $0xa50] sm:$0xff]
  %v403 = vld [vmem:[%s1 + $0xa58] sm:$0xff]
  %v404 = vld [vmem:[%s1 + $0xa60] sm:$0xff]
  %v405 = vld [vmem:[%s1 + $0xa68] sm:$0xff]
  %v406 = vld [vmem:[%s1 + $0xa70] sm:$0xff]
  %v407 = vld [vmem:[%s1 + $0xa78] sm:$0xff]
  %v408 = vld [vmem:[%s1 + $0xa80] sm:$0xff]
  %v409 = vld [vmem:[%s1 + $0xa88] sm:$0xff]
  %v410 = vld [vmem:[%s1 + $0xa90] sm:$0xff]
  %v411 = vld [vmem:[%s1 + $0xa98] sm:$0xff]
  %v412 = vld [vmem:[%s1 + $0xaa0] sm:$0xff]
  %v413 = vld [vmem:[%s1 + $0xaa8] sm:$0xff]
  %v414 = vld [vmem:[%s1 + $0xab0] sm:$0xff]
  %v415 = vld [vmem:[%s1 + $0xab8] sm:$0xff]
  %v416 = vld [vmem:[%s1 + $0xac0] sm:$0xff]
  %v417 = vld [vmem:[%s1 + $0xac8] sm:$0xff]
  %v418 = vld [vmem:[%s1 + $0xad0] sm:$0xff]
  %v419 = vld [vmem:[%s1 + $0xad8] sm:$0xff]
  %v420 = vld [vmem:[%s1 + $0xae0] sm:$0xff]
  %v421 = vld [vmem:[%s1 + $0xae8] sm:$0xff]
  %v422 = vld [vmem:[%s1 + $0xaf0] sm:$0xff]
  %v423 = vld [vmem:[%s1 + $0xaf8] sm:$0xff]
  %v424 = vld [vmem:[%s1 + $0xb00] sm:$0xff]
  %v425 = vld [vmem:[%s1 + $0xb08] sm:$0xff]
  %v426 = vld [vmem:[%s1 + $0xb10] sm:$0xff]
  %v427 = vld [vmem:[%s1 + $0xb18] sm:$0xff]
  %v428 = vld [vmem:[%s1 + $0xb20] sm:$0xff]
  %v429 = vld [vmem:[%s1 + $0xb28] sm:$0xff]
  %v430 = vld [vmem:[%s1 + $0xb30] sm:$0xff]
  %v431 = vld [vmem:[%s1 + $0xb38] sm:$0xff]
  %v432 = vld [vmem:[%s1 + $0xb40] sm:$0xff]
  %v433 = vld [vmem:[%s1 + $0xb48] sm:$0xff]
  %v434 = vld [vmem:[%s1 + $0xb50] sm:$0xff]
  %v435 = vld [vmem:[%s1 + $0xb58] sm:$0xff]
  %v436 = vld [vmem:[%s1 + $0xb60] sm:$0xff]
  %v437 = vld [vmem:[%s1 + $0xb68] sm:$0xff]
  %v438 = vld [vmem:[%s1 + $0xb70] sm:$0xff]
  %v439 = vld [vmem:[%s1 + $0xb78] sm:$0xff]
  %v440 = vld [vmem:[%s1 + $0xb80] sm:$0xff]
  %v441 = vld [vmem:[%s1 + $0xb88] sm:$0xff]
  %v442 = vld [vmem:[%s1 + $0xb90] sm:$0xff]
  %v443 = vld [vmem:[%s1 + $0xb98] sm:$0xff]
  %v444 = vld [vmem:[%s1 + $0xba0] sm:$0xff]
  %v445 = vld [vmem:[%s1 + $0xba8] sm:$0xff]
  %v446 = vld [vmem:[%s1 + $0xbb0] sm:$0xff]
  %v447 = vld [vmem:[%s1 + $0xbb8] sm:$0xff]
  %v448 = vld [vmem:[%s1 + $0xbc0] sm:$0xff]
  %v449 = vld [vmem:[%s1 + $0xbc8] sm:$0xff]
  %v450 = vld [vmem:[%s1 + $0xbd0] sm:$0xff]
  %v451 = vld [vmem:[%s1 + $0xbd8] sm:$0xff]
  %v452 = vld [vmem:[%s1 + $0xbe0] sm:$0xff]
  %v453 = vld [vmem:[%s1 + $0xbe8] sm:$0xff]
  %v454 = vld [vmem:[%s1 + $0xbf0] sm:$0xff]
  %v455 = vld [vmem:[%s1 + $0xbf8] sm:$0xff]
  %v456 = vld [vmem:[%s1 + $0xc00] sm:$0xff]
  %v457 = vld [vmem:[%s1 + $0xc08] sm:$0xff]
  %v458 = vld [vmem:[%s1 + $0xc10] sm:$0xff]
  %v459 = vld [vmem:[%s1 + $0xc18] sm:$0xff]
  %v460 = vld [vmem:[%s1 + $0xc20] sm:$0xff]
  %v461 = vld [vmem:[%s1 + $0xc28] sm:$0xff]
  %v462 = vld [vmem:[%s1 + $0xc30] sm:$0xff]
  %v463 = vld [vmem:[%s1 + $0xc38] sm:$0xff]
  %v464 = vld [vmem:[%s1 + $0xc40] sm:$0xff]
  %v465 = vld [vmem:[%s1 + $0xc48] sm:$0xff]
  %v466 = vld [vmem:[%s1 + $0xc50] sm:$0xff]
  %v467 = vld [vmem:[%s1 + $0xc58] sm:$0xff]
  %v468 = vld [vmem:[%s1 + $0xc60] sm:$0xff]
  %v469 = vld [vmem:[%s1 + $0xc68] sm:$0xff]
  %v470 = vld [vmem:[%s1 + $0xc70] sm:$0xff]
  %v471 = vld [vmem:[%s1 + $0xc78] sm:$0xff]
  %v472 = vld [vmem:[%s1 + $0xc80] sm:$0xff]
  %v473 = vld [vmem:[%s1 + $0xc88] sm:$0xff]
  %v474 = vld [vmem:[%s1 + $0xc90] sm:$0xff]
  %v475 = vld [vmem:[%s1 + $0xc98] sm:$0xff]
  %v476 = vld [vmem:[%s1 + $0xca0] sm:$0xff]
  %v477 = vld [vmem:[%s1 + $0xca8] sm:$0xff]
  %v478 = vld [vmem:[%s1 + $0xcb0] sm:$0xff]
  %v479 = vld [vmem:[%s1 + $0xcb8] sm:$0xff]
  %v480 = vld [vmem:[%s1 + $0xcc0] sm:$0xff]
  %v481 = vld [vmem:[%s1 + $0xcc8] sm:$0xff]
  %v482 = vld [vmem:[%s1 + $0xcd0] sm:$0xff]
  %v483 = vld [vmem:[%s1 + $0xcd8] sm:$0xff]
  %v484 = vld [vmem:[%s1 + $0xce0] sm:$0xff]
  %v485 = vld [vmem:[%s1 + $0xce8] sm:$0xff]
  %v486 = vld [vmem:[%s1 + $0xcf0] sm:$0xff]
  %v487 = vld [vmem:[%s1 + $0xcf8] sm:$0xff]
  %v488 = vld [vmem:[%s1 + $0xd00] sm:$0xff]
  %v489 = vld [vmem:[%s1 + $0xd08] sm:$0xff]
  %v490 = vld [vmem:[%s1 + $0xd10] sm:$0xff]
  %v491 = vld [vmem:[%s1 + $0xd18] sm:$0xff]
  %v492 = vld [vmem:[%s1 + $0xd20] sm:$0xff]
  %v493 = vld [vmem:[%s1 + $0xd28] sm:$0xff]
  %v494 = vld [vmem:[%s1 + $0xd30] sm:$0xff]
  %v495 = vld [vmem:[%s1 + $0xd38] sm:$0xff]
  %v496 = vld [vmem:[%s1 + $0xd40] sm:$0xff]
  %v497 = vld [vmem:[%s1 + $0xd48] sm:$0xff]
  %v498 = vld [vmem:[%s1 + $0xd50] sm:$0xff]
  %v499 = vld [vmem:[%s1 + $0xd58] sm:$0xff]
  %v500 = vld [vmem:[%s1 + $0xd60] sm:$0xff]
  %v501 = vld [vmem:[%s1 + $0xd68] sm:$0xff]
  %v502 = vld [vmem:[%s1 + $0xd70] sm:$0xff]
  %v503 = vld [vmem:[%s1 + $0xd78] sm:$0xff]
  %v504 = vld [vmem:[%s1 + $0xd80] sm:$0xff]
  %v505 = vld [vmem:[%s1 + $0xd88] sm:$0xff]
  %v506 = vld [vmem:[%s1 + $0xd90] sm:$0xff]
  %v507 = vld [vmem:[%s1 + $0xd98] sm:$0xff]
  %v508 = vld [vmem:[%s1 + $0xda0] sm:$0xff]
  %v509 = vld [vmem:[%s1 + $0xda8] sm:$0xff]
  %v510 = vld [vmem:[%s1 + $0xdb0] sm:$0xff]
  %v511 = vld [vmem:[%s1 + $0xdb8] sm:$0xff]
  %v512 = vld [vmem:[%s1 + $0xdc0] sm:$0xff]
  %v513 = vld [vmem:[%s1 + $0xdc8] sm:$0xff]
  %v514 = vld [vmem:[%s1 + $0xdd0] sm:$0xff]
  %v515 = vld [vmem:[%s1 + $0xdd8] sm:$0xff]
  %v516 = vld [vmem:[%s1 + $0xde0] sm:$0xff]
  %v517 = vld [vmem:[%s1 + $0xde8] sm:$0xff]
  %v518 = vld [vmem:[%s1 + $0xdf0] sm:$0xff]
  %v519 = vld [vmem:[%s1 + $0xdf8] sm:$0xff]
  %v520 = vld [vmem:[%s1 + $0xe00] sm:$0xff]
  %v521 = vld [vmem:[%s1 + $0xe08] sm:$0xff]
  %v522 = vld [vmem:[%s1 + $0xe10] sm:$0xff]
  %v523 = vld [vmem:[%s1 + $0xe18] sm:$0xff]
  %v524 = vld [vmem:[%s1 + $0xe20] sm:$0xff]
  %v525 = vld [vmem:[%s1 + $0xe28] sm:$0xff]
  %v526 = vld [vmem:[%s1 + $0xe30] sm:$0xff]
  %v527 = vld [vmem:[%s1 + $0xe38] sm:$0xff]
  %v528 = vld [vmem:[%s1 + $0xe40] sm:$0xff]
  %v529 = vld [vmem:[%s1 + $0xe48] sm:$0xff]
  %v530 = vld [vmem:[%s1 + $0xe50] sm:$0xff]
  %v531 = vld [vmem:[%s1 + $0xe58] sm:$0xff]
  %v532 = vld [vmem:[%s1 + $0xe60] sm:$0xff]
  %v533 = vld [vmem:[%s1 + $0xe68] sm:$0xff]
  %v534 = vld [vmem:[%s1 + $0xe70] sm:$0xff]
  %v535 = vld [vmem:[%s1 + $0xe78] sm:$0xff]
  %v536 = vld [vmem:[%s1 + $0xe80] sm:$0xff]
  %v537 = vld [vmem:[%s1 + $0xe88] sm:$0xff]
  %v538 = vld [vmem:[%s1 + $0xe90] sm:$0xff]
  %v539 = vld [vmem:[%s1 + $0xe98] sm:$0xff]
  %v540 = vld [vmem:[%s1 + $0xea0] sm:$0xff]
  %v541 = vld [vmem:[%s1 + $0xea8] sm:$0xff]
  %v542 = vld [vmem:[%s1 + $0xeb0] sm:$0xff]
  %v543 = vld [vmem:[%s1 + $0xeb8] sm:$0xff]
  %v544 = vld [vmem:[%s1 + $0xec0] sm:$0xff]
  %v545 = vld [vmem:[%s1 + $0xec8] sm:$0xff]
  %v546 = vld [vmem:[%s1 + $0xed0] sm:$0xff]
  %v547 = vld [vmem:[%s1 + $0xed8] sm:$0xff]
  %v548 = vld [vmem:[%s1 + $0xee0] sm:$0xff]
  %v549 = vld [vmem:[%s1 + $0xee8] sm:$0xff]
  %v550 = vld [vmem:[%s1 + $0xef0] sm:$0xff]
  %v551 = vld [vmem:[%s1 + $0xef8] sm:$0xff]
  %v552 = vld [vmem:[%s1 + $0xf00] sm:$0xff]
  %v553 = vld [vmem:[%s1 + $0xf08] sm:$0xff]
  %v554 = vld [vmem:[%s1 + $0xf10] sm:$0xff]
  %v555 = vld [vmem:[%s1 + $0xf18] sm:$0xff]
  %v556 = vld [vmem:[%s1 + $0xf20] sm:$0xff]
  %v557 = vld [vmem:[%s1 + $0xf28] sm:$0xff]
  %v558 = vld [vmem:[%s1 + $0xf30] sm:$0xff]
  %v559 = vld [vmem:[%s1 + $0xf38] sm:$0xff]
  %v560 = vld [vmem:[%s1 + $0xf40] sm:$0xff]
  %v561 = vld [vmem:[%s1 + $0xf48] sm:$0xff]
  %v562 = vld [vmem:[%s1 + $0xf50] sm:$0xff]
  %v563 = vld [vmem:[%s1 + $0xf58] sm:$0xff]
  %v564 = vld [vmem:[%s1 + $0xf60] sm:$0xff]
  %v565 = vld [vmem:[%s1 + $0xf68] sm:$0xff]
  %v566 = vld [vmem:[%s1 + $0xf70] sm:$0xff]
  %v567 = vld [vmem:[%s1 + $0xf78] sm:$0xff]
  %v568 = vld [vmem:[%s1 + $0xf80] sm:$0xff]
  %v569 = vld [vmem:[%s1 + $0xf88] sm:$0xff]
  %v570 = vld [vmem:[%s1 + $0xf90] sm:$0xff]
  %v571 = vld [vmem:[%s1 + $0xf98] sm:$0xff]
  %v572 = vld [vmem:[%s1 + $0xfa0] sm:$0xff]
  %v573 = vld [vmem:[%s1 + $0xfa8] sm:$0xff]
  %v574 = vld [vmem:[%s1 + $0xfb0] sm:$0xff]
  %v575 = vld [vmem:[%s1 + $0xfb8] sm:$0xff]
  %v576 = vld [vmem:[%s1 + $0xfc0] sm:$0xff]
  %v577 = vld [vmem:[%s1 + $0xfc8] sm:$0xff]
  %v578 = vld [vmem:[%s1 + $0xfd0] sm:$0xff]
  %v579 = vld [vmem:[%s1 + $0xfd8] sm:$0xff]
  %v580 = vld [vmem:[%s1 + $0xfe0] sm:$0xff]
  %v581 = vld [vmem:[%s1 + $0xfe8] sm:$0xff]
  %v582 = vld [vmem:[%s1 + $0xff0] sm:$0xff]
  %v583 = vld [vmem:[%s1 + $0xff8] sm:$0xff]
  %v584 = vld [vmem:[%s1 + $0x1000] sm:$0xff]
  %v585 = vld [vmem:[%s1 + $0x1008] sm:$0xff]
  %v586 = vld [vmem:[%s1 + $0x1010] sm:$0xff]
  %v587 = vld [vmem:[%s1 + $0x1018] sm:$0xff]
  %v588 = vld [vmem:[%s1 + $0x1020] sm:$0xff]
  %v589 = vld [vmem:[%s1 + $0x1028] sm:$0xff]
  %v590 = vld [vmem:[%s1 + $0x1030] sm:$0xff]
  %v591 = vld [vmem:[%s1 + $0x1038] sm:$0xff]
  %v592 = vld [vmem:[%s1 + $0x1040] sm:$0xff]
  %v593 = vld [vmem:[%s1 + $0x1048] sm:$0xff]
  %v594 = vld [vmem:[%s1 + $0x1050] sm:$0xff]
  %v595 = vld [vmem:[%s1 + $0x1058] sm:$0xff]
  %v596 = vld [vmem:[%s1 + $0x1060] sm:$0xff]
  %v597 = vld [vmem:[%s1 + $0x1068] sm:$0xff]
  %v598 = vld [vmem:[%s1 + $0x1070] sm:$0xff]
  %v599 = vld [vmem:[%s1 + $0x1078] sm:$0xff]
  %v600 = vld [vmem:[%s1 + $0x1080] sm:$0xff]
  %v601 = vld [vmem:[%s1 + $0x1088] sm:$0xff]
  %v602 = vld [vmem:[%s1 + $0x1090] sm:$0xff]
  %v603 = vld [vmem:[%s1 + $0x1098] sm:$0xff]
  %v604 = vld [vmem:[%s1 + $0x10a0] sm:$0xff]
  %v605 = vld [vmem:[%s1 + $0x10a8] sm:$0xff]
  %v606 = vld [vmem:[%s1 + $0x10b0] sm:$0xff]
  %v607 = vld [vmem:[%s1 + $0x10b8] sm:$0xff]
  %v608 = vld [vmem:[%s1 + $0x10c0] sm:$0xff]
  %v609 = vld [vmem:[%s1 + $0x10c8] sm:$0xff]
  %v610 = vld [vmem:[%s1 + $0x10d0] sm:$0xff]
  %v611 = vld [vmem:[%s1 + $0x10d8] sm:$0xff]
  %v612 = vld [vmem:[%s1 + $0x10e0] sm:$0xff]
  %v613 = vld [vmem:[%s1 + $0x10e8] sm:$0xff]
  %v614 = vld [vmem:[%s1 + $0x10f0] sm:$0xff]
  %v615 = vld [vmem:[%s1 + $0x10f8] sm:$0xff]
  %v616 = vld [vmem:[%s1 + $0x1100] sm:$0xff]
  %v617 = vld [vmem:[%s1 + $0x1108] sm:$0xff]
  %v618 = vld [vmem:[%s1 + $0x1110] sm:$0xff]
  %v619 = vld [vmem:[%s1 + $0x1118] sm:$0xff]
  %v620 = vld [vmem:[%s1 + $0x1120] sm:$0xff]
  %v621 = vld [vmem:[%s1 + $0x1128] sm:$0xff]
  %v622 = vld [vmem:[%s1 + $0x1130] sm:$0xff]
  %v623 = vld [vmem:[%s1 + $0x1138] sm:$0xff]
  %v624 = vld [vmem:[%s1 + $0x1140] sm:$0xff]
  %v625 = vld [vmem:[%s1 + $0x1148] sm:$0xff]
  %v626 = vld [vmem:[%s1 + $0x1150] sm:$0xff]
  %v627 = vld [vmem:[%s1 + $0x1158] sm:$0xff]
  %v628 = vld [vmem:[%s1 + $0x1160] sm:$0xff]
  %v629 = vld [vmem:[%s1 + $0x1168] sm:$0xff]
  %v630 = vld [vmem:[%s1 + $0x1170] sm:$0xff]
  %v631 = vld [vmem:[%s1 + $0x1178] sm:$0xff]
  %v632 = vld [vmem:[%s1 + $0x1180] sm:$0xff]
  %v633 = vld [vmem:[%s1 + $0x1188] sm:$0xff]
  %v634 = vld [vmem:[%s1 + $0x1190] sm:$0xff]
  %v635 = vld [vmem:[%s1 + $0x1198] sm:$0xff]
  %v636 = vld [vmem:[%s1 + $0x11a0] sm:$0xff]
  %v637 = vld [vmem:[%s1 + $0x11a8] sm:$0xff]
  %v638 = vld [vmem:[%s1 + $0x11b0] sm:$0xff]
  %v639 = vld [vmem:[%s1 + $0x11b8] sm:$0xff]
  %v640 = vld [vmem:[%s1 + $0x11c0] sm:$0xff]
  %v641 = vld [vmem:[%s1 + $0x11c8] sm:$0xff]
  %v642 = vld [vmem:[%s1 + $0x11d0] sm:$0xff]
  %v643 = vld [vmem:[%s1 + $0x11d8] sm:$0xff]
  %v644 = vld [vmem:[%s1 + $0x11e0] sm:$0xff]
  %v645 = vld [vmem:[%s1 + $0x11e8] sm:$0xff]
  %v646 = vld [vmem:[%s1 + $0x11f0] sm:$0xff]
  %v647 = vld [vmem:[%s1 + $0x11f8] sm:$0xff]
  %v702 = vunpack.c.l.b16 %v18
  %v703 = vunpack.c.h.b16 %v18
  %v704 = vunpack.c.l.b16 %v19
  %v705 = vunpack.c.h.b16 %v19
  %v706 = vunpack.c.l.b16 %v20
  %v707 = vunpack.c.h.b16 %v20
  %v708 = vunpack.c.l.b16 %v21
  %v709 = vunpack.c.h.b16 %v21
  %v710 = vunpack.c.l.b16 %v22
  %v711 = vunpack.c.h.b16 %v22
  %v712 = vunpack.c.l.b16 %v23
  %v713 = vunpack.c.h.b16 %v23
  %v714 = vunpack.c.l.b16 %v24
  %v715 = vunpack.c.h.b16 %v24
  %v716 = vunpack.c.l.b16 %v25
  %v717 = vunpack.c.h.b16 %v25
  %v718 = vunpack.c.l.b16 %v26
  %v719 = vunpack.c.h.b16 %v26
  %v720 = vunpack.c.l.b16 %v27
  %v721 = vunpack.c.h.b16 %v27
  %v722 = vunpack.c.l.b16 %v28
  %v723 = vunpack.c.h.b16 %v28
  %v724 = vunpack.c.l.b16 %v29
  %v725 = vunpack.c.h.b16 %v29
  %v726 = vunpack.c.l.b16 %v30
  %v727 = vunpack.c.h.b16 %v30
  %v728 = vunpack.c.l.b16 %v31
  %v729 = vunpack.c.h.b16 %v31
  %v730 = vunpack.c.l.b16 %v32
  %v731 = vunpack.c.h.b16 %v32
  %v732 = vunpack.c.l.b16 %v33
  %v733 = vunpack.c.h.b16 %v33
  %v734 = vunpack.c.l.b16 %v34
  %v735 = vunpack.c.h.b16 %v34
  %v736 = vunpack.c.l.b16 %v35
  %v737 = vunpack.c.h.b16 %v35
  %v738 = vunpack.c.l.b16 %v36
  %v739 = vunpack.c.h.b16 %v36
  %v740 = vunpack.c.l.b16 %v37
  %v741 = vunpack.c.h.b16 %v37
  %v742 = vunpack.c.l.b16 %v38
  %v743 = vunpack.c.h.b16 %v38
  %v744 = vunpack.c.l.b16 %v39
  %v745 = vunpack.c.h.b16 %v39
  %v746 = vunpack.c.l.b16 %v40
  %v747 = vunpack.c.h.b16 %v40
  %v748 = vunpack.c.l.b16 %v41
  %v749 = vunpack.c.h.b16 %v41
  %v750 = vunpack.c.l.b16 %v42
  %v751 = vunpack.c.h.b16 %v42
  %v752 = vunpack.c.l.b16 %v43
  %v753 = vunpack.c.h.b16 %v43
  %v754 = vunpack.c.l.b16 %v44
  %v755 = vunpack.c.h.b16 %v44
  %v756 = vunpack.c.l.b16 %v45
  %v757 = vunpack.c.h.b16 %v45
  %v758 = vunpack.c.l.b16 %v46
  %v759 = vunpack.c.h.b16 %v46
  %v760 = vunpack.c.l.b16 %v47
  %v761 = vunpack.c.h.b16 %v47
  %v762 = vunpack.c.l.b16 %v48
  %v763 = vunpack.c.h.b16 %v48
  %v764 = vunpack.c.l.b16 %v49
  %v765 = vunpack.c.h.b16 %v49
  %v766 = vunpack.c.l.b16 %v50
  %v767 = vunpack.c.h.b16 %v50
  %v768 = vunpack.c.l.b16 %v51
  %v769 = vunpack.c.h.b16 %v51
  %v770 = vunpack.c.l.b16 %v52
  %v771 = vunpack.c.h.b16 %v52
  %v772 = vunpack.c.l.b16 %v53
  %v773 = vunpack.c.h.b16 %v53
  %v774 = vunpack.c.l.b16 %v54
  %v775 = vunpack.c.h.b16 %v54
  %v776 = vunpack.c.l.b16 %v55
  %v777 = vunpack.c.h.b16 %v55
  %v778 = vunpack.c.l.b16 %v56
  %v779 = vunpack.c.h.b16 %v56
  %v780 = vunpack.c.l.b16 %v57
  %v781 = vunpack.c.h.b16 %v57
  %v782 = vunpack.c.l.b16 %v58
  %v783 = vunpack.c.h.b16 %v58
  %v784 = vunpack.c.l.b16 %v59
  %v785 = vunpack.c.h.b16 %v59
  %v786 = vunpack.c.l.b16 %v60
  %v787 = vunpack.c.h.b16 %v60
  %v788 = vunpack.c.l.b16 %v61
  %v789 = vunpack.c.h.b16 %v61
  %v790 = vunpack.c.l.b16 %v62
  %v791 = vunpack.c.h.b16 %v62
  %v792 = vunpack.c.l.b16 %v63
  %v793 = vunpack.c.h.b16 %v63
  %v794 = vunpack.c.l.b16 %v64
  %v795 = vunpack.c.h.b16 %v64
  %v796 = vunpack.c.l.b16 %v65
  %v797 = vunpack.c.h.b16 %v65
  %v798 = vunpack.c.l.b16 %v66
  %v799 = vunpack.c.h.b16 %v66
  %v800 = vunpack.c.l.b16 %v67
  %v801 = vunpack.c.h.b16 %v67
  %v802 = vunpack.c.l.b16 %v68
  %v803 = vunpack.c.h.b16 %v68
  %v804 = vunpack.c.l.b16 %v69
  %v805 = vunpack.c.h.b16 %v69
  %v806 = vunpack.c.l.b16 %v70
  %v807 = vunpack.c.h.b16 %v70
  %v808 = vunpack.c.l.b16 %v71
  %v809 = vunpack.c.h.b16 %v71
  %v810 = vpack.c.b16 %v720, %v702
  %v811 = vpack.c.b16 %v721, %v703
  %v812 = vpack.c.b16 %v722, %v704
  %v813 = vpack.c.b16 %v723, %v705
  %v814 = vpack.c.b16 %v724, %v706
  %v815 = vpack.c.b16 %v725, %v707
  %v816 = vpack.c.b16 %v726, %v708
  %v817 = vpack.c.b16 %v727, %v709
  %v818 = vpack.c.b16 %v728, %v710
  %v819 = vpack.c.b16 %v729, %v711
  %v820 = vpack.c.b16 %v730, %v712
  %v821 = vpack.c.b16 %v731, %v713
  %v822 = vpack.c.b16 %v732, %v714
  %v823 = vpack.c.b16 %v733, %v715
  %v824 = vpack.c.b16 %v734, %v716
  %v825 = vpack.c.b16 %v735, %v717
  %v826 = vpack.c.b16 %v736, %v718
  %v827 = vpack.c.b16 %v737, %v719
  %v828 = vpack.c.b16 %v756, %v738
  %v829 = vpack.c.b16 %v757, %v739
  %v830 = vpack.c.b16 %v758, %v740
  %v831 = vpack.c.b16 %v759, %v741
  %v832 = vpack.c.b16 %v760, %v742
  %v833 = vpack.c.b16 %v761, %v743
  %v834 = vpack.c.b16 %v762, %v744
  %v835 = vpack.c.b16 %v763, %v745
  %v836 = vpack.c.b16 %v764, %v746
  %v837 = vpack.c.b16 %v765, %v747
  %v838 = vpack.c.b16 %v766, %v748
  %v839 = vpack.c.b16 %v767, %v749
  %v840 = vpack.c.b16 %v768, %v750
  %v841 = vpack.c.b16 %v769, %v751
  %v842 = vpack.c.b16 %v770, %v752
  %v843 = vpack.c.b16 %v771, %v753
  %v844 = vpack.c.b16 %v772, %v754
  %v845 = vpack.c.b16 %v773, %v755
  %v846 = vpack.c.b16 %v792, %v774
  %v847 = vpack.c.b16 %v793, %v775
  %v848 = vpack.c.b16 %v794, %v776
  %v849 = vpack.c.b16 %v795, %v777
  %v850 = vpack.c.b16 %v796, %v778
  %v851 = vpack.c.b16 %v797, %v779
  %v852 = vpack.c.b16 %v798, %v780
  %v853 = vpack.c.b16 %v799, %v781
  %v854 = vpack.c.b16 %v800, %v782
  %v855 = vpack.c.b16 %v801, %v783
  %v856 = vpack.c.b16 %v802, %v784
  %v857 = vpack.c.b16 %v803, %v785
  %v858 = vpack.c.b16 %v804, %v786
  %v859 = vpack.c.b16 %v805, %v787
  %v860 = vpack.c.b16 %v806, %v788
  %v861 = vpack.c.b16 %v807, %v789
  %v862 = vpack.c.b16 %v808, %v790
  %v863 = vpack.c.b16 %v809, %v791
  %v1494 = vunpack.c.l.b16 %v72
  %v1495 = vunpack.c.h.b16 %v72
  %v1496 = vunpack.c.l.b16 %v73
  %v1497 = vunpack.c.h.b16 %v73
  %v1498 = vunpack.c.l.b16 %v74
  %v1499 = vunpack.c.h.b16 %v74
  %v1500 = vunpack.c.l.b16 %v75
  %v1501 = vunpack.c.h.b16 %v75
  %v1502 = vunpack.c.l.b16 %v76
  %v1503 = vunpack.c.h.b16 %v76
  %v1504 = vunpack.c.l.b16 %v77
  %v1505 = vunpack.c.h.b16 %v77
  %v1506 = vunpack.c.l.b16 %v78
  %v1507 = vunpack.c.h.b16 %v78
  %v1508 = vunpack.c.l.b16 %v79
  %v1509 = vunpack.c.h.b16 %v79
  %v1510 = vunpack.c.l.b16 %v80
  %v1511 = vunpack.c.h.b16 %v80
  %v1512 = vunpack.c.l.b16 %v81
  %v1513 = vunpack.c.h.b16 %v81
  %v1514 = vunpack.c.l.b16 %v82
  %v1515 = vunpack.c.h.b16 %v82
  %v1516 = vunpack.c.l.b16 %v83
  %v1517 = vunpack.c.h.b16 %v83
  %v1518 = vunpack.c.l.b16 %v84
  %v1519 = vunpack.c.h.b16 %v84
  %v1520 = vunpack.c.l.b16 %v85
  %v1521 = vunpack.c.h.b16 %v85
  %v1522 = vunpack.c.l.b16 %v86
  %v1523 = vunpack.c.h.b16 %v86
  %v1524 = vunpack.c.l.b16 %v87
  %v1525 = vunpack.c.h.b16 %v87
  %v1526 = vunpack.c.l.b16 %v88
  %v1527 = vunpack.c.h.b16 %v88
  %v1528 = vunpack.c.l.b16 %v89
  %v1529 = vunpack.c.h.b16 %v89
  %v1530 = vunpack.c.l.b16 %v90
  %v1531 = vunpack.c.h.b16 %v90
  %v1532 = vunpack.c.l.b16 %v91
  %v1533 = vunpack.c.h.b16 %v91
  %v1534 = vunpack.c.l.b16 %v92
  %v1535 = vunpack.c.h.b16 %v92
  %v1536 = vunpack.c.l.b16 %v93
  %v1537 = vunpack.c.h.b16 %v93
  %v1538 = vunpack.c.l.b16 %v94
  %v1539 = vunpack.c.h.b16 %v94
  %v1540 = vunpack.c.l.b16 %v95
  %v1541 = vunpack.c.h.b16 %v95
  %v1542 = vunpack.c.l.b16 %v96
  %v1543 = vunpack.c.h.b16 %v96
  %v1544 = vunpack.c.l.b16 %v97
  %v1545 = vunpack.c.h.b16 %v97
  %v1546 = vunpack.c.l.b16 %v98
  %v1547 = vunpack.c.h.b16 %v98
  %v1548 = vunpack.c.l.b16 %v99
  %v1549 = vunpack.c.h.b16 %v99
  %v1550 = vunpack.c.l.b16 %v100
  %v1551 = vunpack.c.h.b16 %v100
  %v1552 = vunpack.c.l.b16 %v101
  %v1553 = vunpack.c.h.b16 %v101
  %v1554 = vunpack.c.l.b16 %v102
  %v1555 = vunpack.c.h.b16 %v102
  %v1556 = vunpack.c.l.b16 %v103
  %v1557 = vunpack.c.h.b16 %v103
  %v1558 = vunpack.c.l.b16 %v104
  %v1559 = vunpack.c.h.b16 %v104
  %v1560 = vunpack.c.l.b16 %v105
  %v1561 = vunpack.c.h.b16 %v105
  %v1562 = vunpack.c.l.b16 %v106
  %v1563 = vunpack.c.h.b16 %v106
  %v1564 = vunpack.c.l.b16 %v107
  %v1565 = vunpack.c.h.b16 %v107
  %v1566 = vunpack.c.l.b16 %v108
  %v1567 = vunpack.c.h.b16 %v108
  %v1568 = vunpack.c.l.b16 %v109
  %v1569 = vunpack.c.h.b16 %v109
  %v1570 = vunpack.c.l.b16 %v110
  %v1571 = vunpack.c.h.b16 %v110
  %v1572 = vunpack.c.l.b16 %v111
  %v1573 = vunpack.c.h.b16 %v111
  %v1574 = vunpack.c.l.b16 %v112
  %v1575 = vunpack.c.h.b16 %v112
  %v1576 = vunpack.c.l.b16 %v113
  %v1577 = vunpack.c.h.b16 %v113
  %v1578 = vunpack.c.l.b16 %v114
  %v1579 = vunpack.c.h.b16 %v114
  %v1580 = vunpack.c.l.b16 %v115
  %v1581 = vunpack.c.h.b16 %v115
  %v1582 = vunpack.c.l.b16 %v116
  %v1583 = vunpack.c.h.b16 %v116
  %v1584 = vunpack.c.l.b16 %v117
  %v1585 = vunpack.c.h.b16 %v117
  %v1586 = vunpack.c.l.b16 %v118
  %v1587 = vunpack.c.h.b16 %v118
  %v1588 = vunpack.c.l.b16 %v119
  %v1589 = vunpack.c.h.b16 %v119
  %v1590 = vunpack.c.l.b16 %v120
  %v1591 = vunpack.c.h.b16 %v120
  %v1592 = vunpack.c.l.b16 %v121
  %v1593 = vunpack.c.h.b16 %v121
  %v1594 = vunpack.c.l.b16 %v122
  %v1595 = vunpack.c.h.b16 %v122
  %v1596 = vunpack.c.l.b16 %v123
  %v1597 = vunpack.c.h.b16 %v123
  %v1598 = vunpack.c.l.b16 %v124
  %v1599 = vunpack.c.h.b16 %v124
  %v1600 = vunpack.c.l.b16 %v125
  %v1601 = vunpack.c.h.b16 %v125
  %v1602 = vunpack.c.l.b16 %v126
  %v1603 = vunpack.c.h.b16 %v126
  %v1604 = vunpack.c.l.b16 %v127
  %v1605 = vunpack.c.h.b16 %v127
  %v1606 = vunpack.c.l.b16 %v128
  %v1607 = vunpack.c.h.b16 %v128
  %v1608 = vunpack.c.l.b16 %v129
  %v1609 = vunpack.c.h.b16 %v129
  %v1610 = vunpack.c.l.b16 %v130
  %v1611 = vunpack.c.h.b16 %v130
  %v1612 = vunpack.c.l.b16 %v131
  %v1613 = vunpack.c.h.b16 %v131
  %v1614 = vunpack.c.l.b16 %v132
  %v1615 = vunpack.c.h.b16 %v132
  %v1616 = vunpack.c.l.b16 %v133
  %v1617 = vunpack.c.h.b16 %v133
  %v1618 = vunpack.c.l.b16 %v134
  %v1619 = vunpack.c.h.b16 %v134
  %v1620 = vunpack.c.l.b16 %v135
  %v1621 = vunpack.c.h.b16 %v135
  %v1622 = vunpack.c.l.b16 %v136
  %v1623 = vunpack.c.h.b16 %v136
  %v1624 = vunpack.c.l.b16 %v137
  %v1625 = vunpack.c.h.b16 %v137
  %v1626 = vunpack.c.l.b16 %v138
  %v1627 = vunpack.c.h.b16 %v138
  %v1628 = vunpack.c.l.b16 %v139
  %v1629 = vunpack.c.h.b16 %v139
  %v1630 = vunpack.c.l.b16 %v140
  %v1631 = vunpack.c.h.b16 %v140
  %v1632 = vunpack.c.l.b16 %v141
  %v1633 = vunpack.c.h.b16 %v141
  %v1634 = vunpack.c.l.b16 %v142
  %v1635 = vunpack.c.h.b16 %v142
  %v1636 = vunpack.c.l.b16 %v143
  %v1637 = vunpack.c.h.b16 %v143
  %v1638 = vunpack.c.l.b16 %v144
  %v1639 = vunpack.c.h.b16 %v144
  %v1640 = vunpack.c.l.b16 %v145
  %v1641 = vunpack.c.h.b16 %v145
  %v1642 = vunpack.c.l.b16 %v146
  %v1643 = vunpack.c.h.b16 %v146
  %v1644 = vunpack.c.l.b16 %v147
  %v1645 = vunpack.c.h.b16 %v147
  %v1646 = vunpack.c.l.b16 %v148
  %v1647 = vunpack.c.h.b16 %v148
  %v1648 = vunpack.c.l.b16 %v149
  %v1649 = vunpack.c.h.b16 %v149
  %v1650 = vunpack.c.l.b16 %v150
  %v1651 = vunpack.c.h.b16 %v150
  %v1652 = vunpack.c.l.b16 %v151
  %v1653 = vunpack.c.h.b16 %v151
  %v1654 = vunpack.c.l.b16 %v152
  %v1655 = vunpack.c.h.b16 %v152
  %v1656 = vunpack.c.l.b16 %v153
  %v1657 = vunpack.c.h.b16 %v153
  %v1658 = vunpack.c.l.b16 %v154
  %v1659 = vunpack.c.h.b16 %v154
  %v1660 = vunpack.c.l.b16 %v155
  %v1661 = vunpack.c.h.b16 %v155
  %v1662 = vunpack.c.l.b16 %v156
  %v1663 = vunpack.c.h.b16 %v156
  %v1664 = vunpack.c.l.b16 %v157
  %v1665 = vunpack.c.h.b16 %v157
  %v1666 = vunpack.c.l.b16 %v158
  %v1667 = vunpack.c.h.b16 %v158
  %v1668 = vunpack.c.l.b16 %v159
  %v1669 = vunpack.c.h.b16 %v159
  %v1670 = vunpack.c.l.b16 %v160
  %v1671 = vunpack.c.h.b16 %v160
  %v1672 = vunpack.c.l.b16 %v161
  %v1673 = vunpack.c.h.b16 %v161
  %v1674 = vunpack.c.l.b16 %v162
  %v1675 = vunpack.c.h.b16 %v162
  %v1676 = vunpack.c.l.b16 %v163
  %v1677 = vunpack.c.h.b16 %v163
  %v1678 = vunpack.c.l.b16 %v164
  %v1679 = vunpack.c.h.b16 %v164
  %v1680 = vunpack.c.l.b16 %v165
  %v1681 = vunpack.c.h.b16 %v165
  %v1682 = vunpack.c.l.b16 %v166
  %v1683 = vunpack.c.h.b16 %v166
  %v1684 = vunpack.c.l.b16 %v167
  %v1685 = vunpack.c.h.b16 %v167
  %v1686 = vunpack.c.l.b16 %v168
  %v1687 = vunpack.c.h.b16 %v168
  %v1688 = vunpack.c.l.b16 %v169
  %v1689 = vunpack.c.h.b16 %v169
  %v1690 = vunpack.c.l.b16 %v170
  %v1691 = vunpack.c.h.b16 %v170
  %v1692 = vunpack.c.l.b16 %v171
  %v1693 = vunpack.c.h.b16 %v171
  %v1694 = vunpack.c.l.b16 %v172
  %v1695 = vunpack.c.h.b16 %v172
  %v1696 = vunpack.c.l.b16 %v173
  %v1697 = vunpack.c.h.b16 %v173
  %v1698 = vunpack.c.l.b16 %v174
  %v1699 = vunpack.c.h.b16 %v174
  %v1700 = vunpack.c.l.b16 %v175
  %v1701 = vunpack.c.h.b16 %v175
  %v1702 = vunpack.c.l.b16 %v176
  %v1703 = vunpack.c.h.b16 %v176
  %v1704 = vunpack.c.l.b16 %v177
  %v1705 = vunpack.c.h.b16 %v177
  %v1706 = vunpack.c.l.b16 %v178
  %v1707 = vunpack.c.h.b16 %v178
  %v1708 = vunpack.c.l.b16 %v179
  %v1709 = vunpack.c.h.b16 %v179
  %v1710 = vunpack.c.l.b16 %v180
  %v1711 = vunpack.c.h.b16 %v180
  %v1712 = vunpack.c.l.b16 %v181
  %v1713 = vunpack.c.h.b16 %v181
  %v1714 = vunpack.c.l.b16 %v182
  %v1715 = vunpack.c.h.b16 %v182
  %v1716 = vunpack.c.l.b16 %v183
  %v1717 = vunpack.c.h.b16 %v183
  %v1718 = vunpack.c.l.b16 %v184
  %v1719 = vunpack.c.h.b16 %v184
  %v1720 = vunpack.c.l.b16 %v185
  %v1721 = vunpack.c.h.b16 %v185
  %v1722 = vunpack.c.l.b16 %v186
  %v1723 = vunpack.c.h.b16 %v186
  %v1724 = vunpack.c.l.b16 %v187
  %v1725 = vunpack.c.h.b16 %v187
  %v1726 = vunpack.c.l.b16 %v188
  %v1727 = vunpack.c.h.b16 %v188
  %v1728 = vunpack.c.l.b16 %v189
  %v1729 = vunpack.c.h.b16 %v189
  %v1730 = vunpack.c.l.b16 %v190
  %v1731 = vunpack.c.h.b16 %v190
  %v1732 = vunpack.c.l.b16 %v191
  %v1733 = vunpack.c.h.b16 %v191
  %v1734 = vunpack.c.l.b16 %v192
  %v1735 = vunpack.c.h.b16 %v192
  %v1736 = vunpack.c.l.b16 %v193
  %v1737 = vunpack.c.h.b16 %v193
  %v1738 = vunpack.c.l.b16 %v194
  %v1739 = vunpack.c.h.b16 %v194
  %v1740 = vunpack.c.l.b16 %v195
  %v1741 = vunpack.c.h.b16 %v195
  %v1742 = vunpack.c.l.b16 %v196
  %v1743 = vunpack.c.h.b16 %v196
  %v1744 = vunpack.c.l.b16 %v197
  %v1745 = vunpack.c.h.b16 %v197
  %v1746 = vunpack.c.l.b16 %v198
  %v1747 = vunpack.c.h.b16 %v198
  %v1748 = vunpack.c.l.b16 %v199
  %v1749 = vunpack.c.h.b16 %v199
  %v1750 = vunpack.c.l.b16 %v200
  %v1751 = vunpack.c.h.b16 %v200
  %v1752 = vunpack.c.l.b16 %v201
  %v1753 = vunpack.c.h.b16 %v201
  %v1754 = vunpack.c.l.b16 %v202
  %v1755 = vunpack.c.h.b16 %v202
  %v1756 = vunpack.c.l.b16 %v203
  %v1757 = vunpack.c.h.b16 %v203
  %v1758 = vunpack.c.l.b16 %v204
  %v1759 = vunpack.c.h.b16 %v204
  %v1760 = vunpack.c.l.b16 %v205
  %v1761 = vunpack.c.h.b16 %v205
  %v1762 = vunpack.c.l.b16 %v206
  %v1763 = vunpack.c.h.b16 %v206
  %v1764 = vunpack.c.l.b16 %v207
  %v1765 = vunpack.c.h.b16 %v207
  %v1766 = vunpack.c.l.b16 %v208
  %v1767 = vunpack.c.h.b16 %v208
  %v1768 = vunpack.c.l.b16 %v209
  %v1769 = vunpack.c.h.b16 %v209
  %v1770 = vunpack.c.l.b16 %v210
  %v1771 = vunpack.c.h.b16 %v210
  %v1772 = vunpack.c.l.b16 %v211
  %v1773 = vunpack.c.h.b16 %v211
  %v1774 = vunpack.c.l.b16 %v212
  %v1775 = vunpack.c.h.b16 %v212
  %v1776 = vunpack.c.l.b16 %v213
  %v1777 = vunpack.c.h.b16 %v213
  %v1778 = vunpack.c.l.b16 %v214
  %v1779 = vunpack.c.h.b16 %v214
  %v1780 = vunpack.c.l.b16 %v215
  %v1781 = vunpack.c.h.b16 %v215
  %v1782 = vunpack.c.l.b16 %v216
  %v1783 = vunpack.c.h.b16 %v216
  %v1784 = vunpack.c.l.b16 %v217
  %v1785 = vunpack.c.h.b16 %v217
  %v1786 = vunpack.c.l.b16 %v218
  %v1787 = vunpack.c.h.b16 %v218
  %v1788 = vunpack.c.l.b16 %v219
  %v1789 = vunpack.c.h.b16 %v219
  %v1790 = vunpack.c.l.b16 %v220
  %v1791 = vunpack.c.h.b16 %v220
  %v1792 = vunpack.c.l.b16 %v221
  %v1793 = vunpack.c.h.b16 %v221
  %v1794 = vunpack.c.l.b16 %v222
  %v1795 = vunpack.c.h.b16 %v222
  %v1796 = vunpack.c.l.b16 %v223
  %v1797 = vunpack.c.h.b16 %v223
  %v1798 = vunpack.c.l.b16 %v224
  %v1799 = vunpack.c.h.b16 %v224
  %v1800 = vunpack.c.l.b16 %v225
  %v1801 = vunpack.c.h.b16 %v225
  %v1802 = vunpack.c.l.b16 %v226
  %v1803 = vunpack.c.h.b16 %v226
  %v1804 = vunpack.c.l.b16 %v227
  %v1805 = vunpack.c.h.b16 %v227
  %v1806 = vunpack.c.l.b16 %v228
  %v1807 = vunpack.c.h.b16 %v228
  %v1808 = vunpack.c.l.b16 %v229
  %v1809 = vunpack.c.h.b16 %v229
  %v1810 = vunpack.c.l.b16 %v230
  %v1811 = vunpack.c.h.b16 %v230
  %v1812 = vunpack.c.l.b16 %v231
  %v1813 = vunpack.c.h.b16 %v231
  %v1814 = vunpack.c.l.b16 %v232
  %v1815 = vunpack.c.h.b16 %v232
  %v1816 = vunpack.c.l.b16 %v233
  %v1817 = vunpack.c.h.b16 %v233
  %v1818 = vunpack.c.l.b16 %v234
  %v1819 = vunpack.c.h.b16 %v234
  %v1820 = vunpack.c.l.b16 %v235
  %v1821 = vunpack.c.h.b16 %v235
  %v1822 = vunpack.c.l.b16 %v236
  %v1823 = vunpack.c.h.b16 %v236
  %v1824 = vunpack.c.l.b16 %v237
  %v1825 = vunpack.c.h.b16 %v237
  %v1826 = vunpack.c.l.b16 %v238
  %v1827 = vunpack.c.h.b16 %v238
  %v1828 = vunpack.c.l.b16 %v239
  %v1829 = vunpack.c.h.b16 %v239
  %v1830 = vunpack.c.l.b16 %v240
  %v1831 = vunpack.c.h.b16 %v240
  %v1832 = vunpack.c.l.b16 %v241
  %v1833 = vunpack.c.h.b16 %v241
  %v1834 = vunpack.c.l.b16 %v242
  %v1835 = vunpack.c.h.b16 %v242
  %v1836 = vunpack.c.l.b16 %v243
  %v1837 = vunpack.c.h.b16 %v243
  %v1838 = vunpack.c.l.b16 %v244
  %v1839 = vunpack.c.h.b16 %v244
  %v1840 = vunpack.c.l.b16 %v245
  %v1841 = vunpack.c.h.b16 %v245
  %v1842 = vunpack.c.l.b16 %v246
  %v1843 = vunpack.c.h.b16 %v246
  %v1844 = vunpack.c.l.b16 %v247
  %v1845 = vunpack.c.h.b16 %v247
  %v1846 = vunpack.c.l.b16 %v248
  %v1847 = vunpack.c.h.b16 %v248
  %v1848 = vunpack.c.l.b16 %v249
  %v1849 = vunpack.c.h.b16 %v249
  %v1850 = vunpack.c.l.b16 %v250
  %v1851 = vunpack.c.h.b16 %v250
  %v1852 = vunpack.c.l.b16 %v251
  %v1853 = vunpack.c.h.b16 %v251
  %v1854 = vunpack.c.l.b16 %v252
  %v1855 = vunpack.c.h.b16 %v252
  %v1856 = vunpack.c.l.b16 %v253
  %v1857 = vunpack.c.h.b16 %v253
  %v1858 = vunpack.c.l.b16 %v254
  %v1859 = vunpack.c.h.b16 %v254
  %v1860 = vunpack.c.l.b16 %v255
  %v1861 = vunpack.c.h.b16 %v255
  %v1862 = vunpack.c.l.b16 %v256
  %v1863 = vunpack.c.h.b16 %v256
  %v1864 = vunpack.c.l.b16 %v257
  %v1865 = vunpack.c.h.b16 %v257
  %v1866 = vunpack.c.l.b16 %v258
  %v1867 = vunpack.c.h.b16 %v258
  %v1868 = vunpack.c.l.b16 %v259
  %v1869 = vunpack.c.h.b16 %v259
  %v1870 = vunpack.c.l.b16 %v260
  %v1871 = vunpack.c.h.b16 %v260
  %v1872 = vunpack.c.l.b16 %v261
  %v1873 = vunpack.c.h.b16 %v261
  %v1874 = vunpack.c.l.b16 %v262
  %v1875 = vunpack.c.h.b16 %v262
  %v1876 = vunpack.c.l.b16 %v263
  %v1877 = vunpack.c.h.b16 %v263
  %v1878 = vunpack.c.l.b16 %v264
  %v1879 = vunpack.c.h.b16 %v264
  %v1880 = vunpack.c.l.b16 %v265
  %v1881 = vunpack.c.h.b16 %v265
  %v1882 = vunpack.c.l.b16 %v266
  %v1883 = vunpack.c.h.b16 %v266
  %v1884 = vunpack.c.l.b16 %v267
  %v1885 = vunpack.c.h.b16 %v267
  %v1886 = vunpack.c.l.b16 %v268
  %v1887 = vunpack.c.h.b16 %v268
  %v1888 = vunpack.c.l.b16 %v269
  %v1889 = vunpack.c.h.b16 %v269
  %v1890 = vunpack.c.l.b16 %v270
  %v1891 = vunpack.c.h.b16 %v270
  %v1892 = vunpack.c.l.b16 %v271
  %v1893 = vunpack.c.h.b16 %v271
  %v1894 = vunpack.c.l.b16 %v272
  %v1895 = vunpack.c.h.b16 %v272
  %v1896 = vunpack.c.l.b16 %v273
  %v1897 = vunpack.c.h.b16 %v273
  %v1898 = vunpack.c.l.b16 %v274
  %v1899 = vunpack.c.h.b16 %v274
  %v1900 = vunpack.c.l.b16 %v275
  %v1901 = vunpack.c.h.b16 %v275
  %v1902 = vunpack.c.l.b16 %v276
  %v1903 = vunpack.c.h.b16 %v276
  %v1904 = vunpack.c.l.b16 %v277
  %v1905 = vunpack.c.h.b16 %v277
  %v1906 = vunpack.c.l.b16 %v278
  %v1907 = vunpack.c.h.b16 %v278
  %v1908 = vunpack.c.l.b16 %v279
  %v1909 = vunpack.c.h.b16 %v279
  %v1910 = vunpack.c.l.b16 %v280
  %v1911 = vunpack.c.h.b16 %v280
  %v1912 = vunpack.c.l.b16 %v281
  %v1913 = vunpack.c.h.b16 %v281
  %v1914 = vunpack.c.l.b16 %v282
  %v1915 = vunpack.c.h.b16 %v282
  %v1916 = vunpack.c.l.b16 %v283
  %v1917 = vunpack.c.h.b16 %v283
  %v1918 = vunpack.c.l.b16 %v284
  %v1919 = vunpack.c.h.b16 %v284
  %v1920 = vunpack.c.l.b16 %v285
  %v1921 = vunpack.c.h.b16 %v285
  %v1922 = vunpack.c.l.b16 %v286
  %v1923 = vunpack.c.h.b16 %v286
  %v1924 = vunpack.c.l.b16 %v287
  %v1925 = vunpack.c.h.b16 %v287
  %v1926 = vunpack.c.l.b16 %v288
  %v1927 = vunpack.c.h.b16 %v288
  %v1928 = vunpack.c.l.b16 %v289
  %v1929 = vunpack.c.h.b16 %v289
  %v1930 = vunpack.c.l.b16 %v290
  %v1931 = vunpack.c.h.b16 %v290
  %v1932 = vunpack.c.l.b16 %v291
  %v1933 = vunpack.c.h.b16 %v291
  %v1934 = vunpack.c.l.b16 %v292
  %v1935 = vunpack.c.h.b16 %v292
  %v1936 = vunpack.c.l.b16 %v293
  %v1937 = vunpack.c.h.b16 %v293
  %v1938 = vunpack.c.l.b16 %v294
  %v1939 = vunpack.c.h.b16 %v294
  %v1940 = vunpack.c.l.b16 %v295
  %v1941 = vunpack.c.h.b16 %v295
  %v1942 = vunpack.c.l.b16 %v296
  %v1943 = vunpack.c.h.b16 %v296
  %v1944 = vunpack.c.l.b16 %v297
  %v1945 = vunpack.c.h.b16 %v297
  %v1946 = vunpack.c.l.b16 %v298
  %v1947 = vunpack.c.h.b16 %v298
  %v1948 = vunpack.c.l.b16 %v299
  %v1949 = vunpack.c.h.b16 %v299
  %v1950 = vunpack.c.l.b16 %v300
  %v1951 = vunpack.c.h.b16 %v300
  %v1952 = vunpack.c.l.b16 %v301
  %v1953 = vunpack.c.h.b16 %v301
  %v1954 = vunpack.c.l.b16 %v302
  %v1955 = vunpack.c.h.b16 %v302
  %v1956 = vunpack.c.l.b16 %v303
  %v1957 = vunpack.c.h.b16 %v303
  %v1958 = vunpack.c.l.b16 %v304
  %v1959 = vunpack.c.h.b16 %v304
  %v1960 = vunpack.c.l.b16 %v305
  %v1961 = vunpack.c.h.b16 %v305
  %v1962 = vunpack.c.l.b16 %v306
  %v1963 = vunpack.c.h.b16 %v306
  %v1964 = vunpack.c.l.b16 %v307
  %v1965 = vunpack.c.h.b16 %v307
  %v1966 = vunpack.c.l.b16 %v308
  %v1967 = vunpack.c.h.b16 %v308
  %v1968 = vunpack.c.l.b16 %v309
  %v1969 = vunpack.c.h.b16 %v309
  %v1970 = vunpack.c.l.b16 %v310
  %v1971 = vunpack.c.h.b16 %v310
  %v1972 = vunpack.c.l.b16 %v311
  %v1973 = vunpack.c.h.b16 %v311
  %v1974 = vunpack.c.l.b16 %v312
  %v1975 = vunpack.c.h.b16 %v312
  %v1976 = vunpack.c.l.b16 %v313
  %v1977 = vunpack.c.h.b16 %v313
  %v1978 = vunpack.c.l.b16 %v314
  %v1979 = vunpack.c.h.b16 %v314
  %v1980 = vunpack.c.l.b16 %v315
  %v1981 = vunpack.c.h.b16 %v315
  %v1982 = vunpack.c.l.b16 %v316
  %v1983 = vunpack.c.h.b16 %v316
  %v1984 = vunpack.c.l.b16 %v317
  %v1985 = vunpack.c.h.b16 %v317
  %v1986 = vunpack.c.l.b16 %v318
  %v1987 = vunpack.c.h.b16 %v318
  %v1988 = vunpack.c.l.b16 %v319
  %v1989 = vunpack.c.h.b16 %v319
  %v1990 = vunpack.c.l.b16 %v320
  %v1991 = vunpack.c.h.b16 %v320
  %v1992 = vunpack.c.l.b16 %v321
  %v1993 = vunpack.c.h.b16 %v321
  %v1994 = vunpack.c.l.b16 %v322
  %v1995 = vunpack.c.h.b16 %v322
  %v1996 = vunpack.c.l.b16 %v323
  %v1997 = vunpack.c.h.b16 %v323
  %v1998 = vunpack.c.l.b16 %v324
  %v1999 = vunpack.c.h.b16 %v324
  %v2000 = vunpack.c.l.b16 %v325
  %v2001 = vunpack.c.h.b16 %v325
  %v2002 = vunpack.c.l.b16 %v326
  %v2003 = vunpack.c.h.b16 %v326
  %v2004 = vunpack.c.l.b16 %v327
  %v2005 = vunpack.c.h.b16 %v327
  %v2006 = vunpack.c.l.b16 %v328
  %v2007 = vunpack.c.h.b16 %v328
  %v2008 = vunpack.c.l.b16 %v329
  %v2009 = vunpack.c.h.b16 %v329
  %v2010 = vunpack.c.l.b16 %v330
  %v2011 = vunpack.c.h.b16 %v330
  %v2012 = vunpack.c.l.b16 %v331
  %v2013 = vunpack.c.h.b16 %v331
  %v2014 = vunpack.c.l.b16 %v332
  %v2015 = vunpack.c.h.b16 %v332
  %v2016 = vunpack.c.l.b16 %v333
  %v2017 = vunpack.c.h.b16 %v333
  %v2018 = vunpack.c.l.b16 %v334
  %v2019 = vunpack.c.h.b16 %v334
  %v2020 = vunpack.c.l.b16 %v335
  %v2021 = vunpack.c.h.b16 %v335
  %v2022 = vunpack.c.l.b16 %v336
  %v2023 = vunpack.c.h.b16 %v336
  %v2024 = vunpack.c.l.b16 %v337
  %v2025 = vunpack.c.h.b16 %v337
  %v2026 = vunpack.c.l.b16 %v338
  %v2027 = vunpack.c.h.b16 %v338
  %v2028 = vunpack.c.l.b16 %v339
  %v2029 = vunpack.c.h.b16 %v339
  %v2030 = vunpack.c.l.b16 %v340
  %v2031 = vunpack.c.h.b16 %v340
  %v2032 = vunpack.c.l.b16 %v341
  %v2033 = vunpack.c.h.b16 %v341
  %v2034 = vunpack.c.l.b16 %v342
  %v2035 = vunpack.c.h.b16 %v342
  %v2036 = vunpack.c.l.b16 %v343
  %v2037 = vunpack.c.h.b16 %v343
  %v2038 = vunpack.c.l.b16 %v344
  %v2039 = vunpack.c.h.b16 %v344
  %v2040 = vunpack.c.l.b16 %v345
  %v2041 = vunpack.c.h.b16 %v345
  %v2042 = vunpack.c.l.b16 %v346
  %v2043 = vunpack.c.h.b16 %v346
  %v2044 = vunpack.c.l.b16 %v347
  %v2045 = vunpack.c.h.b16 %v347
  %v2046 = vunpack.c.l.b16 %v348
  %v2047 = vunpack.c.h.b16 %v348
  %v2048 = vunpack.c.l.b16 %v349
  %v2049 = vunpack.c.h.b16 %v349
  %v2050 = vunpack.c.l.b16 %v350
  %v2051 = vunpack.c.h.b16 %v350
  %v2052 = vunpack.c.l.b16 %v351
  %v2053 = vunpack.c.h.b16 %v351
  %v2054 = vunpack.c.l.b16 %v352
  %v2055 = vunpack.c.h.b16 %v352
  %v2056 = vunpack.c.l.b16 %v353
  %v2057 = vunpack.c.h.b16 %v353
  %v2058 = vunpack.c.l.b16 %v354
  %v2059 = vunpack.c.h.b16 %v354
  %v2060 = vunpack.c.l.b16 %v355
  %v2061 = vunpack.c.h.b16 %v355
  %v2062 = vunpack.c.l.b16 %v356
  %v2063 = vunpack.c.h.b16 %v356
  %v2064 = vunpack.c.l.b16 %v357
  %v2065 = vunpack.c.h.b16 %v357
  %v2066 = vunpack.c.l.b16 %v358
  %v2067 = vunpack.c.h.b16 %v358
  %v2068 = vunpack.c.l.b16 %v359
  %v2069 = vunpack.c.h.b16 %v359
  %v2070 = vunpack.c.l.b16 %v360
  %v2071 = vunpack.c.h.b16 %v360
  %v2072 = vunpack.c.l.b16 %v361
  %v2073 = vunpack.c.h.b16 %v361
  %v2074 = vunpack.c.l.b16 %v362
  %v2075 = vunpack.c.h.b16 %v362
  %v2076 = vunpack.c.l.b16 %v363
  %v2077 = vunpack.c.h.b16 %v363
  %v2078 = vunpack.c.l.b16 %v364
  %v2079 = vunpack.c.h.b16 %v364
  %v2080 = vunpack.c.l.b16 %v365
  %v2081 = vunpack.c.h.b16 %v365
  %v2082 = vunpack.c.l.b16 %v366
  %v2083 = vunpack.c.h.b16 %v366
  %v2084 = vunpack.c.l.b16 %v367
  %v2085 = vunpack.c.h.b16 %v367
  %v2086 = vunpack.c.l.b16 %v368
  %v2087 = vunpack.c.h.b16 %v368
  %v2088 = vunpack.c.l.b16 %v369
  %v2089 = vunpack.c.h.b16 %v369
  %v2090 = vunpack.c.l.b16 %v370
  %v2091 = vunpack.c.h.b16 %v370
  %v2092 = vunpack.c.l.b16 %v371
  %v2093 = vunpack.c.h.b16 %v371
  %v2094 = vunpack.c.l.b16 %v372
  %v2095 = vunpack.c.h.b16 %v372
  %v2096 = vunpack.c.l.b16 %v373
  %v2097 = vunpack.c.h.b16 %v373
  %v2098 = vunpack.c.l.b16 %v374
  %v2099 = vunpack.c.h.b16 %v374
  %v2100 = vunpack.c.l.b16 %v375
  %v2101 = vunpack.c.h.b16 %v375
  %v2102 = vunpack.c.l.b16 %v376
  %v2103 = vunpack.c.h.b16 %v376
  %v2104 = vunpack.c.l.b16 %v377
  %v2105 = vunpack.c.h.b16 %v377
  %v2106 = vunpack.c.l.b16 %v378
  %v2107 = vunpack.c.h.b16 %v378
  %v2108 = vunpack.c.l.b16 %v379
  %v2109 = vunpack.c.h.b16 %v379
  %v2110 = vunpack.c.l.b16 %v380
  %v2111 = vunpack.c.h.b16 %v380
  %v2112 = vunpack.c.l.b16 %v381
  %v2113 = vunpack.c.h.b16 %v381
  %v2114 = vunpack.c.l.b16 %v382
  %v2115 = vunpack.c.h.b16 %v382
  %v2116 = vunpack.c.l.b16 %v383
  %v2117 = vunpack.c.h.b16 %v383
  %v2118 = vunpack.c.l.b16 %v384
  %v2119 = vunpack.c.h.b16 %v384
  %v2120 = vunpack.c.l.b16 %v385
  %v2121 = vunpack.c.h.b16 %v385
  %v2122 = vunpack.c.l.b16 %v386
  %v2123 = vunpack.c.h.b16 %v386
  %v2124 = vunpack.c.l.b16 %v387
  %v2125 = vunpack.c.h.b16 %v387
  %v2126 = vunpack.c.l.b16 %v388
  %v2127 = vunpack.c.h.b16 %v388
  %v2128 = vunpack.c.l.b16 %v389
  %v2129 = vunpack.c.h.b16 %v389
  %v2130 = vunpack.c.l.b16 %v390
  %v2131 = vunpack.c.h.b16 %v390
  %v2132 = vunpack.c.l.b16 %v391
  %v2133 = vunpack.c.h.b16 %v391
  %v2134 = vunpack.c.l.b16 %v392
  %v2135 = vunpack.c.h.b16 %v392
  %v2136 = vunpack.c.l.b16 %v393
  %v2137 = vunpack.c.h.b16 %v393
  %v2138 = vunpack.c.l.b16 %v394
  %v2139 = vunpack.c.h.b16 %v394
  %v2140 = vunpack.c.l.b16 %v395
  %v2141 = vunpack.c.h.b16 %v395
  %v2142 = vunpack.c.l.b16 %v396
  %v2143 = vunpack.c.h.b16 %v396
  %v2144 = vunpack.c.l.b16 %v397
  %v2145 = vunpack.c.h.b16 %v397
  %v2146 = vunpack.c.l.b16 %v398
  %v2147 = vunpack.c.h.b16 %v398
  %v2148 = vunpack.c.l.b16 %v399
  %v2149 = vunpack.c.h.b16 %v399
  %v2150 = vunpack.c.l.b16 %v400
  %v2151 = vunpack.c.h.b16 %v400
  %v2152 = vunpack.c.l.b16 %v401
  %v2153 = vunpack.c.h.b16 %v401
  %v2154 = vunpack.c.l.b16 %v402
  %v2155 = vunpack.c.h.b16 %v402
  %v2156 = vunpack.c.l.b16 %v403
  %v2157 = vunpack.c.h.b16 %v403
  %v2158 = vunpack.c.l.b16 %v404
  %v2159 = vunpack.c.h.b16 %v404
  %v2160 = vunpack.c.l.b16 %v405
  %v2161 = vunpack.c.h.b16 %v405
  %v2162 = vunpack.c.l.b16 %v406
  %v2163 = vunpack.c.h.b16 %v406
  %v2164 = vunpack.c.l.b16 %v407
  %v2165 = vunpack.c.h.b16 %v407
  %v2166 = vunpack.c.l.b16 %v408
  %v2167 = vunpack.c.h.b16 %v408
  %v2168 = vunpack.c.l.b16 %v409
  %v2169 = vunpack.c.h.b16 %v409
  %v2170 = vunpack.c.l.b16 %v410
  %v2171 = vunpack.c.h.b16 %v410
  %v2172 = vunpack.c.l.b16 %v411
  %v2173 = vunpack.c.h.b16 %v411
  %v2174 = vunpack.c.l.b16 %v412
  %v2175 = vunpack.c.h.b16 %v412
  %v2176 = vunpack.c.l.b16 %v413
  %v2177 = vunpack.c.h.b16 %v413
  %v2178 = vunpack.c.l.b16 %v414
  %v2179 = vunpack.c.h.b16 %v414
  %v2180 = vunpack.c.l.b16 %v415
  %v2181 = vunpack.c.h.b16 %v415
  %v2182 = vunpack.c.l.b16 %v416
  %v2183 = vunpack.c.h.b16 %v416
  %v2184 = vunpack.c.l.b16 %v417
  %v2185 = vunpack.c.h.b16 %v417
  %v2186 = vunpack.c.l.b16 %v418
  %v2187 = vunpack.c.h.b16 %v418
  %v2188 = vunpack.c.l.b16 %v419
  %v2189 = vunpack.c.h.b16 %v419
  %v2190 = vunpack.c.l.b16 %v420
  %v2191 = vunpack.c.h.b16 %v420
  %v2192 = vunpack.c.l.b16 %v421
  %v2193 = vunpack.c.h.b16 %v421
  %v2194 = vunpack.c.l.b16 %v422
  %v2195 = vunpack.c.h.b16 %v422
  %v2196 = vunpack.c.l.b16 %v423
  %v2197 = vunpack.c.h.b16 %v423
  %v2198 = vunpack.c.l.b16 %v424
  %v2199 = vunpack.c.h.b16 %v424
  %v2200 = vunpack.c.l.b16 %v425
  %v2201 = vunpack.c.h.b16 %v425
  %v2202 = vunpack.c.l.b16 %v426
  %v2203 = vunpack.c.h.b16 %v426
  %v2204 = vunpack.c.l.b16 %v427
  %v2205 = vunpack.c.h.b16 %v427
  %v2206 = vunpack.c.l.b16 %v428
  %v2207 = vunpack.c.h.b16 %v428
  %v2208 = vunpack.c.l.b16 %v429
  %v2209 = vunpack.c.h.b16 %v429
  %v2210 = vunpack.c.l.b16 %v430
  %v2211 = vunpack.c.h.b16 %v430
  %v2212 = vunpack.c.l.b16 %v431
  %v2213 = vunpack.c.h.b16 %v431
  %v2214 = vunpack.c.l.b16 %v432
  %v2215 = vunpack.c.h.b16 %v432
  %v2216 = vunpack.c.l.b16 %v433
  %v2217 = vunpack.c.h.b16 %v433
  %v2218 = vunpack.c.l.b16 %v434
  %v2219 = vunpack.c.h.b16 %v434
  %v2220 = vunpack.c.l.b16 %v435
  %v2221 = vunpack.c.h.b16 %v435
  %v2222 = vunpack.c.l.b16 %v436
  %v2223 = vunpack.c.h.b16 %v436
  %v2224 = vunpack.c.l.b16 %v437
  %v2225 = vunpack.c.h.b16 %v437
  %v2226 = vunpack.c.l.b16 %v438
  %v2227 = vunpack.c.h.b16 %v438
  %v2228 = vunpack.c.l.b16 %v439
  %v2229 = vunpack.c.h.b16 %v439
  %v2230 = vunpack.c.l.b16 %v440
  %v2231 = vunpack.c.h.b16 %v440
  %v2232 = vunpack.c.l.b16 %v441
  %v2233 = vunpack.c.h.b16 %v441
  %v2234 = vunpack.c.l.b16 %v442
  %v2235 = vunpack.c.h.b16 %v442
  %v2236 = vunpack.c.l.b16 %v443
  %v2237 = vunpack.c.h.b16 %v443
  %v2238 = vunpack.c.l.b16 %v444
  %v2239 = vunpack.c.h.b16 %v444
  %v2240 = vunpack.c.l.b16 %v445
  %v2241 = vunpack.c.h.b16 %v445
  %v2242 = vunpack.c.l.b16 %v446
  %v2243 = vunpack.c.h.b16 %v446
  %v2244 = vunpack.c.l.b16 %v447
  %v2245 = vunpack.c.h.b16 %v447
  %v2246 = vunpack.c.l.b16 %v448
  %v2247 = vunpack.c.h.b16 %v448
  %v2248 = vunpack.c.l.b16 %v449
  %v2249 = vunpack.c.h.b16 %v449
  %v2250 = vunpack.c.l.b16 %v450
  %v2251 = vunpack.c.h.b16 %v450
  %v2252 = vunpack.c.l.b16 %v451
  %v2253 = vunpack.c.h.b16 %v451
  %v2254 = vunpack.c.l.b16 %v452
  %v2255 = vunpack.c.h.b16 %v452
  %v2256 = vunpack.c.l.b16 %v453
  %v2257 = vunpack.c.h.b16 %v453
  %v2258 = vunpack.c.l.b16 %v454
  %v2259 = vunpack.c.h.b16 %v454
  %v2260 = vunpack.c.l.b16 %v455
  %v2261 = vunpack.c.h.b16 %v455
  %v2262 = vunpack.c.l.b16 %v456
  %v2263 = vunpack.c.h.b16 %v456
  %v2264 = vunpack.c.l.b16 %v457
  %v2265 = vunpack.c.h.b16 %v457
  %v2266 = vunpack.c.l.b16 %v458
  %v2267 = vunpack.c.h.b16 %v458
  %v2268 = vunpack.c.l.b16 %v459
  %v2269 = vunpack.c.h.b16 %v459
  %v2270 = vunpack.c.l.b16 %v460
  %v2271 = vunpack.c.h.b16 %v460
  %v2272 = vunpack.c.l.b16 %v461
  %v2273 = vunpack.c.h.b16 %v461
  %v2274 = vunpack.c.l.b16 %v462
  %v2275 = vunpack.c.h.b16 %v462
  %v2276 = vunpack.c.l.b16 %v463
  %v2277 = vunpack.c.h.b16 %v463
  %v2278 = vunpack.c.l.b16 %v464
  %v2279 = vunpack.c.h.b16 %v464
  %v2280 = vunpack.c.l.b16 %v465
  %v2281 = vunpack.c.h.b16 %v465
  %v2282 = vunpack.c.l.b16 %v466
  %v2283 = vunpack.c.h.b16 %v466
  %v2284 = vunpack.c.l.b16 %v467
  %v2285 = vunpack.c.h.b16 %v467
  %v2286 = vunpack.c.l.b16 %v468
  %v2287 = vunpack.c.h.b16 %v468
  %v2288 = vunpack.c.l.b16 %v469
  %v2289 = vunpack.c.h.b16 %v469
  %v2290 = vunpack.c.l.b16 %v470
  %v2291 = vunpack.c.h.b16 %v470
  %v2292 = vunpack.c.l.b16 %v471
  %v2293 = vunpack.c.h.b16 %v471
  %v2294 = vunpack.c.l.b16 %v472
  %v2295 = vunpack.c.h.b16 %v472
  %v2296 = vunpack.c.l.b16 %v473
  %v2297 = vunpack.c.h.b16 %v473
  %v2298 = vunpack.c.l.b16 %v474
  %v2299 = vunpack.c.h.b16 %v474
  %v2300 = vunpack.c.l.b16 %v475
  %v2301 = vunpack.c.h.b16 %v475
  %v2302 = vunpack.c.l.b16 %v476
  %v2303 = vunpack.c.h.b16 %v476
  %v2304 = vunpack.c.l.b16 %v477
  %v2305 = vunpack.c.h.b16 %v477
  %v2306 = vunpack.c.l.b16 %v478
  %v2307 = vunpack.c.h.b16 %v478
  %v2308 = vunpack.c.l.b16 %v479
  %v2309 = vunpack.c.h.b16 %v479
  %v2310 = vunpack.c.l.b16 %v480
  %v2311 = vunpack.c.h.b16 %v480
  %v2312 = vunpack.c.l.b16 %v481
  %v2313 = vunpack.c.h.b16 %v481
  %v2314 = vunpack.c.l.b16 %v482
  %v2315 = vunpack.c.h.b16 %v482
  %v2316 = vunpack.c.l.b16 %v483
  %v2317 = vunpack.c.h.b16 %v483
  %v2318 = vunpack.c.l.b16 %v484
  %v2319 = vunpack.c.h.b16 %v484
  %v2320 = vunpack.c.l.b16 %v485
  %v2321 = vunpack.c.h.b16 %v485
  %v2322 = vunpack.c.l.b16 %v486
  %v2323 = vunpack.c.h.b16 %v486
  %v2324 = vunpack.c.l.b16 %v487
  %v2325 = vunpack.c.h.b16 %v487
  %v2326 = vunpack.c.l.b16 %v488
  %v2327 = vunpack.c.h.b16 %v488
  %v2328 = vunpack.c.l.b16 %v489
  %v2329 = vunpack.c.h.b16 %v489
  %v2330 = vunpack.c.l.b16 %v490
  %v2331 = vunpack.c.h.b16 %v490
  %v2332 = vunpack.c.l.b16 %v491
  %v2333 = vunpack.c.h.b16 %v491
  %v2334 = vunpack.c.l.b16 %v492
  %v2335 = vunpack.c.h.b16 %v492
  %v2336 = vunpack.c.l.b16 %v493
  %v2337 = vunpack.c.h.b16 %v493
  %v2338 = vunpack.c.l.b16 %v494
  %v2339 = vunpack.c.h.b16 %v494
  %v2340 = vunpack.c.l.b16 %v495
  %v2341 = vunpack.c.h.b16 %v495
  %v2342 = vunpack.c.l.b16 %v496
  %v2343 = vunpack.c.h.b16 %v496
  %v2344 = vunpack.c.l.b16 %v497
  %v2345 = vunpack.c.h.b16 %v497
  %v2346 = vunpack.c.l.b16 %v498
  %v2347 = vunpack.c.h.b16 %v498
  %v2348 = vunpack.c.l.b16 %v499
  %v2349 = vunpack.c.h.b16 %v499
  %v2350 = vunpack.c.l.b16 %v500
  %v2351 = vunpack.c.h.b16 %v500
  %v2352 = vunpack.c.l.b16 %v501
  %v2353 = vunpack.c.h.b16 %v501
  %v2354 = vunpack.c.l.b16 %v502
  %v2355 = vunpack.c.h.b16 %v502
  %v2356 = vunpack.c.l.b16 %v503
  %v2357 = vunpack.c.h.b16 %v503
  %v2358 = vunpack.c.l.b16 %v504
  %v2359 = vunpack.c.h.b16 %v504
  %v2360 = vunpack.c.l.b16 %v505
  %v2361 = vunpack.c.h.b16 %v505
  %v2362 = vunpack.c.l.b16 %v506
  %v2363 = vunpack.c.h.b16 %v506
  %v2364 = vunpack.c.l.b16 %v507
  %v2365 = vunpack.c.h.b16 %v507
  %v2366 = vunpack.c.l.b16 %v508
  %v2367 = vunpack.c.h.b16 %v508
  %v2368 = vunpack.c.l.b16 %v509
  %v2369 = vunpack.c.h.b16 %v509
  %v2370 = vunpack.c.l.b16 %v510
  %v2371 = vunpack.c.h.b16 %v510
  %v2372 = vunpack.c.l.b16 %v511
  %v2373 = vunpack.c.h.b16 %v511
  %v2374 = vunpack.c.l.b16 %v512
  %v2375 = vunpack.c.h.b16 %v512
  %v2376 = vunpack.c.l.b16 %v513
  %v2377 = vunpack.c.h.b16 %v513
  %v2378 = vunpack.c.l.b16 %v514
  %v2379 = vunpack.c.h.b16 %v514
  %v2380 = vunpack.c.l.b16 %v515
  %v2381 = vunpack.c.h.b16 %v515
  %v2382 = vunpack.c.l.b16 %v516
  %v2383 = vunpack.c.h.b16 %v516
  %v2384 = vunpack.c.l.b16 %v517
  %v2385 = vunpack.c.h.b16 %v517
  %v2386 = vunpack.c.l.b16 %v518
  %v2387 = vunpack.c.h.b16 %v518
  %v2388 = vunpack.c.l.b16 %v519
  %v2389 = vunpack.c.h.b16 %v519
  %v2390 = vunpack.c.l.b16 %v520
  %v2391 = vunpack.c.h.b16 %v520
  %v2392 = vunpack.c.l.b16 %v521
  %v2393 = vunpack.c.h.b16 %v521
  %v2394 = vunpack.c.l.b16 %v522
  %v2395 = vunpack.c.h.b16 %v522
  %v2396 = vunpack.c.l.b16 %v523
  %v2397 = vunpack.c.h.b16 %v523
  %v2398 = vunpack.c.l.b16 %v524
  %v2399 = vunpack.c.h.b16 %v524
  %v2400 = vunpack.c.l.b16 %v525
  %v2401 = vunpack.c.h.b16 %v525
  %v2402 = vunpack.c.l.b16 %v526
  %v2403 = vunpack.c.h.b16 %v526
  %v2404 = vunpack.c.l.b16 %v527
  %v2405 = vunpack.c.h.b16 %v527
  %v2406 = vunpack.c.l.b16 %v528
  %v2407 = vunpack.c.h.b16 %v528
  %v2408 = vunpack.c.l.b16 %v529
  %v2409 = vunpack.c.h.b16 %v529
  %v2410 = vunpack.c.l.b16 %v530
  %v2411 = vunpack.c.h.b16 %v530
  %v2412 = vunpack.c.l.b16 %v531
  %v2413 = vunpack.c.h.b16 %v531
  %v2414 = vunpack.c.l.b16 %v532
  %v2415 = vunpack.c.h.b16 %v532
  %v2416 = vunpack.c.l.b16 %v533
  %v2417 = vunpack.c.h.b16 %v533
  %v2418 = vunpack.c.l.b16 %v534
  %v2419 = vunpack.c.h.b16 %v534
  %v2420 = vunpack.c.l.b16 %v535
  %v2421 = vunpack.c.h.b16 %v535
  %v2422 = vunpack.c.l.b16 %v536
  %v2423 = vunpack.c.h.b16 %v536
  %v2424 = vunpack.c.l.b16 %v537
  %v2425 = vunpack.c.h.b16 %v537
  %v2426 = vunpack.c.l.b16 %v538
  %v2427 = vunpack.c.h.b16 %v538
  %v2428 = vunpack.c.l.b16 %v539
  %v2429 = vunpack.c.h.b16 %v539
  %v2430 = vunpack.c.l.b16 %v540
  %v2431 = vunpack.c.h.b16 %v540
  %v2432 = vunpack.c.l.b16 %v541
  %v2433 = vunpack.c.h.b16 %v541
  %v2434 = vunpack.c.l.b16 %v542
  %v2435 = vunpack.c.h.b16 %v542
  %v2436 = vunpack.c.l.b16 %v543
  %v2437 = vunpack.c.h.b16 %v543
  %v2438 = vunpack.c.l.b16 %v544
  %v2439 = vunpack.c.h.b16 %v544
  %v2440 = vunpack.c.l.b16 %v545
  %v2441 = vunpack.c.h.b16 %v545
  %v2442 = vunpack.c.l.b16 %v546
  %v2443 = vunpack.c.h.b16 %v546
  %v2444 = vunpack.c.l.b16 %v547
  %v2445 = vunpack.c.h.b16 %v547
  %v2446 = vunpack.c.l.b16 %v548
  %v2447 = vunpack.c.h.b16 %v548
  %v2448 = vunpack.c.l.b16 %v549
  %v2449 = vunpack.c.h.b16 %v549
  %v2450 = vunpack.c.l.b16 %v550
  %v2451 = vunpack.c.h.b16 %v550
  %v2452 = vunpack.c.l.b16 %v551
  %v2453 = vunpack.c.h.b16 %v551
  %v2454 = vunpack.c.l.b16 %v552
  %v2455 = vunpack.c.h.b16 %v552
  %v2456 = vunpack.c.l.b16 %v553
  %v2457 = vunpack.c.h.b16 %v553
  %v2458 = vunpack.c.l.b16 %v554
  %v2459 = vunpack.c.h.b16 %v554
  %v2460 = vunpack.c.l.b16 %v555
  %v2461 = vunpack.c.h.b16 %v555
  %v2462 = vunpack.c.l.b16 %v556
  %v2463 = vunpack.c.h.b16 %v556
  %v2464 = vunpack.c.l.b16 %v557
  %v2465 = vunpack.c.h.b16 %v557
  %v2466 = vunpack.c.l.b16 %v558
  %v2467 = vunpack.c.h.b16 %v558
  %v2468 = vunpack.c.l.b16 %v559
  %v2469 = vunpack.c.h.b16 %v559
  %v2470 = vunpack.c.l.b16 %v560
  %v2471 = vunpack.c.h.b16 %v560
  %v2472 = vunpack.c.l.b16 %v561
  %v2473 = vunpack.c.h.b16 %v561
  %v2474 = vunpack.c.l.b16 %v562
  %v2475 = vunpack.c.h.b16 %v562
  %v2476 = vunpack.c.l.b16 %v563
  %v2477 = vunpack.c.h.b16 %v563
  %v2478 = vunpack.c.l.b16 %v564
  %v2479 = vunpack.c.h.b16 %v564
  %v2480 = vunpack.c.l.b16 %v565
  %v2481 = vunpack.c.h.b16 %v565
  %v2482 = vunpack.c.l.b16 %v566
  %v2483 = vunpack.c.h.b16 %v566
  %v2484 = vunpack.c.l.b16 %v567
  %v2485 = vunpack.c.h.b16 %v567
  %v2486 = vunpack.c.l.b16 %v568
  %v2487 = vunpack.c.h.b16 %v568
  %v2488 = vunpack.c.l.b16 %v569
  %v2489 = vunpack.c.h.b16 %v569
  %v2490 = vunpack.c.l.b16 %v570
  %v2491 = vunpack.c.h.b16 %v570
  %v2492 = vunpack.c.l.b16 %v571
  %v2493 = vunpack.c.h.b16 %v571
  %v2494 = vunpack.c.l.b16 %v572
  %v2495 = vunpack.c.h.b16 %v572
  %v2496 = vunpack.c.l.b16 %v573
  %v2497 = vunpack.c.h.b16 %v573
  %v2498 = vunpack.c.l.b16 %v574
  %v2499 = vunpack.c.h.b16 %v574
  %v2500 = vunpack.c.l.b16 %v575
  %v2501 = vunpack.c.h.b16 %v575
  %v2502 = vunpack.c.l.b16 %v576
  %v2503 = vunpack.c.h.b16 %v576
  %v2504 = vunpack.c.l.b16 %v577
  %v2505 = vunpack.c.h.b16 %v577
  %v2506 = vunpack.c.l.b16 %v578
  %v2507 = vunpack.c.h.b16 %v578
  %v2508 = vunpack.c.l.b16 %v579
  %v2509 = vunpack.c.h.b16 %v579
  %v2510 = vunpack.c.l.b16 %v580
  %v2511 = vunpack.c.h.b16 %v580
  %v2512 = vunpack.c.l.b16 %v581
  %v2513 = vunpack.c.h.b16 %v581
  %v2514 = vunpack.c.l.b16 %v582
  %v2515 = vunpack.c.h.b16 %v582
  %v2516 = vunpack.c.l.b16 %v583
  %v2517 = vunpack.c.h.b16 %v583
  %v2518 = vunpack.c.l.b16 %v584
  %v2519 = vunpack.c.h.b16 %v584
  %v2520 = vunpack.c.l.b16 %v585
  %v2521 = vunpack.c.h.b16 %v585
  %v2522 = vunpack.c.l.b16 %v586
  %v2523 = vunpack.c.h.b16 %v586
  %v2524 = vunpack.c.l.b16 %v587
  %v2525 = vunpack.c.h.b16 %v587
  %v2526 = vunpack.c.l.b16 %v588
  %v2527 = vunpack.c.h.b16 %v588
  %v2528 = vunpack.c.l.b16 %v589
  %v2529 = vunpack.c.h.b16 %v589
  %v2530 = vunpack.c.l.b16 %v590
  %v2531 = vunpack.c.h.b16 %v590
  %v2532 = vunpack.c.l.b16 %v591
  %v2533 = vunpack.c.h.b16 %v591
  %v2534 = vunpack.c.l.b16 %v592
  %v2535 = vunpack.c.h.b16 %v592
  %v2536 = vunpack.c.l.b16 %v593
  %v2537 = vunpack.c.h.b16 %v593
  %v2538 = vunpack.c.l.b16 %v594
  %v2539 = vunpack.c.h.b16 %v594
  %v2540 = vunpack.c.l.b16 %v595
  %v2541 = vunpack.c.h.b16 %v595
  %v2542 = vunpack.c.l.b16 %v596
  %v2543 = vunpack.c.h.b16 %v596
  %v2544 = vunpack.c.l.b16 %v597
  %v2545 = vunpack.c.h.b16 %v597
  %v2546 = vunpack.c.l.b16 %v598
  %v2547 = vunpack.c.h.b16 %v598
  %v2548 = vunpack.c.l.b16 %v599
  %v2549 = vunpack.c.h.b16 %v599
  %v2550 = vunpack.c.l.b16 %v600
  %v2551 = vunpack.c.h.b16 %v600
  %v2552 = vunpack.c.l.b16 %v601
  %v2553 = vunpack.c.h.b16 %v601
  %v2554 = vunpack.c.l.b16 %v602
  %v2555 = vunpack.c.h.b16 %v602
  %v2556 = vunpack.c.l.b16 %v603
  %v2557 = vunpack.c.h.b16 %v603
  %v2558 = vunpack.c.l.b16 %v604
  %v2559 = vunpack.c.h.b16 %v604
  %v2560 = vunpack.c.l.b16 %v605
  %v2561 = vunpack.c.h.b16 %v605
  %v2562 = vunpack.c.l.b16 %v606
  %v2563 = vunpack.c.h.b16 %v606
  %v2564 = vunpack.c.l.b16 %v607
  %v2565 = vunpack.c.h.b16 %v607
  %v2566 = vunpack.c.l.b16 %v608
  %v2567 = vunpack.c.h.b16 %v608
  %v2568 = vunpack.c.l.b16 %v609
  %v2569 = vunpack.c.h.b16 %v609
  %v2570 = vunpack.c.l.b16 %v610
  %v2571 = vunpack.c.h.b16 %v610
  %v2572 = vunpack.c.l.b16 %v611
  %v2573 = vunpack.c.h.b16 %v611
  %v2574 = vunpack.c.l.b16 %v612
  %v2575 = vunpack.c.h.b16 %v612
  %v2576 = vunpack.c.l.b16 %v613
  %v2577 = vunpack.c.h.b16 %v613
  %v2578 = vunpack.c.l.b16 %v614
  %v2579 = vunpack.c.h.b16 %v614
  %v2580 = vunpack.c.l.b16 %v615
  %v2581 = vunpack.c.h.b16 %v615
  %v2582 = vunpack.c.l.b16 %v616
  %v2583 = vunpack.c.h.b16 %v616
  %v2584 = vunpack.c.l.b16 %v617
  %v2585 = vunpack.c.h.b16 %v617
  %v2586 = vunpack.c.l.b16 %v618
  %v2587 = vunpack.c.h.b16 %v618
  %v2588 = vunpack.c.l.b16 %v619
  %v2589 = vunpack.c.h.b16 %v619
  %v2590 = vunpack.c.l.b16 %v620
  %v2591 = vunpack.c.h.b16 %v620
  %v2592 = vunpack.c.l.b16 %v621
  %v2593 = vunpack.c.h.b16 %v621
  %v2594 = vunpack.c.l.b16 %v622
  %v2595 = vunpack.c.h.b16 %v622
  %v2596 = vunpack.c.l.b16 %v623
  %v2597 = vunpack.c.h.b16 %v623
  %v2598 = vunpack.c.l.b16 %v624
  %v2599 = vunpack.c.h.b16 %v624
  %v2600 = vunpack.c.l.b16 %v625
  %v2601 = vunpack.c.h.b16 %v625
  %v2602 = vunpack.c.l.b16 %v626
  %v2603 = vunpack.c.h.b16 %v626
  %v2604 = vunpack.c.l.b16 %v627
  %v2605 = vunpack.c.h.b16 %v627
  %v2606 = vunpack.c.l.b16 %v628
  %v2607 = vunpack.c.h.b16 %v628
  %v2608 = vunpack.c.l.b16 %v629
  %v2609 = vunpack.c.h.b16 %v629
  %v2610 = vunpack.c.l.b16 %v630
  %v2611 = vunpack.c.h.b16 %v630
  %v2612 = vunpack.c.l.b16 %v631
  %v2613 = vunpack.c.h.b16 %v631
  %v2614 = vunpack.c.l.b16 %v632
  %v2615 = vunpack.c.h.b16 %v632
  %v2616 = vunpack.c.l.b16 %v633
  %v2617 = vunpack.c.h.b16 %v633
  %v2618 = vunpack.c.l.b16 %v634
  %v2619 = vunpack.c.h.b16 %v634
  %v2620 = vunpack.c.l.b16 %v635
  %v2621 = vunpack.c.h.b16 %v635
  %v2622 = vunpack.c.l.b16 %v636
  %v2623 = vunpack.c.h.b16 %v636
  %v2624 = vunpack.c.l.b16 %v637
  %v2625 = vunpack.c.h.b16 %v637
  %v2626 = vunpack.c.l.b16 %v638
  %v2627 = vunpack.c.h.b16 %v638
  %v2628 = vunpack.c.l.b16 %v639
  %v2629 = vunpack.c.h.b16 %v639
  %v2630 = vunpack.c.l.b16 %v640
  %v2631 = vunpack.c.h.b16 %v640
  %v2632 = vunpack.c.l.b16 %v641
  %v2633 = vunpack.c.h.b16 %v641
  %v2634 = vunpack.c.l.b16 %v642
  %v2635 = vunpack.c.h.b16 %v642
  %v2636 = vunpack.c.l.b16 %v643
  %v2637 = vunpack.c.h.b16 %v643
  %v2638 = vunpack.c.l.b16 %v644
  %v2639 = vunpack.c.h.b16 %v644
  %v2640 = vunpack.c.l.b16 %v645
  %v2641 = vunpack.c.h.b16 %v645
  %v2642 = vunpack.c.l.b16 %v646
  %v2643 = vunpack.c.h.b16 %v646
  %v2644 = vunpack.c.l.b16 %v647
  %v2645 = vunpack.c.h.b16 %v647
  %v2646 = vpack.c.b16 %v1498, %v1494
  %v2647 = vpack.c.b16 %v1499, %v1495
  %v2648 = vpack.c.b16 %v1500, %v1496
  %v2649 = vpack.c.b16 %v1501, %v1497
  %v2650 = vpack.c.b16 %v1506, %v1502
  %v2651 = vpack.c.b16 %v1507, %v1503
  %v2652 = vpack.c.b16 %v1508, %v1504
  %v2653 = vpack.c.b16 %v1509, %v1505
  %v2654 = vpack.c.b16 %v1514, %v1510
  %v2655 = vpack.c.b16 %v1515, %v1511
  %v2656 = vpack.c.b16 %v1516, %v1512
  %v2657 = vpack.c.b16 %v1517, %v1513
  %v2658 = vpack.c.b16 %v1522, %v1518
  %v2659 = vpack.c.b16 %v1523, %v1519
  %v2660 = vpack.c.b16 %v1524, %v1520
  %v2661 = vpack.c.b16 %v1525, %v1521
  %v2662 = vpack.c.b16 %v1530, %v1526
  %v2663 = vpack.c.b16 %v1531, %v1527
  %v2664 = vpack.c.b16 %v1532, %v1528
  %v2665 = vpack.c.b16 %v1533, %v1529
  %v2666 = vpack.c.b16 %v1538, %v1534
  %v2667 = vpack.c.b16 %v1539, %v1535
  %v2668 = vpack.c.b16 %v1540, %v1536
  %v2669 = vpack.c.b16 %v1541, %v1537
  %v2670 = vpack.c.b16 %v1546, %v1542
  %v2671 = vpack.c.b16 %v1547, %v1543
  %v2672 = vpack.c.b16 %v1548, %v1544
  %v2673 = vpack.c.b16 %v1549, %v1545
  %v2674 = vpack.c.b16 %v1554, %v1550
  %v2675 = vpack.c.b16 %v1555, %v1551
  %v2676 = vpack.c.b16 %v1556, %v1552
  %v2677 = vpack.c.b16 %v1557, %v1553
  %v2678 = vpack.c.b16 %v1562, %v1558
  %v2679 = vpack.c.b16 %v1563, %v1559
  %v2680 = vpack.c.b16 %v1564, %v1560
  %v2681 = vpack.c.b16 %v1565, %v1561
  %v2682 = vpack.c.b16 %v1570, %v1566
  %v2683 = vpack.c.b16 %v1571, %v1567
  %v2684 = vpack.c.b16 %v1572, %v1568
  %v2685 = vpack.c.b16 %v1573, %v1569
  %v2686 = vpack.c.b16 %v1578, %v1574
  %v2687 = vpack.c.b16 %v1579, %v1575
  %v2688 = vpack.c.b16 %v1580, %v1576
  %v2689 = vpack.c.b16 %v1581, %v1577
  %v2690 = vpack.c.b16 %v1586, %v1582
  %v2691 = vpack.c.b16 %v1587, %v1583
  %v2692 = vpack.c.b16 %v1588, %v1584
  %v2693 = vpack.c.b16 %v1589, %v1585
  %v2694 = vpack.c.b16 %v1594, %v1590
  %v2695 = vpack.c.b16 %v1595, %v1591
  %v2696 = vpack.c.b16 %v1596, %v1592
  %v2697 = vpack.c.b16 %v1597, %v1593
  %v2698 = vpack.c.b16 %v1602, %v1598
  %v2699 = vpack.c.b16 %v1603, %v1599
  %v2700 = vpack.c.b16 %v1604, %v1600
  %v2701 = vpack.c.b16 %v1605, %v1601
  %v2702 = vpack.c.b16 %v1610, %v1606
  %v2703 = vpack.c.b16 %v1611, %v1607
  %v2704 = vpack.c.b16 %v1612, %v1608
  %v2705 = vpack.c.b16 %v1613, %v1609
  %v2706 = vpack.c.b16 %v1618, %v1614
  %v2707 = vpack.c.b16 %v1619, %v1615
  %v2708 = vpack.c.b16 %v1620, %v1616
  %v2709 = vpack.c.b16 %v1621, %v1617
  %v2710 = vpack.c.b16 %v1626, %v1622
  %v2711 = vpack.c.b16 %v1627, %v1623
  %v2712 = vpack.c.b16 %v1628, %v1624
  %v2713 = vpack.c.b16 %v1629, %v1625
  %v2714 = vpack.c.b16 %v1634, %v1630
  %v2715 = vpack.c.b16 %v1635, %v1631
  %v2716 = vpack.c.b16 %v1636, %v1632
  %v2717 = vpack.c.b16 %v1637, %v1633
  %v2718 = vpack.c.b16 %v1642, %v1638
  %v2719 = vpack.c.b16 %v1643, %v1639
  %v2720 = vpack.c.b16 %v1644, %v1640
  %v2721 = vpack.c.b16 %v1645, %v1641
  %v2722 = vpack.c.b16 %v1650, %v1646
  %v2723 = vpack.c.b16 %v1651, %v1647
  %v2724 = vpack.c.b16 %v1652, %v1648
  %v2725 = vpack.c.b16 %v1653, %v1649
  %v2726 = vpack.c.b16 %v1658, %v1654
  %v2727 = vpack.c.b16 %v1659, %v1655
  %v2728 = vpack.c.b16 %v1660, %v1656
  %v2729 = vpack.c.b16 %v1661, %v1657
  %v2730 = vpack.c.b16 %v1666, %v1662
  %v2731 = vpack.c.b16 %v1667, %v1663
  %v2732 = vpack.c.b16 %v1668, %v1664
  %v2733 = vpack.c.b16 %v1669, %v1665
  %v2734 = vpack.c.b16 %v1674, %v1670
  %v2735 = vpack.c.b16 %v1675, %v1671
  %v2736 = vpack.c.b16 %v1676, %v1672
  %v2737 = vpack.c.b16 %v1677, %v1673
  %v2738 = vpack.c.b16 %v1682, %v1678
  %v2739 = vpack.c.b16 %v1683, %v1679
  %v2740 = vpack.c.b16 %v1684, %v1680
  %v2741 = vpack.c.b16 %v1685, %v1681
  %v2742 = vpack.c.b16 %v1690, %v1686
  %v2743 = vpack.c.b16 %v1691, %v1687
  %v2744 = vpack.c.b16 %v1692, %v1688
  %v2745 = vpack.c.b16 %v1693, %v1689
  %v2746 = vpack.c.b16 %v1698, %v1694
  %v2747 = vpack.c.b16 %v1699, %v1695
  %v2748 = vpack.c.b16 %v1700, %v1696
  %v2749 = vpack.c.b16 %v1701, %v1697
  %v2750 = vpack.c.b16 %v1706, %v1702
  %v2751 = vpack.c.b16 %v1707, %v1703
  %v2752 = vpack.c.b16 %v1708, %v1704
  %v2753 = vpack.c.b16 %v1709, %v1705
  %v2754 = vpack.c.b16 %v1714, %v1710
  %v2755 = vpack.c.b16 %v1715, %v1711
  %v2756 = vpack.c.b16 %v1716, %v1712
  %v2757 = vpack.c.b16 %v1717, %v1713
  %v2758 = vpack.c.b16 %v1722, %v1718
  %v2759 = vpack.c.b16 %v1723, %v1719
  %v2760 = vpack.c.b16 %v1724, %v1720
  %v2761 = vpack.c.b16 %v1725, %v1721
  %v2762 = vpack.c.b16 %v1730, %v1726
  %v2763 = vpack.c.b16 %v1731, %v1727
  %v2764 = vpack.c.b16 %v1732, %v1728
  %v2765 = vpack.c.b16 %v1733, %v1729
  %v2766 = vpack.c.b16 %v1738, %v1734
  %v2767 = vpack.c.b16 %v1739, %v1735
  %v2768 = vpack.c.b16 %v1740, %v1736
  %v2769 = vpack.c.b16 %v1741, %v1737
  %v2770 = vpack.c.b16 %v1746, %v1742
  %v2771 = vpack.c.b16 %v1747, %v1743
  %v2772 = vpack.c.b16 %v1748, %v1744
  %v2773 = vpack.c.b16 %v1749, %v1745
  %v2774 = vpack.c.b16 %v1754, %v1750
  %v2775 = vpack.c.b16 %v1755, %v1751
  %v2776 = vpack.c.b16 %v1756, %v1752
  %v2777 = vpack.c.b16 %v1757, %v1753
  %v2778 = vpack.c.b16 %v1762, %v1758
  %v2779 = vpack.c.b16 %v1763, %v1759
  %v2780 = vpack.c.b16 %v1764, %v1760
  %v2781 = vpack.c.b16 %v1765, %v1761
  %v2782 = vpack.c.b16 %v1770, %v1766
  %v2783 = vpack.c.b16 %v1771, %v1767
  %v2784 = vpack.c.b16 %v1772, %v1768
  %v2785 = vpack.c.b16 %v1773, %v1769
  %v2786 = vpack.c.b16 %v1778, %v1774
  %v2787 = vpack.c.b16 %v1779, %v1775
  %v2788 = vpack.c.b16 %v1780, %v1776
  %v2789 = vpack.c.b16 %v1781, %v1777
  %v2790 = vpack.c.b16 %v1786, %v1782
  %v2791 = vpack.c.b16 %v1787, %v1783
  %v2792 = vpack.c.b16 %v1788, %v1784
  %v2793 = vpack.c.b16 %v1789, %v1785
  %v2794 = vpack.c.b16 %v1794, %v1790
  %v2795 = vpack.c.b16 %v1795, %v1791
  %v2796 = vpack.c.b16 %v1796, %v1792
  %v2797 = vpack.c.b16 %v1797, %v1793
  %v2798 = vpack.c.b16 %v1802, %v1798
  %v2799 = vpack.c.b16 %v1803, %v1799
  %v2800 = vpack.c.b16 %v1804, %v1800
  %v2801 = vpack.c.b16 %v1805, %v1801
  %v2802 = vpack.c.b16 %v1810, %v1806
  %v2803 = vpack.c.b16 %v1811, %v1807
  %v2804 = vpack.c.b16 %v1812, %v1808
  %v2805 = vpack.c.b16 %v1813, %v1809
  %v2806 = vpack.c.b16 %v1818, %v1814
  %v2807 = vpack.c.b16 %v1819, %v1815
  %v2808 = vpack.c.b16 %v1820, %v1816
  %v2809 = vpack.c.b16 %v1821, %v1817
  %v2810 = vpack.c.b16 %v1826, %v1822
  %v2811 = vpack.c.b16 %v1827, %v1823
  %v2812 = vpack.c.b16 %v1828, %v1824
  %v2813 = vpack.c.b16 %v1829, %v1825
  %v2814 = vpack.c.b16 %v1834, %v1830
  %v2815 = vpack.c.b16 %v1835, %v1831
  %v2816 = vpack.c.b16 %v1836, %v1832
  %v2817 = vpack.c.b16 %v1837, %v1833
  %v2818 = vpack.c.b16 %v1842, %v1838
  %v2819 = vpack.c.b16 %v1843, %v1839
  %v2820 = vpack.c.b16 %v1844, %v1840
  %v2821 = vpack.c.b16 %v1845, %v1841
  %v2822 = vpack.c.b16 %v1850, %v1846
  %v2823 = vpack.c.b16 %v1851, %v1847
  %v2824 = vpack.c.b16 %v1852, %v1848
  %v2825 = vpack.c.b16 %v1853, %v1849
  %v2826 = vpack.c.b16 %v1858, %v1854
  %v2827 = vpack.c.b16 %v1859, %v1855
  %v2828 = vpack.c.b16 %v1860, %v1856
  %v2829 = vpack.c.b16 %v1861, %v1857
  %v2830 = vpack.c.b16 %v1866, %v1862
  %v2831 = vpack.c.b16 %v1867, %v1863
  %v2832 = vpack.c.b16 %v1868, %v1864
  %v2833 = vpack.c.b16 %v1869, %v1865
  %v2834 = vpack.c.b16 %v1874, %v1870
  %v2835 = vpack.c.b16 %v1875, %v1871
  %v2836 = vpack.c.b16 %v1876, %v1872
  %v2837 = vpack.c.b16 %v1877, %v1873
  %v2838 = vpack.c.b16 %v1882, %v1878
  %v2839 = vpack.c.b16 %v1883, %v1879
  %v2840 = vpack.c.b16 %v1884, %v1880
  %v2841 = vpack.c.b16 %v1885, %v1881
  %v2842 = vpack.c.b16 %v1890, %v1886
  %v2843 = vpack.c.b16 %v1891, %v1887
  %v2844 = vpack.c.b16 %v1892, %v1888
  %v2845 = vpack.c.b16 %v1893, %v1889
  %v2846 = vpack.c.b16 %v1898, %v1894
  %v2847 = vpack.c.b16 %v1899, %v1895
  %v2848 = vpack.c.b16 %v1900, %v1896
  %v2849 = vpack.c.b16 %v1901, %v1897
  %v2850 = vpack.c.b16 %v1906, %v1902
  %v2851 = vpack.c.b16 %v1907, %v1903
  %v2852 = vpack.c.b16 %v1908, %v1904
  %v2853 = vpack.c.b16 %v1909, %v1905
  %v2854 = vpack.c.b16 %v1914, %v1910
  %v2855 = vpack.c.b16 %v1915, %v1911
  %v2856 = vpack.c.b16 %v1916, %v1912
  %v2857 = vpack.c.b16 %v1917, %v1913
  %v2858 = vpack.c.b16 %v1922, %v1918
  %v2859 = vpack.c.b16 %v1923, %v1919
  %v2860 = vpack.c.b16 %v1924, %v1920
  %v2861 = vpack.c.b16 %v1925, %v1921
  %v2862 = vpack.c.b16 %v1930, %v1926
  %v2863 = vpack.c.b16 %v1931, %v1927
  %v2864 = vpack.c.b16 %v1932, %v1928
  %v2865 = vpack.c.b16 %v1933, %v1929
  %v2866 = vpack.c.b16 %v1938, %v1934
  %v2867 = vpack.c.b16 %v1939, %v1935
  %v2868 = vpack.c.b16 %v1940, %v1936
  %v2869 = vpack.c.b16 %v1941, %v1937
  %v2870 = vpack.c.b16 %v1946, %v1942
  %v2871 = vpack.c.b16 %v1947, %v1943
  %v2872 = vpack.c.b16 %v1948, %v1944
  %v2873 = vpack.c.b16 %v1949, %v1945
  %v2874 = vpack.c.b16 %v1954, %v1950
  %v2875 = vpack.c.b16 %v1955, %v1951
  %v2876 = vpack.c.b16 %v1956, %v1952
  %v2877 = vpack.c.b16 %v1957, %v1953
  %v2878 = vpack.c.b16 %v1962, %v1958
  %v2879 = vpack.c.b16 %v1963, %v1959
  %v2880 = vpack.c.b16 %v1964, %v1960
  %v2881 = vpack.c.b16 %v1965, %v1961
  %v2882 = vpack.c.b16 %v1970, %v1966
  %v2883 = vpack.c.b16 %v1971, %v1967
  %v2884 = vpack.c.b16 %v1972, %v1968
  %v2885 = vpack.c.b16 %v1973, %v1969
  %v2886 = vpack.c.b16 %v1978, %v1974
  %v2887 = vpack.c.b16 %v1979, %v1975
  %v2888 = vpack.c.b16 %v1980, %v1976
  %v2889 = vpack.c.b16 %v1981, %v1977
  %v2890 = vpack.c.b16 %v1986, %v1982
  %v2891 = vpack.c.b16 %v1987, %v1983
  %v2892 = vpack.c.b16 %v1988, %v1984
  %v2893 = vpack.c.b16 %v1989, %v1985
  %v2894 = vpack.c.b16 %v1994, %v1990
  %v2895 = vpack.c.b16 %v1995, %v1991
  %v2896 = vpack.c.b16 %v1996, %v1992
  %v2897 = vpack.c.b16 %v1997, %v1993
  %v2898 = vpack.c.b16 %v2002, %v1998
  %v2899 = vpack.c.b16 %v2003, %v1999
  %v2900 = vpack.c.b16 %v2004, %v2000
  %v2901 = vpack.c.b16 %v2005, %v2001
  %v2902 = vpack.c.b16 %v2010, %v2006
  %v2903 = vpack.c.b16 %v2011, %v2007
  %v2904 = vpack.c.b16 %v2012, %v2008
  %v2905 = vpack.c.b16 %v2013, %v2009
  %v2906 = vpack.c.b16 %v2018, %v2014
  %v2907 = vpack.c.b16 %v2019, %v2015
  %v2908 = vpack.c.b16 %v2020, %v2016
  %v2909 = vpack.c.b16 %v2021, %v2017
  %v2910 = vpack.c.b16 %v2026, %v2022
  %v2911 = vpack.c.b16 %v2027, %v2023
  %v2912 = vpack.c.b16 %v2028, %v2024
  %v2913 = vpack.c.b16 %v2029, %v2025
  %v2914 = vpack.c.b16 %v2034, %v2030
  %v2915 = vpack.c.b16 %v2035, %v2031
  %v2916 = vpack.c.b16 %v2036, %v2032
  %v2917 = vpack.c.b16 %v2037, %v2033
  %v2918 = vpack.c.b16 %v2042, %v2038
  %v2919 = vpack.c.b16 %v2043, %v2039
  %v2920 = vpack.c.b16 %v2044, %v2040
  %v2921 = vpack.c.b16 %v2045, %v2041
  %v2922 = vpack.c.b16 %v2050, %v2046
  %v2923 = vpack.c.b16 %v2051, %v2047
  %v2924 = vpack.c.b16 %v2052, %v2048
  %v2925 = vpack.c.b16 %v2053, %v2049
  %v2926 = vpack.c.b16 %v2058, %v2054
  %v2927 = vpack.c.b16 %v2059, %v2055
  %v2928 = vpack.c.b16 %v2060, %v2056
  %v2929 = vpack.c.b16 %v2061, %v2057
  %v2930 = vpack.c.b16 %v2066, %v2062
  %v2931 = vpack.c.b16 %v2067, %v2063
  %v2932 = vpack.c.b16 %v2068, %v2064
  %v2933 = vpack.c.b16 %v2069, %v2065
  %v2934 = vpack.c.b16 %v2074, %v2070
  %v2935 = vpack.c.b16 %v2075, %v2071
  %v2936 = vpack.c.b16 %v2076, %v2072
  %v2937 = vpack.c.b16 %v2077, %v2073
  %v2938 = vpack.c.b16 %v2082, %v2078
  %v2939 = vpack.c.b16 %v2083, %v2079
  %v2940 = vpack.c.b16 %v2084, %v2080
  %v2941 = vpack.c.b16 %v2085, %v2081
  %v2942 = vpack.c.b16 %v2090, %v2086
  %v2943 = vpack.c.b16 %v2091, %v2087
  %v2944 = vpack.c.b16 %v2092, %v2088
  %v2945 = vpack.c.b16 %v2093, %v2089
  %v2946 = vpack.c.b16 %v2098, %v2094
  %v2947 = vpack.c.b16 %v2099, %v2095
  %v2948 = vpack.c.b16 %v2100, %v2096
  %v2949 = vpack.c.b16 %v2101, %v2097
  %v2950 = vpack.c.b16 %v2106, %v2102
  %v2951 = vpack.c.b16 %v2107, %v2103
  %v2952 = vpack.c.b16 %v2108, %v2104
  %v2953 = vpack.c.b16 %v2109, %v2105
  %v2954 = vpack.c.b16 %v2114, %v2110
  %v2955 = vpack.c.b16 %v2115, %v2111
  %v2956 = vpack.c.b16 %v2116, %v2112
  %v2957 = vpack.c.b16 %v2117, %v2113
  %v2958 = vpack.c.b16 %v2122, %v2118
  %v2959 = vpack.c.b16 %v2123, %v2119
  %v2960 = vpack.c.b16 %v2124, %v2120
  %v2961 = vpack.c.b16 %v2125, %v2121
  %v2962 = vpack.c.b16 %v2130, %v2126
  %v2963 = vpack.c.b16 %v2131, %v2127
  %v2964 = vpack.c.b16 %v2132, %v2128
  %v2965 = vpack.c.b16 %v2133, %v2129
  %v2966 = vpack.c.b16 %v2138, %v2134
  %v2967 = vpack.c.b16 %v2139, %v2135
  %v2968 = vpack.c.b16 %v2140, %v2136
  %v2969 = vpack.c.b16 %v2141, %v2137
  %v2970 = vpack.c.b16 %v2146, %v2142
  %v2971 = vpack.c.b16 %v2147, %v2143
  %v2972 = vpack.c.b16 %v2148, %v2144
  %v2973 = vpack.c.b16 %v2149, %v2145
  %v2974 = vpack.c.b16 %v2154, %v2150
  %v2975 = vpack.c.b16 %v2155, %v2151
  %v2976 = vpack.c.b16 %v2156, %v2152
  %v2977 = vpack.c.b16 %v2157, %v2153
  %v2978 = vpack.c.b16 %v2162, %v2158
  %v2979 = vpack.c.b16 %v2163, %v2159
  %v2980 = vpack.c.b16 %v2164, %v2160
  %v2981 = vpack.c.b16 %v2165, %v2161
  %v2982 = vpack.c.b16 %v2170, %v2166
  %v2983 = vpack.c.b16 %v2171, %v2167
  %v2984 = vpack.c.b16 %v2172, %v2168
  %v2985 = vpack.c.b16 %v2173, %v2169
  %v2986 = vpack.c.b16 %v2178, %v2174
  %v2987 = vpack.c.b16 %v2179, %v2175
  %v2988 = vpack.c.b16 %v2180, %v2176
  %v2989 = vpack.c.b16 %v2181, %v2177
  %v2990 = vpack.c.b16 %v2186, %v2182
  %v2991 = vpack.c.b16 %v2187, %v2183
  %v2992 = vpack.c.b16 %v2188, %v2184
  %v2993 = vpack.c.b16 %v2189, %v2185
  %v2994 = vpack.c.b16 %v2194, %v2190
  %v2995 = vpack.c.b16 %v2195, %v2191
  %v2996 = vpack.c.b16 %v2196, %v2192
  %v2997 = vpack.c.b16 %v2197, %v2193
  %v2998 = vpack.c.b16 %v2202, %v2198
  %v2999 = vpack.c.b16 %v2203, %v2199
  %v3000 = vpack.c.b16 %v2204, %v2200
  %v3001 = vpack.c.b16 %v2205, %v2201
  %v3002 = vpack.c.b16 %v2210, %v2206
  %v3003 = vpack.c.b16 %v2211, %v2207
  %v3004 = vpack.c.b16 %v2212, %v2208
  %v3005 = vpack.c.b16 %v2213, %v2209
  %v3006 = vpack.c.b16 %v2218, %v2214
  %v3007 = vpack.c.b16 %v2219, %v2215
  %v3008 = vpack.c.b16 %v2220, %v2216
  %v3009 = vpack.c.b16 %v2221, %v2217
  %v3010 = vpack.c.b16 %v2226, %v2222
  %v3011 = vpack.c.b16 %v2227, %v2223
  %v3012 = vpack.c.b16 %v2228, %v2224
  %v3013 = vpack.c.b16 %v2229, %v2225
  %v3014 = vpack.c.b16 %v2234, %v2230
  %v3015 = vpack.c.b16 %v2235, %v2231
  %v3016 = vpack.c.b16 %v2236, %v2232
  %v3017 = vpack.c.b16 %v2237, %v2233
  %v3018 = vpack.c.b16 %v2242, %v2238
  %v3019 = vpack.c.b16 %v2243, %v2239
  %v3020 = vpack.c.b16 %v2244, %v2240
  %v3021 = vpack.c.b16 %v2245, %v2241
  %v3022 = vpack.c.b16 %v2250, %v2246
  %v3023 = vpack.c.b16 %v2251, %v2247
  %v3024 = vpack.c.b16 %v2252, %v2248
  %v3025 = vpack.c.b16 %v2253, %v2249
  %v3026 = vpack.c.b16 %v2258, %v2254
  %v3027 = vpack.c.b16 %v2259, %v2255
  %v3028 = vpack.c.b16 %v2260, %v2256
  %v3029 = vpack.c.b16 %v2261, %v2257
  %v3030 = vpack.c.b16 %v2266, %v2262
  %v3031 = vpack.c.b16 %v2267, %v2263
  %v3032 = vpack.c.b16 %v2268, %v2264
  %v3033 = vpack.c.b16 %v2269, %v2265
  %v3034 = vpack.c.b16 %v2274, %v2270
  %v3035 = vpack.c.b16 %v2275, %v2271
  %v3036 = vpack.c.b16 %v2276, %v2272
  %v3037 = vpack.c.b16 %v2277, %v2273
  %v3038 = vpack.c.b16 %v2282, %v2278
  %v3039 = vpack.c.b16 %v2283, %v2279
  %v3040 = vpack.c.b16 %v2284, %v2280
  %v3041 = vpack.c.b16 %v2285, %v2281
  %v3042 = vpack.c.b16 %v2290, %v2286
  %v3043 = vpack.c.b16 %v2291, %v2287
  %v3044 = vpack.c.b16 %v2292, %v2288
  %v3045 = vpack.c.b16 %v2293, %v2289
  %v3046 = vpack.c.b16 %v2298, %v2294
  %v3047 = vpack.c.b16 %v2299, %v2295
  %v3048 = vpack.c.b16 %v2300, %v2296
  %v3049 = vpack.c.b16 %v2301, %v2297
  %v3050 = vpack.c.b16 %v2306, %v2302
  %v3051 = vpack.c.b16 %v2307, %v2303
  %v3052 = vpack.c.b16 %v2308, %v2304
  %v3053 = vpack.c.b16 %v2309, %v2305
  %v3054 = vpack.c.b16 %v2314, %v2310
  %v3055 = vpack.c.b16 %v2315, %v2311
  %v3056 = vpack.c.b16 %v2316, %v2312
  %v3057 = vpack.c.b16 %v2317, %v2313
  %v3058 = vpack.c.b16 %v2322, %v2318
  %v3059 = vpack.c.b16 %v2323, %v2319
  %v3060 = vpack.c.b16 %v2324, %v2320
  %v3061 = vpack.c.b16 %v2325, %v2321
  %v3062 = vpack.c.b16 %v2330, %v2326
  %v3063 = vpack.c.b16 %v2331, %v2327
  %v3064 = vpack.c.b16 %v2332, %v2328
  %v3065 = vpack.c.b16 %v2333, %v2329
  %v3066 = vpack.c.b16 %v2338, %v2334
  %v3067 = vpack.c.b16 %v2339, %v2335
  %v3068 = vpack.c.b16 %v2340, %v2336
  %v3069 = vpack.c.b16 %v2341, %v2337
  %v3070 = vpack.c.b16 %v2346, %v2342
  %v3071 = vpack.c.b16 %v2347, %v2343
  %v3072 = vpack.c.b16 %v2348, %v2344
  %v3073 = vpack.c.b16 %v2349, %v2345
  %v3074 = vpack.c.b16 %v2354, %v2350
  %v3075 = vpack.c.b16 %v2355, %v2351
  %v3076 = vpack.c.b16 %v2356, %v2352
  %v3077 = vpack.c.b16 %v2357, %v2353
  %v3078 = vpack.c.b16 %v2362, %v2358
  %v3079 = vpack.c.b16 %v2363, %v2359
  %v3080 = vpack.c.b16 %v2364, %v2360
  %v3081 = vpack.c.b16 %v2365, %v2361
  %v3082 = vpack.c.b16 %v2370, %v2366
  %v3083 = vpack.c.b16 %v2371, %v2367
  %v3084 = vpack.c.b16 %v2372, %v2368
  %v3085 = vpack.c.b16 %v2373, %v2369
  %v3086 = vpack.c.b16 %v2378, %v2374
  %v3087 = vpack.c.b16 %v2379, %v2375
  %v3088 = vpack.c.b16 %v2380, %v2376
  %v3089 = vpack.c.b16 %v2381, %v2377
  %v3090 = vpack.c.b16 %v2386, %v2382
  %v3091 = vpack.c.b16 %v2387, %v2383
  %v3092 = vpack.c.b16 %v2388, %v2384
  %v3093 = vpack.c.b16 %v2389, %v2385
  %v3094 = vpack.c.b16 %v2394, %v2390
  %v3095 = vpack.c.b16 %v2395, %v2391
  %v3096 = vpack.c.b16 %v2396, %v2392
  %v3097 = vpack.c.b16 %v2397, %v2393
  %v3098 = vpack.c.b16 %v2402, %v2398
  %v3099 = vpack.c.b16 %v2403, %v2399
  %v3100 = vpack.c.b16 %v2404, %v2400
  %v3101 = vpack.c.b16 %v2405, %v2401
  %v3102 = vpack.c.b16 %v2410, %v2406
  %v3103 = vpack.c.b16 %v2411, %v2407
  %v3104 = vpack.c.b16 %v2412, %v2408
  %v3105 = vpack.c.b16 %v2413, %v2409
  %v3106 = vpack.c.b16 %v2418, %v2414
  %v3107 = vpack.c.b16 %v2419, %v2415
  %v3108 = vpack.c.b16 %v2420, %v2416
  %v3109 = vpack.c.b16 %v2421, %v2417
  %v3110 = vpack.c.b16 %v2426, %v2422
  %v3111 = vpack.c.b16 %v2427, %v2423
  %v3112 = vpack.c.b16 %v2428, %v2424
  %v3113 = vpack.c.b16 %v2429, %v2425
  %v3114 = vpack.c.b16 %v2434, %v2430
  %v3115 = vpack.c.b16 %v2435, %v2431
  %v3116 = vpack.c.b16 %v2436, %v2432
  %v3117 = vpack.c.b16 %v2437, %v2433
  %v3118 = vpack.c.b16 %v2442, %v2438
  %v3119 = vpack.c.b16 %v2443, %v2439
  %v3120 = vpack.c.b16 %v2444, %v2440
  %v3121 = vpack.c.b16 %v2445, %v2441
  %v3122 = vpack.c.b16 %v2450, %v2446
  %v3123 = vpack.c.b16 %v2451, %v2447
  %v3124 = vpack.c.b16 %v2452, %v2448
  %v3125 = vpack.c.b16 %v2453, %v2449
  %v3126 = vpack.c.b16 %v2458, %v2454
  %v3127 = vpack.c.b16 %v2459, %v2455
  %v3128 = vpack.c.b16 %v2460, %v2456
  %v3129 = vpack.c.b16 %v2461, %v2457
  %v3130 = vpack.c.b16 %v2466, %v2462
  %v3131 = vpack.c.b16 %v2467, %v2463
  %v3132 = vpack.c.b16 %v2468, %v2464
  %v3133 = vpack.c.b16 %v2469, %v2465
  %v3134 = vpack.c.b16 %v2474, %v2470
  %v3135 = vpack.c.b16 %v2475, %v2471
  %v3136 = vpack.c.b16 %v2476, %v2472
  %v3137 = vpack.c.b16 %v2477, %v2473
  %v3138 = vpack.c.b16 %v2482, %v2478
  %v3139 = vpack.c.b16 %v2483, %v2479
  %v3140 = vpack.c.b16 %v2484, %v2480
  %v3141 = vpack.c.b16 %v2485, %v2481
  %v3142 = vpack.c.b16 %v2490, %v2486
  %v3143 = vpack.c.b16 %v2491, %v2487
  %v3144 = vpack.c.b16 %v2492, %v2488
  %v3145 = vpack.c.b16 %v2493, %v2489
  %v3146 = vpack.c.b16 %v2498, %v2494
  %v3147 = vpack.c.b16 %v2499, %v2495
  %v3148 = vpack.c.b16 %v2500, %v2496
  %v3149 = vpack.c.b16 %v2501, %v2497
  %v3150 = vpack.c.b16 %v2506, %v2502
  %v3151 = vpack.c.b16 %v2507, %v2503
  %v3152 = vpack.c.b16 %v2508, %v2504
  %v3153 = vpack.c.b16 %v2509, %v2505
  %v3154 = vpack.c.b16 %v2514, %v2510
  %v3155 = vpack.c.b16 %v2515, %v2511
  %v3156 = vpack.c.b16 %v2516, %v2512
  %v3157 = vpack.c.b16 %v2517, %v2513
  %v3158 = vpack.c.b16 %v2522, %v2518
  %v3159 = vpack.c.b16 %v2523, %v2519
  %v3160 = vpack.c.b16 %v2524, %v2520
  %v3161 = vpack.c.b16 %v2525, %v2521
  %v3162 = vpack.c.b16 %v2530, %v2526
  %v3163 = vpack.c.b16 %v2531, %v2527
  %v3164 = vpack.c.b16 %v2532, %v2528
  %v3165 = vpack.c.b16 %v2533, %v2529
  %v3166 = vpack.c.b16 %v2538, %v2534
  %v3167 = vpack.c.b16 %v2539, %v2535
  %v3168 = vpack.c.b16 %v2540, %v2536
  %v3169 = vpack.c.b16 %v2541, %v2537
  %v3170 = vpack.c.b16 %v2546, %v2542
  %v3171 = vpack.c.b16 %v2547, %v2543
  %v3172 = vpack.c.b16 %v2548, %v2544
  %v3173 = vpack.c.b16 %v2549, %v2545
  %v3174 = vpack.c.b16 %v2554, %v2550
  %v3175 = vpack.c.b16 %v2555, %v2551
  %v3176 = vpack.c.b16 %v2556, %v2552
  %v3177 = vpack.c.b16 %v2557, %v2553
  %v3178 = vpack.c.b16 %v2562, %v2558
  %v3179 = vpack.c.b16 %v2563, %v2559
  %v3180 = vpack.c.b16 %v2564, %v2560
  %v3181 = vpack.c.b16 %v2565, %v2561
  %v3182 = vpack.c.b16 %v2570, %v2566
  %v3183 = vpack.c.b16 %v2571, %v2567
  %v3184 = vpack.c.b16 %v2572, %v2568
  %v3185 = vpack.c.b16 %v2573, %v2569
  %v3186 = vpack.c.b16 %v2578, %v2574
  %v3187 = vpack.c.b16 %v2579, %v2575
  %v3188 = vpack.c.b16 %v2580, %v2576
  %v3189 = vpack.c.b16 %v2581, %v2577
  %v3190 = vpack.c.b16 %v2586, %v2582
  %v3191 = vpack.c.b16 %v2587, %v2583
  %v3192 = vpack.c.b16 %v2588, %v2584
  %v3193 = vpack.c.b16 %v2589, %v2585
  %v3194 = vpack.c.b16 %v2594, %v2590
  %v3195 = vpack.c.b16 %v2595, %v2591
  %v3196 = vpack.c.b16 %v2596, %v2592
  %v3197 = vpack.c.b16 %v2597, %v2593
  %v3198 = vpack.c.b16 %v2602, %v2598
  %v3199 = vpack.c.b16 %v2603, %v2599
  %v3200 = vpack.c.b16 %v2604, %v2600
  %v3201 = vpack.c.b16 %v2605, %v2601
  %v3202 = vpack.c.b16 %v2610, %v2606
  %v3203 = vpack.c.b16 %v2611, %v2607
  %v3204 = vpack.c.b16 %v2612, %v2608
  %v3205 = vpack.c.b16 %v2613, %v2609
  %v3206 = vpack.c.b16 %v2618, %v2614
  %v3207 = vpack.c.b16 %v2619, %v2615
  %v3208 = vpack.c.b16 %v2620, %v2616
  %v3209 = vpack.c.b16 %v2621, %v2617
  %v3210 = vpack.c.b16 %v2626, %v2622
  %v3211 = vpack.c.b16 %v2627, %v2623
  %v3212 = vpack.c.b16 %v2628, %v2624
  %v3213 = vpack.c.b16 %v2629, %v2625
  %v3214 = vpack.c.b16 %v2634, %v2630
  %v3215 = vpack.c.b16 %v2635, %v2631
  %v3216 = vpack.c.b16 %v2636, %v2632
  %v3217 = vpack.c.b16 %v2637, %v2633
  %v3218 = vpack.c.b16 %v2642, %v2638
  %v3219 = vpack.c.b16 %v2643, %v2639
  %v3220 = vpack.c.b16 %v2644, %v2640
  %v3221 = vpack.c.b16 %v2645, %v2641
  %3798 = vmatprep.subr.bf16.mxu0 %v2647
  %3799 = vmatpush1.bf16.msra.mxu0 %v2646
  %3800 = vmatprep.subr.bf16.mxu0 %v2651
  %3801 = vmatpush1.bf16.msra.mxu0 %v2650
  %3802 = vmatprep.subr.bf16.mxu0 %v2655
  %3803 = vmatpush1.bf16.msra.mxu0 %v2654
  %3804 = vmatprep.subr.bf16.mxu0 %v2659
  %3805 = vmatpush1.bf16.msra.mxu0 %v2658
  %3806 = vmatprep.subr.bf16.mxu0 %v2663
  %3807 = vmatpush1.bf16.msra.mxu0 %v2662
  %3808 = vmatprep.subr.bf16.mxu0 %v2667
  %3809 = vmatpush1.bf16.msra.mxu0 %v2666
  %3810 = vmatprep.subr.bf16.mxu0 %v2671
  %3811 = vmatpush1.bf16.msra.mxu0 %v2670
  %3812 = vmatprep.subr.bf16.mxu0 %v2675
  %3813 = vmatpush1.bf16.msra.mxu0 %v2674
  %3814 = vmatprep.subr.bf16.mxu0 %v2679
  %3815 = vmatpush1.bf16.msra.mxu0 %v2678
  %3816 = vmatprep.subr.bf16.mxu0 %v2683
  %3817 = vmatpush1.bf16.msra.mxu0 %v2682
  %3818 = vmatprep.subr.bf16.mxu0 %v2687
  %3819 = vmatpush1.bf16.msra.mxu0 %v2686
  %3820 = vmatprep.subr.bf16.mxu0 %v2691
  %3821 = vmatpush1.bf16.msra.mxu0 %v2690
  %3822 = vmatprep.subr.bf16.mxu0 %v2695
  %3823 = vmatpush1.bf16.msra.mxu0 %v2694
  %3824 = vmatprep.subr.bf16.mxu0 %v2699
  %3825 = vmatpush1.bf16.msra.mxu0 %v2698
  %3826 = vmatprep.subr.bf16.mxu0 %v2703
  %3827 = vmatpush1.bf16.msra.mxu0 %v2702
  %3828 = vmatprep.subr.bf16.mxu0 %v2707
  %3829 = vmatpush1.bf16.msra.mxu0 %v2706
  %3830 = vmatprep.mubr.bf16.mxu0 %v811
  %3831 = vmatmul.mubr.bf16.gmra.mrb[0].mxu0 %v810
  %v3832 = vpop.f32.mrb[0].mxu0
  %v3833 = vadd.f32 0.0, %v3832
  %v3834 = vpop.f32.mrb[0].mxu0
  %v3835 = vadd.f32 0.0, %v3834
  %v3836 = vpop.f32.mrb[0].mxu0
  %v3837 = vadd.f32 0.0, %v3836
  %v3838 = vpop.f32.mrb[0].mxu0
  %v3839 = vadd.f32 0.0, %v3838
  %3840 = vmatprep.mubr.bf16.mxu0 %v829
  %3841 = vmatmul.mubr.bf16.gmra.mrb[0].mxu0 %v828
  %v3842 = vpop.f32.mrb[0].mxu0
  %v3843 = vadd.f32 0.0, %v3842
  %v3844 = vpop.f32.mrb[0].mxu0
  %v3845 = vadd.f32 0.0, %v3844
  %v3846 = vpop.f32.mrb[0].mxu0
  %v3847 = vadd.f32 0.0, %v3846
  %v3848 = vpop.f32.mrb[0].mxu0
  %v3849 = vadd.f32 0.0, %v3848
  %3850 = vmatprep.mubr.bf16.mxu0 %v847
  %3851 = vmatmul.mubr.bf16.gmra.mrb[0].mxu0 %v846
  %v3852 = vpop.f32.mrb[0].mxu0
  %v3853 = vadd.f32 0.0, %v3852
  %v3854 = vpop.f32.mrb[0].mxu0
  %v3855 = vadd.f32 0.0, %v3854
  %v3856 = vpop.f32.mrb[0].mxu0
  %v3857 = vadd.f32 0.0, %v3856
  %v3858 = vpop.f32.mrb[0].mxu0
  %v3859 = vadd.f32 0.0, %v3858
  %3860 = vdwg.mxu0
  %3861 = vmatprep.subr.bf16.mxu0 %v2711
  %3862 = vmatpush1.bf16.msra.mxu0 %v2710
  %3863 = vmatprep.subr.bf16.mxu0 %v2715
  %3864 = vmatpush1.bf16.msra.mxu0 %v2714
  %3865 = vmatprep.subr.bf16.mxu0 %v2719
  %3866 = vmatpush1.bf16.msra.mxu0 %v2718
  %3867 = vmatprep.subr.bf16.mxu0 %v2723
  %3868 = vmatpush1.bf16.msra.mxu0 %v2722
  %3869 = vmatprep.subr.bf16.mxu0 %v2727
  %3870 = vmatpush1.bf16.msra.mxu0 %v2726
  %3871 = vmatprep.subr.bf16.mxu0 %v2731
  %3872 = vmatpush1.bf16.msra.mxu0 %v2730
  %3873 = vmatprep.subr.bf16.mxu0 %v2735
  %3874 = vmatpush1.bf16.msra.mxu0 %v2734
  %3875 = vmatprep.subr.bf16.mxu0 %v2739
  %3876 = vmatpush1.bf16.msra.mxu0 %v2738
  %3877 = vmatprep.subr.bf16.mxu0 %v2743
  %3878 = vmatpush1.bf16.msra.mxu0 %v2742
  %3879 = vmatprep.subr.bf16.mxu0 %v2747
  %3880 = vmatpush1.bf16.msra.mxu0 %v2746
  %3881 = vmatprep.subr.bf16.mxu0 %v2751
  %3882 = vmatpush1.bf16.msra.mxu0 %v2750
  %3883 = vmatprep.subr.bf16.mxu0 %v2755
  %3884 = vmatpush1.bf16.msra.mxu0 %v2754
  %3885 = vmatprep.subr.bf16.mxu0 %v2759
  %3886 = vmatpush1.bf16.msra.mxu0 %v2758
  %3887 = vmatprep.subr.bf16.mxu0 %v2763
  %3888 = vmatpush1.bf16.msra.mxu0 %v2762
  %3889 = vmatprep.subr.bf16.mxu0 %v2767
  %3890 = vmatpush1.bf16.msra.mxu0 %v2766
  %3891 = vmatprep.subr.bf16.mxu0 %v2771
  %3892 = vmatpush1.bf16.msra.mxu0 %v2770
  %3893 = vmatprep.mubr.bf16.mxu0 %v813
  %3894 = vmatmul.mubr.bf16.gmra.mrb[0].mxu0 %v812
  %v3895 = vpop.f32.mrb[0].mxu0
  %v3896 = vadd.f32 %v3833, %v3895
  %v3897 = vpop.f32.mrb[0].mxu0
  %v3898 = vadd.f32 %v3835, %v3897
  %v3899 = vpop.f32.mrb[0].mxu0
  %v3900 = vadd.f32 %v3837, %v3899
  %v3901 = vpop.f32.mrb[0].mxu0
  %v3902 = vadd.f32 %v3839, %v3901
  %3903 = vmatprep.mubr.bf16.mxu0 %v831
  %3904 = vmatmul.mubr.bf16.gmra.mrb[0].mxu0 %v830
  %v3905 = vpop.f32.mrb[0].mxu0
  %v3906 = vadd.f32 %v3843, %v3905
  %v3907 = vpop.f32.mrb[0].mxu0
  %v3908 = vadd.f32 %v3845, %v3907
  %v3909 = vpop.f32.mrb[0].mxu0
  %v3910 = vadd.f32 %v3847, %v3909
  %v3911 = vpop.f32.mrb[0].mxu0
  %v3912 = vadd.f32 %v3849, %v3911
  %3913 = vmatprep.mubr.bf16.mxu0 %v849
  %3914 = vmatmul.mubr.bf16.gmra.mrb[0].mxu0 %v848
  %v3915 = vpop.f32.mrb[0].mxu0
  %v3916 = vadd.f32 %v3853, %v3915
  %v3917 = vpop.f32.mrb[0].mxu0
  %v3918 = vadd.f32 %v3855, %v3917
  %v3919 = vpop.f32.mrb[0].mxu0
  %v3920 = vadd.f32 %v3857, %v3919
  %v3921 = vpop.f32.mrb[0].mxu0
  %v3922 = vadd.f32 %v3859, %v3921
  %3923 = vdwg.mxu0
  %3924 = vmatprep.subr.bf16.mxu0 %v2775
  %3925 = vmatpush1.bf16.msra.mxu0 %v2774
  %3926 = vmatprep.subr.bf16.mxu0 %v2779
  %3927 = vmatpush1.bf16.msra.mxu0 %v2778
  %3928 = vmatprep.subr.bf16.mxu0 %v2783
  %3929 = vmatpush1.bf16.msra.mxu0 %v2782
  %3930 = vmatprep.subr.bf16.mxu0 %v2787
  %3931 = vmatpush1.bf16.msra.mxu0 %v2786
  %3932 = vmatprep.subr.bf16.mxu0 %v2791
  %3933 = vmatpush1.bf16.msra.mxu0 %v2790
  %3934 = vmatprep.subr.bf16.mxu0 %v2795
  %3935 = vmatpush1.bf16.msra.mxu0 %v2794
  %3936 = vmatprep.subr.bf16.mxu0 %v2799
  %3937 = vmatpush1.bf16.msra.mxu0 %v2798
  %3938 = vmatprep.subr.bf16.mxu0 %v2803
  %3939 = vmatpush1.bf16.msra.mxu0 %v2802
  %3940 = vmatprep.subr.bf16.mxu0 %v2807
  %3941 = vmatpush1.bf16.msra.mxu0 %v2806
  %3942 = vmatprep.subr.bf16.mxu0 %v2811
  %3943 = vmatpush1.bf16.msra.mxu0 %v2810
  %3944 = vmatprep.subr.bf16.mxu0 %v2815
  %3945 = vmatpush1.bf16.msra.mxu0 %v2814
  %3946 = vmatprep.subr.bf16.mxu0 %v2819
  %3947 = vmatpush1.bf16.msra.mxu0 %v2818
  %3948 = vmatprep.subr.bf16.mxu0 %v2823
  %3949 = vmatpush1.bf16.msra.mxu0 %v2822
  %3950 = vmatprep.subr.bf16.mxu0 %v2827
  %3951 = vmatpush1.bf16.msra.mxu0 %v2826
  %3952 = vmatprep.subr.bf16.mxu0 %v2831
  %3953 = vmatpush1.bf16.msra.mxu0 %v2830
  %3954 = vmatprep.subr.bf16.mxu0 %v2835
  %3955 = vmatpush1.bf16.msra.mxu0 %v2834
  %3956 = vmatprep.mubr.bf16.mxu0 %v815
  %3957 = vmatmul.mubr.bf16.gmra.mrb[0].mxu0 %v814
  %v3958 = vpop.f32.mrb[0].mxu0
  %v3959 = vadd.f32 %v3896, %v3958
  %v3960 = vpop.f32.mrb[0].mxu0
  %v3961 = vadd.f32 %v3898, %v3960
  %v3962 = vpop.f32.mrb[0].mxu0
  %v3963 = vadd.f32 %v3900, %v3962
  %v3964 = vpop.f32.mrb[0].mxu0
  %v3965 = vadd.f32 %v3902, %v3964
  %3966 = vmatprep.mubr.bf16.mxu0 %v833
  %3967 = vmatmul.mubr.bf16.gmra.mrb[0].mxu0 %v832
  %v3968 = vpop.f32.mrb[0].mxu0
  %v3969 = vadd.f32 %v3906, %v3968
  %v3970 = vpop.f32.mrb[0].mxu0
  %v3971 = vadd.f32 %v3908, %v3970
  %v3972 = vpop.f32.mrb[0].mxu0
  %v3973 = vadd.f32 %v3910, %v3972
  %v3974 = vpop.f32.mrb[0].mxu0
  %v3975 = vadd.f32 %v3912, %v3974
  %3976 = vmatprep.mubr.bf16.mxu0 %v851
  %3977 = vmatmul.mubr.bf16.gmra.mrb[0].mxu0 %v850
  %v3978 = vpop.f32.mrb[0].mxu0
  %v3979 = vadd.f32 %v3916, %v3978
  %v3980 = vpop.f32.mrb[0].mxu0
  %v3981 = vadd.f32 %v3918, %v3980
  %v3982 = vpop.f32.mrb[0].mxu0
  %v3983 = vadd.f32 %v3920, %v3982
  %v3984 = vpop.f32.mrb[0].mxu0
  %v3985 = vadd.f32 %v3922, %v3984
  %3986 = vdwg.mxu0
  %3987 = vmatprep.subr.bf16.mxu0 %v2839
  %3988 = vmatpush1.bf16.msra.mxu0 %v2838
  %3989 = vmatprep.subr.bf16.mxu0 %v2843
  %3990 = vmatpush1.bf16.msra.mxu0 %v2842
  %3991 = vmatprep.subr.bf16.mxu0 %v2847
  %3992 = vmatpush1.bf16.msra.mxu0 %v2846
  %3993 = vmatprep.subr.bf16.mxu0 %v2851
  %3994 = vmatpush1.bf16.msra.mxu0 %v2850
  %3995 = vmatprep.subr.bf16.mxu0 %v2855
  %3996 = vmatpush1.bf16.msra.mxu0 %v2854
  %3997 = vmatprep.subr.bf16.mxu0 %v2859
  %3998 = vmatpush1.bf16.msra.mxu0 %v2858
  %3999 = vmatprep.subr.bf16.mxu0 %v2863
  %4000 = vmatpush1.bf16.msra.mxu0 %v2862
  %4001 = vmatprep.subr.bf16.mxu0 %v2867
  %4002 = vmatpush1.bf16.msra.mxu0 %v2866
  %4003 = vmatprep.subr.bf16.mxu0 %v2871
  %4004 = vmatpush1.bf16.msra.mxu0 %v2870
  %4005 = vmatprep.subr.bf16.mxu0 %v2875
  %4006 = vmatpush1.bf16.msra.mxu0 %v2874
  %4007 = vmatprep.subr.bf16.mxu0 %v2879
  %4008 = vmatpush1.bf16.msra.mxu0 %v2878
  %4009 = vmatprep.subr.bf16.mxu0 %v2883
  %4010 = vmatpush1.bf16.msra.mxu0 %v2882
  %4011 = vmatprep.subr.bf16.mxu0 %v2887
  %4012 = vmatpush1.bf16.msra.mxu0 %v2886
  %4013 = vmatprep.subr.bf16.mxu0 %v2891
  %4014 = vmatpush1.bf16.msra.mxu0 %v2890
  %4015 = vmatprep.subr.bf16.mxu0 %v2895
  %4016 = vmatpush1.bf16.msra.mxu0 %v2894
  %4017 = vmatprep.subr.bf16.mxu0 %v2899
  %4018 = vmatpush1.bf16.msra.mxu0 %v2898
  %4019 = vmatprep.mubr.bf16.mxu0 %v817
  %4020 = vmatmul.mubr.bf16.gmra.mrb[0].mxu0 %v816
  %v4021 = vpop.f32.mrb[0].mxu0
  %v4022 = vadd.f32 %v3959, %v4021
  %v4023 = vpop.f32.mrb[0].mxu0
  %v4024 = vadd.f32 %v3961, %v4023
  %v4025 = vpop.f32.mrb[0].mxu0
  %v4026 = vadd.f32 %v3963, %v4025
  %v4027 = vpop.f32.mrb[0].mxu0
  %v4028 = vadd.f32 %v3965, %v4027
  %4029 = vmatprep.mubr.bf16.mxu0 %v835
  %4030 = vmatmul.mubr.bf16.gmra.mrb[0].mxu0 %v834
  %v4031 = vpop.f32.mrb[0].mxu0
  %v4032 = vadd.f32 %v3969, %v4031
  %v4033 = vpop.f32.mrb[0].mxu0
  %v4034 = vadd.f32 %v3971, %v4033
  %v4035 = vpop.f32.mrb[0].mxu0
  %v4036 = vadd.f32 %v3973, %v4035
  %v4037 = vpop.f32.mrb[0].mxu0
  %v4038 = vadd.f32 %v3975, %v4037
  %4039 = vmatprep.mubr.bf16.mxu0 %v853
  %4040 = vmatmul.mubr.bf16.gmra.mrb[0].mxu0 %v852
  %v4041 = vpop.f32.mrb[0].mxu0
  %v4042 = vadd.f32 %v3979, %v4041
  %v4043 = vpop.f32.mrb[0].mxu0
  %v4044 = vadd.f32 %v3981, %v4043
  %v4045 = vpop.f32.mrb[0].mxu0
  %v4046 = vadd.f32 %v3983, %v4045
  %v4047 = vpop.f32.mrb[0].mxu0
  %v4048 = vadd.f32 %v3985, %v4047
  %4049 = vdwg.mxu0
  %4050 = vmatprep.subr.bf16.mxu0 %v2903
  %4051 = vmatpush1.bf16.msra.mxu0 %v2902
  %4052 = vmatprep.subr.bf16.mxu0 %v2907
  %4053 = vmatpush1.bf16.msra.mxu0 %v2906
  %4054 = vmatprep.subr.bf16.mxu0 %v2911
  %4055 = vmatpush1.bf16.msra.mxu0 %v2910
  %4056 = vmatprep.subr.bf16.mxu0 %v2915
  %4057 = vmatpush1.bf16.msra.mxu0 %v2914
  %4058 = vmatprep.subr.bf16.mxu0 %v2919
  %4059 = vmatpush1.bf16.msra.mxu0 %v2918
  %4060 = vmatprep.subr.bf16.mxu0 %v2923
  %4061 = vmatpush1.bf16.msra.mxu0 %v2922
  %4062 = vmatprep.subr.bf16.mxu0 %v2927
  %4063 = vmatpush1.bf16.msra.mxu0 %v2926
  %4064 = vmatprep.subr.bf16.mxu0 %v2931
  %4065 = vmatpush1.bf16.msra.mxu0 %v2930
  %4066 = vmatprep.subr.bf16.mxu0 %v2935
  %4067 = vmatpush1.bf16.msra.mxu0 %v2934
  %4068 = vmatprep.subr.bf16.mxu0 %v2939
  %4069 = vmatpush1.bf16.msra.mxu0 %v2938
  %4070 = vmatprep.subr.bf16.mxu0 %v2943
  %4071 = vmatpush1.bf16.msra.mxu0 %v2942
  %4072 = vmatprep.subr.bf16.mxu0 %v2947
  %4073 = vmatpush1.bf16.msra.mxu0 %v2946
  %4074 = vmatprep.subr.bf16.mxu0 %v2951
  %4075 = vmatpush1.bf16.msra.mxu0 %v2950
  %4076 = vmatprep.subr.bf16.mxu0 %v2955
  %4077 = vmatpush1.bf16.msra.mxu0 %v2954
  %4078 = vmatprep.subr.bf16.mxu0 %v2959
  %4079 = vmatpush1.bf16.msra.mxu0 %v2958
  %4080 = vmatprep.subr.bf16.mxu0 %v2963
  %4081 = vmatpush1.bf16.msra.mxu0 %v2962
  %4082 = vmatprep.mubr.bf16.mxu0 %v819
  %4083 = vmatmul.mubr.bf16.gmra.mrb[0].mxu0 %v818
  %v4084 = vpop.f32.mrb[0].mxu0
  %v4085 = vadd.f32 %v4022, %v4084
  %v4086 = vpop.f32.mrb[0].mxu0
  %v4087 = vadd.f32 %v4024, %v4086
  %v4088 = vpop.f32.mrb[0].mxu0
  %v4089 = vadd.f32 %v4026, %v4088
  %v4090 = vpop.f32.mrb[0].mxu0
  %v4091 = vadd.f32 %v4028, %v4090
  %4092 = vmatprep.mubr.bf16.mxu0 %v837
  %4093 = vmatmul.mubr.bf16.gmra.mrb[0].mxu0 %v836
  %v4094 = vpop.f32.mrb[0].mxu0
  %v4095 = vadd.f32 %v4032, %v4094
  %v4096 = vpop.f32.mrb[0].mxu0
  %v4097 = vadd.f32 %v4034, %v4096
  %v4098 = vpop.f32.mrb[0].mxu0
  %v4099 = vadd.f32 %v4036, %v4098
  %v4100 = vpop.f32.mrb[0].mxu0
  %v4101 = vadd.f32 %v4038, %v4100
  %4102 = vmatprep.mubr.bf16.mxu0 %v855
  %4103 = vmatmul.mubr.bf16.gmra.mrb[0].mxu0 %v854
  %v4104 = vpop.f32.mrb[0].mxu0
  %v4105 = vadd.f32 %v4042, %v4104
  %v4106 = vpop.f32.mrb[0].mxu0
  %v4107 = vadd.f32 %v4044, %v4106
  %v4108 = vpop.f32.mrb[0].mxu0
  %v4109 = vadd.f32 %v4046, %v4108
  %v4110 = vpop.f32.mrb[0].mxu0
  %v4111 = vadd.f32 %v4048, %v4110
  %4112 = vdwg.mxu0
  %4113 = vmatprep.subr.bf16.mxu0 %v2967
  %4114 = vmatpush1.bf16.msra.mxu0 %v2966
  %4115 = vmatprep.subr.bf16.mxu0 %v2971
  %4116 = vmatpush1.bf16.msra.mxu0 %v2970
  %4117 = vmatprep.subr.bf16.mxu0 %v2975
  %4118 = vmatpush1.bf16.msra.mxu0 %v2974
  %4119 = vmatprep.subr.bf16.mxu0 %v2979
  %4120 = vmatpush1.bf16.msra.mxu0 %v2978
  %4121 = vmatprep.subr.bf16.mxu0 %v2983
  %4122 = vmatpush1.bf16.msra.mxu0 %v2982
  %4123 = vmatprep.subr.bf16.mxu0 %v2987
  %4124 = vmatpush1.bf16.msra.mxu0 %v2986
  %4125 = vmatprep.subr.bf16.mxu0 %v2991
  %4126 = vmatpush1.bf16.msra.mxu0 %v2990
  %4127 = vmatprep.subr.bf16.mxu0 %v2995
  %4128 = vmatpush1.bf16.msra.mxu0 %v2994
  %4129 = vmatprep.subr.bf16.mxu0 %v2999
  %4130 = vmatpush1.bf16.msra.mxu0 %v2998
  %4131 = vmatprep.subr.bf16.mxu0 %v3003
  %4132 = vmatpush1.bf16.msra.mxu0 %v3002
  %4133 = vmatprep.subr.bf16.mxu0 %v3007
  %4134 = vmatpush1.bf16.msra.mxu0 %v3006
  %4135 = vmatprep.subr.bf16.mxu0 %v3011
  %4136 = vmatpush1.bf16.msra.mxu0 %v3010
  %4137 = vmatprep.subr.bf16.mxu0 %v3015
  %4138 = vmatpush1.bf16.msra.mxu0 %v3014
  %4139 = vmatprep.subr.bf16.mxu0 %v3019
  %4140 = vmatpush1.bf16.msra.mxu0 %v3018
  %4141 = vmatprep.subr.bf16.mxu0 %v3023
  %4142 = vmatpush1.bf16.msra.mxu0 %v3022
  %4143 = vmatprep.subr.bf16.mxu0 %v3027
  %4144 = vmatpush1.bf16.msra.mxu0 %v3026
  %4145 = vmatprep.mubr.bf16.mxu0 %v821
  %4146 = vmatmul.mubr.bf16.gmra.mrb[0].mxu0 %v820
  %v4147 = vpop.f32.mrb[0].mxu0
  %v4148 = vadd.f32 %v4085, %v4147
  %v4149 = vpop.f32.mrb[0].mxu0
  %v4150 = vadd.f32 %v4087, %v4149
  %v4151 = vpop.f32.mrb[0].mxu0
  %v4152 = vadd.f32 %v4089, %v4151
  %v4153 = vpop.f32.mrb[0].mxu0
  %v4154 = vadd.f32 %v4091, %v4153
  %4155 = vmatprep.mubr.bf16.mxu0 %v839
  %4156 = vmatmul.mubr.bf16.gmra.mrb[0].mxu0 %v838
  %v4157 = vpop.f32.mrb[0].mxu0
  %v4158 = vadd.f32 %v4095, %v4157
  %v4159 = vpop.f32.mrb[0].mxu0
  %v4160 = vadd.f32 %v4097, %v4159
  %v4161 = vpop.f32.mrb[0].mxu0
  %v4162 = vadd.f32 %v4099, %v4161
  %v4163 = vpop.f32.mrb[0].mxu0
  %v4164 = vadd.f32 %v4101, %v4163
  %4165 = vmatprep.mubr.bf16.mxu0 %v857
  %4166 = vmatmul.mubr.bf16.gmra.mrb[0].mxu0 %v856
  %v4167 = vpop.f32.mrb[0].mxu0
  %v4168 = vadd.f32 %v4105, %v4167
  %v4169 = vpop.f32.mrb[0].mxu0
  %v4170 = vadd.f32 %v4107, %v4169
  %v4171 = vpop.f32.mrb[0].mxu0
  %v4172 = vadd.f32 %v4109, %v4171
  %v4173 = vpop.f32.mrb[0].mxu0
  %v4174 = vadd.f32 %v4111, %v4173
  %4175 = vdwg.mxu0
  %4176 = vmatprep.subr.bf16.mxu0 %v3031
  %4177 = vmatpush1.bf16.msra.mxu0 %v3030
  %4178 = vmatprep.subr.bf16.mxu0 %v3035
  %4179 = vmatpush1.bf16.msra.mxu0 %v3034
  %4180 = vmatprep.subr.bf16.mxu0 %v3039
  %4181 = vmatpush1.bf16.msra.mxu0 %v3038
  %4182 = vmatprep.subr.bf16.mxu0 %v3043
  %4183 = vmatpush1.bf16.msra.mxu0 %v3042
  %4184 = vmatprep.subr.bf16.mxu0 %v3047
  %4185 = vmatpush1.bf16.msra.mxu0 %v3046
  %4186 = vmatprep.subr.bf16.mxu0 %v3051
  %4187 = vmatpush1.bf16.msra.mxu0 %v3050
  %4188 = vmatprep.subr.bf16.mxu0 %v3055
  %4189 = vmatpush1.bf16.msra.mxu0 %v3054
  %4190 = vmatprep.subr.bf16.mxu0 %v3059
  %4191 = vmatpush1.bf16.msra.mxu0 %v3058
  %4192 = vmatprep.subr.bf16.mxu0 %v3063
  %4193 = vmatpush1.bf16.msra.mxu0 %v3062
  %4194 = vmatprep.subr.bf16.mxu0 %v3067
  %4195 = vmatpush1.bf16.msra.mxu0 %v3066
  %4196 = vmatprep.subr.bf16.mxu0 %v3071
  %4197 = vmatpush1.bf16.msra.mxu0 %v3070
  %4198 = vmatprep.subr.bf16.mxu0 %v3075
  %4199 = vmatpush1.bf16.msra.mxu0 %v3074
  %4200 = vmatprep.subr.bf16.mxu0 %v3079
  %4201 = vmatpush1.bf16.msra.mxu0 %v3078
  %4202 = vmatprep.subr.bf16.mxu0 %v3083
  %4203 = vmatpush1.bf16.msra.mxu0 %v3082
  %4204 = vmatprep.subr.bf16.mxu0 %v3087
  %4205 = vmatpush1.bf16.msra.mxu0 %v3086
  %4206 = vmatprep.subr.bf16.mxu0 %v3091
  %4207 = vmatpush1.bf16.msra.mxu0 %v3090
  %4208 = vmatprep.mubr.bf16.mxu0 %v823
  %4209 = vmatmul.mubr.bf16.gmra.mrb[0].mxu0 %v822
  %v4210 = vpop.f32.mrb[0].mxu0
  %v4211 = vadd.f32 %v4148, %v4210
  %v4212 = vpop.f32.mrb[0].mxu0
  %v4213 = vadd.f32 %v4150, %v4212
  %v4214 = vpop.f32.mrb[0].mxu0
  %v4215 = vadd.f32 %v4152, %v4214
  %v4216 = vpop.f32.mrb[0].mxu0
  %v4217 = vadd.f32 %v4154, %v4216
  %4218 = vmatprep.mubr.bf16.mxu0 %v841
  %4219 = vmatmul.mubr.bf16.gmra.mrb[0].mxu0 %v840
  %v4220 = vpop.f32.mrb[0].mxu0
  %v4221 = vadd.f32 %v4158, %v4220
  %v4222 = vpop.f32.mrb[0].mxu0
  %v4223 = vadd.f32 %v4160, %v4222
  %v4224 = vpop.f32.mrb[0].mxu0
  %v4225 = vadd.f32 %v4162, %v4224
  %v4226 = vpop.f32.mrb[0].mxu0
  %v4227 = vadd.f32 %v4164, %v4226
  %4228 = vmatprep.mubr.bf16.mxu0 %v859
  %4229 = vmatmul.mubr.bf16.gmra.mrb[0].mxu0 %v858
  %v4230 = vpop.f32.mrb[0].mxu0
  %v4231 = vadd.f32 %v4168, %v4230
  %v4232 = vpop.f32.mrb[0].mxu0
  %v4233 = vadd.f32 %v4170, %v4232
  %v4234 = vpop.f32.mrb[0].mxu0
  %v4235 = vadd.f32 %v4172, %v4234
  %v4236 = vpop.f32.mrb[0].mxu0
  %v4237 = vadd.f32 %v4174, %v4236
  %4238 = vdwg.mxu0
  %4239 = vmatprep.subr.bf16.mxu0 %v3095
  %4240 = vmatpush1.bf16.msra.mxu0 %v3094
  %4241 = vmatprep.subr.bf16.mxu0 %v3099
  %4242 = vmatpush1.bf16.msra.mxu0 %v3098
  %4243 = vmatprep.subr.bf16.mxu0 %v3103
  %4244 = vmatpush1.bf16.msra.mxu0 %v3102
  %4245 = vmatprep.subr.bf16.mxu0 %v3107
  %4246 = vmatpush1.bf16.msra.mxu0 %v3106
  %4247 = vmatprep.subr.bf16.mxu0 %v3111
  %4248 = vmatpush1.bf16.msra.mxu0 %v3110
  %4249 = vmatprep.subr.bf16.mxu0 %v3115
  %4250 = vmatpush1.bf16.msra.mxu0 %v3114
  %4251 = vmatprep.subr.bf16.mxu0 %v3119
  %4252 = vmatpush1.bf16.msra.mxu0 %v3118
  %4253 = vmatprep.subr.bf16.mxu0 %v3123
  %4254 = vmatpush1.bf16.msra.mxu0 %v3122
  %4255 = vmatprep.subr.bf16.mxu0 %v3127
  %4256 = vmatpush1.bf16.msra.mxu0 %v3126
  %4257 = vmatprep.subr.bf16.mxu0 %v3131
  %4258 = vmatpush1.bf16.msra.mxu0 %v3130
  %4259 = vmatprep.subr.bf16.mxu0 %v3135
  %4260 = vmatpush1.bf16.msra.mxu0 %v3134
  %4261 = vmatprep.subr.bf16.mxu0 %v3139
  %4262 = vmatpush1.bf16.msra.mxu0 %v3138
  %4263 = vmatprep.subr.bf16.mxu0 %v3143
  %4264 = vmatpush1.bf16.msra.mxu0 %v3142
  %4265 = vmatprep.subr.bf16.mxu0 %v3147
  %4266 = vmatpush1.bf16.msra.mxu0 %v3146
  %4267 = vmatprep.subr.bf16.mxu0 %v3151
  %4268 = vmatpush1.bf16.msra.mxu0 %v3150
  %4269 = vmatprep.subr.bf16.mxu0 %v3155
  %4270 = vmatpush1.bf16.msra.mxu0 %v3154
  %4271 = vmatprep.mubr.bf16.mxu0 %v825
  %4272 = vmatmul.mubr.bf16.gmra.mrb[0].mxu0 %v824
  %v4273 = vpop.f32.mrb[0].mxu0
  %v4274 = vadd.f32 %v4211, %v4273
  %v4275 = vpop.f32.mrb[0].mxu0
  %v4276 = vadd.f32 %v4213, %v4275
  %v4277 = vpop.f32.mrb[0].mxu0
  %v4278 = vadd.f32 %v4215, %v4277
  %v4279 = vpop.f32.mrb[0].mxu0
  %v4280 = vadd.f32 %v4217, %v4279
  %4281 = vmatprep.mubr.bf16.mxu0 %v843
  %4282 = vmatmul.mubr.bf16.gmra.mrb[0].mxu0 %v842
  %v4283 = vpop.f32.mrb[0].mxu0
  %v4284 = vadd.f32 %v4221, %v4283
  %v4285 = vpop.f32.mrb[0].mxu0
  %v4286 = vadd.f32 %v4223, %v4285
  %v4287 = vpop.f32.mrb[0].mxu0
  %v4288 = vadd.f32 %v4225, %v4287
  %v4289 = vpop.f32.mrb[0].mxu0
  %v4290 = vadd.f32 %v4227, %v4289
  %4291 = vmatprep.mubr.bf16.mxu0 %v861
  %4292 = vmatmul.mubr.bf16.gmra.mrb[0].mxu0 %v860
  %v4293 = vpop.f32.mrb[0].mxu0
  %v4294 = vadd.f32 %v4231, %v4293
  %v4295 = vpop.f32.mrb[0].mxu0
  %v4296 = vadd.f32 %v4233, %v4295
  %v4297 = vpop.f32.mrb[0].mxu0
  %v4298 = vadd.f32 %v4235, %v4297
  %v4299 = vpop.f32.mrb[0].mxu0
  %v4300 = vadd.f32 %v4237, %v4299
  %4301 = vdwg.mxu0
  %4302 = vmatprep.subr.bf16.mxu0 %v3159
  %4303 = vmatpush1.bf16.msra.mxu0 %v3158
  %4304 = vmatprep.subr.bf16.mxu0 %v3163
  %4305 = vmatpush1.bf16.msra.mxu0 %v3162
  %4306 = vmatprep.subr.bf16.mxu0 %v3167
  %4307 = vmatpush1.bf16.msra.mxu0 %v3166
  %4308 = vmatprep.subr.bf16.mxu0 %v3171
  %4309 = vmatpush1.bf16.msra.mxu0 %v3170
  %4310 = vmatprep.subr.bf16.mxu0 %v3175
  %4311 = vmatpush1.bf16.msra.mxu0 %v3174
  %4312 = vmatprep.subr.bf16.mxu0 %v3179
  %4313 = vmatpush1.bf16.msra.mxu0 %v3178
  %4314 = vmatprep.subr.bf16.mxu0 %v3183
  %4315 = vmatpush1.bf16.msra.mxu0 %v3182
  %4316 = vmatprep.subr.bf16.mxu0 %v3187
  %4317 = vmatpush1.bf16.msra.mxu0 %v3186
  %4318 = vmatprep.subr.bf16.mxu0 %v3191
  %4319 = vmatpush1.bf16.msra.mxu0 %v3190
  %4320 = vmatprep.subr.bf16.mxu0 %v3195
  %4321 = vmatpush1.bf16.msra.mxu0 %v3194
  %4322 = vmatprep.subr.bf16.mxu0 %v3199
  %4323 = vmatpush1.bf16.msra.mxu0 %v3198
  %4324 = vmatprep.subr.bf16.mxu0 %v3203
  %4325 = vmatpush1.bf16.msra.mxu0 %v3202
  %4326 = vmatprep.subr.bf16.mxu0 %v3207
  %4327 = vmatpush1.bf16.msra.mxu0 %v3206
  %4328 = vmatprep.subr.bf16.mxu0 %v3211
  %4329 = vmatpush1.bf16.msra.mxu0 %v3210
  %4330 = vmatprep.subr.bf16.mxu0 %v3215
  %4331 = vmatpush1.bf16.msra.mxu0 %v3214
  %4332 = vmatprep.subr.bf16.mxu0 %v3219
  %4333 = vmatpush1.bf16.msra.mxu0 %v3218
  %4334 = vmatprep.mubr.bf16.mxu0 %v827
  %4335 = vmatmul.mubr.bf16.gmra.mrb[0].mxu0 %v826
  %v4336 = vpop.f32.mrb[0].mxu0
  %v4337 = vadd.f32 %v4274, %v4336
  %v4338 = vpop.f32.mrb[0].mxu0
  %v4339 = vadd.f32 %v4276, %v4338
  %v4340 = vpop.f32.mrb[0].mxu0
  %v4341 = vadd.f32 %v4278, %v4340
  %v4342 = vpop.f32.mrb[0].mxu0
  %v4343 = vadd.f32 %v4280, %v4342
  %4344 = vmatprep.mubr.bf16.mxu0 %v845
  %4345 = vmatmul.mubr.bf16.gmra.mrb[0].mxu0 %v844
  %v4346 = vpop.f32.mrb[0].mxu0
  %v4347 = vadd.f32 %v4284, %v4346
  %v4348 = vpop.f32.mrb[0].mxu0
  %v4349 = vadd.f32 %v4286, %v4348
  %v4350 = vpop.f32.mrb[0].mxu0
  %v4351 = vadd.f32 %v4288, %v4350
  %v4352 = vpop.f32.mrb[0].mxu0
  %v4353 = vadd.f32 %v4290, %v4352
  %4354 = vmatprep.mubr.bf16.mxu0 %v863
  %4355 = vmatmul.mubr.bf16.gmra.mrb[0].mxu0 %v862
  %v4356 = vpop.f32.mrb[0].mxu0
  %v4357 = vadd.f32 %v4294, %v4356
  %v4358 = vpop.f32.mrb[0].mxu0
  %v4359 = vadd.f32 %v4296, %v4358
  %v4360 = vpop.f32.mrb[0].mxu0
  %v4361 = vadd.f32 %v4298, %v4360
  %v4362 = vpop.f32.mrb[0].mxu0
  %v4363 = vadd.f32 %v4300, %v4362
  %4364 = vdwg.mxu0
  %4365 = vmatprep.subr.bf16.mxu0 %v2649
  %4366 = vmatpush1.bf16.msra.mxu0 %v2648
  %4367 = vmatprep.subr.bf16.mxu0 %v2653
  %4368 = vmatpush1.bf16.msra.mxu0 %v2652
  %4369 = vmatprep.subr.bf16.mxu0 %v2657
  %4370 = vmatpush1.bf16.msra.mxu0 %v2656
  %4371 = vmatprep.subr.bf16.mxu0 %v2661
  %4372 = vmatpush1.bf16.msra.mxu0 %v2660
  %4373 = vmatprep.subr.bf16.mxu0 %v2665
  %4374 = vmatpush1.bf16.msra.mxu0 %v2664
  %4375 = vmatprep.subr.bf16.mxu0 %v2669
  %4376 = vmatpush1.bf16.msra.mxu0 %v2668
  %4377 = vmatprep.subr.bf16.mxu0 %v2673
  %4378 = vmatpush1.bf16.msra.mxu0 %v2672
  %4379 = vmatprep.subr.bf16.mxu0 %v2677
  %4380 = vmatpush1.bf16.msra.mxu0 %v2676
  %4381 = vmatprep.subr.bf16.mxu0 %v2681
  %4382 = vmatpush1.bf16.msra.mxu0 %v2680
  %4383 = vmatprep.subr.bf16.mxu0 %v2685
  %4384 = vmatpush1.bf16.msra.mxu0 %v2684
  %4385 = vmatprep.subr.bf16.mxu0 %v2689
  %4386 = vmatpush1.bf16.msra.mxu0 %v2688
  %4387 = vmatprep.subr.bf16.mxu0 %v2693
  %4388 = vmatpush1.bf16.msra.mxu0 %v2692
  %4389 = vmatprep.subr.bf16.mxu0 %v2697
  %4390 = vmatpush1.bf16.msra.mxu0 %v2696
  %4391 = vmatprep.subr.bf16.mxu0 %v2701
  %4392 = vmatpush1.bf16.msra.mxu0 %v2700
  %4393 = vmatprep.subr.bf16.mxu0 %v2705
  %4394 = vmatpush1.bf16.msra.mxu0 %v2704
  %4395 = vmatprep.subr.bf16.mxu0 %v2709
  %4396 = vmatpush1.bf16.msra.mxu0 %v2708
  %4397 = vmatprep.mubr.bf16.mxu0 %v811
  %4398 = vmatmul.mubr.bf16.gmra.mrb[0].mxu0 %v810
  %v4399 = vpop.f32.mrb[0].mxu0
  %v4400 = vadd.f32 0.0, %v4399
  %v4401 = vpop.f32.mrb[0].mxu0
  %v4402 = vadd.f32 0.0, %v4401
  %v4403 = vpop.f32.mrb[0].mxu0
  %v4404 = vadd.f32 0.0, %v4403
  %v4405 = vpop.f32.mrb[0].mxu0
  %v4406 = vadd.f32 0.0, %v4405
  %4407 = vmatprep.mubr.bf16.mxu0 %v829
  %4408 = vmatmul.mubr.bf16.gmra.mrb[0].mxu0 %v828
  %v4409 = vpop.f32.mrb[0].mxu0
  %v4410 = vadd.f32 0.0, %v4409
  %v4411 = vpop.f32.mrb[0].mxu0
  %v4412 = vadd.f32 0.0, %v4411
  %v4413 = vpop.f32.mrb[0].mxu0
  %v4414 = vadd.f32 0.0, %v4413
  %v4415 = vpop.f32.mrb[0].mxu0
  %v4416 = vadd.f32 0.0, %v4415
  %4417 = vmatprep.mubr.bf16.mxu0 %v847
  %4418 = vmatmul.mubr.bf16.gmra.mrb[0].mxu0 %v846
  %v4419 = vpop.f32.mrb[0].mxu0
  %v4420 = vadd.f32 0.0, %v4419
  %v4421 = vpop.f32.mrb[0].mxu0
  %v4422 = vadd.f32 0.0, %v4421
  %v4423 = vpop.f32.mrb[0].mxu0
  %v4424 = vadd.f32 0.0, %v4423
  %v4425 = vpop.f32.mrb[0].mxu0
  %v4426 = vadd.f32 0.0, %v4425
  %4427 = vdwg.mxu0
  %4428 = vmatprep.subr.bf16.mxu0 %v2713
  %4429 = vmatpush1.bf16.msra.mxu0 %v2712
  %4430 = vmatprep.subr.bf16.mxu0 %v2717
  %4431 = vmatpush1.bf16.msra.mxu0 %v2716
  %4432 = vmatprep.subr.bf16.mxu0 %v2721
  %4433 = vmatpush1.bf16.msra.mxu0 %v2720
  %4434 = vmatprep.subr.bf16.mxu0 %v2725
  %4435 = vmatpush1.bf16.msra.mxu0 %v2724
  %4436 = vmatprep.subr.bf16.mxu0 %v2729
  %4437 = vmatpush1.bf16.msra.mxu0 %v2728
  %4438 = vmatprep.subr.bf16.mxu0 %v2733
  %4439 = vmatpush1.bf16.msra.mxu0 %v2732
  %4440 = vmatprep.subr.bf16.mxu0 %v2737
  %4441 = vmatpush1.bf16.msra.mxu0 %v2736
  %4442 = vmatprep.subr.bf16.mxu0 %v2741
  %4443 = vmatpush1.bf16.msra.mxu0 %v2740
  %4444 = vmatprep.subr.bf16.mxu0 %v2745
  %4445 = vmatpush1.bf16.msra.mxu0 %v2744
  %4446 = vmatprep.subr.bf16.mxu0 %v2749
  %4447 = vmatpush1.bf16.msra.mxu0 %v2748
  %4448 = vmatprep.subr.bf16.mxu0 %v2753
  %4449 = vmatpush1.bf16.msra.mxu0 %v2752
  %4450 = vmatprep.subr.bf16.mxu0 %v2757
  %4451 = vmatpush1.bf16.msra.mxu0 %v2756
  %4452 = vmatprep.subr.bf16.mxu0 %v2761
  %4453 = vmatpush1.bf16.msra.mxu0 %v2760
  %4454 = vmatprep.subr.bf16.mxu0 %v2765
  %4455 = vmatpush1.bf16.msra.mxu0 %v2764
  %4456 = vmatprep.subr.bf16.mxu0 %v2769
  %4457 = vmatpush1.bf16.msra.mxu0 %v2768
  %4458 = vmatprep.subr.bf16.mxu0 %v2773
  %4459 = vmatpush1.bf16.msra.mxu0 %v2772
  %4460 = vmatprep.mubr.bf16.mxu0 %v813
  %4461 = vmatmul.mubr.bf16.gmra.mrb[0].mxu0 %v812
  %v4462 = vpop.f32.mrb[0].mxu0
  %v4463 = vadd.f32 %v4400, %v4462
  %v4464 = vpop.f32.mrb[0].mxu0
  %v4465 = vadd.f32 %v4402, %v4464
  %v4466 = vpop.f32.mrb[0].mxu0
  %v4467 = vadd.f32 %v4404, %v4466
  %v4468 = vpop.f32.mrb[0].mxu0
  %v4469 = vadd.f32 %v4406, %v4468
  %4470 = vmatprep.mubr.bf16.mxu0 %v831
  %4471 = vmatmul.mubr.bf16.gmra.mrb[0].mxu0 %v830
  %v4472 = vpop.f32.mrb[0].mxu0
  %v4473 = vadd.f32 %v4410, %v4472
  %v4474 = vpop.f32.mrb[0].mxu0
  %v4475 = vadd.f32 %v4412, %v4474
  %v4476 = vpop.f32.mrb[0].mxu0
  %v4477 = vadd.f32 %v4414, %v4476
  %v4478 = vpop.f32.mrb[0].mxu0
  %v4479 = vadd.f32 %v4416, %v4478
  %4480 = vmatprep.mubr.bf16.mxu0 %v849
  %4481 = vmatmul.mubr.bf16.gmra.mrb[0].mxu0 %v848
  %v4482 = vpop.f32.mrb[0].mxu0
  %v4483 = vadd.f32 %v4420, %v4482
  %v4484 = vpop.f32.mrb[0].mxu0
  %v4485 = vadd.f32 %v4422, %v4484
  %v4486 = vpop.f32.mrb[0].mxu0
  %v4487 = vadd.f32 %v4424, %v4486
  %v4488 = vpop.f32.mrb[0].mxu0
  %v4489 = vadd.f32 %v4426, %v4488
  %4490 = vdwg.mxu0
  %4491 = vmatprep.subr.bf16.mxu0 %v2777
  %4492 = vmatpush1.bf16.msra.mxu0 %v2776
  %4493 = vmatprep.subr.bf16.mxu0 %v2781
  %4494 = vmatpush1.bf16.msra.mxu0 %v2780
  %4495 = vmatprep.subr.bf16.mxu0 %v2785
  %4496 = vmatpush1.bf16.msra.mxu0 %v2784
  %4497 = vmatprep.subr.bf16.mxu0 %v2789
  %4498 = vmatpush1.bf16.msra.mxu0 %v2788
  %4499 = vmatprep.subr.bf16.mxu0 %v2793
  %4500 = vmatpush1.bf16.msra.mxu0 %v2792
  %4501 = vmatprep.subr.bf16.mxu0 %v2797
  %4502 = vmatpush1.bf16.msra.mxu0 %v2796
  %4503 = vmatprep.subr.bf16.mxu0 %v2801
  %4504 = vmatpush1.bf16.msra.mxu0 %v2800
  %4505 = vmatprep.subr.bf16.mxu0 %v2805
  %4506 = vmatpush1.bf16.msra.mxu0 %v2804
  %4507 = vmatprep.subr.bf16.mxu0 %v2809
  %4508 = vmatpush1.bf16.msra.mxu0 %v2808
  %4509 = vmatprep.subr.bf16.mxu0 %v2813
  %4510 = vmatpush1.bf16.msra.mxu0 %v2812
  %4511 = vmatprep.subr.bf16.mxu0 %v2817
  %4512 = vmatpush1.bf16.msra.mxu0 %v2816
  %4513 = vmatprep.subr.bf16.mxu0 %v2821
  %4514 = vmatpush1.bf16.msra.mxu0 %v2820
  %4515 = vmatprep.subr.bf16.mxu0 %v2825
  %4516 = vmatpush1.bf16.msra.mxu0 %v2824
  %4517 = vmatprep.subr.bf16.mxu0 %v2829
  %4518 = vmatpush1.bf16.msra.mxu0 %v2828
  %4519 = vmatprep.subr.bf16.mxu0 %v2833
  %4520 = vmatpush1.bf16.msra.mxu0 %v2832
  %4521 = vmatprep.subr.bf16.mxu0 %v2837
  %4522 = vmatpush1.bf16.msra.mxu0 %v2836
  %4523 = vmatprep.mubr.bf16.mxu0 %v815
  %4524 = vmatmul.mubr.bf16.gmra.mrb[0].mxu0 %v814
  %v4525 = vpop.f32.mrb[0].mxu0
  %v4526 = vadd.f32 %v4463, %v4525
  %v4527 = vpop.f32.mrb[0].mxu0
  %v4528 = vadd.f32 %v4465, %v4527
  %v4529 = vpop.f32.mrb[0].mxu0
  %v4530 = vadd.f32 %v4467, %v4529
  %v4531 = vpop.f32.mrb[0].mxu0
  %v4532 = vadd.f32 %v4469, %v4531
  %4533 = vmatprep.mubr.bf16.mxu0 %v833
  %4534 = vmatmul.mubr.bf16.gmra.mrb[0].mxu0 %v832
  %v4535 = vpop.f32.mrb[0].mxu0
  %v4536 = vadd.f32 %v4473, %v4535
  %v4537 = vpop.f32.mrb[0].mxu0
  %v4538 = vadd.f32 %v4475, %v4537
  %v4539 = vpop.f32.mrb[0].mxu0
  %v4540 = vadd.f32 %v4477, %v4539
  %v4541 = vpop.f32.mrb[0].mxu0
  %v4542 = vadd.f32 %v4479, %v4541
  %4543 = vmatprep.mubr.bf16.mxu0 %v851
  %4544 = vmatmul.mubr.bf16.gmra.mrb[0].mxu0 %v850
  %v4545 = vpop.f32.mrb[0].mxu0
  %v4546 = vadd.f32 %v4483, %v4545
  %v4547 = vpop.f32.mrb[0].mxu0
  %v4548 = vadd.f32 %v4485, %v4547
  %v4549 = vpop.f32.mrb[0].mxu0
  %v4550 = vadd.f32 %v4487, %v4549
  %v4551 = vpop.f32.mrb[0].mxu0
  %v4552 = vadd.f32 %v4489, %v4551
  %4553 = vdwg.mxu0
  %4554 = vmatprep.subr.bf16.mxu0 %v2841
  %4555 = vmatpush1.bf16.msra.mxu0 %v2840
  %4556 = vmatprep.subr.bf16.mxu0 %v2845
  %4557 = vmatpush1.bf16.msra.mxu0 %v2844
  %4558 = vmatprep.subr.bf16.mxu0 %v2849
  %4559 = vmatpush1.bf16.msra.mxu0 %v2848
  %4560 = vmatprep.subr.bf16.mxu0 %v2853
  %4561 = vmatpush1.bf16.msra.mxu0 %v2852
  %4562 = vmatprep.subr.bf16.mxu0 %v2857
  %4563 = vmatpush1.bf16.msra.mxu0 %v2856
  %4564 = vmatprep.subr.bf16.mxu0 %v2861
  %4565 = vmatpush1.bf16.msra.mxu0 %v2860
  %4566 = vmatprep.subr.bf16.mxu0 %v2865
  %4567 = vmatpush1.bf16.msra.mxu0 %v2864
  %4568 = vmatprep.subr.bf16.mxu0 %v2869
  %4569 = vmatpush1.bf16.msra.mxu0 %v2868
  %4570 = vmatprep.subr.bf16.mxu0 %v2873
  %4571 = vmatpush1.bf16.msra.mxu0 %v2872
  %4572 = vmatprep.subr.bf16.mxu0 %v2877
  %4573 = vmatpush1.bf16.msra.mxu0 %v2876
  %4574 = vmatprep.subr.bf16.mxu0 %v2881
  %4575 = vmatpush1.bf16.msra.mxu0 %v2880
  %4576 = vmatprep.subr.bf16.mxu0 %v2885
  %4577 = vmatpush1.bf16.msra.mxu0 %v2884
  %4578 = vmatprep.subr.bf16.mxu0 %v2889
  %4579 = vmatpush1.bf16.msra.mxu0 %v2888
  %4580 = vmatprep.subr.bf16.mxu0 %v2893
  %4581 = vmatpush1.bf16.msra.mxu0 %v2892
  %4582 = vmatprep.subr.bf16.mxu0 %v2897
  %4583 = vmatpush1.bf16.msra.mxu0 %v2896
  %4584 = vmatprep.subr.bf16.mxu0 %v2901
  %4585 = vmatpush1.bf16.msra.mxu0 %v2900
  %4586 = vmatprep.mubr.bf16.mxu0 %v817
  %4587 = vmatmul.mubr.bf16.gmra.mrb[0].mxu0 %v816
  %v4588 = vpop.f32.mrb[0].mxu0
  %v4589 = vadd.f32 %v4526, %v4588
  %v4590 = vpop.f32.mrb[0].mxu0
  %v4591 = vadd.f32 %v4528, %v4590
  %v4592 = vpop.f32.mrb[0].mxu0
  %v4593 = vadd.f32 %v4530, %v4592
  %v4594 = vpop.f32.mrb[0].mxu0
  %v4595 = vadd.f32 %v4532, %v4594
  %4596 = vmatprep.mubr.bf16.mxu0 %v835
  %4597 = vmatmul.mubr.bf16.gmra.mrb[0].mxu0 %v834
  %v4598 = vpop.f32.mrb[0].mxu0
  %v4599 = vadd.f32 %v4536, %v4598
  %v4600 = vpop.f32.mrb[0].mxu0
  %v4601 = vadd.f32 %v4538, %v4600
  %v4602 = vpop.f32.mrb[0].mxu0
  %v4603 = vadd.f32 %v4540, %v4602
  %v4604 = vpop.f32.mrb[0].mxu0
  %v4605 = vadd.f32 %v4542, %v4604
  %4606 = vmatprep.mubr.bf16.mxu0 %v853
  %4607 = vmatmul.mubr.bf16.gmra.mrb[0].mxu0 %v852
  %v4608 = vpop.f32.mrb[0].mxu0
  %v4609 = vadd.f32 %v4546, %v4608
  %v4610 = vpop.f32.mrb[0].mxu0
  %v4611 = vadd.f32 %v4548, %v4610
  %v4612 = vpop.f32.mrb[0].mxu0
  %v4613 = vadd.f32 %v4550, %v4612
  %v4614 = vpop.f32.mrb[0].mxu0
  %v4615 = vadd.f32 %v4552, %v4614
  %4616 = vdwg.mxu0
  %4617 = vmatprep.subr.bf16.mxu0 %v2905
  %4618 = vmatpush1.bf16.msra.mxu0 %v2904
  %4619 = vmatprep.subr.bf16.mxu0 %v2909
  %4620 = vmatpush1.bf16.msra.mxu0 %v2908
  %4621 = vmatprep.subr.bf16.mxu0 %v2913
  %4622 = vmatpush1.bf16.msra.mxu0 %v2912
  %4623 = vmatprep.subr.bf16.mxu0 %v2917
  %4624 = vmatpush1.bf16.msra.mxu0 %v2916
  %4625 = vmatprep.subr.bf16.mxu0 %v2921
  %4626 = vmatpush1.bf16.msra.mxu0 %v2920
  %4627 = vmatprep.subr.bf16.mxu0 %v2925
  %4628 = vmatpush1.bf16.msra.mxu0 %v2924
  %4629 = vmatprep.subr.bf16.mxu0 %v2929
  %4630 = vmatpush1.bf16.msra.mxu0 %v2928
  %4631 = vmatprep.subr.bf16.mxu0 %v2933
  %4632 = vmatpush1.bf16.msra.mxu0 %v2932
  %4633 = vmatprep.subr.bf16.mxu0 %v2937
  %4634 = vmatpush1.bf16.msra.mxu0 %v2936
  %4635 = vmatprep.subr.bf16.mxu0 %v2941
  %4636 = vmatpush1.bf16.msra.mxu0 %v2940
  %4637 = vmatprep.subr.bf16.mxu0 %v2945
  %4638 = vmatpush1.bf16.msra.mxu0 %v2944
  %4639 = vmatprep.subr.bf16.mxu0 %v2949
  %4640 = vmatpush1.bf16.msra.mxu0 %v2948
  %4641 = vmatprep.subr.bf16.mxu0 %v2953
  %4642 = vmatpush1.bf16.msra.mxu0 %v2952
  %4643 = vmatprep.subr.bf16.mxu0 %v2957
  %4644 = vmatpush1.bf16.msra.mxu0 %v2956
  %4645 = vmatprep.subr.bf16.mxu0 %v2961
  %4646 = vmatpush1.bf16.msra.mxu0 %v2960
  %4647 = vmatprep.subr.bf16.mxu0 %v2965
  %4648 = vmatpush1.bf16.msra.mxu0 %v2964
  %4649 = vmatprep.mubr.bf16.mxu0 %v819
  %4650 = vmatmul.mubr.bf16.gmra.mrb[0].mxu0 %v818
  %v4651 = vpop.f32.mrb[0].mxu0
  %v4652 = vadd.f32 %v4589, %v4651
  %v4653 = vpop.f32.mrb[0].mxu0
  %v4654 = vadd.f32 %v4591, %v4653
  %v4655 = vpop.f32.mrb[0].mxu0
  %v4656 = vadd.f32 %v4593, %v4655
  %v4657 = vpop.f32.mrb[0].mxu0
  %v4658 = vadd.f32 %v4595, %v4657
  %4659 = vmatprep.mubr.bf16.mxu0 %v837
  %4660 = vmatmul.mubr.bf16.gmra.mrb[0].mxu0 %v836
  %v4661 = vpop.f32.mrb[0].mxu0
  %v4662 = vadd.f32 %v4599, %v4661
  %v4663 = vpop.f32.mrb[0].mxu0
  %v4664 = vadd.f32 %v4601, %v4663
  %v4665 = vpop.f32.mrb[0].mxu0
  %v4666 = vadd.f32 %v4603, %v4665
  %v4667 = vpop.f32.mrb[0].mxu0
  %v4668 = vadd.f32 %v4605, %v4667
  %4669 = vmatprep.mubr.bf16.mxu0 %v855
  %4670 = vmatmul.mubr.bf16.gmra.mrb[0].mxu0 %v854
  %v4671 = vpop.f32.mrb[0].mxu0
  %v4672 = vadd.f32 %v4609, %v4671
  %v4673 = vpop.f32.mrb[0].mxu0
  %v4674 = vadd.f32 %v4611, %v4673
  %v4675 = vpop.f32.mrb[0].mxu0
  %v4676 = vadd.f32 %v4613, %v4675
  %v4677 = vpop.f32.mrb[0].mxu0
  %v4678 = vadd.f32 %v4615, %v4677
  %4679 = vdwg.mxu0
  %4680 = vmatprep.subr.bf16.mxu0 %v2969
  %4681 = vmatpush1.bf16.msra.mxu0 %v2968
  %4682 = vmatprep.subr.bf16.mxu0 %v2973
  %4683 = vmatpush1.bf16.msra.mxu0 %v2972
  %4684 = vmatprep.subr.bf16.mxu0 %v2977
  %4685 = vmatpush1.bf16.msra.mxu0 %v2976
  %4686 = vmatprep.subr.bf16.mxu0 %v2981
  %4687 = vmatpush1.bf16.msra.mxu0 %v2980
  %4688 = vmatprep.subr.bf16.mxu0 %v2985
  %4689 = vmatpush1.bf16.msra.mxu0 %v2984
  %4690 = vmatprep.subr.bf16.mxu0 %v2989
  %4691 = vmatpush1.bf16.msra.mxu0 %v2988
  %4692 = vmatprep.subr.bf16.mxu0 %v2993
  %4693 = vmatpush1.bf16.msra.mxu0 %v2992
  %4694 = vmatprep.subr.bf16.mxu0 %v2997
  %4695 = vmatpush1.bf16.msra.mxu0 %v2996
  %4696 = vmatprep.subr.bf16.mxu0 %v3001
  %4697 = vmatpush1.bf16.msra.mxu0 %v3000
  %4698 = vmatprep.subr.bf16.mxu0 %v3005
  %4699 = vmatpush1.bf16.msra.mxu0 %v3004
  %4700 = vmatprep.subr.bf16.mxu0 %v3009
  %4701 = vmatpush1.bf16.msra.mxu0 %v3008
  %4702 = vmatprep.subr.bf16.mxu0 %v3013
  %4703 = vmatpush1.bf16.msra.mxu0 %v3012
  %4704 = vmatprep.subr.bf16.mxu0 %v3017
  %4705 = vmatpush1.bf16.msra.mxu0 %v3016
  %4706 = vmatprep.subr.bf16.mxu0 %v3021
  %4707 = vmatpush1.bf16.msra.mxu0 %v3020
  %4708 = vmatprep.subr.bf16.mxu0 %v3025
  %4709 = vmatpush1.bf16.msra.mxu0 %v3024
  %4710 = vmatprep.subr.bf16.mxu0 %v3029
  %4711 = vmatpush1.bf16.msra.mxu0 %v3028
  %4712 = vmatprep.mubr.bf16.mxu0 %v821
  %4713 = vmatmul.mubr.bf16.gmra.mrb[0].mxu0 %v820
  %v4714 = vpop.f32.mrb[0].mxu0
  %v4715 = vadd.f32 %v4652, %v4714
  %v4716 = vpop.f32.mrb[0].mxu0
  %v4717 = vadd.f32 %v4654, %v4716
  %v4718 = vpop.f32.mrb[0].mxu0
  %v4719 = vadd.f32 %v4656, %v4718
  %v4720 = vpop.f32.mrb[0].mxu0
  %v4721 = vadd.f32 %v4658, %v4720
  %4722 = vmatprep.mubr.bf16.mxu0 %v839
  %4723 = vmatmul.mubr.bf16.gmra.mrb[0].mxu0 %v838
  %v4724 = vpop.f32.mrb[0].mxu0
  %v4725 = vadd.f32 %v4662, %v4724
  %v4726 = vpop.f32.mrb[0].mxu0
  %v4727 = vadd.f32 %v4664, %v4726
  %v4728 = vpop.f32.mrb[0].mxu0
  %v4729 = vadd.f32 %v4666, %v4728
  %v4730 = vpop.f32.mrb[0].mxu0
  %v4731 = vadd.f32 %v4668, %v4730
  %4732 = vmatprep.mubr.bf16.mxu0 %v857
  %4733 = vmatmul.mubr.bf16.gmra.mrb[0].mxu0 %v856
  %v4734 = vpop.f32.mrb[0].mxu0
  %v4735 = vadd.f32 %v4672, %v4734
  %v4736 = vpop.f32.mrb[0].mxu0
  %v4737 = vadd.f32 %v4674, %v4736
  %v4738 = vpop.f32.mrb[0].mxu0
  %v4739 = vadd.f32 %v4676, %v4738
  %v4740 = vpop.f32.mrb[0].mxu0
  %v4741 = vadd.f32 %v4678, %v4740
  %4742 = vdwg.mxu0
  %4743 = vmatprep.subr.bf16.mxu0 %v3033
  %4744 = vmatpush1.bf16.msra.mxu0 %v3032
  %4745 = vmatprep.subr.bf16.mxu0 %v3037
  %4746 = vmatpush1.bf16.msra.mxu0 %v3036
  %4747 = vmatprep.subr.bf16.mxu0 %v3041
  %4748 = vmatpush1.bf16.msra.mxu0 %v3040
  %4749 = vmatprep.subr.bf16.mxu0 %v3045
  %4750 = vmatpush1.bf16.msra.mxu0 %v3044
  %4751 = vmatprep.subr.bf16.mxu0 %v3049
  %4752 = vmatpush1.bf16.msra.mxu0 %v3048
  %4753 = vmatprep.subr.bf16.mxu0 %v3053
  %4754 = vmatpush1.bf16.msra.mxu0 %v3052
  %4755 = vmatprep.subr.bf16.mxu0 %v3057
  %4756 = vmatpush1.bf16.msra.mxu0 %v3056
  %4757 = vmatprep.subr.bf16.mxu0 %v3061
  %4758 = vmatpush1.bf16.msra.mxu0 %v3060
  %4759 = vmatprep.subr.bf16.mxu0 %v3065
  %4760 = vmatpush1.bf16.msra.mxu0 %v3064
  %4761 = vmatprep.subr.bf16.mxu0 %v3069
  %4762 = vmatpush1.bf16.msra.mxu0 %v3068
  %4763 = vmatprep.subr.bf16.mxu0 %v3073
  %4764 = vmatpush1.bf16.msra.mxu0 %v3072
  %4765 = vmatprep.subr.bf16.mxu0 %v3077
  %4766 = vmatpush1.bf16.msra.mxu0 %v3076
  %4767 = vmatprep.subr.bf16.mxu0 %v3081
  %4768 = vmatpush1.bf16.msra.mxu0 %v3080
  %4769 = vmatprep.subr.bf16.mxu0 %v3085
  %4770 = vmatpush1.bf16.msra.mxu0 %v3084
  %4771 = vmatprep.subr.bf16.mxu0 %v3089
  %4772 = vmatpush1.bf16.msra.mxu0 %v3088
  %4773 = vmatprep.subr.bf16.mxu0 %v3093
  %4774 = vmatpush1.bf16.msra.mxu0 %v3092
  %4775 = vmatprep.mubr.bf16.mxu0 %v823
  %4776 = vmatmul.mubr.bf16.gmra.mrb[0].mxu0 %v822
  %v4777 = vpop.f32.mrb[0].mxu0
  %v4778 = vadd.f32 %v4715, %v4777
  %v4779 = vpop.f32.mrb[0].mxu0
  %v4780 = vadd.f32 %v4717, %v4779
  %v4781 = vpop.f32.mrb[0].mxu0
  %v4782 = vadd.f32 %v4719, %v4781
  %v4783 = vpop.f32.mrb[0].mxu0
  %v4784 = vadd.f32 %v4721, %v4783
  %4785 = vmatprep.mubr.bf16.mxu0 %v841
  %4786 = vmatmul.mubr.bf16.gmra.mrb[0].mxu0 %v840
  %v4787 = vpop.f32.mrb[0].mxu0
  %v4788 = vadd.f32 %v4725, %v4787
  %v4789 = vpop.f32.mrb[0].mxu0
  %v4790 = vadd.f32 %v4727, %v4789
  %v4791 = vpop.f32.mrb[0].mxu0
  %v4792 = vadd.f32 %v4729, %v4791
  %v4793 = vpop.f32.mrb[0].mxu0
  %v4794 = vadd.f32 %v4731, %v4793
  %4795 = vmatprep.mubr.bf16.mxu0 %v859
  %4796 = vmatmul.mubr.bf16.gmra.mrb[0].mxu0 %v858
  %v4797 = vpop.f32.mrb[0].mxu0
  %v4798 = vadd.f32 %v4735, %v4797
  %v4799 = vpop.f32.mrb[0].mxu0
  %v4800 = vadd.f32 %v4737, %v4799
  %v4801 = vpop.f32.mrb[0].mxu0
  %v4802 = vadd.f32 %v4739, %v4801
  %v4803 = vpop.f32.mrb[0].mxu0
  %v4804 = vadd.f32 %v4741, %v4803
  %4805 = vdwg.mxu0
  %4806 = vmatprep.subr.bf16.mxu0 %v3097
  %4807 = vmatpush1.bf16.msra.mxu0 %v3096
  %4808 = vmatprep.subr.bf16.mxu0 %v3101
  %4809 = vmatpush1.bf16.msra.mxu0 %v3100
  %4810 = vmatprep.subr.bf16.mxu0 %v3105
  %4811 = vmatpush1.bf16.msra.mxu0 %v3104
  %4812 = vmatprep.subr.bf16.mxu0 %v3109
  %4813 = vmatpush1.bf16.msra.mxu0 %v3108
  %4814 = vmatprep.subr.bf16.mxu0 %v3113
  %4815 = vmatpush1.bf16.msra.mxu0 %v3112
  %4816 = vmatprep.subr.bf16.mxu0 %v3117
  %4817 = vmatpush1.bf16.msra.mxu0 %v3116
  %4818 = vmatprep.subr.bf16.mxu0 %v3121
  %4819 = vmatpush1.bf16.msra.mxu0 %v3120
  %4820 = vmatprep.subr.bf16.mxu0 %v3125
  %4821 = vmatpush1.bf16.msra.mxu0 %v3124
  %4822 = vmatprep.subr.bf16.mxu0 %v3129
  %4823 = vmatpush1.bf16.msra.mxu0 %v3128
  %4824 = vmatprep.subr.bf16.mxu0 %v3133
  %4825 = vmatpush1.bf16.msra.mxu0 %v3132
  %4826 = vmatprep.subr.bf16.mxu0 %v3137
  %4827 = vmatpush1.bf16.msra.mxu0 %v3136
  %4828 = vmatprep.subr.bf16.mxu0 %v3141
  %4829 = vmatpush1.bf16.msra.mxu0 %v3140
  %4830 = vmatprep.subr.bf16.mxu0 %v3145
  %4831 = vmatpush1.bf16.msra.mxu0 %v3144
  %4832 = vmatprep.subr.bf16.mxu0 %v3149
  %4833 = vmatpush1.bf16.msra.mxu0 %v3148
  %4834 = vmatprep.subr.bf16.mxu0 %v3153
  %4835 = vmatpush1.bf16.msra.mxu0 %v3152
  %4836 = vmatprep.subr.bf16.mxu0 %v3157
  %4837 = vmatpush1.bf16.msra.mxu0 %v3156
  %4838 = vmatprep.mubr.bf16.mxu0 %v825
  %4839 = vmatmul.mubr.bf16.gmra.mrb[0].mxu0 %v824
  %v4840 = vpop.f32.mrb[0].mxu0
  %v4841 = vadd.f32 %v4778, %v4840
  %v4842 = vpop.f32.mrb[0].mxu0
  %v4843 = vadd.f32 %v4780, %v4842
  %v4844 = vpop.f32.mrb[0].mxu0
  %v4845 = vadd.f32 %v4782, %v4844
  %v4846 = vpop.f32.mrb[0].mxu0
  %v4847 = vadd.f32 %v4784, %v4846
  %4848 = vmatprep.mubr.bf16.mxu0 %v843
  %4849 = vmatmul.mubr.bf16.gmra.mrb[0].mxu0 %v842
  %v4850 = vpop.f32.mrb[0].mxu0
  %v4851 = vadd.f32 %v4788, %v4850
  %v4852 = vpop.f32.mrb[0].mxu0
  %v4853 = vadd.f32 %v4790, %v4852
  %v4854 = vpop.f32.mrb[0].mxu0
  %v4855 = vadd.f32 %v4792, %v4854
  %v4856 = vpop.f32.mrb[0].mxu0
  %v4857 = vadd.f32 %v4794, %v4856
  %4858 = vmatprep.mubr.bf16.mxu0 %v861
  %4859 = vmatmul.mubr.bf16.gmra.mrb[0].mxu0 %v860
  %v4860 = vpop.f32.mrb[0].mxu0
  %v4861 = vadd.f32 %v4798, %v4860
  %v4862 = vpop.f32.mrb[0].mxu0
  %v4863 = vadd.f32 %v4800, %v4862
  %v4864 = vpop.f32.mrb[0].mxu0
  %v4865 = vadd.f32 %v4802, %v4864
  %v4866 = vpop.f32.mrb[0].mxu0
  %v4867 = vadd.f32 %v4804, %v4866
  %4868 = vdwg.mxu0
  %4869 = vmatprep.subr.bf16.mxu0 %v3161
  %4870 = vmatpush1.bf16.msra.mxu0 %v3160
  %4871 = vmatprep.subr.bf16.mxu0 %v3165
  %4872 = vmatpush1.bf16.msra.mxu0 %v3164
  %4873 = vmatprep.subr.bf16.mxu0 %v3169
  %4874 = vmatpush1.bf16.msra.mxu0 %v3168
  %4875 = vmatprep.subr.bf16.mxu0 %v3173
  %4876 = vmatpush1.bf16.msra.mxu0 %v3172
  %4877 = vmatprep.subr.bf16.mxu0 %v3177
  %4878 = vmatpush1.bf16.msra.mxu0 %v3176
  %4879 = vmatprep.subr.bf16.mxu0 %v3181
  %4880 = vmatpush1.bf16.msra.mxu0 %v3180
  %4881 = vmatprep.subr.bf16.mxu0 %v3185
  %4882 = vmatpush1.bf16.msra.mxu0 %v3184
  %4883 = vmatprep.subr.bf16.mxu0 %v3189
  %4884 = vmatpush1.bf16.msra.mxu0 %v3188
  %4885 = vmatprep.subr.bf16.mxu0 %v3193
  %4886 = vmatpush1.bf16.msra.mxu0 %v3192
  %4887 = vmatprep.subr.bf16.mxu0 %v3197
  %4888 = vmatpush1.bf16.msra.mxu0 %v3196
  %4889 = vmatprep.subr.bf16.mxu0 %v3201
  %4890 = vmatpush1.bf16.msra.mxu0 %v3200
  %4891 = vmatprep.subr.bf16.mxu0 %v3205
  %4892 = vmatpush1.bf16.msra.mxu0 %v3204
  %4893 = vmatprep.subr.bf16.mxu0 %v3209
  %4894 = vmatpush1.bf16.msra.mxu0 %v3208
  %4895 = vmatprep.subr.bf16.mxu0 %v3213
  %4896 = vmatpush1.bf16.msra.mxu0 %v3212
  %4897 = vmatprep.subr.bf16.mxu0 %v3217
  %4898 = vmatpush1.bf16.msra.mxu0 %v3216
  %4899 = vmatprep.subr.bf16.mxu0 %v3221
  %4900 = vmatpush1.bf16.msra.mxu0 %v3220
  %4901 = vmatprep.mubr.bf16.mxu0 %v827
  %4902 = vmatmul.mubr.bf16.gmra.mrb[0].mxu0 %v826
  %v4903 = vpop.f32.mrb[0].mxu0
  %v4904 = vadd.f32 %v4841, %v4903
  %v4905 = vpop.f32.mrb[0].mxu0
  %v4906 = vadd.f32 %v4843, %v4905
  %v4907 = vpop.f32.mrb[0].mxu0
  %v4908 = vadd.f32 %v4845, %v4907
  %v4909 = vpop.f32.mrb[0].mxu0
  %v4910 = vadd.f32 %v4847, %v4909
  %4911 = vmatprep.mubr.bf16.mxu0 %v845
  %4912 = vmatmul.mubr.bf16.gmra.mrb[0].mxu0 %v844
  %v4913 = vpop.f32.mrb[0].mxu0
  %v4914 = vadd.f32 %v4851, %v4913
  %v4915 = vpop.f32.mrb[0].mxu0
  %v4916 = vadd.f32 %v4853, %v4915
  %v4917 = vpop.f32.mrb[0].mxu0
  %v4918 = vadd.f32 %v4855, %v4917
  %v4919 = vpop.f32.mrb[0].mxu0
  %v4920 = vadd.f32 %v4857, %v4919
  %4921 = vmatprep.mubr.bf16.mxu0 %v863
  %4922 = vmatmul.mubr.bf16.gmra.mrb[0].mxu0 %v862
  %v4923 = vpop.f32.mrb[0].mxu0
  %v4924 = vadd.f32 %v4861, %v4923
  %v4925 = vpop.f32.mrb[0].mxu0
  %v4926 = vadd.f32 %v4863, %v4925
  %v4927 = vpop.f32.mrb[0].mxu0
  %v4928 = vadd.f32 %v4865, %v4927
  %v4929 = vpop.f32.mrb[0].mxu0
  %v4930 = vadd.f32 %v4867, %v4929
  %4931 = vdwg.mxu0
  %v4932 = vld [vmem:[%s2] sm:$0xf]
  %v4933 = vld [vmem:[%s3] sm:$0xf]
  %v4934 = vadd.f32 %v4337, %v4341
  %v4935 = vadd.f32 %v4934, %v4347
  %v4936 = vadd.f32 %v4935, %v4351
  %v4937 = vrot.slane %v4936, 4
  %v4938 = vadd.f32 %v4936, %v4937
  %v4939 = vrot.slane %v4938, 2
  %v4940 = vadd.f32 %v4938, %v4939
  %v4941 = vrot.slane %v4940, 1
  %v4942 = vadd.f32 %v4940, %v4941
  %v4943 = vadd.f32 %v4339, %v4343
  %v4944 = vadd.f32 %v4943, %v4349
  %v4945 = vadd.f32 %v4944, %v4353
  %v4946 = vrot.slane %v4945, 4
  %v4947 = vadd.f32 %v4945, %v4946
  %v4948 = vrot.slane %v4947, 2
  %v4949 = vadd.f32 %v4947, %v4948
  %v4950 = vrot.slane %v4949, 1
  %v4951 = vadd.f32 %v4949, %v4950
  %v4952 = vadd.f32 %v4904, %v4908
  %v4953 = vadd.f32 %v4952, %v4914
  %v4954 = vadd.f32 %v4953, %v4918
  %v4955 = vrot.slane %v4954, 4
  %v4956 = vadd.f32 %v4954, %v4955
  %v4957 = vrot.slane %v4956, 2
  %v4958 = vadd.f32 %v4956, %v4957
  %v4959 = vrot.slane %v4958, 1
  %v4960 = vadd.f32 %v4958, %v4959
  %v4961 = vadd.f32 %v4906, %v4910
  %v4962 = vadd.f32 %v4961, %v4916
  %v4963 = vadd.f32 %v4962, %v4920
  %v4964 = vrot.slane %v4963, 4
  %v4965 = vadd.f32 %v4963, %v4964
  %v4966 = vrot.slane %v4965, 2
  %v4967 = vadd.f32 %v4965, %v4966
  %v4968 = vrot.slane %v4967, 1
  %v4969 = vadd.f32 %v4967, %v4968
  %v4970 = vmul.f32 %v4942, 0.03125
  %v4971 = vmul.f32 %v4951, 0.03125
  %v4972 = vmul.f32 %v4960, 0.03125
  %v4973 = vmul.f32 %v4969, 0.03125
  %v4974 = vmul.f32 %v4337, %v4337
  %v4975 = vmul.f32 %v4339, %v4339
  %v4976 = vmul.f32 %v4904, %v4904
  %v4977 = vmul.f32 %v4906, %v4906
  %v4978 = vmul.f32 %v4341, %v4341
  %v4979 = vmul.f32 %v4343, %v4343
  %v4980 = vmul.f32 %v4908, %v4908
  %v4981 = vmul.f32 %v4910, %v4910
  %v4982 = vmul.f32 %v4347, %v4347
  %v4983 = vmul.f32 %v4349, %v4349
  %v4984 = vmul.f32 %v4914, %v4914
  %v4985 = vmul.f32 %v4916, %v4916
  %v4986 = vmul.f32 %v4351, %v4351
  %v4987 = vmul.f32 %v4353, %v4353
  %v4988 = vmul.f32 %v4918, %v4918
  %v4989 = vmul.f32 %v4920, %v4920
  %v4990 = vadd.f32 %v4974, %v4978
  %v4991 = vadd.f32 %v4990, %v4982
  %v4992 = vadd.f32 %v4991, %v4986
  %v4993 = vrot.slane %v4992, 4
  %v4994 = vadd.f32 %v4992, %v4993
  %v4995 = vrot.slane %v4994, 2
  %v4996 = vadd.f32 %v4994, %v4995
  %v4997 = vrot.slane %v4996, 1
  %v4998 = vadd.f32 %v4996, %v4997
  %v4999 = vadd.f32 %v4975, %v4979
  %v5000 = vadd.f32 %v4999, %v4983
  %v5001 = vadd.f32 %v5000, %v4987
  %v5002 = vrot.slane %v5001, 4
  %v5003 = vadd.f32 %v5001, %v5002
  %v5004 = vrot.slane %v5003, 2
  %v5005 = vadd.f32 %v5003, %v5004
  %v5006 = vrot.slane %v5005, 1
  %v5007 = vadd.f32 %v5005, %v5006
  %v5008 = vadd.f32 %v4976, %v4980
  %v5009 = vadd.f32 %v5008, %v4984
  %v5010 = vadd.f32 %v5009, %v4988
  %v5011 = vrot.slane %v5010, 4
  %v5012 = vadd.f32 %v5010, %v5011
  %v5013 = vrot.slane %v5012, 2
  %v5014 = vadd.f32 %v5012, %v5013
  %v5015 = vrot.slane %v5014, 1
  %v5016 = vadd.f32 %v5014, %v5015
  %v5017 = vadd.f32 %v4977, %v4981
  %v5018 = vadd.f32 %v5017, %v4985
  %v5019 = vadd.f32 %v5018, %v4989
  %v5020 = vrot.slane %v5019, 4
  %v5021 = vadd.f32 %v5019, %v5020
  %v5022 = vrot.slane %v5021, 2
  %v5023 = vadd.f32 %v5021, %v5022
  %v5024 = vrot.slane %v5023, 1
  %v5025 = vadd.f32 %v5023, %v5024
  %v5026 = vmul.f32 %v4998, 0.03125
  %v5027 = vmul.f32 %v5007, 0.03125
  %v5028 = vmul.f32 %v5016, 0.03125
  %v5029 = vmul.f32 %v5025, 0.03125
  %v5030 = vmul.f32 %v4970, %v4970
  %v5031 = vmul.f32 %v4971, %v4971
  %v5032 = vmul.f32 %v4972, %v4972
  %v5033 = vmul.f32 %v4973, %v4973
  %v5034 = vsub.f32 %v5026, %v5030
  %v5035 = vsub.f32 %v5027, %v5031
  %v5036 = vsub.f32 %v5028, %v5032
  %v5037 = vsub.f32 %v5029, %v5033
  %v5038 = vmax.f32 %v5034, 0.0
  %v5039 = vmax.f32 %v5035, 0.0
  %v5040 = vmax.f32 %v5036, 0.0
  %v5041 = vmax.f32 %v5037, 0.0
  %v5042 = vsub.f32 %v4337, %v4970
  %v5043 = vsub.f32 %v4339, %v4971
  %v5044 = vsub.f32 %v4904, %v4972
  %v5045 = vsub.f32 %v4906, %v4973
  %v5046 = vsub.f32 %v4341, %v4970
  %v5047 = vsub.f32 %v4343, %v4971
  %v5048 = vsub.f32 %v4908, %v4972
  %v5049 = vsub.f32 %v4910, %v4973
  %v5050 = vsub.f32 %v4347, %v4970
  %v5051 = vsub.f32 %v4349, %v4971
  %v5052 = vsub.f32 %v4914, %v4972
  %v5053 = vsub.f32 %v4916, %v4973
  %v5054 = vsub.f32 %v4351, %v4970
  %v5055 = vsub.f32 %v4353, %v4971
  %v5056 = vsub.f32 %v4918, %v4972
  %v5057 = vsub.f32 %v4920, %v4973
  %v5058 = vadd.f32 %v5038, 1e-05
  %v5059 = vadd.f32 %v5039, 1e-05
  %v5060 = vadd.f32 %v5040, 1e-05
  %v5061 = vadd.f32 %v5041, 1e-05
  %v5062 = vrsqrt.pop %v5058
  %v5063 = vrsqrt.pop %v5059
  %v5064 = vrsqrt.pop %v5060
  %v5065 = vrsqrt.pop %v5061
  %v5066 = vmul.f32 %v5042, %v5062
  %v5067 = vmul.f32 %v5043, %v5063
  %v5068 = vmul.f32 %v5044, %v5064
  %v5069 = vmul.f32 %v5045, %v5065
  %v5070 = vmul.f32 %v5046, %v5062
  %v5071 = vmul.f32 %v5047, %v5063
  %v5072 = vmul.f32 %v5048, %v5064
  %v5073 = vmul.f32 %v5049, %v5065
  %v5074 = vmul.f32 %v5050, %v5062
  %v5075 = vmul.f32 %v5051, %v5063
  %v5076 = vmul.f32 %v5052, %v5064
  %v5077 = vmul.f32 %v5053, %v5065
  %v5078 = vmul.f32 %v5054, %v5062
  %v5079 = vmul.f32 %v5055, %v5063
  %v5080 = vmul.f32 %v5056, %v5064
  %v5081 = vmul.f32 %v5057, %v5065
  %v5083 = vlaneseq
  %v5084 = vshrl.u32 %v5083, 7
  %v5085 = vsub.s32 0, %v5084
  %v5086 = vrot.slane %v4932, %v5085
  %v5087 = vlaneseq
  %v5088 = vshrl.u32 %v5087, 7
  %v5089 = vsub.s32 1, %v5088
  %v5090 = vrot.slane %v4932, %v5089
  %v5091 = vlaneseq
  %v5092 = vshrl.u32 %v5091, 7
  %v5093 = vsub.s32 2, %v5092
  %v5094 = vrot.slane %v4932, %v5093
  %v5095 = vlaneseq
  %v5096 = vshrl.u32 %v5095, 7
  %v5097 = vsub.s32 3, %v5096
  %v5098 = vrot.slane %v4932, %v5097
  %v5103 = vmul.f32 %v5066, %v5086
  %v5104 = vmul.f32 %v5067, %v5090
  %v5105 = vmul.f32 %v5068, %v5094
  %v5106 = vmul.f32 %v5069, %v5098
  %v5107 = vmul.f32 %v5070, %v5086
  %v5108 = vmul.f32 %v5071, %v5090
  %v5109 = vmul.f32 %v5072, %v5094
  %v5110 = vmul.f32 %v5073, %v5098
  %v5111 = vmul.f32 %v5074, %v5086
  %v5112 = vmul.f32 %v5075, %v5090
  %v5113 = vmul.f32 %v5076, %v5094
  %v5114 = vmul.f32 %v5077, %v5098
  %v5115 = vmul.f32 %v5078, %v5086
  %v5116 = vmul.f32 %v5079, %v5090
  %v5117 = vmul.f32 %v5080, %v5094
  %v5118 = vmul.f32 %v5081, %v5098
  %v5120 = vlaneseq
  %v5121 = vshrl.u32 %v5120, 7
  %v5122 = vsub.s32 0, %v5121
  %v5123 = vrot.slane %v4933, %v5122
  %v5124 = vlaneseq
  %v5125 = vshrl.u32 %v5124, 7
  %v5126 = vsub.s32 1, %v5125
  %v5127 = vrot.slane %v4933, %v5126
  %v5128 = vlaneseq
  %v5129 = vshrl.u32 %v5128, 7
  %v5130 = vsub.s32 2, %v5129
  %v5131 = vrot.slane %v4933, %v5130
  %v5132 = vlaneseq
  %v5133 = vshrl.u32 %v5132, 7
  %v5134 = vsub.s32 3, %v5133
  %v5135 = vrot.slane %v4933, %v5134
  %v5140 = vadd.f32 %v5103, %v5123
  %v5141 = vadd.f32 %v5104, %v5127
  %v5142 = vadd.f32 %v5105, %v5131
  %v5143 = vadd.f32 %v5106, %v5135
  %v5144 = vadd.f32 %v5107, %v5123
  %v5145 = vadd.f32 %v5108, %v5127
  %v5146 = vadd.f32 %v5109, %v5131
  %v5147 = vadd.f32 %v5110, %v5135
  %v5148 = vadd.f32 %v5111, %v5123
  %v5149 = vadd.f32 %v5112, %v5127
  %v5150 = vadd.f32 %v5113, %v5131
  %v5151 = vadd.f32 %v5114, %v5135
  %v5152 = vadd.f32 %v5115, %v5123
  %v5153 = vadd.f32 %v5116, %v5127
  %v5154 = vadd.f32 %v5117, %v5131
  %v5155 = vadd.f32 %v5118, %v5135
  %v5156 = vmul.f32 %v5140, 0.2
  %v5157 = vmul.f32 %v5141, 0.2
  %v5158 = vmul.f32 %v5142, 0.2
  %v5159 = vmul.f32 %v5143, 0.2
  %v5160 = vmul.f32 %v5144, 0.2
  %v5161 = vmul.f32 %v5145, 0.2
  %v5162 = vmul.f32 %v5146, 0.2
  %v5163 = vmul.f32 %v5147, 0.2
  %v5164 = vmul.f32 %v5148, 0.2
  %v5165 = vmul.f32 %v5149, 0.2
  %v5166 = vmul.f32 %v5150, 0.2
  %v5167 = vmul.f32 %v5151, 0.2
  %v5168 = vmul.f32 %v5152, 0.2
  %v5169 = vmul.f32 %v5153, 0.2
  %v5170 = vmul.f32 %v5154, 0.2
  %v5171 = vmul.f32 %v5155, 0.2
  %v5172 = vmax.f32 %v5140, %v5156
  %v5173 = vmax.f32 %v5141, %v5157
  %v5174 = vmax.f32 %v5142, %v5158
  %v5175 = vmax.f32 %v5143, %v5159
  %v5176 = vmax.f32 %v5144, %v5160
  %v5177 = vmax.f32 %v5145, %v5161
  %v5178 = vmax.f32 %v5146, %v5162
  %v5179 = vmax.f32 %v5147, %v5163
  %v5180 = vmax.f32 %v5148, %v5164
  %v5181 = vmax.f32 %v5149, %v5165
  %v5182 = vmax.f32 %v5150, %v5166
  %v5183 = vmax.f32 %v5151, %v5167
  %v5184 = vmax.f32 %v5152, %v5168
  %v5185 = vmax.f32 %v5153, %v5169
  %v5186 = vmax.f32 %v5154, %v5170
  %v5187 = vmax.f32 %v5155, %v5171
  %v5188 = vpack.c.bf16 %v5176, %v5172
  %v5189 = vpack.c.bf16 %v5177, %v5173
  %v5190 = vpack.c.bf16 %v5178, %v5174
  %v5191 = vpack.c.bf16 %v5179, %v5175
  %v5192 = vpack.c.bf16 %v5184, %v5180
  %v5193 = vpack.c.bf16 %v5185, %v5181
  %v5194 = vpack.c.bf16 %v5186, %v5182
  %v5195 = vpack.c.bf16 %v5187, %v5183
  %v5204 = vunpack.c.l.b16 %v5188
  %v5205 = vunpack.c.l.b16 %v5189
  %v5206 = vunpack.c.l.b16 %v5190
  %v5207 = vunpack.c.l.b16 %v5191
  %v5208 = vunpack.c.h.b16 %v5188
  %v5209 = vunpack.c.h.b16 %v5189
  %v5210 = vunpack.c.h.b16 %v5190
  %v5211 = vunpack.c.h.b16 %v5191
  %v5212 = vunpack.c.l.b16 %v5192
  %v5213 = vunpack.c.l.b16 %v5193
  %v5214 = vunpack.c.l.b16 %v5194
  %v5215 = vunpack.c.l.b16 %v5195
  %v5216 = vunpack.c.h.b16 %v5192
  %v5217 = vunpack.c.h.b16 %v5193
  %v5218 = vunpack.c.h.b16 %v5194
  %v5219 = vunpack.c.h.b16 %v5195
  %v5220 = vpack.c.b16 %v5205, %v5204
  %v5221 = vpack.c.b16 %v5207, %v5206
  %v5222 = vpack.c.b16 %v5209, %v5208
  %v5223 = vpack.c.b16 %v5211, %v5210
  %v5224 = vpack.c.b16 %v5213, %v5212
  %v5225 = vpack.c.b16 %v5215, %v5214
  %v5226 = vpack.c.b16 %v5217, %v5216
  %v5227 = vpack.c.b16 %v5219, %v5218
  %5236 = vst [vmem:[%s4] sm:$0xff] %v5220
  %5237 = vst [vmem:[%s4 + $0x8] sm:$0xff] %v5221
  %5238 = vst [vmem:[%s4 + $0x10] sm:$0xff] %v5222
  %5239 = vst [vmem:[%s4 + $0x18] sm:$0xff] %v5223
  %5240 = vst [vmem:[%s4 + $0x20] sm:$0xff] %v5224
  %5241 = vst [vmem:[%s4 + $0x28] sm:$0xff] %v5225
  %5242 = vst [vmem:[%s4 + $0x30] sm:$0xff] %v5226
  %5243 = vst [vmem:[%s4 + $0x38] sm:$0xff] %v5227
  %v5244 = vrot.slane %v4357, 4
  %v5245 = vadd.f32 %v4357, %v5244
  %v5246 = vrot.slane %v5245, 2
  %v5247 = vadd.f32 %v5245, %v5246
  %v5248 = vrot.slane %v5247, 1
  %v5249 = vadd.f32 %v5247, %v5248
  %v5250 = vrot.slane %v4359, 4
  %v5251 = vadd.f32 %v4359, %v5250
  %v5252 = vrot.slane %v5251, 2
  %v5253 = vadd.f32 %v5251, %v5252
  %v5254 = vrot.slane %v5253, 1
  %v5255 = vadd.f32 %v5253, %v5254
  %v5256 = vrot.slane %v4924, 4
  %v5257 = vadd.f32 %v4924, %v5256
  %v5258 = vrot.slane %v5257, 2
  %v5259 = vadd.f32 %v5257, %v5258
  %v5260 = vrot.slane %v5259, 1
  %v5261 = vadd.f32 %v5259, %v5260
  %v5262 = vrot.slane %v4926, 4
  %v5263 = vadd.f32 %v4926, %v5262
  %v5264 = vrot.slane %v5263, 2
  %v5265 = vadd.f32 %v5263, %v5264
  %v5266 = vrot.slane %v5265, 1
  %v5267 = vadd.f32 %v5265, %v5266
  %v5268 = vmul.f32 %v5249, 0.125
  %v5269 = vmul.f32 %v5255, 0.125
  %v5270 = vmul.f32 %v5261, 0.125
  %v5271 = vmul.f32 %v5267, 0.125
  %v5272 = vmul.f32 %v4357, %v4357
  %v5273 = vmul.f32 %v4359, %v4359
  %v5274 = vmul.f32 %v4924, %v4924
  %v5275 = vmul.f32 %v4926, %v4926
  %v5276 = vrot.slane %v5272, 4
  %v5277 = vadd.f32 %v5272, %v5276
  %v5278 = vrot.slane %v5277, 2
  %v5279 = vadd.f32 %v5277, %v5278
  %v5280 = vrot.slane %v5279, 1
  %v5281 = vadd.f32 %v5279, %v5280
  %v5282 = vrot.slane %v5273, 4
  %v5283 = vadd.f32 %v5273, %v5282
  %v5284 = vrot.slane %v5283, 2
  %v5285 = vadd.f32 %v5283, %v5284
  %v5286 = vrot.slane %v5285, 1
  %v5287 = vadd.f32 %v5285, %v5286
  %v5288 = vrot.slane %v5274, 4
  %v5289 = vadd.f32 %v5274, %v5288
  %v5290 = vrot.slane %v5289, 2
  %v5291 = vadd.f32 %v5289, %v5290
  %v5292 = vrot.slane %v5291, 1
  %v5293 = vadd.f32 %v5291, %v5292
  %v5294 = vrot.slane %v5275, 4
  %v5295 = vadd.f32 %v5275, %v5294
  %v5296 = vrot.slane %v5295, 2
  %v5297 = vadd.f32 %v5295, %v5296
  %v5298 = vrot.slane %v5297, 1
  %v5299 = vadd.f32 %v5297, %v5298
  %v5300 = vmul.f32 %v5281, 0.125
  %v5301 = vmul.f32 %v5287, 0.125
  %v5302 = vmul.f32 %v5293, 0.125
  %v5303 = vmul.f32 %v5299, 0.125
  %v5304 = vmul.f32 %v5268, %v5268
  %v5305 = vmul.f32 %v5269, %v5269
  %v5306 = vmul.f32 %v5270, %v5270
  %v5307 = vmul.f32 %v5271, %v5271
  %v5308 = vsub.f32 %v5300, %v5304
  %v5309 = vsub.f32 %v5301, %v5305
  %v5310 = vsub.f32 %v5302, %v5306
  %v5311 = vsub.f32 %v5303, %v5307
  %v5312 = vmax.f32 %v5308, 0.0
  %v5313 = vmax.f32 %v5309, 0.0
  %v5314 = vmax.f32 %v5310, 0.0
  %v5315 = vmax.f32 %v5311, 0.0
  %v5316 = vsub.f32 %v4357, %v5268
  %v5317 = vsub.f32 %v4359, %v5269
  %v5318 = vsub.f32 %v4924, %v5270
  %v5319 = vsub.f32 %v4926, %v5271
  %v5320 = vadd.f32 %v5312, 1e-05
  %v5321 = vadd.f32 %v5313, 1e-05
  %v5322 = vadd.f32 %v5314, 1e-05
  %v5323 = vadd.f32 %v5315, 1e-05
  %v5324 = vrsqrt.pop %v5320
  %v5325 = vrsqrt.pop %v5321
  %v5326 = vrsqrt.pop %v5322
  %v5327 = vrsqrt.pop %v5323
  %v5328 = vmul.f32 %v5316, %v5324
  %v5329 = vmul.f32 %v5317, %v5325
  %v5330 = vmul.f32 %v5318, %v5326
  %v5331 = vmul.f32 %v5319, %v5327
  %v5332 = vmul.f32 %v5328, %v5086
  %v5333 = vmul.f32 %v5329, %v5090
  %v5334 = vmul.f32 %v5330, %v5094
  %v5335 = vmul.f32 %v5331, %v5098
  %v5336 = vadd.f32 %v5332, %v5123
  %v5337 = vadd.f32 %v5333, %v5127
  %v5338 = vadd.f32 %v5334, %v5131
  %v5339 = vadd.f32 %v5335, %v5135
  %v5340 = vmul.f32 %v5336, 0.2
  %v5341 = vmul.f32 %v5337, 0.2
  %v5342 = vmul.f32 %v5338, 0.2
  %v5343 = vmul.f32 %v5339, 0.2
  %v5344 = vmax.f32 %v5336, %v5340
  %v5345 = vmax.f32 %v5337, %v5341
  %v5346 = vmax.f32 %v5338, %v5342
  %v5347 = vmax.f32 %v5339, %v5343
  %v5348 = vpack.c.bf16 %v5344, %v5344
  %v5349 = vpack.c.bf16 %v5345, %v5345
  %v5350 = vpack.c.bf16 %v5346, %v5346
  %v5351 = vpack.c.bf16 %v5347, %v5347
  %v5356 = vunpack.c.l.b16 %v5348
  %v5357 = vunpack.c.l.b16 %v5349
  %v5358 = vunpack.c.l.b16 %v5350
  %v5359 = vunpack.c.l.b16 %v5351
  %v5360 = vpack.c.b16 %v5357, %v5356
  %v5361 = vpack.c.b16 %v5359, %v5358
  %5364 = vst [vmem:[%s4 + $0x40] sm:$0xff] %v5360
  %5365 = vst [vmem:[%s4 + $0x48] sm:$0xff] %v5361
  %vm5366 = vcmask 1041408
  %v5367 = vsel %vm5366, %v4361, 0.0
  %v5368 = vrot.slane %v5367, 4
  %v5369 = vadd.f32 %v5367, %v5368
  %v5370 = vrot.slane %v5369, 2
  %v5371 = vadd.f32 %v5369, %v5370
  %v5372 = vrot.slane %v5371, 1
  %v5373 = vadd.f32 %v5371, %v5372
  %v5374 = vsel %vm5366, %v4363, 0.0
  %v5375 = vrot.slane %v5374, 4
  %v5376 = vadd.f32 %v5374, %v5375
  %v5377 = vrot.slane %v5376, 2
  %v5378 = vadd.f32 %v5376, %v5377
  %v5379 = vrot.slane %v5378, 1
  %v5380 = vadd.f32 %v5378, %v5379
  %v5381 = vsel %vm5366, %v4928, 0.0
  %v5382 = vrot.slane %v5381, 4
  %v5383 = vadd.f32 %v5381, %v5382
  %v5384 = vrot.slane %v5383, 2
  %v5385 = vadd.f32 %v5383, %v5384
  %v5386 = vrot.slane %v5385, 1
  %v5387 = vadd.f32 %v5385, %v5386
  %v5388 = vsel %vm5366, %v4930, 0.0
  %v5389 = vrot.slane %v5388, 4
  %v5390 = vadd.f32 %v5388, %v5389
  %v5391 = vrot.slane %v5390, 2
  %v5392 = vadd.f32 %v5390, %v5391
  %v5393 = vrot.slane %v5392, 1
  %v5394 = vadd.f32 %v5392, %v5393
  %v5395 = vmul.f32 %v5373, 0.5
  %v5396 = vmul.f32 %v5380, 0.5
  %v5397 = vmul.f32 %v5387, 0.5
  %v5398 = vmul.f32 %v5394, 0.5
  %v5399 = vmul.f32 %v4361, %v4361
  %v5400 = vmul.f32 %v4363, %v4363
  %v5401 = vmul.f32 %v4928, %v4928
  %v5402 = vmul.f32 %v4930, %v4930
  %v5403 = vsel %vm5366, %v5399, 0.0
  %v5404 = vrot.slane %v5403, 4
  %v5405 = vadd.f32 %v5403, %v5404
  %v5406 = vrot.slane %v5405, 2
  %v5407 = vadd.f32 %v5405, %v5406
  %v5408 = vrot.slane %v5407, 1
  %v5409 = vadd.f32 %v5407, %v5408
  %v5410 = vsel %vm5366, %v5400, 0.0
  %v5411 = vrot.slane %v5410, 4
  %v5412 = vadd.f32 %v5410, %v5411
  %v5413 = vrot.slane %v5412, 2
  %v5414 = vadd.f32 %v5412, %v5413
  %v5415 = vrot.slane %v5414, 1
  %v5416 = vadd.f32 %v5414, %v5415
  %v5417 = vsel %vm5366, %v5401, 0.0
  %v5418 = vrot.slane %v5417, 4
  %v5419 = vadd.f32 %v5417, %v5418
  %v5420 = vrot.slane %v5419, 2
  %v5421 = vadd.f32 %v5419, %v5420
  %v5422 = vrot.slane %v5421, 1
  %v5423 = vadd.f32 %v5421, %v5422
  %v5424 = vsel %vm5366, %v5402, 0.0
  %v5425 = vrot.slane %v5424, 4
  %v5426 = vadd.f32 %v5424, %v5425
  %v5427 = vrot.slane %v5426, 2
  %v5428 = vadd.f32 %v5426, %v5427
  %v5429 = vrot.slane %v5428, 1
  %v5430 = vadd.f32 %v5428, %v5429
  %v5431 = vmul.f32 %v5409, 0.5
  %v5432 = vmul.f32 %v5416, 0.5
  %v5433 = vmul.f32 %v5423, 0.5
  %v5434 = vmul.f32 %v5430, 0.5
  %v5435 = vmul.f32 %v5395, %v5395
  %v5436 = vmul.f32 %v5396, %v5396
  %v5437 = vmul.f32 %v5397, %v5397
  %v5438 = vmul.f32 %v5398, %v5398
  %v5439 = vsub.f32 %v5431, %v5435
  %v5440 = vsub.f32 %v5432, %v5436
  %v5441 = vsub.f32 %v5433, %v5437
  %v5442 = vsub.f32 %v5434, %v5438
  %v5443 = vmax.f32 %v5439, 0.0
  %v5444 = vmax.f32 %v5440, 0.0
  %v5445 = vmax.f32 %v5441, 0.0
  %v5446 = vmax.f32 %v5442, 0.0
  %v5447 = vsub.f32 %v4361, %v5395
  %v5448 = vsub.f32 %v4363, %v5396
  %v5449 = vsub.f32 %v4928, %v5397
  %v5450 = vsub.f32 %v4930, %v5398
  %v5451 = vadd.f32 %v5443, 1e-05
  %v5452 = vadd.f32 %v5444, 1e-05
  %v5453 = vadd.f32 %v5445, 1e-05
  %v5454 = vadd.f32 %v5446, 1e-05
  %v5455 = vrsqrt.pop %v5451
  %v5456 = vrsqrt.pop %v5452
  %v5457 = vrsqrt.pop %v5453
  %v5458 = vrsqrt.pop %v5454
  %v5459 = vmul.f32 %v5447, %v5455
  %v5460 = vmul.f32 %v5448, %v5456
  %v5461 = vmul.f32 %v5449, %v5457
  %v5462 = vmul.f32 %v5450, %v5458
  %v5463 = vmul.f32 %v5459, %v5086
  %v5464 = vmul.f32 %v5460, %v5090
  %v5465 = vmul.f32 %v5461, %v5094
  %v5466 = vmul.f32 %v5462, %v5098
  %v5467 = vadd.f32 %v5463, %v5123
  %v5468 = vadd.f32 %v5464, %v5127
  %v5469 = vadd.f32 %v5465, %v5131
  %v5470 = vadd.f32 %v5466, %v5135
  %v5471 = vmul.f32 %v5467, 0.2
  %v5472 = vmul.f32 %v5468, 0.2
  %v5473 = vmul.f32 %v5469, 0.2
  %v5474 = vmul.f32 %v5470, 0.2
  %v5475 = vmax.f32 %v5467, %v5471
  %v5476 = vmax.f32 %v5468, %v5472
  %v5477 = vmax.f32 %v5469, %v5473
  %v5478 = vmax.f32 %v5470, %v5474
  %v5479 = vpack.c.bf16 %v5475, %v5475
  %v5480 = vpack.c.bf16 %v5476, %v5476
  %v5481 = vpack.c.bf16 %v5477, %v5477
  %v5482 = vpack.c.bf16 %v5478, %v5478
  %v5487 = vunpack.c.l.b16 %v5479
  %v5488 = vunpack.c.l.b16 %v5480
  %v5489 = vunpack.c.l.b16 %v5481
  %v5490 = vunpack.c.l.b16 %v5482
  %v5491 = vpack.c.b16 %v5488, %v5487
  %v5492 = vpack.c.b16 %v5490, %v5489
  %5495 = vst [vmem:[%s4 + $0x50] sm:$0x11] %v5491
  %5496 = vst [vmem:[%s4 + $0x58] sm:$0x11] %v5492
  %5497 = vst [vmem:[%s4 + $0x50] sm:$0xee] 0
  %5498 = vst [vmem:[%s4 + $0x58] sm:$0xee] 0
  // Predicated region
  $region18: #{tipd_forward.8} parent=0 // pred_check
    _
  $region19: #{tipd_forward.8} parent=0 // pred_check_branch
    %5500 = sbr.rel (0) target = $region21
  $region20: #{tipd_forward.8} parent=0 // pred_region
    _
  $region21: #{tipd_forward.8} parent=0 // pred_fallthru
    _
  // Predicated region
  $region22: #{tipd_forward.8} parent=0 // pred_check
    _
  $region23: #{tipd_forward.8} parent=0 // pred_check_branch
    %5502 = sbr.rel (0) target = $region25
  $region24: #{tipd_forward.8} parent=0 // pred_region
    _
  $region25: #{tipd_forward.8} parent=0 // pred_fallthru
    _

// kernel: tipd_forward.9
$region0: #{tipd_forward.9}
  #allocation0 [shape = 'u32[]', space=smem, size = 0x4, offset = 0x4, fixed_abs, tag = 'smem constant byte address 0x4 - core index']
  #allocation1 [shape = 'u32[144,128]{1,0:T(1,128)}', space=vmem, size = 0x12000, scoped, tag = 'internal scratch']
  #allocation2 [shape = 'f32[1,1]{1,0:T(1,128)S(6)}', space=smem, size = 0x200, scoped, tag = 'scoped memory for tipd_forward.9']
  %s0 = inlined_call_operand.vmem [shape: bf16[48,4608], index: 0, kind: input, shape index: {}]
  %s1 = inlined_call_operand.vmem [shape: bf16[1,4608], index: 1, kind: input, shape index: {}]
  %s2 = inlined_call_operand.<no memory space> [shape: f32[1,1], index: 2, kind: input, shape index: {}]
  %s3 = inlined_call_operand.vmem [shape: f32[3,2], index: 3, kind: output, shape index: {}]
  %s4 = sld [smem:[#allocation0]]
  $region22: #{tipd_forward.9} parent=0
    _
  %s6 = ssub.s32 1, %s4
  %s7 = scalar_select 0, %s6, %s4
  %8 = sst [smem:[#allocation2]] %s2
  $region1: #{tipd_forward.9} parent=0
    #allocation3 [shape = 'u8[2048]{0}', space=smem, size = 0x800, scoped, tag = 'output window, operand 0, single buffered']
    #allocation4 [shape = 's32[1]{0}', space=sflag, size = 0x4, scoped, tag = 'scoped memory for tipd_forward.9']
    %9 = vsyncpa [#allocation4], 0
    // Predicated region
    $region2: #{tipd_forward.9} parent=1 // pred_check
      _
    $region3: #{tipd_forward.9} parent=1 // pred_check_branch
      %11 = sbr.rel (0) target = $region5
    $region4: #{tipd_forward.9} parent=1 // pred_region
      _
    $region5: #{tipd_forward.9} parent=1 // pred_fallthru
      _
    // Predicated region
    $region6: #{tipd_forward.9} parent=1 // pred_check
      _
    $region7: #{tipd_forward.9} parent=1 // pred_check_branch
      %13 = sbr.rel (0) target = $region9
    $region8: #{tipd_forward.9} parent=1 // pred_region
      _
    $region9: #{tipd_forward.9} parent=1 // pred_fallthru
      _
    // Predicated region
    $region10: #{tipd_forward.9} parent=1 // pred_check
      _
    $region11: #{tipd_forward.9} parent=1 // pred_check_branch
      %15 = sbr.rel (0) target = $region13
    $region12: #{tipd_forward.9} parent=1 // pred_region
      _
    $region13: #{tipd_forward.9} parent=1 // pred_fallthru
      _
    %v16 = vld [vmem:[%s0] sm:$0xf]
    %v17 = vld [vmem:[%s0 + $0x90] sm:$0xf]
    %v18 = vld [vmem:[%s0 + $0x120] sm:$0xf]
    %v19 = vld [vmem:[%s0 + $0x1b0] sm:$0xf]
    %v20 = vld [vmem:[%s0 + $0x240] sm:$0xf]
    %v21 = vld [vmem:[%s0 + $0x2d0] sm:$0xf]
    %v22 = vunpack.c.l.bf16 %v16
    %v23 = vunpack.c.l.bf16 %v17
    %v24 = vunpack.c.l.bf16 %v18
    %v25 = vunpack.c.l.bf16 %v19
    %v26 = vunpack.c.l.bf16 %v20
    %v27 = vunpack.c.l.bf16 %v21
    %v28 = vld [vmem:[%s1] sm:$0x1]
    %v29 = vunpack.c.l.bf16 %v28
    %v30 = vlaneseq
    %v31 = vshrl.u32 %v30, 7
    %v32 = vsub.s32 0, %v31
    %v33 = vrot.slane %v29, %v32
    %v34 = vmul.f32 %v22, %v33
    %v35 = vmul.f32 %v23, %v33
    %v36 = vmul.f32 %v24, %v33
    %v37 = vmul.f32 %v25, %v33
    %v38 = vmul.f32 %v26, %v33
    %v39 = vmul.f32 %v27, %v33
    %v40 = vadd.f32 %v34, 0.0
    %v41 = vadd.f32 %v35, 0.0
    %v42 = vadd.f32 %v36, 0.0
    %v43 = vadd.f32 %v37, 0.0
    %v44 = vadd.f32 %v38, 0.0
    %v45 = vadd.f32 %v39, 0.0
    %v46 = vld [vmem:[%s0 + $0x4] sm:$0xf]
    %v47 = vld [vmem:[%s0 + $0x94] sm:$0xf]
    %v48 = vld [vmem:[%s0 + $0x124] sm:$0xf]
    %v49 = vld [vmem:[%s0 + $0x1b4] sm:$0xf]
    %v50 = vld [vmem:[%s0 + $0x244] sm:$0xf]
    %v51 = vld [vmem:[%s0 + $0x2d4] sm:$0xf]
    %v52 = vunpack.c.l.bf16 %v46
    %v53 = vunpack.c.l.bf16 %v47
    %v54 = vunpack.c.l.bf16 %v48
    %v55 = vunpack.c.l.bf16 %v49
    %v56 = vunpack.c.l.bf16 %v50
    %v57 = vunpack.c.l.bf16 %v51
    %v58 = vld [vmem:[%s1 + $0x1] sm:$0x1]
    %v59 = vunpack.c.l.bf16 %v58
    %v60 = vlaneseq
    %v61 = vshrl.u32 %v60, 7
    %v62 = vsub.s32 0, %v61
    %v63 = vrot.slane %v59, %v62
    %v64 = vmul.f32 %v52, %v63
    %v65 = vmul.f32 %v53, %v63
    %v66 = vmul.f32 %v54, %v63
    %v67 = vmul.f32 %v55, %v63
    %v68 = vmul.f32 %v56, %v63
    %v69 = vmul.f32 %v57, %v63
    %v70 = vadd.f32 %v40, %v64
    %v71 = vadd.f32 %v41, %v65
    %v72 = vadd.f32 %v42, %v66
    %v73 = vadd.f32 %v43, %v67
    %v74 = vadd.f32 %v44, %v68
    %v75 = vadd.f32 %v45, %v69
    %v76 = vld [vmem:[%s0 + $0x8] sm:$0xf]
    %v77 = vld [vmem:[%s0 + $0x98] sm:$0xf]
    %v78 = vld [vmem:[%s0 + $0x128] sm:$0xf]
    %v79 = vld [vmem:[%s0 + $0x1b8] sm:$0xf]
    %v80 = vld [vmem:[%s0 + $0x248] sm:$0xf]
    %v81 = vld [vmem:[%s0 + $0x2d8] sm:$0xf]
    %v82 = vunpack.c.l.bf16 %v76
    %v83 = vunpack.c.l.bf16 %v77
    %v84 = vunpack.c.l.bf16 %v78
    %v85 = vunpack.c.l.bf16 %v79
    %v86 = vunpack.c.l.bf16 %v80
    %v87 = vunpack.c.l.bf16 %v81
    %v88 = vld [vmem:[%s1 + $0x2] sm:$0x1]
    %v89 = vunpack.c.l.bf16 %v88
    %v90 = vlaneseq
    %v91 = vshrl.u32 %v90, 7
    %v92 = vsub.s32 0, %v91
    %v93 = vrot.slane %v89, %v92
    %v94 = vmul.f32 %v82, %v93
    %v95 = vmul.f32 %v83, %v93
    %v96 = vmul.f32 %v84, %v93
    %v97 = vmul.f32 %v85, %v93
    %v98 = vmul.f32 %v86, %v93
    %v99 = vmul.f32 %v87, %v93
    %v100 = vadd.f32 %v70, %v94
    %v101 = vadd.f32 %v71, %v95
    %v102 = vadd.f32 %v72, %v96
    %v103 = vadd.f32 %v73, %v97
    %v104 = vadd.f32 %v74, %v98
    %v105 = vadd.f32 %v75, %v99
    %v106 = vld [vmem:[%s0 + $0xc] sm:$0xf]
    %v107 = vld [vmem:[%s0 + $0x9c] sm:$0xf]
    %v108 = vld [vmem:[%s0 + $0x12c] sm:$0xf]
    %v109 = vld [vmem:[%s0 + $0x1bc] sm:$0xf]
    %v110 = vld [vmem:[%s0 + $0x24c] sm:$0xf]
    %v111 = vld [vmem:[%s0 + $0x2dc] sm:$0xf]
    %v112 = vunpack.c.l.bf16 %v106
    %v113 = vunpack.c.l.bf16 %v107
    %v114 = vunpack.c.l.bf16 %v108
    %v115 = vunpack.c.l.bf16 %v109
    %v116 = vunpack.c.l.bf16 %v110
    %v117 = vunpack.c.l.bf16 %v111
    %v118 = vld [vmem:[%s1 + $0x3] sm:$0x1]
    %v119 = vunpack.c.l.bf16 %v118
    %v120 = vlaneseq
    %v121 = vshrl.u32 %v120, 7
    %v122 = vsub.s32 0, %v121
    %v123 = vrot.slane %v119, %v122
    %v124 = vmul.f32 %v112, %v123
    %v125 = vmul.f32 %v113, %v123
    %v126 = vmul.f32 %v114, %v123
    %v127 = vmul.f32 %v115, %v123
    %v128 = vmul.f32 %v116, %v123
    %v129 = vmul.f32 %v117, %v123
    %v130 = vadd.f32 %v100, %v124
    %v131 = vadd.f32 %v101, %v125
    %v132 = vadd.f32 %v102, %v126
    %v133 = vadd.f32 %v103, %v127
    %v134 = vadd.f32 %v104, %v128
    %v135 = vadd.f32 %v105, %v129
    %v136 = vld [vmem:[%s0 + $0x10] sm:$0xf]
    %v137 = vld [vmem:[%s0 + $0xa0] sm:$0xf]
    %v138 = vld [vmem:[%s0 + $0x130] sm:$0xf]
    %v139 = vld [vmem:[%s0 + $0x1c0] sm:$0xf]
    %v140 = vld [vmem:[%s0 + $0x250] sm:$0xf]
    %v141 = vld [vmem:[%s0 + $0x2e0] sm:$0xf]
    %v142 = vunpack.c.l.bf16 %v136
    %v143 = vunpack.c.l.bf16 %v137
    %v144 = vunpack.c.l.bf16 %v138
    %v145 = vunpack.c.l.bf16 %v139
    %v146 = vunpack.c.l.bf16 %v140
    %v147 = vunpack.c.l.bf16 %v141
    %v148 = vld [vmem:[%s1 + $0x4] sm:$0x1]
    %v149 = vunpack.c.l.bf16 %v148
    %v150 = vlaneseq
    %v151 = vshrl.u32 %v150, 7
    %v152 = vsub.s32 0, %v151
    %v153 = vrot.slane %v149, %v152
    %v154 = vmul.f32 %v142, %v153
    %v155 = vmul.f32 %v143, %v153
    %v156 = vmul.f32 %v144, %v153
    %v157 = vmul.f32 %v145, %v153
    %v158 = vmul.f32 %v146, %v153
    %v159 = vmul.f32 %v147, %v153
    %v160 = vadd.f32 %v130, %v154
    %v161 = vadd.f32 %v131, %v155
    %v162 = vadd.f32 %v132, %v156
    %v163 = vadd.f32 %v133, %v157
    %v164 = vadd.f32 %v134, %v158
    %v165 = vadd.f32 %v135, %v159
    %v166 = vld [vmem:[%s0 + $0x14] sm:$0xf]
    %v167 = vld [vmem:[%s0 + $0xa4] sm:$0xf]
    %v168 = vld [vmem:[%s0 + $0x134] sm:$0xf]
    %v169 = vld [vmem:[%s0 + $0x1c4] sm:$0xf]
    %v170 = vld [vmem:[%s0 + $0x254] sm:$0xf]
    %v171 = vld [vmem:[%s0 + $0x2e4] sm:$0xf]
    %v172 = vunpack.c.l.bf16 %v166
    %v173 = vunpack.c.l.bf16 %v167
    %v174 = vunpack.c.l.bf16 %v168
    %v175 = vunpack.c.l.bf16 %v169
    %v176 = vunpack.c.l.bf16 %v170
    %v177 = vunpack.c.l.bf16 %v171
    %v178 = vld [vmem:[%s1 + $0x5] sm:$0x1]
    %v179 = vunpack.c.l.bf16 %v178
    %v180 = vlaneseq
    %v181 = vshrl.u32 %v180, 7
    %v182 = vsub.s32 0, %v181
    %v183 = vrot.slane %v179, %v182
    %v184 = vmul.f32 %v172, %v183
    %v185 = vmul.f32 %v173, %v183
    %v186 = vmul.f32 %v174, %v183
    %v187 = vmul.f32 %v175, %v183
    %v188 = vmul.f32 %v176, %v183
    %v189 = vmul.f32 %v177, %v183
    %v190 = vadd.f32 %v160, %v184
    %v191 = vadd.f32 %v161, %v185
    %v192 = vadd.f32 %v162, %v186
    %v193 = vadd.f32 %v163, %v187
    %v194 = vadd.f32 %v164, %v188
    %v195 = vadd.f32 %v165, %v189
    %v196 = vld [vmem:[%s0 + $0x18] sm:$0xf]
    %v197 = vld [vmem:[%s0 + $0xa8] sm:$0xf]
    %v198 = vld [vmem:[%s0 + $0x138] sm:$0xf]
    %v199 = vld [vmem:[%s0 + $0x1c8] sm:$0xf]
    %v200 = vld [vmem:[%s0 + $0x258] sm:$0xf]
    %v201 = vld [vmem:[%s0 + $0x2e8] sm:$0xf]
    %v202 = vunpack.c.l.bf16 %v196
    %v203 = vunpack.c.l.bf16 %v197
    %v204 = vunpack.c.l.bf16 %v198
    %v205 = vunpack.c.l.bf16 %v199
    %v206 = vunpack.c.l.bf16 %v200
    %v207 = vunpack.c.l.bf16 %v201
    %v208 = vld [vmem:[%s1 + $0x6] sm:$0x1]
    %v209 = vunpack.c.l.bf16 %v208
    %v210 = vlaneseq
    %v211 = vshrl.u32 %v210, 7
    %v212 = vsub.s32 0, %v211
    %v213 = vrot.slane %v209, %v212
    %v214 = vmul.f32 %v202, %v213
    %v215 = vmul.f32 %v203, %v213
    %v216 = vmul.f32 %v204, %v213
    %v217 = vmul.f32 %v205, %v213
    %v218 = vmul.f32 %v206, %v213
    %v219 = vmul.f32 %v207, %v213
    %v220 = vadd.f32 %v190, %v214
    %v221 = vadd.f32 %v191, %v215
    %v222 = vadd.f32 %v192, %v216
    %v223 = vadd.f32 %v193, %v217
    %v224 = vadd.f32 %v194, %v218
    %v225 = vadd.f32 %v195, %v219
    %v226 = vld [vmem:[%s0 + $0x1c] sm:$0xf]
    %v227 = vld [vmem:[%s0 + $0xac] sm:$0xf]
    %v228 = vld [vmem:[%s0 + $0x13c] sm:$0xf]
    %v229 = vld [vmem:[%s0 + $0x1cc] sm:$0xf]
    %v230 = vld [vmem:[%s0 + $0x25c] sm:$0xf]
    %v231 = vld [vmem:[%s0 + $0x2ec] sm:$0xf]
    %v232 = vunpack.c.l.bf16 %v226
    %v233 = vunpack.c.l.bf16 %v227
    %v234 = vunpack.c.l.bf16 %v228
    %v235 = vunpack.c.l.bf16 %v229
    %v236 = vunpack.c.l.bf16 %v230
    %v237 = vunpack.c.l.bf16 %v231
    %v238 = vld [vmem:[%s1 + $0x7] sm:$0x1]
    %v239 = vunpack.c.l.bf16 %v238
    %v240 = vlaneseq
    %v241 = vshrl.u32 %v240, 7
    %v242 = vsub.s32 0, %v241
    %v243 = vrot.slane %v239, %v242
    %v244 = vmul.f32 %v232, %v243
    %v245 = vmul.f32 %v233, %v243
    %v246 = vmul.f32 %v234, %v243
    %v247 = vmul.f32 %v235, %v243
    %v248 = vmul.f32 %v236, %v243
    %v249 = vmul.f32 %v237, %v243
    %v250 = vadd.f32 %v220, %v244
    %v251 = vadd.f32 %v221, %v245
    %v252 = vadd.f32 %v222, %v246
    %v253 = vadd.f32 %v223, %v247
    %v254 = vadd.f32 %v224, %v248
    %v255 = vadd.f32 %v225, %v249
    %v256 = vld [vmem:[%s0 + $0x20] sm:$0xf]
    %v257 = vld [vmem:[%s0 + $0xb0] sm:$0xf]
    %v258 = vld [vmem:[%s0 + $0x140] sm:$0xf]
    %v259 = vld [vmem:[%s0 + $0x1d0] sm:$0xf]
    %v260 = vld [vmem:[%s0 + $0x260] sm:$0xf]
    %v261 = vld [vmem:[%s0 + $0x2f0] sm:$0xf]
    %v262 = vunpack.c.l.bf16 %v256
    %v263 = vunpack.c.l.bf16 %v257
    %v264 = vunpack.c.l.bf16 %v258
    %v265 = vunpack.c.l.bf16 %v259
    %v266 = vunpack.c.l.bf16 %v260
    %v267 = vunpack.c.l.bf16 %v261
    %v268 = vld [vmem:[%s1 + $0x8] sm:$0x1]
    %v269 = vunpack.c.l.bf16 %v268
    %v270 = vlaneseq
    %v271 = vshrl.u32 %v270, 7
    %v272 = vsub.s32 0, %v271
    %v273 = vrot.slane %v269, %v272
    %v274 = vmul.f32 %v262, %v273
    %v275 = vmul.f32 %v263, %v273
    %v276 = vmul.f32 %v264, %v273
    %v277 = vmul.f32 %v265, %v273
    %v278 = vmul.f32 %v266, %v273
    %v279 = vmul.f32 %v267, %v273
    %v280 = vadd.f32 %v250, %v274
    %v281 = vadd.f32 %v251, %v275
    %v282 = vadd.f32 %v252, %v276
    %v283 = vadd.f32 %v253, %v277
    %v284 = vadd.f32 %v254, %v278
    %v285 = vadd.f32 %v255, %v279
    %v286 = vld [vmem:[%s0 + $0x24] sm:$0xf]
    %v287 = vld [vmem:[%s0 + $0xb4] sm:$0xf]
    %v288 = vld [vmem:[%s0 + $0x144] sm:$0xf]
    %v289 = vld [vmem:[%s0 + $0x1d4] sm:$0xf]
    %v290 = vld [vmem:[%s0 + $0x264] sm:$0xf]
    %v291 = vld [vmem:[%s0 + $0x2f4] sm:$0xf]
    %v292 = vunpack.c.l.bf16 %v286
    %v293 = vunpack.c.l.bf16 %v287
    %v294 = vunpack.c.l.bf16 %v288
    %v295 = vunpack.c.l.bf16 %v289
    %v296 = vunpack.c.l.bf16 %v290
    %v297 = vunpack.c.l.bf16 %v291
    %v298 = vld [vmem:[%s1 + $0x9] sm:$0x1]
    %v299 = vunpack.c.l.bf16 %v298
    %v300 = vlaneseq
    %v301 = vshrl.u32 %v300, 7
    %v302 = vsub.s32 0, %v301
    %v303 = vrot.slane %v299, %v302
    %v304 = vmul.f32 %v292, %v303
    %v305 = vmul.f32 %v293, %v303
    %v306 = vmul.f32 %v294, %v303
    %v307 = vmul.f32 %v295, %v303
    %v308 = vmul.f32 %v296, %v303
    %v309 = vmul.f32 %v297, %v303
    %v310 = vadd.f32 %v280, %v304
    %v311 = vadd.f32 %v281, %v305
    %v312 = vadd.f32 %v282, %v306
    %v313 = vadd.f32 %v283, %v307
    %v314 = vadd.f32 %v284, %v308
    %v315 = vadd.f32 %v285, %v309
    %v316 = vld [vmem:[%s0 + $0x28] sm:$0xf]
    %v317 = vld [vmem:[%s0 + $0xb8] sm:$0xf]
    %v318 = vld [vmem:[%s0 + $0x148] sm:$0xf]
    %v319 = vld [vmem:[%s0 + $0x1d8] sm:$0xf]
    %v320 = vld [vmem:[%s0 + $0x268] sm:$0xf]
    %v321 = vld [vmem:[%s0 + $0x2f8] sm:$0xf]
    %v322 = vunpack.c.l.bf16 %v316
    %v323 = vunpack.c.l.bf16 %v317
    %v324 = vunpack.c.l.bf16 %v318
    %v325 = vunpack.c.l.bf16 %v319
    %v326 = vunpack.c.l.bf16 %v320
    %v327 = vunpack.c.l.bf16 %v321
    %v328 = vld [vmem:[%s1 + $0xa] sm:$0x1]
    %v329 = vunpack.c.l.bf16 %v328
    %v330 = vlaneseq
    %v331 = vshrl.u32 %v330, 7
    %v332 = vsub.s32 0, %v331
    %v333 = vrot.slane %v329, %v332
    %v334 = vmul.f32 %v322, %v333
    %v335 = vmul.f32 %v323, %v333
    %v336 = vmul.f32 %v324, %v333
    %v337 = vmul.f32 %v325, %v333
    %v338 = vmul.f32 %v326, %v333
    %v339 = vmul.f32 %v327, %v333
    %v340 = vadd.f32 %v310, %v334
    %v341 = vadd.f32 %v311, %v335
    %v342 = vadd.f32 %v312, %v336
    %v343 = vadd.f32 %v313, %v337
    %v344 = vadd.f32 %v314, %v338
    %v345 = vadd.f32 %v315, %v339
    %v346 = vld [vmem:[%s0 + $0x2c] sm:$0xf]
    %v347 = vld [vmem:[%s0 + $0xbc] sm:$0xf]
    %v348 = vld [vmem:[%s0 + $0x14c] sm:$0xf]
    %v349 = vld [vmem:[%s0 + $0x1dc] sm:$0xf]
    %v350 = vld [vmem:[%s0 + $0x26c] sm:$0xf]
    %v351 = vld [vmem:[%s0 + $0x2fc] sm:$0xf]
    %v352 = vunpack.c.l.bf16 %v346
    %v353 = vunpack.c.l.bf16 %v347
    %v354 = vunpack.c.l.bf16 %v348
    %v355 = vunpack.c.l.bf16 %v349
    %v356 = vunpack.c.l.bf16 %v350
    %v357 = vunpack.c.l.bf16 %v351
    %v358 = vld [vmem:[%s1 + $0xb] sm:$0x1]
    %v359 = vunpack.c.l.bf16 %v358
    %v360 = vlaneseq
    %v361 = vshrl.u32 %v360, 7
    %v362 = vsub.s32 0, %v361
    %v363 = vrot.slane %v359, %v362
    %v364 = vmul.f32 %v352, %v363
    %v365 = vmul.f32 %v353, %v363
    %v366 = vmul.f32 %v354, %v363
    %v367 = vmul.f32 %v355, %v363
    %v368 = vmul.f32 %v356, %v363
    %v369 = vmul.f32 %v357, %v363
    %v370 = vadd.f32 %v340, %v364
    %v371 = vadd.f32 %v341, %v365
    %v372 = vadd.f32 %v342, %v366
    %v373 = vadd.f32 %v343, %v367
    %v374 = vadd.f32 %v344, %v368
    %v375 = vadd.f32 %v345, %v369
    %v376 = vld [vmem:[%s0 + $0x30] sm:$0xf]
    %v377 = vld [vmem:[%s0 + $0xc0] sm:$0xf]
    %v378 = vld [vmem:[%s0 + $0x150] sm:$0xf]
    %v379 = vld [vmem:[%s0 + $0x1e0] sm:$0xf]
    %v380 = vld [vmem:[%s0 + $0x270] sm:$0xf]
    %v381 = vld [vmem:[%s0 + $0x300] sm:$0xf]
    %v382 = vunpack.c.l.bf16 %v376
    %v383 = vunpack.c.l.bf16 %v377
    %v384 = vunpack.c.l.bf16 %v378
    %v385 = vunpack.c.l.bf16 %v379
    %v386 = vunpack.c.l.bf16 %v380
    %v387 = vunpack.c.l.bf16 %v381
    %v388 = vld [vmem:[%s1 + $0xc] sm:$0x1]
    %v389 = vunpack.c.l.bf16 %v388
    %v390 = vlaneseq
    %v391 = vshrl.u32 %v390, 7
    %v392 = vsub.s32 0, %v391
    %v393 = vrot.slane %v389, %v392
    %v394 = vmul.f32 %v382, %v393
    %v395 = vmul.f32 %v383, %v393
    %v396 = vmul.f32 %v384, %v393
    %v397 = vmul.f32 %v385, %v393
    %v398 = vmul.f32 %v386, %v393
    %v399 = vmul.f32 %v387, %v393
    %v400 = vadd.f32 %v370, %v394
    %v401 = vadd.f32 %v371, %v395
    %v402 = vadd.f32 %v372, %v396
    %v403 = vadd.f32 %v373, %v397
    %v404 = vadd.f32 %v374, %v398
    %v405 = vadd.f32 %v375, %v399
    %v406 = vld [vmem:[%s0 + $0x34] sm:$0xf]
    %v407 = vld [vmem:[%s0 + $0xc4] sm:$0xf]
    %v408 = vld [vmem:[%s0 + $0x154] sm:$0xf]
    %v409 = vld [vmem:[%s0 + $0x1e4] sm:$0xf]
    %v410 = vld [vmem:[%s0 + $0x274] sm:$0xf]
    %v411 = vld [vmem:[%s0 + $0x304] sm:$0xf]
    %v412 = vunpack.c.l.bf16 %v406
    %v413 = vunpack.c.l.bf16 %v407
    %v414 = vunpack.c.l.bf16 %v408
    %v415 = vunpack.c.l.bf16 %v409
    %v416 = vunpack.c.l.bf16 %v410
    %v417 = vunpack.c.l.bf16 %v411
    %v418 = vld [vmem:[%s1 + $0xd] sm:$0x1]
    %v419 = vunpack.c.l.bf16 %v418
    %v420 = vlaneseq
    %v421 = vshrl.u32 %v420, 7
    %v422 = vsub.s32 0, %v421
    %v423 = vrot.slane %v419, %v422
    %v424 = vmul.f32 %v412, %v423
    %v425 = vmul.f32 %v413, %v423
    %v426 = vmul.f32 %v414, %v423
    %v427 = vmul.f32 %v415, %v423
    %v428 = vmul.f32 %v416, %v423
    %v429 = vmul.f32 %v417, %v423
    %v430 = vadd.f32 %v400, %v424
    %v431 = vadd.f32 %v401, %v425
    %v432 = vadd.f32 %v402, %v426
    %v433 = vadd.f32 %v403, %v427
    %v434 = vadd.f32 %v404, %v428
    %v435 = vadd.f32 %v405, %v429
    %v436 = vld [vmem:[%s0 + $0x38] sm:$0xf]
    %v437 = vld [vmem:[%s0 + $0xc8] sm:$0xf]
    %v438 = vld [vmem:[%s0 + $0x158] sm:$0xf]
    %v439 = vld [vmem:[%s0 + $0x1e8] sm:$0xf]
    %v440 = vld [vmem:[%s0 + $0x278] sm:$0xf]
    %v441 = vld [vmem:[%s0 + $0x308] sm:$0xf]
    %v442 = vunpack.c.l.bf16 %v436
    %v443 = vunpack.c.l.bf16 %v437
    %v444 = vunpack.c.l.bf16 %v438
    %v445 = vunpack.c.l.bf16 %v439
    %v446 = vunpack.c.l.bf16 %v440
    %v447 = vunpack.c.l.bf16 %v441
    %v448 = vld [vmem:[%s1 + $0xe] sm:$0x1]
    %v449 = vunpack.c.l.bf16 %v448
    %v450 = vlaneseq
    %v451 = vshrl.u32 %v450, 7
    %v452 = vsub.s32 0, %v451
    %v453 = vrot.slane %v449, %v452
    %v454 = vmul.f32 %v442, %v453
    %v455 = vmul.f32 %v443, %v453
    %v456 = vmul.f32 %v444, %v453
    %v457 = vmul.f32 %v445, %v453
    %v458 = vmul.f32 %v446, %v453
    %v459 = vmul.f32 %v447, %v453
    %v460 = vadd.f32 %v430, %v454
    %v461 = vadd.f32 %v431, %v455
    %v462 = vadd.f32 %v432, %v456
    %v463 = vadd.f32 %v433, %v457
    %v464 = vadd.f32 %v434, %v458
    %v465 = vadd.f32 %v435, %v459
    %v466 = vld [vmem:[%s0 + $0x3c] sm:$0xf]
    %v467 = vld [vmem:[%s0 + $0xcc] sm:$0xf]
    %v468 = vld [vmem:[%s0 + $0x15c] sm:$0xf]
    %v469 = vld [vmem:[%s0 + $0x1ec] sm:$0xf]
    %v470 = vld [vmem:[%s0 + $0x27c] sm:$0xf]
    %v471 = vld [vmem:[%s0 + $0x30c] sm:$0xf]
    %v472 = vunpack.c.l.bf16 %v466
    %v473 = vunpack.c.l.bf16 %v467
    %v474 = vunpack.c.l.bf16 %v468
    %v475 = vunpack.c.l.bf16 %v469
    %v476 = vunpack.c.l.bf16 %v470
    %v477 = vunpack.c.l.bf16 %v471
    %v478 = vld [vmem:[%s1 + $0xf] sm:$0x1]
    %v479 = vunpack.c.l.bf16 %v478
    %v480 = vlaneseq
    %v481 = vshrl.u32 %v480, 7
    %v482 = vsub.s32 0, %v481
    %v483 = vrot.slane %v479, %v482
    %v484 = vmul.f32 %v472, %v483
    %v485 = vmul.f32 %v473, %v483
    %v486 = vmul.f32 %v474, %v483
    %v487 = vmul.f32 %v475, %v483
    %v488 = vmul.f32 %v476, %v483
    %v489 = vmul.f32 %v477, %v483
    %v490 = vadd.f32 %v460, %v484
    %v491 = vadd.f32 %v461, %v485
    %v492 = vadd.f32 %v462, %v486
    %v493 = vadd.f32 %v463, %v487
    %v494 = vadd.f32 %v464, %v488
    %v495 = vadd.f32 %v465, %v489
    %v496 = vld [vmem:[%s0 + $0x40] sm:$0xf]
    %v497 = vld [vmem:[%s0 + $0xd0] sm:$0xf]
    %v498 = vld [vmem:[%s0 + $0x160] sm:$0xf]
    %v499 = vld [vmem:[%s0 + $0x1f0] sm:$0xf]
    %v500 = vld [vmem:[%s0 + $0x280] sm:$0xf]
    %v501 = vld [vmem:[%s0 + $0x310] sm:$0xf]
    %v502 = vunpack.c.l.bf16 %v496
    %v503 = vunpack.c.l.bf16 %v497
    %v504 = vunpack.c.l.bf16 %v498
    %v505 = vunpack.c.l.bf16 %v499
    %v506 = vunpack.c.l.bf16 %v500
    %v507 = vunpack.c.l.bf16 %v501
    %v508 = vld [vmem:[%s1 + $0x10] sm:$0x1]
    %v509 = vunpack.c.l.bf16 %v508
    %v510 = vlaneseq
    %v511 = vshrl.u32 %v510, 7
    %v512 = vsub.s32 0, %v511
    %v513 = vrot.slane %v509, %v512
    %v514 = vmul.f32 %v502, %v513
    %v515 = vmul.f32 %v503, %v513
    %v516 = vmul.f32 %v504, %v513
    %v517 = vmul.f32 %v505, %v513
    %v518 = vmul.f32 %v506, %v513
    %v519 = vmul.f32 %v507, %v513
    %v520 = vadd.f32 %v490, %v514
    %v521 = vadd.f32 %v491, %v515
    %v522 = vadd.f32 %v492, %v516
    %v523 = vadd.f32 %v493, %v517
    %v524 = vadd.f32 %v494, %v518
    %v525 = vadd.f32 %v495, %v519
    %v526 = vld [vmem:[%s0 + $0x44] sm:$0xf]
    %v527 = vld [vmem:[%s0 + $0xd4] sm:$0xf]
    %v528 = vld [vmem:[%s0 + $0x164] sm:$0xf]
    %v529 = vld [vmem:[%s0 + $0x1f4] sm:$0xf]
    %v530 = vld [vmem:[%s0 + $0x284] sm:$0xf]
    %v531 = vld [vmem:[%s0 + $0x314] sm:$0xf]
    %v532 = vunpack.c.l.bf16 %v526
    %v533 = vunpack.c.l.bf16 %v527
    %v534 = vunpack.c.l.bf16 %v528
    %v535 = vunpack.c.l.bf16 %v529
    %v536 = vunpack.c.l.bf16 %v530
    %v537 = vunpack.c.l.bf16 %v531
    %v538 = vld [vmem:[%s1 + $0x11] sm:$0x1]
    %v539 = vunpack.c.l.bf16 %v538
    %v540 = vlaneseq
    %v541 = vshrl.u32 %v540, 7
    %v542 = vsub.s32 0, %v541
    %v543 = vrot.slane %v539, %v542
    %v544 = vmul.f32 %v532, %v543
    %v545 = vmul.f32 %v533, %v543
    %v546 = vmul.f32 %v534, %v543
    %v547 = vmul.f32 %v535, %v543
    %v548 = vmul.f32 %v536, %v543
    %v549 = vmul.f32 %v537, %v543
    %v550 = vadd.f32 %v520, %v544
    %v551 = vadd.f32 %v521, %v545
    %v552 = vadd.f32 %v522, %v546
    %v553 = vadd.f32 %v523, %v547
    %v554 = vadd.f32 %v524, %v548
    %v555 = vadd.f32 %v525, %v549
    %v556 = vld [vmem:[%s0 + $0x48] sm:$0xf]
    %v557 = vld [vmem:[%s0 + $0xd8] sm:$0xf]
    %v558 = vld [vmem:[%s0 + $0x168] sm:$0xf]
    %v559 = vld [vmem:[%s0 + $0x1f8] sm:$0xf]
    %v560 = vld [vmem:[%s0 + $0x288] sm:$0xf]
    %v561 = vld [vmem:[%s0 + $0x318] sm:$0xf]
    %v562 = vunpack.c.l.bf16 %v556
    %v563 = vunpack.c.l.bf16 %v557
    %v564 = vunpack.c.l.bf16 %v558
    %v565 = vunpack.c.l.bf16 %v559
    %v566 = vunpack.c.l.bf16 %v560
    %v567 = vunpack.c.l.bf16 %v561
    %v568 = vld [vmem:[%s1 + $0x12] sm:$0x1]
    %v569 = vunpack.c.l.bf16 %v568
    %v570 = vlaneseq
    %v571 = vshrl.u32 %v570, 7
    %v572 = vsub.s32 0, %v571
    %v573 = vrot.slane %v569, %v572
    %v574 = vmul.f32 %v562, %v573
    %v575 = vmul.f32 %v563, %v573
    %v576 = vmul.f32 %v564, %v573
    %v577 = vmul.f32 %v565, %v573
    %v578 = vmul.f32 %v566, %v573
    %v579 = vmul.f32 %v567, %v573
    %v580 = vadd.f32 %v550, %v574
    %v581 = vadd.f32 %v551, %v575
    %v582 = vadd.f32 %v552, %v576
    %v583 = vadd.f32 %v553, %v577
    %v584 = vadd.f32 %v554, %v578
    %v585 = vadd.f32 %v555, %v579
    %v586 = vld [vmem:[%s0 + $0x4c] sm:$0xf]
    %v587 = vld [vmem:[%s0 + $0xdc] sm:$0xf]
    %v588 = vld [vmem:[%s0 + $0x16c] sm:$0xf]
    %v589 = vld [vmem:[%s0 + $0x1fc] sm:$0xf]
    %v590 = vld [vmem:[%s0 + $0x28c] sm:$0xf]
    %v591 = vld [vmem:[%s0 + $0x31c] sm:$0xf]
    %v592 = vunpack.c.l.bf16 %v586
    %v593 = vunpack.c.l.bf16 %v587
    %v594 = vunpack.c.l.bf16 %v588
    %v595 = vunpack.c.l.bf16 %v589
    %v596 = vunpack.c.l.bf16 %v590
    %v597 = vunpack.c.l.bf16 %v591
    %v598 = vld [vmem:[%s1 + $0x13] sm:$0x1]
    %v599 = vunpack.c.l.bf16 %v598
    %v600 = vlaneseq
    %v601 = vshrl.u32 %v600, 7
    %v602 = vsub.s32 0, %v601
    %v603 = vrot.slane %v599, %v602
    %v604 = vmul.f32 %v592, %v603
    %v605 = vmul.f32 %v593, %v603
    %v606 = vmul.f32 %v594, %v603
    %v607 = vmul.f32 %v595, %v603
    %v608 = vmul.f32 %v596, %v603
    %v609 = vmul.f32 %v597, %v603
    %v610 = vadd.f32 %v580, %v604
    %v611 = vadd.f32 %v581, %v605
    %v612 = vadd.f32 %v582, %v606
    %v613 = vadd.f32 %v583, %v607
    %v614 = vadd.f32 %v584, %v608
    %v615 = vadd.f32 %v585, %v609
    %v616 = vld [vmem:[%s0 + $0x50] sm:$0xf]
    %v617 = vld [vmem:[%s0 + $0xe0] sm:$0xf]
    %v618 = vld [vmem:[%s0 + $0x170] sm:$0xf]
    %v619 = vld [vmem:[%s0 + $0x200] sm:$0xf]
    %v620 = vld [vmem:[%s0 + $0x290] sm:$0xf]
    %v621 = vld [vmem:[%s0 + $0x320] sm:$0xf]
    %v622 = vunpack.c.l.bf16 %v616
    %v623 = vunpack.c.l.bf16 %v617
    %v624 = vunpack.c.l.bf16 %v618
    %v625 = vunpack.c.l.bf16 %v619
    %v626 = vunpack.c.l.bf16 %v620
    %v627 = vunpack.c.l.bf16 %v621
    %v628 = vld [vmem:[%s1 + $0x14] sm:$0x1]
    %v629 = vunpack.c.l.bf16 %v628
    %v630 = vlaneseq
    %v631 = vshrl.u32 %v630, 7
    %v632 = vsub.s32 0, %v631
    %v633 = vrot.slane %v629, %v632
    %v634 = vmul.f32 %v622, %v633
    %v635 = vmul.f32 %v623, %v633
    %v636 = vmul.f32 %v624, %v633
    %v637 = vmul.f32 %v625, %v633
    %v638 = vmul.f32 %v626, %v633
    %v639 = vmul.f32 %v627, %v633
    %v640 = vadd.f32 %v610, %v634
    %v641 = vadd.f32 %v611, %v635
    %v642 = vadd.f32 %v612, %v636
    %v643 = vadd.f32 %v613, %v637
    %v644 = vadd.f32 %v614, %v638
    %v645 = vadd.f32 %v615, %v639
    %v646 = vld [vmem:[%s0 + $0x54] sm:$0xf]
    %v647 = vld [vmem:[%s0 + $0xe4] sm:$0xf]
    %v648 = vld [vmem:[%s0 + $0x174] sm:$0xf]
    %v649 = vld [vmem:[%s0 + $0x204] sm:$0xf]
    %v650 = vld [vmem:[%s0 + $0x294] sm:$0xf]
    %v651 = vld [vmem:[%s0 + $0x324] sm:$0xf]
    %v652 = vunpack.c.l.bf16 %v646
    %v653 = vunpack.c.l.bf16 %v647
    %v654 = vunpack.c.l.bf16 %v648
    %v655 = vunpack.c.l.bf16 %v649
    %v656 = vunpack.c.l.bf16 %v650
    %v657 = vunpack.c.l.bf16 %v651
    %v658 = vld [vmem:[%s1 + $0x15] sm:$0x1]
    %v659 = vunpack.c.l.bf16 %v658
    %v660 = vlaneseq
    %v661 = vshrl.u32 %v660, 7
    %v662 = vsub.s32 0, %v661
    %v663 = vrot.slane %v659, %v662
    %v664 = vmul.f32 %v652, %v663
    %v665 = vmul.f32 %v653, %v663
    %v666 = vmul.f32 %v654, %v663
    %v667 = vmul.f32 %v655, %v663
    %v668 = vmul.f32 %v656, %v663
    %v669 = vmul.f32 %v657, %v663
    %v670 = vadd.f32 %v640, %v664
    %v671 = vadd.f32 %v641, %v665
    %v672 = vadd.f32 %v642, %v666
    %v673 = vadd.f32 %v643, %v667
    %v674 = vadd.f32 %v644, %v668
    %v675 = vadd.f32 %v645, %v669
    %v676 = vld [vmem:[%s0 + $0x58] sm:$0xf]
    %v677 = vld [vmem:[%s0 + $0xe8] sm:$0xf]
    %v678 = vld [vmem:[%s0 + $0x178] sm:$0xf]
    %v679 = vld [vmem:[%s0 + $0x208] sm:$0xf]
    %v680 = vld [vmem:[%s0 + $0x298] sm:$0xf]
    %v681 = vld [vmem:[%s0 + $0x328] sm:$0xf]
    %v682 = vunpack.c.l.bf16 %v676
    %v683 = vunpack.c.l.bf16 %v677
    %v684 = vunpack.c.l.bf16 %v678
    %v685 = vunpack.c.l.bf16 %v679
    %v686 = vunpack.c.l.bf16 %v680
    %v687 = vunpack.c.l.bf16 %v681
    %v688 = vld [vmem:[%s1 + $0x16] sm:$0x1]
    %v689 = vunpack.c.l.bf16 %v688
    %v690 = vlaneseq
    %v691 = vshrl.u32 %v690, 7
    %v692 = vsub.s32 0, %v691
    %v693 = vrot.slane %v689, %v692
    %v694 = vmul.f32 %v682, %v693
    %v695 = vmul.f32 %v683, %v693
    %v696 = vmul.f32 %v684, %v693
    %v697 = vmul.f32 %v685, %v693
    %v698 = vmul.f32 %v686, %v693
    %v699 = vmul.f32 %v687, %v693
    %v700 = vadd.f32 %v670, %v694
    %v701 = vadd.f32 %v671, %v695
    %v702 = vadd.f32 %v672, %v696
    %v703 = vadd.f32 %v673, %v697
    %v704 = vadd.f32 %v674, %v698
    %v705 = vadd.f32 %v675, %v699
    %v706 = vld [vmem:[%s0 + $0x5c] sm:$0xf]
    %v707 = vld [vmem:[%s0 + $0xec] sm:$0xf]
    %v708 = vld [vmem:[%s0 + $0x17c] sm:$0xf]
    %v709 = vld [vmem:[%s0 + $0x20c] sm:$0xf]
    %v710 = vld [vmem:[%s0 + $0x29c] sm:$0xf]
    %v711 = vld [vmem:[%s0 + $0x32c] sm:$0xf]
    %v712 = vunpack.c.l.bf16 %v706
    %v713 = vunpack.c.l.bf16 %v707
    %v714 = vunpack.c.l.bf16 %v708
    %v715 = vunpack.c.l.bf16 %v709
    %v716 = vunpack.c.l.bf16 %v710
    %v717 = vunpack.c.l.bf16 %v711
    %v718 = vld [vmem:[%s1 + $0x17] sm:$0x1]
    %v719 = vunpack.c.l.bf16 %v718
    %v720 = vlaneseq
    %v721 = vshrl.u32 %v720, 7
    %v722 = vsub.s32 0, %v721
    %v723 = vrot.slane %v719, %v722
    %v724 = vmul.f32 %v712, %v723
    %v725 = vmul.f32 %v713, %v723
    %v726 = vmul.f32 %v714, %v723
    %v727 = vmul.f32 %v715, %v723
    %v728 = vmul.f32 %v716, %v723
    %v729 = vmul.f32 %v717, %v723
    %v730 = vadd.f32 %v700, %v724
    %v731 = vadd.f32 %v701, %v725
    %v732 = vadd.f32 %v702, %v726
    %v733 = vadd.f32 %v703, %v727
    %v734 = vadd.f32 %v704, %v728
    %v735 = vadd.f32 %v705, %v729
    %v736 = vld [vmem:[%s0 + $0x60] sm:$0xf]
    %v737 = vld [vmem:[%s0 + $0xf0] sm:$0xf]
    %v738 = vld [vmem:[%s0 + $0x180] sm:$0xf]
    %v739 = vld [vmem:[%s0 + $0x210] sm:$0xf]
    %v740 = vld [vmem:[%s0 + $0x2a0] sm:$0xf]
    %v741 = vld [vmem:[%s0 + $0x330] sm:$0xf]
    %v742 = vunpack.c.l.bf16 %v736
    %v743 = vunpack.c.l.bf16 %v737
    %v744 = vunpack.c.l.bf16 %v738
    %v745 = vunpack.c.l.bf16 %v739
    %v746 = vunpack.c.l.bf16 %v740
    %v747 = vunpack.c.l.bf16 %v741
    %v748 = vld [vmem:[%s1 + $0x18] sm:$0x1]
    %v749 = vunpack.c.l.bf16 %v748
    %v750 = vlaneseq
    %v751 = vshrl.u32 %v750, 7
    %v752 = vsub.s32 0, %v751
    %v753 = vrot.slane %v749, %v752
    %v754 = vmul.f32 %v742, %v753
    %v755 = vmul.f32 %v743, %v753
    %v756 = vmul.f32 %v744, %v753
    %v757 = vmul.f32 %v745, %v753
    %v758 = vmul.f32 %v746, %v753
    %v759 = vmul.f32 %v747, %v753
    %v760 = vadd.f32 %v730, %v754
    %v761 = vadd.f32 %v731, %v755
    %v762 = vadd.f32 %v732, %v756
    %v763 = vadd.f32 %v733, %v757
    %v764 = vadd.f32 %v734, %v758
    %v765 = vadd.f32 %v735, %v759
    %v766 = vld [vmem:[%s0 + $0x64] sm:$0xf]
    %v767 = vld [vmem:[%s0 + $0xf4] sm:$0xf]
    %v768 = vld [vmem:[%s0 + $0x184] sm:$0xf]
    %v769 = vld [vmem:[%s0 + $0x214] sm:$0xf]
    %v770 = vld [vmem:[%s0 + $0x2a4] sm:$0xf]
    %v771 = vld [vmem:[%s0 + $0x334] sm:$0xf]
    %v772 = vunpack.c.l.bf16 %v766
    %v773 = vunpack.c.l.bf16 %v767
    %v774 = vunpack.c.l.bf16 %v768
    %v775 = vunpack.c.l.bf16 %v769
    %v776 = vunpack.c.l.bf16 %v770
    %v777 = vunpack.c.l.bf16 %v771
    %v778 = vld [vmem:[%s1 + $0x19] sm:$0x1]
    %v779 = vunpack.c.l.bf16 %v778
    %v780 = vlaneseq
    %v781 = vshrl.u32 %v780, 7
    %v782 = vsub.s32 0, %v781
    %v783 = vrot.slane %v779, %v782
    %v784 = vmul.f32 %v772, %v783
    %v785 = vmul.f32 %v773, %v783
    %v786 = vmul.f32 %v774, %v783
    %v787 = vmul.f32 %v775, %v783
    %v788 = vmul.f32 %v776, %v783
    %v789 = vmul.f32 %v777, %v783
    %v790 = vadd.f32 %v760, %v784
    %v791 = vadd.f32 %v761, %v785
    %v792 = vadd.f32 %v762, %v786
    %v793 = vadd.f32 %v763, %v787
    %v794 = vadd.f32 %v764, %v788
    %v795 = vadd.f32 %v765, %v789
    %v796 = vld [vmem:[%s0 + $0x68] sm:$0xf]
    %v797 = vld [vmem:[%s0 + $0xf8] sm:$0xf]
    %v798 = vld [vmem:[%s0 + $0x188] sm:$0xf]
    %v799 = vld [vmem:[%s0 + $0x218] sm:$0xf]
    %v800 = vld [vmem:[%s0 + $0x2a8] sm:$0xf]
    %v801 = vld [vmem:[%s0 + $0x338] sm:$0xf]
    %v802 = vunpack.c.l.bf16 %v796
    %v803 = vunpack.c.l.bf16 %v797
    %v804 = vunpack.c.l.bf16 %v798
    %v805 = vunpack.c.l.bf16 %v799
    %v806 = vunpack.c.l.bf16 %v800
    %v807 = vunpack.c.l.bf16 %v801
    %v808 = vld [vmem:[%s1 + $0x1a] sm:$0x1]
    %v809 = vunpack.c.l.bf16 %v808
    %v810 = vlaneseq
    %v811 = vshrl.u32 %v810, 7
    %v812 = vsub.s32 0, %v811
    %v813 = vrot.slane %v809, %v812
    %v814 = vmul.f32 %v802, %v813
    %v815 = vmul.f32 %v803, %v813
    %v816 = vmul.f32 %v804, %v813
    %v817 = vmul.f32 %v805, %v813
    %v818 = vmul.f32 %v806, %v813
    %v819 = vmul.f32 %v807, %v813
    %v820 = vadd.f32 %v790, %v814
    %v821 = vadd.f32 %v791, %v815
    %v822 = vadd.f32 %v792, %v816
    %v823 = vadd.f32 %v793, %v817
    %v824 = vadd.f32 %v794, %v818
    %v825 = vadd.f32 %v795, %v819
    %v826 = vld [vmem:[%s0 + $0x6c] sm:$0xf]
    %v827 = vld [vmem:[%s0 + $0xfc] sm:$0xf]
    %v828 = vld [vmem:[%s0 + $0x18c] sm:$0xf]
    %v829 = vld [vmem:[%s0 + $0x21c] sm:$0xf]
    %v830 = vld [vmem:[%s0 + $0x2ac] sm:$0xf]
    %v831 = vld [vmem:[%s0 + $0x33c] sm:$0xf]
    %v832 = vunpack.c.l.bf16 %v826
    %v833 = vunpack.c.l.bf16 %v827
    %v834 = vunpack.c.l.bf16 %v828
    %v835 = vunpack.c.l.bf16 %v829
    %v836 = vunpack.c.l.bf16 %v830
    %v837 = vunpack.c.l.bf16 %v831
    %v838 = vld [vmem:[%s1 + $0x1b] sm:$0x1]
    %v839 = vunpack.c.l.bf16 %v838
    %v840 = vlaneseq
    %v841 = vshrl.u32 %v840, 7
    %v842 = vsub.s32 0, %v841
    %v843 = vrot.slane %v839, %v842
    %v844 = vmul.f32 %v832, %v843
    %v845 = vmul.f32 %v833, %v843
    %v846 = vmul.f32 %v834, %v843
    %v847 = vmul.f32 %v835, %v843
    %v848 = vmul.f32 %v836, %v843
    %v849 = vmul.f32 %v837, %v843
    %v850 = vadd.f32 %v820, %v844
    %v851 = vadd.f32 %v821, %v845
    %v852 = vadd.f32 %v822, %v846
    %v853 = vadd.f32 %v823, %v847
    %v854 = vadd.f32 %v824, %v848
    %v855 = vadd.f32 %v825, %v849
    %v856 = vld [vmem:[%s0 + $0x70] sm:$0xf]
    %v857 = vld [vmem:[%s0 + $0x100] sm:$0xf]
    %v858 = vld [vmem:[%s0 + $0x190] sm:$0xf]
    %v859 = vld [vmem:[%s0 + $0x220] sm:$0xf]
    %v860 = vld [vmem:[%s0 + $0x2b0] sm:$0xf]
    %v861 = vld [vmem:[%s0 + $0x340] sm:$0xf]
    %v862 = vunpack.c.l.bf16 %v856
    %v863 = vunpack.c.l.bf16 %v857
    %v864 = vunpack.c.l.bf16 %v858
    %v865 = vunpack.c.l.bf16 %v859
    %v866 = vunpack.c.l.bf16 %v860
    %v867 = vunpack.c.l.bf16 %v861
    %v868 = vld [vmem:[%s1 + $0x1c] sm:$0x1]
    %v869 = vunpack.c.l.bf16 %v868
    %v870 = vlaneseq
    %v871 = vshrl.u32 %v870, 7
    %v872 = vsub.s32 0, %v871
    %v873 = vrot.slane %v869, %v872
    %v874 = vmul.f32 %v862, %v873
    %v875 = vmul.f32 %v863, %v873
    %v876 = vmul.f32 %v864, %v873
    %v877 = vmul.f32 %v865, %v873
    %v878 = vmul.f32 %v866, %v873
    %v879 = vmul.f32 %v867, %v873
    %v880 = vadd.f32 %v850, %v874
    %v881 = vadd.f32 %v851, %v875
    %v882 = vadd.f32 %v852, %v876
    %v883 = vadd.f32 %v853, %v877
    %v884 = vadd.f32 %v854, %v878
    %v885 = vadd.f32 %v855, %v879
    %v886 = vld [vmem:[%s0 + $0x74] sm:$0xf]
    %v887 = vld [vmem:[%s0 + $0x104] sm:$0xf]
    %v888 = vld [vmem:[%s0 + $0x194] sm:$0xf]
    %v889 = vld [vmem:[%s0 + $0x224] sm:$0xf]
    %v890 = vld [vmem:[%s0 + $0x2b4] sm:$0xf]
    %v891 = vld [vmem:[%s0 + $0x344] sm:$0xf]
    %v892 = vunpack.c.l.bf16 %v886
    %v893 = vunpack.c.l.bf16 %v887
    %v894 = vunpack.c.l.bf16 %v888
    %v895 = vunpack.c.l.bf16 %v889
    %v896 = vunpack.c.l.bf16 %v890
    %v897 = vunpack.c.l.bf16 %v891
    %v898 = vld [vmem:[%s1 + $0x1d] sm:$0x1]
    %v899 = vunpack.c.l.bf16 %v898
    %v900 = vlaneseq
    %v901 = vshrl.u32 %v900, 7
    %v902 = vsub.s32 0, %v901
    %v903 = vrot.slane %v899, %v902
    %v904 = vmul.f32 %v892, %v903
    %v905 = vmul.f32 %v893, %v903
    %v906 = vmul.f32 %v894, %v903
    %v907 = vmul.f32 %v895, %v903
    %v908 = vmul.f32 %v896, %v903
    %v909 = vmul.f32 %v897, %v903
    %v910 = vadd.f32 %v880, %v904
    %v911 = vadd.f32 %v881, %v905
    %v912 = vadd.f32 %v882, %v906
    %v913 = vadd.f32 %v883, %v907
    %v914 = vadd.f32 %v884, %v908
    %v915 = vadd.f32 %v885, %v909
    %v916 = vld [vmem:[%s0 + $0x78] sm:$0xf]
    %v917 = vld [vmem:[%s0 + $0x108] sm:$0xf]
    %v918 = vld [vmem:[%s0 + $0x198] sm:$0xf]
    %v919 = vld [vmem:[%s0 + $0x228] sm:$0xf]
    %v920 = vld [vmem:[%s0 + $0x2b8] sm:$0xf]
    %v921 = vld [vmem:[%s0 + $0x348] sm:$0xf]
    %v922 = vunpack.c.l.bf16 %v916
    %v923 = vunpack.c.l.bf16 %v917
    %v924 = vunpack.c.l.bf16 %v918
    %v925 = vunpack.c.l.bf16 %v919
    %v926 = vunpack.c.l.bf16 %v920
    %v927 = vunpack.c.l.bf16 %v921
    %v928 = vld [vmem:[%s1 + $0x1e] sm:$0x1]
    %v929 = vunpack.c.l.bf16 %v928
    %v930 = vlaneseq
    %v931 = vshrl.u32 %v930, 7
    %v932 = vsub.s32 0, %v931
    %v933 = vrot.slane %v929, %v932
    %v934 = vmul.f32 %v922, %v933
    %v935 = vmul.f32 %v923, %v933
    %v936 = vmul.f32 %v924, %v933
    %v937 = vmul.f32 %v925, %v933
    %v938 = vmul.f32 %v926, %v933
    %v939 = vmul.f32 %v927, %v933
    %v940 = vadd.f32 %v910, %v934
    %v941 = vadd.f32 %v911, %v935
    %v942 = vadd.f32 %v912, %v936
    %v943 = vadd.f32 %v913, %v937
    %v944 = vadd.f32 %v914, %v938
    %v945 = vadd.f32 %v915, %v939
    %v946 = vld [vmem:[%s0 + $0x7c] sm:$0xf]
    %v947 = vld [vmem:[%s0 + $0x10c] sm:$0xf]
    %v948 = vld [vmem:[%s0 + $0x19c] sm:$0xf]
    %v949 = vld [vmem:[%s0 + $0x22c] sm:$0xf]
    %v950 = vld [vmem:[%s0 + $0x2bc] sm:$0xf]
    %v951 = vld [vmem:[%s0 + $0x34c] sm:$0xf]
    %v952 = vunpack.c.l.bf16 %v946
    %v953 = vunpack.c.l.bf16 %v947
    %v954 = vunpack.c.l.bf16 %v948
    %v955 = vunpack.c.l.bf16 %v949
    %v956 = vunpack.c.l.bf16 %v950
    %v957 = vunpack.c.l.bf16 %v951
    %v958 = vld [vmem:[%s1 + $0x1f] sm:$0x1]
    %v959 = vunpack.c.l.bf16 %v958
    %v960 = vlaneseq
    %v961 = vshrl.u32 %v960, 7
    %v962 = vsub.s32 0, %v961
    %v963 = vrot.slane %v959, %v962
    %v964 = vmul.f32 %v952, %v963
    %v965 = vmul.f32 %v953, %v963
    %v966 = vmul.f32 %v954, %v963
    %v967 = vmul.f32 %v955, %v963
    %v968 = vmul.f32 %v956, %v963
    %v969 = vmul.f32 %v957, %v963
    %v970 = vadd.f32 %v940, %v964
    %v971 = vadd.f32 %v941, %v965
    %v972 = vadd.f32 %v942, %v966
    %v973 = vadd.f32 %v943, %v967
    %v974 = vadd.f32 %v944, %v968
    %v975 = vadd.f32 %v945, %v969
    %v976 = vld [vmem:[%s0 + $0x80] sm:$0xf]
    %v977 = vld [vmem:[%s0 + $0x110] sm:$0xf]
    %v978 = vld [vmem:[%s0 + $0x1a0] sm:$0xf]
    %v979 = vld [vmem:[%s0 + $0x230] sm:$0xf]
    %v980 = vld [vmem:[%s0 + $0x2c0] sm:$0xf]
    %v981 = vld [vmem:[%s0 + $0x350] sm:$0xf]
    %v982 = vunpack.c.l.bf16 %v976
    %v983 = vunpack.c.l.bf16 %v977
    %v984 = vunpack.c.l.bf16 %v978
    %v985 = vunpack.c.l.bf16 %v979
    %v986 = vunpack.c.l.bf16 %v980
    %v987 = vunpack.c.l.bf16 %v981
    %v988 = vld [vmem:[%s1 + $0x20] sm:$0x1]
    %v989 = vunpack.c.l.bf16 %v988
    %v990 = vlaneseq
    %v991 = vshrl.u32 %v990, 7
    %v992 = vsub.s32 0, %v991
    %v993 = vrot.slane %v989, %v992
    %v994 = vmul.f32 %v982, %v993
    %v995 = vmul.f32 %v983, %v993
    %v996 = vmul.f32 %v984, %v993
    %v997 = vmul.f32 %v985, %v993
    %v998 = vmul.f32 %v986, %v993
    %v999 = vmul.f32 %v987, %v993
    %v1000 = vadd.f32 %v970, %v994
    %v1001 = vadd.f32 %v971, %v995
    %v1002 = vadd.f32 %v972, %v996
    %v1003 = vadd.f32 %v973, %v997
    %v1004 = vadd.f32 %v974, %v998
    %v1005 = vadd.f32 %v975, %v999
    %v1006 = vld [vmem:[%s0 + $0x84] sm:$0xf]
    %v1007 = vld [vmem:[%s0 + $0x114] sm:$0xf]
    %v1008 = vld [vmem:[%s0 + $0x1a4] sm:$0xf]
    %v1009 = vld [vmem:[%s0 + $0x234] sm:$0xf]
    %v1010 = vld [vmem:[%s0 + $0x2c4] sm:$0xf]
    %v1011 = vld [vmem:[%s0 + $0x354] sm:$0xf]
    %v1012 = vunpack.c.l.bf16 %v1006
    %v1013 = vunpack.c.l.bf16 %v1007
    %v1014 = vunpack.c.l.bf16 %v1008
    %v1015 = vunpack.c.l.bf16 %v1009
    %v1016 = vunpack.c.l.bf16 %v1010
    %v1017 = vunpack.c.l.bf16 %v1011
    %v1018 = vld [vmem:[%s1 + $0x21] sm:$0x1]
    %v1019 = vunpack.c.l.bf16 %v1018
    %v1020 = vlaneseq
    %v1021 = vshrl.u32 %v1020, 7
    %v1022 = vsub.s32 0, %v1021
    %v1023 = vrot.slane %v1019, %v1022
    %v1024 = vmul.f32 %v1012, %v1023
    %v1025 = vmul.f32 %v1013, %v1023
    %v1026 = vmul.f32 %v1014, %v1023
    %v1027 = vmul.f32 %v1015, %v1023
    %v1028 = vmul.f32 %v1016, %v1023
    %v1029 = vmul.f32 %v1017, %v1023
    %v1030 = vadd.f32 %v1000, %v1024
    %v1031 = vadd.f32 %v1001, %v1025
    %v1032 = vadd.f32 %v1002, %v1026
    %v1033 = vadd.f32 %v1003, %v1027
    %v1034 = vadd.f32 %v1004, %v1028
    %v1035 = vadd.f32 %v1005, %v1029
    %v1036 = vld [vmem:[%s0 + $0x88] sm:$0xf]
    %v1037 = vld [vmem:[%s0 + $0x118] sm:$0xf]
    %v1038 = vld [vmem:[%s0 + $0x1a8] sm:$0xf]
    %v1039 = vld [vmem:[%s0 + $0x238] sm:$0xf]
    %v1040 = vld [vmem:[%s0 + $0x2c8] sm:$0xf]
    %v1041 = vld [vmem:[%s0 + $0x358] sm:$0xf]
    %v1042 = vunpack.c.l.bf16 %v1036
    %v1043 = vunpack.c.l.bf16 %v1037
    %v1044 = vunpack.c.l.bf16 %v1038
    %v1045 = vunpack.c.l.bf16 %v1039
    %v1046 = vunpack.c.l.bf16 %v1040
    %v1047 = vunpack.c.l.bf16 %v1041
    %v1048 = vld [vmem:[%s1 + $0x22] sm:$0x1]
    %v1049 = vunpack.c.l.bf16 %v1048
    %v1050 = vlaneseq
    %v1051 = vshrl.u32 %v1050, 7
    %v1052 = vsub.s32 0, %v1051
    %v1053 = vrot.slane %v1049, %v1052
    %v1054 = vmul.f32 %v1042, %v1053
    %v1055 = vmul.f32 %v1043, %v1053
    %v1056 = vmul.f32 %v1044, %v1053
    %v1057 = vmul.f32 %v1045, %v1053
    %v1058 = vmul.f32 %v1046, %v1053
    %v1059 = vmul.f32 %v1047, %v1053
    %v1060 = vadd.f32 %v1030, %v1054
    %v1061 = vadd.f32 %v1031, %v1055
    %v1062 = vadd.f32 %v1032, %v1056
    %v1063 = vadd.f32 %v1033, %v1057
    %v1064 = vadd.f32 %v1034, %v1058
    %v1065 = vadd.f32 %v1035, %v1059
    %v1066 = vld [vmem:[%s0 + $0x8c] sm:$0xf]
    %v1067 = vld [vmem:[%s0 + $0x11c] sm:$0xf]
    %v1068 = vld [vmem:[%s0 + $0x1ac] sm:$0xf]
    %v1069 = vld [vmem:[%s0 + $0x23c] sm:$0xf]
    %v1070 = vld [vmem:[%s0 + $0x2cc] sm:$0xf]
    %v1071 = vld [vmem:[%s0 + $0x35c] sm:$0xf]
    %v1072 = vunpack.c.l.bf16 %v1066
    %v1073 = vunpack.c.l.bf16 %v1067
    %v1074 = vunpack.c.l.bf16 %v1068
    %v1075 = vunpack.c.l.bf16 %v1069
    %v1076 = vunpack.c.l.bf16 %v1070
    %v1077 = vunpack.c.l.bf16 %v1071
    %v1078 = vld [vmem:[%s1 + $0x23] sm:$0x1]
    %v1079 = vunpack.c.l.bf16 %v1078
    %v1080 = vlaneseq
    %v1081 = vshrl.u32 %v1080, 7
    %v1082 = vsub.s32 0, %v1081
    %v1083 = vrot.slane %v1079, %v1082
    %v1084 = vmul.f32 %v1072, %v1083
    %v1085 = vmul.f32 %v1073, %v1083
    %v1086 = vmul.f32 %v1074, %v1083
    %v1087 = vmul.f32 %v1075, %v1083
    %v1088 = vmul.f32 %v1076, %v1083
    %v1089 = vmul.f32 %v1077, %v1083
    %v1090 = vadd.f32 %v1060, %v1084
    %v1091 = vadd.f32 %v1061, %v1085
    %v1092 = vadd.f32 %v1062, %v1086
    %v1093 = vadd.f32 %v1063, %v1087
    %v1094 = vadd.f32 %v1064, %v1088
    %v1095 = vadd.f32 %v1065, %v1089
    %1096 = vadd.xlane.f32.xlu0 %v1090
    %v1097 = vpop.xlane.xlu0 %1096
    %1098 = vadd.xlane.f32.xlu0 %v1091
    %v1099 = vpop.xlane.xlu0 %1098
    %1100 = vadd.xlane.f32.xlu0 %v1092
    %v1101 = vpop.xlane.xlu0 %1100
    %1102 = vadd.xlane.f32.xlu0 %v1093
    %v1103 = vpop.xlane.xlu0 %1102
    %1104 = vadd.xlane.f32.xlu0 %v1094
    %v1105 = vpop.xlane.xlu0 %1104
    %1106 = vadd.xlane.f32.xlu0 %v1095
    %v1107 = vpop.xlane.xlu0 %1106
    %s1108 = sld [smem:[#allocation2]]
    %v1109 = vstv %s1108
    %v1110 = vadd.f32 %v1097, %v1109
    %v1111 = vadd.f32 %v1099, %v1109
    %v1112 = vadd.f32 %v1101, %v1109
    %v1113 = vadd.f32 %v1103, %v1109
    %v1114 = vadd.f32 %v1105, %v1109
    %v1115 = vadd.f32 %v1107, %v1109
    %v1116 = vxor.u32 %v1110, 2147483648
    %v1117 = vxor.u32 %v1111, 2147483648
    %v1118 = vxor.u32 %v1112, 2147483648
    %v1119 = vxor.u32 %v1113, 2147483648
    %v1120 = vxor.u32 %v1114, 2147483648
    %v1121 = vxor.u32 %v1115, 2147483648
    %v1122 = vmul.f32 %v1116, 1.442695
    %v1123 = vpow.pop %v1122
    %v1124 = vmul.f32 %v1117, 1.442695
    %v1125 = vpow.pop %v1124
    %v1126 = vmul.f32 %v1118, 1.442695
    %v1127 = vpow.pop %v1126
    %v1128 = vmul.f32 %v1119, 1.442695
    %v1129 = vpow.pop %v1128
    %v1130 = vmul.f32 %v1120, 1.442695
    %v1131 = vpow.pop %v1130
    %v1132 = vmul.f32 %v1121, 1.442695
    %v1133 = vpow.pop %v1132
    %v1134 = vadd.f32 %v1123, 1.0
    %v1135 = vadd.f32 %v1125, 1.0
    %v1136 = vadd.f32 %v1127, 1.0
    %v1137 = vadd.f32 %v1129, 1.0
    %v1138 = vadd.f32 %v1131, 1.0
    %v1139 = vadd.f32 %v1133, 1.0
    %v1140 = vrcp.pop %v1134
    %v1141 = vmul.f32 1.0, %v1140
    %v1142 = vrcp.pop %v1135
    %v1143 = vmul.f32 1.0, %v1142
    %v1144 = vrcp.pop %v1136
    %v1145 = vmul.f32 1.0, %v1144
    %v1146 = vrcp.pop %v1137
    %v1147 = vmul.f32 1.0, %v1146
    %v1148 = vrcp.pop %v1138
    %v1149 = vmul.f32 1.0, %v1148
    %v1150 = vrcp.pop %v1139
    %v1151 = vmul.f32 1.0, %v1150
    %vm1152 = vcmask 7168
    %v1153 = vsel %vm1152, %v1141, 0.0
    %v1154 = vsel %vm1152, %v1143, 0.0
    %v1155 = vadd.f32 %v1153, %v1154
    %1156 = vadd.xlane.f32.xlu0 %v1155
    %v1157 = vpop.xlane.xlu0 %1156
    %v1158 = vrot.slane %v1157, 4
    %v1159 = vadd.f32 %v1157, %v1158
    %v1160 = vrot.slane %v1159, 2
    %v1161 = vadd.f32 %v1159, %v1160
    %v1162 = vrot.slane %v1161, 1
    %v1163 = vadd.f32 %v1161, %v1162
    %s1164 = vtos %v1163
    %v1165 = vrcp.pop 16.0
    %s1166 = vtos %v1165
    %s1167 = smul.f32 %s1164, %s1166
    %s1168 = scalar_lea.smem [#allocation3], 0
    %1169 = sst [smem:[%s1168]] %s1167
    %v1170 = vsel %vm1152, %v1145, 0.0
    %v1171 = vsel %vm1152, %v1147, 0.0
    %v1172 = vadd.f32 %v1170, %v1171
    %1173 = vadd.xlane.f32.xlu0 %v1172
    %v1174 = vpop.xlane.xlu0 %1173
    %v1175 = vrot.slane %v1174, 4
    %v1176 = vadd.f32 %v1174, %v1175
    %v1177 = vrot.slane %v1176, 2
    %v1178 = vadd.f32 %v1176, %v1177
    %v1179 = vrot.slane %v1178, 1
    %v1180 = vadd.f32 %v1178, %v1179
    %s1181 = vtos %v1180
    %v1182 = vrcp.pop 16.0
    %s1183 = vtos %v1182
    %s1184 = smul.f32 %s1181, %s1183
    %s1185 = scalar_lea.smem [#allocation3], 1
    %1186 = sst [smem:[%s1185]] %s1184
    %vm1187 = vcmask 3072
    %v1188 = vsel %vm1187, %v1149, 0.0
    %1189 = vadd.xlane.f32.xlu0 %v1188
    %v1190 = vpop.xlane.xlu0 %1189
    %v1191 = vrot.slane %v1190, 4
    %v1192 = vadd.f32 %v1190, %v1191
    %v1193 = vrot.slane %v1192, 2
    %v1194 = vadd.f32 %v1192, %v1193
    %v1195 = vrot.slane %v1194, 1
    %v1196 = vadd.f32 %v1194, %v1195
    %s1197 = vtos %v1196
    %v1198 = vrcp.pop 4.0
    %s1199 = vtos %v1198
    %s1200 = smul.f32 %s1197, %s1199
    %s1201 = scalar_lea.smem [#allocation3], 128
    %1202 = sst [smem:[%s1201]] %s1200
    %v1204 = vrot.slane %v1149, 4
    %v1206 = vsel %vm1187, %v1204, 0.0
    %1207 = vadd.xlane.f32.xlu0 %v1206
    %v1208 = vpop.xlane.xlu0 %1207
    %v1209 = vrot.slane %v1208, 4
    %v1210 = vadd.f32 %v1208, %v1209
    %v1211 = vrot.slane %v1210, 2
    %v1212 = vadd.f32 %v1210, %v1211
    %v1213 = vrot.slane %v1212, 1
    %v1214 = vadd.f32 %v1212, %v1213
    %s1215 = vtos %v1214
    %v1216 = vrcp.pop 4.0
    %s1217 = vtos %v1216
    %s1218 = smul.f32 %s1215, %s1217
    %s1219 = scalar_lea.smem [#allocation3], 129
    %1220 = sst [smem:[%s1219]] %s1218
    %v1221 = vadd.f32 %v1151, 0.0
    %s1222 = vtos %v1221
    %s1223 = scalar_lea.smem [#allocation3], 256
    %1224 = sst [smem:[%s1223]] %s1222
    %v1226 = vrot.slane %v1221, 1
    %s1228 = vtos %v1226
    %s1229 = scalar_lea.smem [#allocation3], 257
    %1230 = sst [smem:[%s1229]] %s1228
    // Predicated region
    $region14: #{tipd_forward.9} parent=1 // pred_check
      _
    $region15: #{tipd_forward.9} parent=1 // pred_check_branch
      %1232 = sbr.rel (0) target = $region17
    $region16: #{tipd_forward.9} parent=1 // pred_region
      %s1234 = ssub.s32 64, 64
      %1235 = vsyncadd [#allocation4], %s1234
      %s1237 = sshll.u32 %s3, 4
      %s1238 = int_to_ptr.vmem [resolvable:$true] %s1237
      %1240 = dma.smem_to_vmem [#allocation3], 64, %s1238, [#allocation4]
    $region17: #{tipd_forward.9} parent=1 // pred_fallthru
      _
    // Predicated region
    $region18: #{tipd_forward.9} parent=1 // pred_check
      _
    $region19: #{tipd_forward.9} parent=1 // pred_check_branch
      %1242 = sbr.rel (0) target = $region21
    $region20: #{tipd_forward.9} parent=1 // pred_region
      %1243 = dma.done [#allocation4], 64
    $region21: #{tipd_forward.9} parent=1 // pred_fallthru
      _
    %1244 = sfence
    %1245 = vsyncpa [#allocation4], 1

</llo_original>
